<compile_context>
chip_gen: v7x
topology: tpu7x:2x2x1
jax: 0.10.0
libtpu: 0.0.40
codegen_flags: <defaults>
</compile_context>

<pallas_src>
import functools

import numpy as np
import jax
import jax.numpy as jnp
from jax import lax
from jax.experimental import pallas as pl
from jax.experimental.pallas import tpu as pltpu

LANES = 128          # TPU lane width; channels are zero-padded to this in-kernel
_BN_EPS = 1e-5
_F32 = 4
_BF16 = 2


# ----------------------------------------------------------------------------
# shared in-kernel helpers
# ----------------------------------------------------------------------------
def _zero_halo(slab_ref, H, W):
    """Zero only the halo strips of the (H+2, W+16, LANES) f32 slab.

    The image interior lives at rows [1, 1+H), cols [8, 8+W).  The 3x3 tap
    windows read rows [0, H+2) and cols [7, W+9), so only the top/bottom rows
    and the (sublane-aligned) left/right 8-col strips need zeroing.
    """
    z_row = jnp.zeros((1, W + 16, LANES), jnp.float32)
    slab_ref[pl.ds(0, 1), pl.ds(0, W + 16), pl.ds(0, LANES)] = z_row
    slab_ref[pl.ds(H + 1, 1), pl.ds(0, W + 16), pl.ds(0, LANES)] = z_row

    z_col = jnp.zeros((H + 2, 8, LANES), jnp.float32)
    slab_ref[pl.ds(0, H + 2), pl.ds(0, 8), pl.ds(0, LANES)] = z_col
    slab_ref[pl.ds(0, H + 2), pl.ds(W + 8, 8), pl.ds(0, LANES)] = z_col


def _accum_conv3x3(slab_ref, w_ref, H, W):
    """3x3 'same' conv as 9 accumulated per-tap MXU matmuls.

    slab_ref : (H+2, W+16, LANES) f32 scratch (interior written, halo zeroed).
    w_ref    : (9, LANES, LANES) bf16 per-tap weights, tap = ky*3 + kx.
    returns  : (H*W, LANES) f32 accumulator.
    """
    acc = jnp.zeros((H * W, LANES), jnp.float32)
    for ky in range(3):
        for kx in range(3):
            win = slab_ref[pl.ds(ky, H), pl.ds(7 + kx, W), :]     # (H, W, 128)
            lhs = win.reshape(H * W, LANES).astype(jnp.bfloat16)  # bf16 MXU path
            acc = acc + jnp.dot(lhs, w_ref[ky * 3 + kx],
                                preferred_element_type=jnp.float32)
    return acc


def _partial_stats(acc, H, W):
    """Per-block partial sum / sum-of-squares shaped (8, LANES) so the stats
    outputs stay (8,128)-tile aligned; the wrapper finishes the reduction."""
    a = acc.reshape(H * W // 8, 8, LANES)
    return jnp.sum(a, axis=0), jnp.sum(a * a, axis=0)


# ----------------------------------------------------------------------------
# kernel 1: conv1 = [concat + zero-pad + 3x3 conv + batch-stat partials]
# ----------------------------------------------------------------------------
def _conv1_kernel(xup_ref, prev_ref, w_ref, y_ref, sum_ref, ssq_ref, slab_ref):
    H, W = y_ref.shape[1], y_ref.shape[2]
    Cx = xup_ref.shape[3]
    Cp = prev_ref.shape[3]
    Ccat = Cx + Cp

    _zero_halo(slab_ref, H, W)

    # Fused torch.cat((x, prev), dim=1) + the conv's zero padding: stage both
    # tensors into their lane ranges of the slab interior.  Together with the
    # pad-lane zero store these cover all 128 lanes, so no full-interior
    # zero-fill is needed.
    slab_ref[pl.ds(1, H), pl.ds(8, W), pl.ds(0, Cx)] = xup_ref[0]
    slab_ref[pl.ds(1, H), pl.ds(8, W), pl.ds(Cx, Cp)] = prev_ref[0]
    if Ccat < LANES:
        # Keep pad lanes finite: uninitialized VMEM * zero weight could be NaN.
        slab_ref[pl.ds(1, H), pl.ds(8, W), pl.ds(Ccat, LANES - Ccat)] = (
            jnp.zeros((H, W, LANES - Ccat), jnp.float32))

    acc = _accum_conv3x3(slab_ref, w_ref, H, W)              # (H*W, LANES) f32
    y_ref[0] = acc.reshape(H, W, LANES).astype(y_ref.dtype)  # bf16 intermediate

    s, ss = _partial_stats(acc, H, W)    # per-batch partials -> "parallel" grid
    sum_ref[0] = s
    ssq_ref[0] = ss


# ----------------------------------------------------------------------------
# kernel 2: conv2 = [bn1+relu on load + zero-pad + 3x3 conv + stat partials]
# ----------------------------------------------------------------------------
def _conv2_kernel(y1_ref, scale_ref, shift_ref, w_ref,
                  y_ref, sum_ref, ssq_ref, slab_ref):
    H, W = y_ref.shape[1], y_ref.shape[2]

    _zero_halo(slab_ref, H, W)

    # Fused BatchNorm1 (precomputed scale/shift) + ReLU applied while staging
    # conv2's input: the bn1/relu tensor never round-trips through HBM.
    # VPU math in f32; y1 is bf16 only to halve the HBM trip.
    a = jnp.maximum(
        y1_ref[0].astype(jnp.float32) * scale_ref[0] + shift_ref[0], 0.0)
    slab_ref[pl.ds(1, H), pl.ds(8, W), pl.ds(0, LANES)] = a   # full-lane store

    acc = _accum_conv3x3(slab_ref, w_ref, H, W)
    y_ref[0] = acc.reshape(H, W, LANES).astype(y_ref.dtype)

    s, ss = _partial_stats(acc, H, W)
    sum_ref[0] = s
    ssq_ref[0] = ss


# ----------------------------------------------------------------------------
# kernel 3: epilogue, bn2 + relu + channel slice (writes only real channels)
# ----------------------------------------------------------------------------
def _bn_relu_slice_kernel(y_ref, scale_ref, shift_ref, o_ref):
    Cout = o_ref.shape[3]
    v = jnp.maximum(
        y_ref[0].astype(jnp.float32) * scale_ref[0] + shift_ref[0], 0.0)
    o_ref[0] = v[:, :, :Cout]      # no 128-lane-padded final tensor in HBM


# ----------------------------------------------------------------------------
# pallas_call wrappers
# ----------------------------------------------------------------------------
def _vmem_limit(block_bytes, scratch_bytes):
    # Pipeline double-buffers every BlockSpec'd operand; scratch is single.
    need = 2 * block_bytes + scratch_bytes
    return int(min(64 << 20, max(8 << 20, int(1.5 * need))))


def _conv_out_shape(N, H, W):
    return (
        jax.ShapeDtypeStruct((N, H, W, LANES), jnp.bfloat16),  # raw conv output
        jax.ShapeDtypeStruct((N, 8, LANES), jnp.float32),      # partial sum
        jax.ShapeDtypeStruct((N, 8, LANES), jnp.float32),      # partial sum-sq
    )


def _conv_grid_spec(N, H, W, in_specs):
    return pltpu.PrefetchScalarGridSpec(
        num_scalar_prefetch=0,
        grid=(N,),
        in_specs=in_specs,
        out_specs=(
            pl.BlockSpec((1, H, W, LANES), lambda n: (n, 0, 0, 0)),
            pl.BlockSpec((1, 8, LANES), lambda n: (n, 0, 0)),
            pl.BlockSpec((1, 8, LANES), lambda n: (n, 0, 0)),
        ),
        scratch_shapes=[pltpu.VMEM((H + 2, W + 16, LANES), jnp.float32)],
    )


def conv1_fused(x_up, prev, w_packed):
    N, H, W, Cx = x_up.shape
    Cp = prev.shape[3]
    assert H % 8 == 0 and W % 8 == 0, "spatial dims must be multiples of 8"
    assert Cx + Cp <= LANES, "concatenated channels must fit in 128 lanes"
    in_specs = [
        pl.BlockSpec((1, H, W, Cx), lambda n: (n, 0, 0, 0)),
        pl.BlockSpec((1, H, W, Cp), lambda n: (n, 0, 0, 0)),
        pl.BlockSpec((9, LANES, LANES), lambda n: (0, 0, 0)),
    ]
    block_bytes = (H * W * (Cx + Cp) * _F32            # activation inputs
                   + 9 * LANES * LANES * _BF16         # packed weights
                   + H * W * LANES * _BF16             # bf16 conv output
                   + 2 * 8 * LANES * _F32)             # stat partials
    scratch_bytes = (H + 2) * (W + 16) * LANES * _F32
    return pl.pallas_call(
        _conv1_kernel,
        out_shape=_conv_out_shape(N, H, W),
        grid_spec=_conv_grid_spec(N, H, W, in_specs),
        compiler_params=pltpu.CompilerParams(
            dimension_semantics=("parallel",),
            vmem_limit_bytes=_vmem_limit(block_bytes, scratch_bytes)),
    )(x_up, prev, w_packed)


def conv2_fused(y1, scale1, shift1, w_packed):
    N, H, W, _ = y1.shape
    in_specs = [
        pl.BlockSpec((1, H, W, LANES), lambda n: (n, 0, 0, 0)),
        pl.BlockSpec((1, LANES), lambda n: (0, 0)),
        pl.BlockSpec((1, LANES), lambda n: (0, 0)),
        pl.BlockSpec((9, LANES, LANES), lambda n: (0, 0, 0)),
    ]
    block_bytes = (H * W * LANES * _BF16               # y1 input (bf16)
                   + 2 * LANES * _F32                  # scale / shift
                   + 9 * LANES * LANES * _BF16         # packed weights
                   + H * W * LANES * _BF16             # bf16 conv output
                   + 2 * 8 * LANES * _F32)             # stat partials
    scratch_bytes = (H + 2) * (W + 16) * LANES * _F32
    return pl.pallas_call(
        _conv2_kernel,
        out_shape=_conv_out_shape(N, H, W),
        grid_spec=_conv_grid_spec(N, H, W, in_specs),
        compiler_params=pltpu.CompilerParams(
            dimension_semantics=("parallel",),
            vmem_limit_bytes=_vmem_limit(block_bytes, scratch_bytes)),
    )(y1, scale1, shift1, w_packed)


def bn_relu_epilogue(y, scale, shift, out_channels):
    N, H, W, _ = y.shape
    block_bytes = (H * W * LANES * _BF16 + 2 * LANES * _F32
                   + H * W * out_channels * _F32)
    return pl.pallas_call(
        _bn_relu_slice_kernel,
        out_shape=jax.ShapeDtypeStruct((N, H, W, out_channels), jnp.float32),
        grid_spec=pltpu.PrefetchScalarGridSpec(
            num_scalar_prefetch=0,
            grid=(N,),
            in_specs=[
                pl.BlockSpec((1, H, W, LANES), lambda n: (n, 0, 0, 0)),
                pl.BlockSpec((1, LANES), lambda n: (0, 0)),
                pl.BlockSpec((1, LANES), lambda n: (0, 0)),
            ],
            out_specs=pl.BlockSpec((1, H, W, out_channels),
                                   lambda n: (n, 0, 0, 0)),
        ),
        compiler_params=pltpu.CompilerParams(
            dimension_semantics=("parallel",),
            vmem_limit_bytes=_vmem_limit(block_bytes, 0)),
    )(y, scale, shift)


# ----------------------------------------------------------------------------
# JAX glue
# ----------------------------------------------------------------------------
def _bn_scale_shift(psum, pssq, gamma_pad, beta_pad, count):
    """Finish the batch-stat reduction and fold BN into (scale, shift)."""
    s = jnp.sum(psum, axis=(0, 1))                   # (LANES,)
    ss = jnp.sum(pssq, axis=(0, 1))
    mean = s / count
    # E[x^2]-E[x]^2 in f32; clamp tiny negative values from cancellation.
    var = jnp.maximum(ss / count - mean * mean, 0.0)  # biased var (train BN)
    scale = gamma_pad * lax.rsqrt(var + _BN_EPS)
    shift = beta_pad - mean * scale
    return scale.reshape(1, LANES), shift.reshape(1, LANES)


def bilinear_upsample_x2(x_nhwc):
    # PyTorch Upsample(scale_factor=2, mode='bilinear', align_corners=False).
    N, h, w, C = x_nhwc.shape

    def idx_weights(insize):
        j = np.arange(2 * insize)
        s = np.maximum((j + 0.5) * 0.5 - 0.5, 0.0)
        i0 = np.minimum(np.floor(s).astype(np.int32), insize - 1)
        i1 = np.minimum(i0 + 1, insize - 1)
        w1 = (s - i0).astype(np.float32)
        return i0, i1, w1

    i0h, i1h, w1h = idx_weights(h)
    i0w, i1w, w1w = idx_weights(w)
    xh = (x_nhwc[:, i0h, :, :] * (1.0 - w1h)[None, :, None, None]
          + x_nhwc[:, i1h, :, :] * w1h[None, :, None, None])
    xw = (xh[:, :, i0w, :] * (1.0 - w1w)[None, None, :, None]
          + xh[:, :, i1w, :] * w1w[None, None, :, None])
    return xw


@functools.partial(jax.jit, static_argnums=(3,))
def unet_up_block_forward(params, prev_nchw, x_nchw, out_channels):
    prev = jnp.transpose(prev_nchw, (0, 2, 3, 1))    # NCHW -> NHWC
    x = jnp.transpose(x_nchw, (0, 2, 3, 1))

    x_up = bilinear_upsample_x2(x)                   # (N, H, W, Cx)

    N, H, W, _ = prev.shape
    cnt = float(N * H * W)

    y1, s1, ss1 = conv1_fused(x_up, prev, params["w1p"])
    sc1, sh1 = _bn_scale_shift(s1, ss1, params["g1p"], params["be1p"], cnt)

    y2, s2, ss2 = conv2_fused(y1, sc1, sh1, params["w2p"])
    sc2, sh2 = _bn_scale_shift(s2, ss2, params["g2p"], params["be2p"], cnt)

    out = bn_relu_epilogue(y2, sc2, sh2, out_channels)   # (N, H, W, Cout) f32
    # The transpose below only touches the real channels (epilogue already
    # dropped the 128-lane padding).
    return jnp.transpose(out, (0, 3, 1, 2))          # back to NCHW


# ----------------------------------------------------------------------------
# parameter construction
# ----------------------------------------------------------------------------
def _pack_conv_weight(w):
    # (3,3,Cin,Cout) -> (9, LANES, LANES) bf16 per-tap blocks, tap = ky*3+kx,
    # zero-padded in both channel dims for the in-kernel accumulated matmuls.
    kh, kw, cin, cout = w.shape
    wp = jnp.zeros((kh * kw, LANES, LANES), jnp.float32)
    wp = wp.at[:, :cin, :cout].set(w.reshape(kh * kw, cin, cout))
    return wp.astype(jnp.bfloat16)


def _pad_vec(v):
    return jnp.zeros((LANES,), v.dtype).at[: v.shape[0]].set(v)


def init_params(key, prev_channel, input_channel, output_channel):
    # Channel order of conv1's input matches torch.cat((x, prev), dim=1):
    # lanes [0:input_channel) = upsampled x, then prev.
    cin1 = input_channel + prev_channel
    k1, k2 = jax.random.split(key, 2)
    fan1 = 1.0 / np.sqrt(cin1 * 9)
    fan2 = 1.0 / np.sqrt(output_channel * 9)
    w1 = jax.random.uniform(k1, (3, 3, cin1, output_channel),
                            jnp.float32, -fan1, fan1)
    w2 = jax.random.uniform(k2, (3, 3, output_channel, output_channel),
                            jnp.float32, -fan2, fan2)
    gamma = jnp.ones((output_channel,), jnp.float32)
    beta = jnp.zeros((output_channel,), jnp.float32)
    # NOTE: conv biases are omitted on purpose -- a per-channel constant added
    # before training-mode BatchNorm cancels exactly in the normalization.
    return {
        "w1p": _pack_conv_weight(w1),
        "w2p": _pack_conv_weight(w2),
        "g1p": _pad_vec(gamma), "be1p": _pad_vec(beta),
        "g2p": _pad_vec(gamma), "be2p": _pad_vec(beta),
    }


if __name__ == "__main__":
    prev_channel, input_channel, output_channel = 4, 8, 8
    N, H, W = 2, 16, 16                      # prev feature-map spatial size
    key = jax.random.PRNGKey(0)
    kp, kx, kw = jax.random.split(key, 3)

    prev_feature_map = jax.random.normal(kp, (N, prev_channel, H, W), jnp.float32)
    x = jax.random.normal(kx, (N, input_channel, H // 2, W // 2), jnp.float32)

    params = init_params(kw, prev_channel, input_channel, output_channel)

    out = unet_up_block_forward(params, prev_feature_map, x, output_channel)
    out = jax.block_until_ready(out)
    assert out.shape == (N, output_channel, H, W)
    assert bool(jnp.all(jnp.isfinite(out)))
    print("KERNEL_OK")
</pallas_src>

<mosaic_0001>
module attributes {stable_mosaic.version = 11 : i64} {
  func.func @_conv1_kernel(%arg0: i32, %arg1: memref<1x16x16x8xf32, #tpu.memory_space<vmem>>, %arg2: memref<1x16x16x4xf32, #tpu.memory_space<vmem>>, %arg3: memref<9x128x128xbf16, #tpu.memory_space<vmem>>, %arg4: memref<1x16x16x128xbf16, #tpu.memory_space<vmem>>, %arg5: memref<1x8x128xf32, #tpu.memory_space<vmem>>, %arg6: memref<1x8x128xf32, #tpu.memory_space<vmem>>, %arg7: memref<18x32x128xf32, #tpu.memory_space<vmem>>) attributes {dimension_semantics = [#tpu.dimension_semantics<parallel>], iteration_bounds = array<i64: 2>, scalar_prefetch = 0 : i64, scratch_operands = 1 : i64, tpu.core_type = #tpu.core_type<tc>, window_params = [{transform_indices = @transform_0, window_bounds = array<i64: 1, 16, 16, 8>}, {transform_indices = @transform_1, window_bounds = array<i64: 1, 16, 16, 4>}, {pipeline_mode = #tpu.pipeline_mode<synchronous>, transform_indices = @transform_2, window_bounds = array<i64: 9, 128, 128>}, {transform_indices = @transform_3, window_bounds = array<i64: 1, 16, 16, 128>}, {transform_indices = @transform_4, window_bounds = array<i64: 1, 8, 128>}, {transform_indices = @transform_5, window_bounds = array<i64: 1, 8, 128>}]} {
    %cst = arith.constant 0.000000e+00 : f32
    %0 = vector.broadcast %cst : f32 to vector<1x32x128xf32>
    %c0 = arith.constant 0 : index
    %c0_0 = arith.constant 0 : index
    %c0_1 = arith.constant 0 : index
    %1 = vector.load %arg7[%c0, %c0_0, %c0_1] : memref<18x32x128xf32, #tpu.memory_space<vmem>>, vector<1x32x128xf32>
    tpu.vector_store %arg7[%c0, %c0_0, %c0_1], %0 {strides = array<i32>} : memref<18x32x128xf32, #tpu.memory_space<vmem>>, vector<1x32x128xf32>,
    %c17 = arith.constant 17 : index
    %c0_2 = arith.constant 0 : index
    %c0_3 = arith.constant 0 : index
    %2 = vector.load %arg7[%c17, %c0_2, %c0_3] : memref<18x32x128xf32, #tpu.memory_space<vmem>>, vector<1x32x128xf32>
    tpu.vector_store %arg7[%c17, %c0_2, %c0_3], %0 {strides = array<i32>} : memref<18x32x128xf32, #tpu.memory_space<vmem>>, vector<1x32x128xf32>,
    %cst_4 = arith.constant 0.000000e+00 : f32
    %3 = vector.broadcast %cst_4 : f32 to vector<18x8x128xf32>
    %c0_5 = arith.constant 0 : index
    %c0_6 = arith.constant 0 : index
    %c0_7 = arith.constant 0 : index
    %4 = vector.load %arg7[%c0_5, %c0_6, %c0_7] : memref<18x32x128xf32, #tpu.memory_space<vmem>>, vector<18x8x128xf32>
    tpu.vector_store %arg7[%c0_5, %c0_6, %c0_7], %3 {strides = array<i32>} : memref<18x32x128xf32, #tpu.memory_space<vmem>>, vector<18x8x128xf32>,
    %c0_8 = arith.constant 0 : index
    %c24 = arith.constant 24 : index
    %c0_9 = arith.constant 0 : index
    %5 = vector.load %arg7[%c0_8, %c24, %c0_9] : memref<18x32x128xf32, #tpu.memory_space<vmem>>, vector<18x8x128xf32>
    tpu.vector_store %arg7[%c0_8, %c24, %c0_9], %3 {strides = array<i32>} : memref<18x32x128xf32, #tpu.memory_space<vmem>>, vector<18x8x128xf32>,
    %c0_10 = arith.constant 0 : index
    %c0_11 = arith.constant 0 : index
    %c0_12 = arith.constant 0 : index
    %c0_13 = arith.constant 0 : index
    %6 = vector.load %arg1[%c0_10, %c0_11, %c0_12, %c0_13] : memref<1x16x16x8xf32, #tpu.memory_space<vmem>>, vector<1x16x16x8xf32>
    %7 = vector.shape_cast %6 : vector<1x16x16x8xf32> to vector<16x16x8xf32>
    %c1 = arith.constant 1 : index
    %c8 = arith.constant 8 : index
    %c0_14 = arith.constant 0 : index
    %8 = vector.load %arg7[%c1, %c8, %c0_14] : memref<18x32x128xf32, #tpu.memory_space<vmem>>, vector<16x16x8xf32>
    tpu.vector_store %arg7[%c1, %c8, %c0_14], %7 {strides = array<i32>} : memref<18x32x128xf32, #tpu.memory_space<vmem>>, vector<16x16x8xf32>,
    %c0_15 = arith.constant 0 : index
    %c0_16 = arith.constant 0 : index
    %c0_17 = arith.constant 0 : index
    %c0_18 = arith.constant 0 : index
    %9 = vector.load %arg2[%c0_15, %c0_16, %c0_17, %c0_18] : memref<1x16x16x4xf32, #tpu.memory_space<vmem>>, vector<1x16x16x4xf32>
    %10 = vector.shape_cast %9 : vector<1x16x16x4xf32> to vector<16x16x4xf32>
    %c1_19 = arith.constant 1 : index
    %c8_20 = arith.constant 8 : index
    %c8_21 = arith.constant 8 : index
    %11 = vector.load %arg7[%c1_19, %c8_20, %c8_21] : memref<18x32x128xf32, #tpu.memory_space<vmem>>, vector<16x16x4xf32>
    tpu.vector_store %arg7[%c1_19, %c8_20, %c8_21], %10 {strides = array<i32>} : memref<18x32x128xf32, #tpu.memory_space<vmem>>, vector<16x16x4xf32>,
    %cst_22 = arith.constant 0.000000e+00 : f32
    %12 = vector.broadcast %cst_22 : f32 to vector<16x16x116xf32>
    %c1_23 = arith.constant 1 : index
    %c8_24 = arith.constant 8 : index
    %c12 = arith.constant 12 : index
    %13 = vector.load %arg7[%c1_23, %c8_24, %c12] : memref<18x32x128xf32, #tpu.memory_space<vmem>>, vector<16x16x116xf32>
    tpu.vector_store %arg7[%c1_23, %c8_24, %c12], %12 {strides = array<i32>} : memref<18x32x128xf32, #tpu.memory_space<vmem>>, vector<16x16x116xf32>,
    %cst_25 = arith.constant 0.000000e+00 : f32
    %14 = vector.broadcast %cst_25 : f32 to vector<256x128xf32>
    %c0_26 = arith.constant 0 : index
    %c7 = arith.constant 7 : index
    %c0_27 = arith.constant 0 : index
    %15 = vector.load %arg7[%c0_26, %c7, %c0_27] : memref<18x32x128xf32, #tpu.memory_space<vmem>>, vector<16x16x128xf32>
    %16 = vector.shape_cast %15 : vector<16x16x128xf32> to vector<256x128xf32>
    %17 = arith.truncf %16 : vector<256x128xf32> to vector<256x128xbf16>
    %c0_28 = arith.constant 0 : index
    %c0_29 = arith.constant 0 : index
    %c0_30 = arith.constant 0 : index
    %18 = vector.load %arg3[%c0_28, %c0_29, %c0_30] : memref<9x128x128xbf16, #tpu.memory_space<vmem>>, vector<1x128x128xbf16>
    %19 = vector.shape_cast %18 : vector<1x128x128xbf16> to vector<128x128xbf16>
    %cst_31 = arith.constant dense<0.000000e+00> : vector<256x128xf32>
    %20 = tpu.matmul %17, %19, %cst_31 {dimension_numbers = #tpu.dot_dimension_numbers<[1], [0], [0], [1], [0, 0, 1, 1], [], []>} : vector<256x128xbf16>, vector<128x128xbf16>, vector<256x128xf32> -> vector<256x128xf32>
    %21 = arith.addf %14, %20 : vector<256x128xf32>
    %c0_32 = arith.constant 0 : index
    %c8_33 = arith.constant 8 : index
    %c0_34 = arith.constant 0 : index
    %22 = vector.load %arg7[%c0_32, %c8_33, %c0_34] : memref<18x32x128xf32, #tpu.memory_space<vmem>>, vector<16x16x128xf32>
    %23 = vector.shape_cast %22 : vector<16x16x128xf32> to vector<256x128xf32>
    %24 = arith.truncf %23 : vector<256x128xf32> to vector<256x128xbf16>
    %c1_35 = arith.constant 1 : index
    %c0_36 = arith.constant 0 : index
    %c0_37 = arith.constant 0 : index
    %25 = vector.load %arg3[%c1_35, %c0_36, %c0_37] : memref<9x128x128xbf16, #tpu.memory_space<vmem>>, vector<1x128x128xbf16>
    %26 = vector.shape_cast %25 : vector<1x128x128xbf16> to vector<128x128xbf16>
    %cst_38 = arith.constant dense<0.000000e+00> : vector<256x128xf32>
    %27 = tpu.matmul %24, %26, %cst_38 {dimension_numbers = #tpu.dot_dimension_numbers<[1], [0], [0], [1], [0, 0, 1, 1], [], []>} : vector<256x128xbf16>, vector<128x128xbf16>, vector<256x128xf32> -> vector<256x128xf32>
    %28 = arith.addf %21, %27 : vector<256x128xf32>
    %c0_39 = arith.constant 0 : index
    %c9 = arith.constant 9 : index
    %c0_40 = arith.constant 0 : index
    %29 = vector.load %arg7[%c0_39, %c9, %c0_40] : memref<18x32x128xf32, #tpu.memory_space<vmem>>, vector<16x16x128xf32>
    %30 = vector.shape_cast %29 : vector<16x16x128xf32> to vector<256x128xf32>
    %31 = arith.truncf %30 : vector<256x128xf32> to vector<256x128xbf16>
    %c2 = arith.constant 2 : index
    %c0_41 = arith.constant 0 : index
    %c0_42 = arith.constant 0 : index
    %32 = vector.load %arg3[%c2, %c0_41, %c0_42] : memref<9x128x128xbf16, #tpu.memory_space<vmem>>, vector<1x128x128xbf16>
    %33 = vector.shape_cast %32 : vector<1x128x128xbf16> to vector<128x128xbf16>
    %cst_43 = arith.constant dense<0.000000e+00> : vector<256x128xf32>
    %34 = tpu.matmul %31, %33, %cst_43 {dimension_numbers = #tpu.dot_dimension_numbers<[1], [0], [0], [1], [0, 0, 1, 1], [], []>} : vector<256x128xbf16>, vector<128x128xbf16>, vector<256x128xf32> -> vector<256x128xf32>
    %35 = arith.addf %28, %34 : vector<256x128xf32>
    %c1_44 = arith.constant 1 : index
    %c7_45 = arith.constant 7 : index
    %c0_46 = arith.constant 0 : index
    %36 = vector.load %arg7[%c1_44, %c7_45, %c0_46] : memref<18x32x128xf32, #tpu.memory_space<vmem>>, vector<16x16x128xf32>
    %37 = vector.shape_cast %36 : vector<16x16x128xf32> to vector<256x128xf32>
    %38 = arith.truncf %37 : vector<256x128xf32> to vector<256x128xbf16>
    %c3 = arith.constant 3 : index
    %c0_47 = arith.constant 0 : index
    %c0_48 = arith.constant 0 : index
    %39 = vector.load %arg3[%c3, %c0_47, %c0_48] : memref<9x128x128xbf16, #tpu.memory_space<vmem>>, vector<1x128x128xbf16>
    %40 = vector.shape_cast %39 : vector<1x128x128xbf16> to vector<128x128xbf16>
    %cst_49 = arith.constant dense<0.000000e+00> : vector<256x128xf32>
    %41 = tpu.matmul %38, %40, %cst_49 {dimension_numbers = #tpu.dot_dimension_numbers<[1], [0], [0], [1], [0, 0, 1, 1], [], []>} : vector<256x128xbf16>, vector<128x128xbf16>, vector<256x128xf32> -> vector<256x128xf32>
    %42 = arith.addf %35, %41 : vector<256x128xf32>
    %c1_50 = arith.constant 1 : index
    %c8_51 = arith.constant 8 : index
    %c0_52 = arith.constant 0 : index
    %43 = vector.load %arg7[%c1_50, %c8_51, %c0_52] : memref<18x32x128xf32, #tpu.memory_space<vmem>>, vector<16x16x128xf32>
    %44 = vector.shape_cast %43 : vector<16x16x128xf32> to vector<256x128xf32>
    %45 = arith.truncf %44 : vector<256x128xf32> to vector<256x128xbf16>
    %c4 = arith.constant 4 : index
    %c0_53 = arith.constant 0 : index
    %c0_54 = arith.constant 0 : index
    %46 = vector.load %arg3[%c4, %c0_53, %c0_54] : memref<9x128x128xbf16, #tpu.memory_space<vmem>>, vector<1x128x128xbf16>
    %47 = vector.shape_cast %46 : vector<1x128x128xbf16> to vector<128x128xbf16>
    %cst_55 = arith.constant dense<0.000000e+00> : vector<256x128xf32>
    %48 = tpu.matmul %45, %47, %cst_55 {dimension_numbers = #tpu.dot_dimension_numbers<[1], [0], [0], [1], [0, 0, 1, 1], [], []>} : vector<256x128xbf16>, vector<128x128xbf16>, vector<256x128xf32> -> vector<256x128xf32>
    %49 = arith.addf %42, %48 : vector<256x128xf32>
    %c1_56 = arith.constant 1 : index
    %c9_57 = arith.constant 9 : index
    %c0_58 = arith.constant 0 : index
    %50 = vector.load %arg7[%c1_56, %c9_57, %c0_58] : memref<18x32x128xf32, #tpu.memory_space<vmem>>, vector<16x16x128xf32>
    %51 = vector.shape_cast %50 : vector<16x16x128xf32> to vector<256x128xf32>
    %52 = arith.truncf %51 : vector<256x128xf32> to vector<256x128xbf16>
    %c5 = arith.constant 5 : index
    %c0_59 = arith.constant 0 : index
    %c0_60 = arith.constant 0 : index
    %53 = vector.load %arg3[%c5, %c0_59, %c0_60] : memref<9x128x128xbf16, #tpu.memory_space<vmem>>, vector<1x128x128xbf16>
    %54 = vector.shape_cast %53 : vector<1x128x128xbf16> to vector<128x128xbf16>
    %cst_61 = arith.constant dense<0.000000e+00> : vector<256x128xf32>
    %55 = tpu.matmul %52, %54, %cst_61 {dimension_numbers = #tpu.dot_dimension_numbers<[1], [0], [0], [1], [0, 0, 1, 1], [], []>} : vector<256x128xbf16>, vector<128x128xbf16>, vector<256x128xf32> -> vector<256x128xf32>
    %56 = arith.addf %49, %55 : vector<256x128xf32>
    %c2_62 = arith.constant 2 : index
    %c7_63 = arith.constant 7 : index
    %c0_64 = arith.constant 0 : index
    %57 = vector.load %arg7[%c2_62, %c7_63, %c0_64] : memref<18x32x128xf32, #tpu.memory_space<vmem>>, vector<16x16x128xf32>
    %58 = vector.shape_cast %57 : vector<16x16x128xf32> to vector<256x128xf32>
    %59 = arith.truncf %58 : vector<256x128xf32> to vector<256x128xbf16>
    %c6 = arith.constant 6 : index
    %c0_65 = arith.constant 0 : index
    %c0_66 = arith.constant 0 : index
    %60 = vector.load %arg3[%c6, %c0_65, %c0_66] : memref<9x128x128xbf16, #tpu.memory_space<vmem>>, vector<1x128x128xbf16>
    %61 = vector.shape_cast %60 : vector<1x128x128xbf16> to vector<128x128xbf16>
    %cst_67 = arith.constant dense<0.000000e+00> : vector<256x128xf32>
    %62 = tpu.matmul %59, %61, %cst_67 {dimension_numbers = #tpu.dot_dimension_numbers<[1], [0], [0], [1], [0, 0, 1, 1], [], []>} : vector<256x128xbf16>, vector<128x128xbf16>, vector<256x128xf32> -> vector<256x128xf32>
    %63 = arith.addf %56, %62 : vector<256x128xf32>
    %c2_68 = arith.constant 2 : index
    %c8_69 = arith.constant 8 : index
    %c0_70 = arith.constant 0 : index
    %64 = vector.load %arg7[%c2_68, %c8_69, %c0_70] : memref<18x32x128xf32, #tpu.memory_space<vmem>>, vector<16x16x128xf32>
    %65 = vector.shape_cast %64 : vector<16x16x128xf32> to vector<256x128xf32>
    %66 = arith.truncf %65 : vector<256x128xf32> to vector<256x128xbf16>
    %c7_71 = arith.constant 7 : index
    %c0_72 = arith.constant 0 : index
    %c0_73 = arith.constant 0 : index
    %67 = vector.load %arg3[%c7_71, %c0_72, %c0_73] : memref<9x128x128xbf16, #tpu.memory_space<vmem>>, vector<1x128x128xbf16>
    %68 = vector.shape_cast %67 : vector<1x128x128xbf16> to vector<128x128xbf16>
    %cst_74 = arith.constant dense<0.000000e+00> : vector<256x128xf32>
    %69 = tpu.matmul %66, %68, %cst_74 {dimension_numbers = #tpu.dot_dimension_numbers<[1], [0], [0], [1], [0, 0, 1, 1], [], []>} : vector<256x128xbf16>, vector<128x128xbf16>, vector<256x128xf32> -> vector<256x128xf32>
    %70 = arith.addf %63, %69 : vector<256x128xf32>
    %c2_75 = arith.constant 2 : index
    %c9_76 = arith.constant 9 : index
    %c0_77 = arith.constant 0 : index
    %71 = vector.load %arg7[%c2_75, %c9_76, %c0_77] : memref<18x32x128xf32, #tpu.memory_space<vmem>>, vector<16x16x128xf32>
    %72 = vector.shape_cast %71 : vector<16x16x128xf32> to vector<256x128xf32>
    %73 = arith.truncf %72 : vector<256x128xf32> to vector<256x128xbf16>
    %c8_78 = arith.constant 8 : index
    %c0_79 = arith.constant 0 : index
    %c0_80 = arith.constant 0 : index
    %74 = vector.load %arg3[%c8_78, %c0_79, %c0_80] : memref<9x128x128xbf16, #tpu.memory_space<vmem>>, vector<1x128x128xbf16>
    %75 = vector.shape_cast %74 : vector<1x128x128xbf16> to vector<128x128xbf16>
    %cst_81 = arith.constant dense<0.000000e+00> : vector<256x128xf32>
    %76 = tpu.matmul %73, %75, %cst_81 {dimension_numbers = #tpu.dot_dimension_numbers<[1], [0], [0], [1], [0, 0, 1, 1], [], []>} : vector<256x128xbf16>, vector<128x128xbf16>, vector<256x128xf32> -> vector<256x128xf32>
    %77 = arith.addf %70, %76 : vector<256x128xf32>
    %78 = vector.shape_cast %77 : vector<256x128xf32> to vector<16x16x128xf32>
    %79 = arith.truncf %78 : vector<16x16x128xf32> to vector<16x16x128xbf16>
    %c0_82 = arith.constant 0 : index
    %c0_83 = arith.constant 0 : index
    %c0_84 = arith.constant 0 : index
    %c0_85 = arith.constant 0 : index
    %80 = vector.load %arg4[%c0_82, %c0_83, %c0_84, %c0_85] : memref<1x16x16x128xbf16, #tpu.memory_space<vmem>>, vector<1x16x16x128xbf16>
    %81 = vector.shape_cast %80 : vector<1x16x16x128xbf16> to vector<16x16x128xbf16>
    %82 = vector.shape_cast %79 : vector<16x16x128xbf16> to vector<1x16x16x128xbf16>
    tpu.vector_store %arg4[%c0_82, %c0_83, %c0_84, %c0_85], %82 {strides = array<i32>} : memref<1x16x16x128xbf16, #tpu.memory_space<vmem>>, vector<1x16x16x128xbf16>,
    %83 = vector.shape_cast %77 : vector<256x128xf32> to vector<32x8x128xf32>
    %cst_86 = arith.constant dense<0.000000e+00> : vector<8x128xf32>
    %84 = vector.multi_reduction <add>, %83, %cst_86 [0] : vector<32x8x128xf32> to vector<8x128xf32>
    %85 = arith.mulf %83, %83 : vector<32x8x128xf32>
    %cst_87 = arith.constant dense<0.000000e+00> : vector<8x128xf32>
    %86 = vector.multi_reduction <add>, %85, %cst_87 [0] : vector<32x8x128xf32> to vector<8x128xf32>
    %c0_88 = arith.constant 0 : index
    %c0_89 = arith.constant 0 : index
    %c0_90 = arith.constant 0 : index
    %87 = vector.load %arg5[%c0_88, %c0_89, %c0_90] : memref<1x8x128xf32, #tpu.memory_space<vmem>>, vector<1x8x128xf32>
    %88 = vector.shape_cast %87 : vector<1x8x128xf32> to vector<8x128xf32>
    %89 = vector.shape_cast %84 : vector<8x128xf32> to vector<1x8x128xf32>
    tpu.vector_store %arg5[%c0_88, %c0_89, %c0_90], %89 {strides = array<i32>} : memref<1x8x128xf32, #tpu.memory_space<vmem>>, vector<1x8x128xf32>,
    %c0_91 = arith.constant 0 : index
    %c0_92 = arith.constant 0 : index
    %c0_93 = arith.constant 0 : index
    %90 = vector.load %arg6[%c0_91, %c0_92, %c0_93] : memref<1x8x128xf32, #tpu.memory_space<vmem>>, vector<1x8x128xf32>
    %91 = vector.shape_cast %90 : vector<1x8x128xf32> to vector<8x128xf32>
    %92 = vector.shape_cast %86 : vector<8x128xf32> to vector<1x8x128xf32>
    tpu.vector_store %arg6[%c0_91, %c0_92, %c0_93], %92 {strides = array<i32>} : memref<1x8x128xf32, #tpu.memory_space<vmem>>, vector<1x8x128xf32>,
    return
  }
  func.func @transform_0(%arg0: i32) -> (i32, i32, i32, i32) {
    %c0_i32 = arith.constant 0 : i32
    %c0_i32_0 = arith.constant 0 : i32
    %c0_i32_1 = arith.constant 0 : i32
    %c0_i32_2 = arith.constant 0 : i32
    return %arg0, %c0_i32, %c0_i32_0, %c0_i32_1 : i32, i32, i32, i32
  }
  func.func @transform_1(%arg0: i32) -> (i32, i32, i32, i32) {
    %c0_i32 = arith.constant 0 : i32
    %c0_i32_0 = arith.constant 0 : i32
    %c0_i32_1 = arith.constant 0 : i32
    %c0_i32_2 = arith.constant 0 : i32
    return %arg0, %c0_i32, %c0_i32_0, %c0_i32_1 : i32, i32, i32, i32
  }
  func.func @transform_2(%arg0: i32) -> (i32, i32, i32) {
    %c0_i32 = arith.constant 0 : i32
    %c0_i32_0 = arith.constant 0 : i32
    %c0_i32_1 = arith.constant 0 : i32
    %c0_i32_2 = arith.constant 0 : i32
    return %c0_i32, %c0_i32_0, %c0_i32_1 : i32, i32, i32
  }
  func.func @transform_3(%arg0: i32) -> (i32, i32, i32, i32) {
    %c0_i32 = arith.constant 0 : i32
    %c0_i32_0 = arith.constant 0 : i32
    %c0_i32_1 = arith.constant 0 : i32
    %c0_i32_2 = arith.constant 0 : i32
    return %arg0, %c0_i32, %c0_i32_0, %c0_i32_1 : i32, i32, i32, i32
  }
  func.func @transform_4(%arg0: i32) -> (i32, i32, i32) {
    %c0_i32 = arith.constant 0 : i32
    %c0_i32_0 = arith.constant 0 : i32
    %c0_i32_1 = arith.constant 0 : i32
    return %arg0, %c0_i32, %c0_i32_0 : i32, i32, i32
  }
  func.func @transform_5(%arg0: i32) -> (i32, i32, i32) {
    %c0_i32 = arith.constant 0 : i32
    %c0_i32_0 = arith.constant 0 : i32
    %c0_i32_1 = arith.constant 0 : i32
    return %arg0, %c0_i32, %c0_i32_0 : i32, i32, i32
  }
}

module attributes {stable_mosaic.version = 11 : i64} {
  func.func @_bn_relu_slice_kernel(%arg0: i32, %arg1: memref<1x16x16x128xbf16, #tpu.memory_space<vmem>>, %arg2: memref<1x128xf32, #tpu.memory_space<vmem>>, %arg3: memref<1x128xf32, #tpu.memory_space<vmem>>, %arg4: memref<1x16x16x8xf32, #tpu.memory_space<vmem>>) attributes {dimension_semantics = [#tpu.dimension_semantics<parallel>], iteration_bounds = array<i64: 2>, scalar_prefetch = 0 : i64, scratch_operands = 0 : i64, tpu.core_type = #tpu.core_type<tc>, window_params = [{transform_indices = @transform_0, window_bounds = array<i64: 1, 16, 16, 128>}, {pipeline_mode = #tpu.pipeline_mode<synchronous>, transform_indices = @transform_1, window_bounds = array<i64: 1, 128>}, {pipeline_mode = #tpu.pipeline_mode<synchronous>, transform_indices = @transform_2, window_bounds = array<i64: 1, 128>}, {transform_indices = @transform_3, window_bounds = array<i64: 1, 16, 16, 8>}]} {
    %c0 = arith.constant 0 : index
    %c0_0 = arith.constant 0 : index
    %c0_1 = arith.constant 0 : index
    %c0_2 = arith.constant 0 : index
    %0 = vector.load %arg1[%c0, %c0_0, %c0_1, %c0_2] : memref<1x16x16x128xbf16, #tpu.memory_space<vmem>>, vector<1x16x16x128xbf16>
    %1 = vector.shape_cast %0 : vector<1x16x16x128xbf16> to vector<16x16x128xbf16>
    %2 = arith.extf %1 : vector<16x16x128xbf16> to vector<16x16x128xf32>
    %c0_3 = arith.constant 0 : index
    %c0_4 = arith.constant 0 : index
    %3 = vector.load %arg2[%c0_3, %c0_4] : memref<1x128xf32, #tpu.memory_space<vmem>>, vector<1x128xf32>
    %4 = vector.shape_cast %3 : vector<1x128xf32> to vector<128xf32>
    %5 = vector.shape_cast %4 : vector<128xf32> to vector<1x1x128xf32>
    %6 = vector.broadcast %5 : vector<1x1x128xf32> to vector<16x16x128xf32>
    %7 = arith.mulf %2, %6 : vector<16x16x128xf32>
    %c0_5 = arith.constant 0 : index
    %c0_6 = arith.constant 0 : index
    %8 = vector.load %arg3[%c0_5, %c0_6] : memref<1x128xf32, #tpu.memory_space<vmem>>, vector<1x128xf32>
    %9 = vector.shape_cast %8 : vector<1x128xf32> to vector<128xf32>
    %10 = vector.shape_cast %9 : vector<128xf32> to vector<1x1x128xf32>
    %11 = vector.broadcast %10 : vector<1x1x128xf32> to vector<16x16x128xf32>
    %12 = arith.addf %7, %11 : vector<16x16x128xf32>
    %cst = arith.constant 0.000000e+00 : f32
    %13 = vector.broadcast %cst : f32 to vector<16x16x128xf32>
    %14 = arith.maximumf %12, %13 : vector<16x16x128xf32>
    %15 = vector.extract_strided_slice %14 {offsets = [0, 0, 0], sizes = [16, 16, 8], strides = [1, 1, 1]} : vector<16x16x128xf32> to vector<16x16x8xf32>
    %c0_7 = arith.constant 0 : index
    %c0_8 = arith.constant 0 : index
    %c0_9 = arith.constant 0 : index
    %c0_10 = arith.constant 0 : index
    %16 = vector.load %arg4[%c0_7, %c0_8, %c0_9, %c0_10] : memref<1x16x16x8xf32, #tpu.memory_space<vmem>>, vector<1x16x16x8xf32>
    %17 = vector.shape_cast %16 : vector<1x16x16x8xf32> to vector<16x16x8xf32>
    %18 = vector.shape_cast %15 : vector<16x16x8xf32> to vector<1x16x16x8xf32>
    tpu.vector_store %arg4[%c0_7, %c0_8, %c0_9, %c0_10], %18 {strides = array<i32>} : memref<1x16x16x8xf32, #tpu.memory_space<vmem>>, vector<1x16x16x8xf32>,
    return
  }
  func.func @transform_0(%arg0: i32) -> (i32, i32, i32, i32) {
    %c0_i32 = arith.constant 0 : i32
    %c0_i32_0 = arith.constant 0 : i32
    %c0_i32_1 = arith.constant 0 : i32
    %c0_i32_2 = arith.constant 0 : i32
    return %arg0, %c0_i32, %c0_i32_0, %c0_i32_1 : i32, i32, i32, i32
  }
  func.func @transform_1(%arg0: i32) -> (i32, i32) {
    %c0_i32 = arith.constant 0 : i32
    %c0_i32_0 = arith.constant 0 : i32
    %c0_i32_1 = arith.constant 0 : i32
    return %c0_i32, %c0_i32_0 : i32, i32
  }
  func.func @transform_2(%arg0: i32) -> (i32, i32) {
    %c0_i32 = arith.constant 0 : i32
    %c0_i32_0 = arith.constant 0 : i32
    %c0_i32_1 = arith.constant 0 : i32
    return %c0_i32, %c0_i32_0 : i32, i32
  }
  func.func @transform_3(%arg0: i32) -> (i32, i32, i32, i32) {
    %c0_i32 = arith.constant 0 : i32
    %c0_i32_0 = arith.constant 0 : i32
    %c0_i32_1 = arith.constant 0 : i32
    %c0_i32_2 = arith.constant 0 : i32
    return %arg0, %c0_i32, %c0_i32_0, %c0_i32_1 : i32, i32, i32, i32
  }
}

module attributes {stable_mosaic.version = 11 : i64} {
  func.func @_conv2_kernel(%arg0: i32, %arg1: memref<1x16x16x128xbf16, #tpu.memory_space<vmem>>, %arg2: memref<1x128xf32, #tpu.memory_space<vmem>>, %arg3: memref<1x128xf32, #tpu.memory_space<vmem>>, %arg4: memref<9x128x128xbf16, #tpu.memory_space<vmem>>, %arg5: memref<1x16x16x128xbf16, #tpu.memory_space<vmem>>, %arg6: memref<1x8x128xf32, #tpu.memory_space<vmem>>, %arg7: memref<1x8x128xf32, #tpu.memory_space<vmem>>, %arg8: memref<18x32x128xf32, #tpu.memory_space<vmem>>) attributes {dimension_semantics = [#tpu.dimension_semantics<parallel>], iteration_bounds = array<i64: 2>, scalar_prefetch = 0 : i64, scratch_operands = 1 : i64, tpu.core_type = #tpu.core_type<tc>, window_params = [{transform_indices = @transform_0, window_bounds = array<i64: 1, 16, 16, 128>}, {pipeline_mode = #tpu.pipeline_mode<synchronous>, transform_indices = @transform_1, window_bounds = array<i64: 1, 128>}, {pipeline_mode = #tpu.pipeline_mode<synchronous>, transform_indices = @transform_2, window_bounds = array<i64: 1, 128>}, {pipeline_mode = #tpu.pipeline_mode<synchronous>, transform_indices = @transform_3, window_bounds = array<i64: 9, 128, 128>}, {transform_indices = @transform_4, window_bounds = array<i64: 1, 16, 16, 128>}, {transform_indices = @transform_5, window_bounds = array<i64: 1, 8, 128>}, {transform_indices = @transform_6, window_bounds = array<i64: 1, 8, 128>}]} {
    %cst = arith.constant 0.000000e+00 : f32
    %0 = vector.broadcast %cst : f32 to vector<1x32x128xf32>
    %c0 = arith.constant 0 : index
    %c0_0 = arith.constant 0 : index
    %c0_1 = arith.constant 0 : index
    %1 = vector.load %arg8[%c0, %c0_0, %c0_1] : memref<18x32x128xf32, #tpu.memory_space<vmem>>, vector<1x32x128xf32>
    tpu.vector_store %arg8[%c0, %c0_0, %c0_1], %0 {strides = array<i32>} : memref<18x32x128xf32, #tpu.memory_space<vmem>>, vector<1x32x128xf32>,
    %c17 = arith.constant 17 : index
    %c0_2 = arith.constant 0 : index
    %c0_3 = arith.constant 0 : index
    %2 = vector.load %arg8[%c17, %c0_2, %c0_3] : memref<18x32x128xf32, #tpu.memory_space<vmem>>, vector<1x32x128xf32>
    tpu.vector_store %arg8[%c17, %c0_2, %c0_3], %0 {strides = array<i32>} : memref<18x32x128xf32, #tpu.memory_space<vmem>>, vector<1x32x128xf32>,
    %cst_4 = arith.constant 0.000000e+00 : f32
    %3 = vector.broadcast %cst_4 : f32 to vector<18x8x128xf32>
    %c0_5 = arith.constant 0 : index
    %c0_6 = arith.constant 0 : index
    %c0_7 = arith.constant 0 : index
    %4 = vector.load %arg8[%c0_5, %c0_6, %c0_7] : memref<18x32x128xf32, #tpu.memory_space<vmem>>, vector<18x8x128xf32>
    tpu.vector_store %arg8[%c0_5, %c0_6, %c0_7], %3 {strides = array<i32>} : memref<18x32x128xf32, #tpu.memory_space<vmem>>, vector<18x8x128xf32>,
    %c0_8 = arith.constant 0 : index
    %c24 = arith.constant 24 : index
    %c0_9 = arith.constant 0 : index
    %5 = vector.load %arg8[%c0_8, %c24, %c0_9] : memref<18x32x128xf32, #tpu.memory_space<vmem>>, vector<18x8x128xf32>
    tpu.vector_store %arg8[%c0_8, %c24, %c0_9], %3 {strides = array<i32>} : memref<18x32x128xf32, #tpu.memory_space<vmem>>, vector<18x8x128xf32>,
    %c0_10 = arith.constant 0 : index
    %c0_11 = arith.constant 0 : index
    %c0_12 = arith.constant 0 : index
    %c0_13 = arith.constant 0 : index
    %6 = vector.load %arg1[%c0_10, %c0_11, %c0_12, %c0_13] : memref<1x16x16x128xbf16, #tpu.memory_space<vmem>>, vector<1x16x16x128xbf16>
    %7 = vector.shape_cast %6 : vector<1x16x16x128xbf16> to vector<16x16x128xbf16>
    %8 = arith.extf %7 : vector<16x16x128xbf16> to vector<16x16x128xf32>
    %c0_14 = arith.constant 0 : index
    %c0_15 = arith.constant 0 : index
    %9 = vector.load %arg2[%c0_14, %c0_15] : memref<1x128xf32, #tpu.memory_space<vmem>>, vector<1x128xf32>
    %10 = vector.shape_cast %9 : vector<1x128xf32> to vector<128xf32>
    %11 = vector.shape_cast %10 : vector<128xf32> to vector<1x1x128xf32>
    %12 = vector.broadcast %11 : vector<1x1x128xf32> to vector<16x16x128xf32>
    %13 = arith.mulf %8, %12 : vector<16x16x128xf32>
    %c0_16 = arith.constant 0 : index
    %c0_17 = arith.constant 0 : index
    %14 = vector.load %arg3[%c0_16, %c0_17] : memref<1x128xf32, #tpu.memory_space<vmem>>, vector<1x128xf32>
    %15 = vector.shape_cast %14 : vector<1x128xf32> to vector<128xf32>
    %16 = vector.shape_cast %15 : vector<128xf32> to vector<1x1x128xf32>
    %17 = vector.broadcast %16 : vector<1x1x128xf32> to vector<16x16x128xf32>
    %18 = arith.addf %13, %17 : vector<16x16x128xf32>
    %cst_18 = arith.constant 0.000000e+00 : f32
    %19 = vector.broadcast %cst_18 : f32 to vector<16x16x128xf32>
    %20 = arith.maximumf %18, %19 : vector<16x16x128xf32>
    %c1 = arith.constant 1 : index
    %c8 = arith.constant 8 : index
    %c0_19 = arith.constant 0 : index
    %21 = vector.load %arg8[%c1, %c8, %c0_19] : memref<18x32x128xf32, #tpu.memory_space<vmem>>, vector<16x16x128xf32>
    tpu.vector_store %arg8[%c1, %c8, %c0_19], %20 {strides = array<i32>} : memref<18x32x128xf32, #tpu.memory_space<vmem>>, vector<16x16x128xf32>,
    %cst_20 = arith.constant 0.000000e+00 : f32
    %22 = vector.broadcast %cst_20 : f32 to vector<256x128xf32>
    %c0_21 = arith.constant 0 : index
    %c7 = arith.constant 7 : index
    %c0_22 = arith.constant 0 : index
    %23 = vector.load %arg8[%c0_21, %c7, %c0_22] : memref<18x32x128xf32, #tpu.memory_space<vmem>>, vector<16x16x128xf32>
    %24 = vector.shape_cast %23 : vector<16x16x128xf32> to vector<256x128xf32>
    %25 = arith.truncf %24 : vector<256x128xf32> to vector<256x128xbf16>
    %c0_23 = arith.constant 0 : index
    %c0_24 = arith.constant 0 : index
    %c0_25 = arith.constant 0 : index
    %26 = vector.load %arg4[%c0_23, %c0_24, %c0_25] : memref<9x128x128xbf16, #tpu.memory_space<vmem>>, vector<1x128x128xbf16>
    %27 = vector.shape_cast %26 : vector<1x128x128xbf16> to vector<128x128xbf16>
    %cst_26 = arith.constant dense<0.000000e+00> : vector<256x128xf32>
    %28 = tpu.matmul %25, %27, %cst_26 {dimension_numbers = #tpu.dot_dimension_numbers<[1], [0], [0], [1], [0, 0, 1, 1], [], []>} : vector<256x128xbf16>, vector<128x128xbf16>, vector<256x128xf32> -> vector<256x128xf32>
    %29 = arith.addf %22, %28 : vector<256x128xf32>
    %c0_27 = arith.constant 0 : index
    %c8_28 = arith.constant 8 : index
    %c0_29 = arith.constant 0 : index
    %30 = vector.load %arg8[%c0_27, %c8_28, %c0_29] : memref<18x32x128xf32, #tpu.memory_space<vmem>>, vector<16x16x128xf32>
    %31 = vector.shape_cast %30 : vector<16x16x128xf32> to vector<256x128xf32>
    %32 = arith.truncf %31 : vector<256x128xf32> to vector<256x128xbf16>
    %c1_30 = arith.constant 1 : index
    %c0_31 = arith.constant 0 : index
    %c0_32 = arith.constant 0 : index
    %33 = vector.load %arg4[%c1_30, %c0_31, %c0_32] : memref<9x128x128xbf16, #tpu.memory_space<vmem>>, vector<1x128x128xbf16>
    %34 = vector.shape_cast %33 : vector<1x128x128xbf16> to vector<128x128xbf16>
    %cst_33 = arith.constant dense<0.000000e+00> : vector<256x128xf32>
    %35 = tpu.matmul %32, %34, %cst_33 {dimension_numbers = #tpu.dot_dimension_numbers<[1], [0], [0], [1], [0, 0, 1, 1], [], []>} : vector<256x128xbf16>, vector<128x128xbf16>, vector<256x128xf32> -> vector<256x128xf32>
    %36 = arith.addf %29, %35 : vector<256x128xf32>
    %c0_34 = arith.constant 0 : index
    %c9 = arith.constant 9 : index
    %c0_35 = arith.constant 0 : index
    %37 = vector.load %arg8[%c0_34, %c9, %c0_35] : memref<18x32x128xf32, #tpu.memory_space<vmem>>, vector<16x16x128xf32>
    %38 = vector.shape_cast %37 : vector<16x16x128xf32> to vector<256x128xf32>
    %39 = arith.truncf %38 : vector<256x128xf32> to vector<256x128xbf16>
    %c2 = arith.constant 2 : index
    %c0_36 = arith.constant 0 : index
    %c0_37 = arith.constant 0 : index
    %40 = vector.load %arg4[%c2, %c0_36, %c0_37] : memref<9x128x128xbf16, #tpu.memory_space<vmem>>, vector<1x128x128xbf16>
    %41 = vector.shape_cast %40 : vector<1x128x128xbf16> to vector<128x128xbf16>
    %cst_38 = arith.constant dense<0.000000e+00> : vector<256x128xf32>
    %42 = tpu.matmul %39, %41, %cst_38 {dimension_numbers = #tpu.dot_dimension_numbers<[1], [0], [0], [1], [0, 0, 1, 1], [], []>} : vector<256x128xbf16>, vector<128x128xbf16>, vector<256x128xf32> -> vector<256x128xf32>
    %43 = arith.addf %36, %42 : vector<256x128xf32>
    %c1_39 = arith.constant 1 : index
    %c7_40 = arith.constant 7 : index
    %c0_41 = arith.constant 0 : index
    %44 = vector.load %arg8[%c1_39, %c7_40, %c0_41] : memref<18x32x128xf32, #tpu.memory_space<vmem>>, vector<16x16x128xf32>
    %45 = vector.shape_cast %44 : vector<16x16x128xf32> to vector<256x128xf32>
    %46 = arith.truncf %45 : vector<256x128xf32> to vector<256x128xbf16>
    %c3 = arith.constant 3 : index
    %c0_42 = arith.constant 0 : index
    %c0_43 = arith.constant 0 : index
    %47 = vector.load %arg4[%c3, %c0_42, %c0_43] : memref<9x128x128xbf16, #tpu.memory_space<vmem>>, vector<1x128x128xbf16>
    %48 = vector.shape_cast %47 : vector<1x128x128xbf16> to vector<128x128xbf16>
    %cst_44 = arith.constant dense<0.000000e+00> : vector<256x128xf32>
    %49 = tpu.matmul %46, %48, %cst_44 {dimension_numbers = #tpu.dot_dimension_numbers<[1], [0], [0], [1], [0, 0, 1, 1], [], []>} : vector<256x128xbf16>, vector<128x128xbf16>, vector<256x128xf32> -> vector<256x128xf32>
    %50 = arith.addf %43, %49 : vector<256x128xf32>
    %c1_45 = arith.constant 1 : index
    %c8_46 = arith.constant 8 : index
    %c0_47 = arith.constant 0 : index
    %51 = vector.load %arg8[%c1_45, %c8_46, %c0_47] : memref<18x32x128xf32, #tpu.memory_space<vmem>>, vector<16x16x128xf32>
    %52 = vector.shape_cast %51 : vector<16x16x128xf32> to vector<256x128xf32>
    %53 = arith.truncf %52 : vector<256x128xf32> to vector<256x128xbf16>
    %c4 = arith.constant 4 : index
    %c0_48 = arith.constant 0 : index
    %c0_49 = arith.constant 0 : index
    %54 = vector.load %arg4[%c4, %c0_48, %c0_49] : memref<9x128x128xbf16, #tpu.memory_space<vmem>>, vector<1x128x128xbf16>
    %55 = vector.shape_cast %54 : vector<1x128x128xbf16> to vector<128x128xbf16>
    %cst_50 = arith.constant dense<0.000000e+00> : vector<256x128xf32>
    %56 = tpu.matmul %53, %55, %cst_50 {dimension_numbers = #tpu.dot_dimension_numbers<[1], [0], [0], [1], [0, 0, 1, 1], [], []>} : vector<256x128xbf16>, vector<128x128xbf16>, vector<256x128xf32> -> vector<256x128xf32>
    %57 = arith.addf %50, %56 : vector<256x128xf32>
    %c1_51 = arith.constant 1 : index
    %c9_52 = arith.constant 9 : index
    %c0_53 = arith.constant 0 : index
    %58 = vector.load %arg8[%c1_51, %c9_52, %c0_53] : memref<18x32x128xf32, #tpu.memory_space<vmem>>, vector<16x16x128xf32>
    %59 = vector.shape_cast %58 : vector<16x16x128xf32> to vector<256x128xf32>
    %60 = arith.truncf %59 : vector<256x128xf32> to vector<256x128xbf16>
    %c5 = arith.constant 5 : index
    %c0_54 = arith.constant 0 : index
    %c0_55 = arith.constant 0 : index
    %61 = vector.load %arg4[%c5, %c0_54, %c0_55] : memref<9x128x128xbf16, #tpu.memory_space<vmem>>, vector<1x128x128xbf16>
    %62 = vector.shape_cast %61 : vector<1x128x128xbf16> to vector<128x128xbf16>
    %cst_56 = arith.constant dense<0.000000e+00> : vector<256x128xf32>
    %63 = tpu.matmul %60, %62, %cst_56 {dimension_numbers = #tpu.dot_dimension_numbers<[1], [0], [0], [1], [0, 0, 1, 1], [], []>} : vector<256x128xbf16>, vector<128x128xbf16>, vector<256x128xf32> -> vector<256x128xf32>
    %64 = arith.addf %57, %63 : vector<256x128xf32>
    %c2_57 = arith.constant 2 : index
    %c7_58 = arith.constant 7 : index
    %c0_59 = arith.constant 0 : index
    %65 = vector.load %arg8[%c2_57, %c7_58, %c0_59] : memref<18x32x128xf32, #tpu.memory_space<vmem>>, vector<16x16x128xf32>
    %66 = vector.shape_cast %65 : vector<16x16x128xf32> to vector<256x128xf32>
    %67 = arith.truncf %66 : vector<256x128xf32> to vector<256x128xbf16>
    %c6 = arith.constant 6 : index
    %c0_60 = arith.constant 0 : index
    %c0_61 = arith.constant 0 : index
    %68 = vector.load %arg4[%c6, %c0_60, %c0_61] : memref<9x128x128xbf16, #tpu.memory_space<vmem>>, vector<1x128x128xbf16>
    %69 = vector.shape_cast %68 : vector<1x128x128xbf16> to vector<128x128xbf16>
    %cst_62 = arith.constant dense<0.000000e+00> : vector<256x128xf32>
    %70 = tpu.matmul %67, %69, %cst_62 {dimension_numbers = #tpu.dot_dimension_numbers<[1], [0], [0], [1], [0, 0, 1, 1], [], []>} : vector<256x128xbf16>, vector<128x128xbf16>, vector<256x128xf32> -> vector<256x128xf32>
    %71 = arith.addf %64, %70 : vector<256x128xf32>
    %c2_63 = arith.constant 2 : index
    %c8_64 = arith.constant 8 : index
    %c0_65 = arith.constant 0 : index
    %72 = vector.load %arg8[%c2_63, %c8_64, %c0_65] : memref<18x32x128xf32, #tpu.memory_space<vmem>>, vector<16x16x128xf32>
    %73 = vector.shape_cast %72 : vector<16x16x128xf32> to vector<256x128xf32>
    %74 = arith.truncf %73 : vector<256x128xf32> to vector<256x128xbf16>
    %c7_66 = arith.constant 7 : index
    %c0_67 = arith.constant 0 : index
    %c0_68 = arith.constant 0 : index
    %75 = vector.load %arg4[%c7_66, %c0_67, %c0_68] : memref<9x128x128xbf16, #tpu.memory_space<vmem>>, vector<1x128x128xbf16>
    %76 = vector.shape_cast %75 : vector<1x128x128xbf16> to vector<128x128xbf16>
    %cst_69 = arith.constant dense<0.000000e+00> : vector<256x128xf32>
    %77 = tpu.matmul %74, %76, %cst_69 {dimension_numbers = #tpu.dot_dimension_numbers<[1], [0], [0], [1], [0, 0, 1, 1], [], []>} : vector<256x128xbf16>, vector<128x128xbf16>, vector<256x128xf32> -> vector<256x128xf32>
    %78 = arith.addf %71, %77 : vector<256x128xf32>
    %c2_70 = arith.constant 2 : index
    %c9_71 = arith.constant 9 : index
    %c0_72 = arith.constant 0 : index
    %79 = vector.load %arg8[%c2_70, %c9_71, %c0_72] : memref<18x32x128xf32, #tpu.memory_space<vmem>>, vector<16x16x128xf32>
    %80 = vector.shape_cast %79 : vector<16x16x128xf32> to vector<256x128xf32>
    %81 = arith.truncf %80 : vector<256x128xf32> to vector<256x128xbf16>
    %c8_73 = arith.constant 8 : index
    %c0_74 = arith.constant 0 : index
    %c0_75 = arith.constant 0 : index
    %82 = vector.load %arg4[%c8_73, %c0_74, %c0_75] : memref<9x128x128xbf16, #tpu.memory_space<vmem>>, vector<1x128x128xbf16>
    %83 = vector.shape_cast %82 : vector<1x128x128xbf16> to vector<128x128xbf16>
    %cst_76 = arith.constant dense<0.000000e+00> : vector<256x128xf32>
    %84 = tpu.matmul %81, %83, %cst_76 {dimension_numbers = #tpu.dot_dimension_numbers<[1], [0], [0], [1], [0, 0, 1, 1], [], []>} : vector<256x128xbf16>, vector<128x128xbf16>, vector<256x128xf32> -> vector<256x128xf32>
    %85 = arith.addf %78, %84 : vector<256x128xf32>
    %86 = vector.shape_cast %85 : vector<256x128xf32> to vector<16x16x128xf32>
    %87 = arith.truncf %86 : vector<16x16x128xf32> to vector<16x16x128xbf16>
    %c0_77 = arith.constant 0 : index
    %c0_78 = arith.constant 0 : index
    %c0_79 = arith.constant 0 : index
    %c0_80 = arith.constant 0 : index
    %88 = vector.load %arg5[%c0_77, %c0_78, %c0_79, %c0_80] : memref<1x16x16x128xbf16, #tpu.memory_space<vmem>>, vector<1x16x16x128xbf16>
    %89 = vector.shape_cast %88 : vector<1x16x16x128xbf16> to vector<16x16x128xbf16>
    %90 = vector.shape_cast %87 : vector<16x16x128xbf16> to vector<1x16x16x128xbf16>
    tpu.vector_store %arg5[%c0_77, %c0_78, %c0_79, %c0_80], %90 {strides = array<i32>} : memref<1x16x16x128xbf16, #tpu.memory_space<vmem>>, vector<1x16x16x128xbf16>,
    %91 = vector.shape_cast %85 : vector<256x128xf32> to vector<32x8x128xf32>
    %cst_81 = arith.constant dense<0.000000e+00> : vector<8x128xf32>
    %92 = vector.multi_reduction <add>, %91, %cst_81 [0] : vector<32x8x128xf32> to vector<8x128xf32>
    %93 = arith.mulf %91, %91 : vector<32x8x128xf32>
    %cst_82 = arith.constant dense<0.000000e+00> : vector<8x128xf32>
    %94 = vector.multi_reduction <add>, %93, %cst_82 [0] : vector<32x8x128xf32> to vector<8x128xf32>
    %c0_83 = arith.constant 0 : index
    %c0_84 = arith.constant 0 : index
    %c0_85 = arith.constant 0 : index
    %95 = vector.load %arg6[%c0_83, %c0_84, %c0_85] : memref<1x8x128xf32, #tpu.memory_space<vmem>>, vector<1x8x128xf32>
    %96 = vector.shape_cast %95 : vector<1x8x128xf32> to vector<8x128xf32>
    %97 = vector.shape_cast %92 : vector<8x128xf32> to vector<1x8x128xf32>
    tpu.vector_store %arg6[%c0_83, %c0_84, %c0_85], %97 {strides = array<i32>} : memref<1x8x128xf32, #tpu.memory_space<vmem>>, vector<1x8x128xf32>,
    %c0_86 = arith.constant 0 : index
    %c0_87 = arith.constant 0 : index
    %c0_88 = arith.constant 0 : index
    %98 = vector.load %arg7[%c0_86, %c0_87, %c0_88] : memref<1x8x128xf32, #tpu.memory_space<vmem>>, vector<1x8x128xf32>
    %99 = vector.shape_cast %98 : vector<1x8x128xf32> to vector<8x128xf32>
    %100 = vector.shape_cast %94 : vector<8x128xf32> to vector<1x8x128xf32>
    tpu.vector_store %arg7[%c0_86, %c0_87, %c0_88], %100 {strides = array<i32>} : memref<1x8x128xf32, #tpu.memory_space<vmem>>, vector<1x8x128xf32>,
    return
  }
  func.func @transform_0(%arg0: i32) -> (i32, i32, i32, i32) {
    %c0_i32 = arith.constant 0 : i32
    %c0_i32_0 = arith.constant 0 : i32
    %c0_i32_1 = arith.constant 0 : i32
    %c0_i32_2 = arith.constant 0 : i32
    return %arg0, %c0_i32, %c0_i32_0, %c0_i32_1 : i32, i32, i32, i32
  }
  func.func @transform_1(%arg0: i32) -> (i32, i32) {
    %c0_i32 = arith.constant 0 : i32
    %c0_i32_0 = arith.constant 0 : i32
    %c0_i32_1 = arith.constant 0 : i32
    return %c0_i32, %c0_i32_0 : i32, i32
  }
  func.func @transform_2(%arg0: i32) -> (i32, i32) {
    %c0_i32 = arith.constant 0 : i32
    %c0_i32_0 = arith.constant 0 : i32
    %c0_i32_1 = arith.constant 0 : i32
    return %c0_i32, %c0_i32_0 : i32, i32
  }
  func.func @transform_3(%arg0: i32) -> (i32, i32, i32) {
    %c0_i32 = arith.constant 0 : i32
    %c0_i32_0 = arith.constant 0 : i32
    %c0_i32_1 = arith.constant 0 : i32
    %c0_i32_2 = arith.constant 0 : i32
    return %c0_i32, %c0_i32_0, %c0_i32_1 : i32, i32, i32
  }
  func.func @transform_4(%arg0: i32) -> (i32, i32, i32, i32) {
    %c0_i32 = arith.constant 0 : i32
    %c0_i32_0 = arith.constant 0 : i32
    %c0_i32_1 = arith.constant 0 : i32
    %c0_i32_2 = arith.constant 0 : i32
    return %arg0, %c0_i32, %c0_i32_0, %c0_i32_1 : i32, i32, i32, i32
  }
  func.func @transform_5(%arg0: i32) -> (i32, i32, i32) {
    %c0_i32 = arith.constant 0 : i32
    %c0_i32_0 = arith.constant 0 : i32
    %c0_i32_1 = arith.constant 0 : i32
    return %arg0, %c0_i32, %c0_i32_0 : i32, i32, i32
  }
  func.func @transform_6(%arg0: i32) -> (i32, i32, i32) {
    %c0_i32 = arith.constant 0 : i32
    %c0_i32_0 = arith.constant 0 : i32
    %c0_i32_1 = arith.constant 0 : i32
    return %arg0, %c0_i32, %c0_i32_0 : i32, i32, i32
  }
}

</mosaic_0001>

<llo_original>
// kernel: unet_up_block_forward.5
$region0: #{unet_up_block_forward.5}
  #allocation0 [shape = 'u32[]', space=smem, size = 0x4, offset = 0x4, fixed_abs, tag = 'smem constant byte address 0x4 - core index']
  #allocation1 [shape = 'u32[144,128]{1,0:T(1,128)}', space=vmem, size = 0x12000, scoped, tag = 'internal scratch']
  %s0 = inlined_call_operand.vmem [shape: bf16[2,16,16,128], index: 0, kind: input, shape index: {}]
  %s1 = inlined_call_operand.vmem [shape: f32[1,128], index: 1, kind: input, shape index: {}]
  %s2 = inlined_call_operand.vmem [shape: f32[1,128], index: 2, kind: input, shape index: {}]
  %s3 = inlined_call_operand.vmem [shape: f32[2,16,16,8], index: 3, kind: output, shape index: {}]
  %s4 = sld [smem:[#allocation0]]
  $region45: #{unet_up_block_forward.5} parent=0
    _
  %s6 = ssub.s32 1, %s4
  %s7 = scalar_select 0, %s6, %s4
  loop: start=0, step=1, limit=4
  $region2: #{unet_up_block_forward.5} parent=0 // loop_pre_header
    _
  $region3: #{unet_up_block_forward.5} parent=0 // loop_header
    %s9 = sphi 0, %s13
    %p10 = scmp.ge.s32.totalorder %s9, 4
    %s19 = sphi 0, %s21
    %s22 = sphi 0, %s19
    %s23 = sphi 0, %s22
    %s39 = sphi 0, %s23
    %s43 = sphi 0, %s43
    %s45 = sphi 0, %s43
    %s46 = sphi 0, %s45
    %s60 = sphi 0, %s46
    %s64 = sphi 0, %s64
    %s66 = sphi 0, %s64
    %s67 = sphi 0, %s66
    %s81 = sphi 0, %s67
    %s87 = sphi 0, %s89
    %s90 = sphi 0, %s87
    %s91 = sphi 0, %s90
    %s107 = sphi 0, %s91
  $region4: #{unet_up_block_forward.5} parent=0 // loop_header_branch
    %12 = sbr.rel (%p10) target = $region8
  $region5: #{unet_up_block_forward.5} parent=0 // loop_body
    %s14 = ssub.s32 %s9, 1
    %s15 = ssub.s32 %s9, 2
    %s16 = sadd.s32 %s9, 1
    %s17 = ssub.s32 %s9, %s16
    %p18 = scmp.eq.s32.totalorder %s17, 0
    %s20 = sadd.s32 %s19, 1
    %s21 = scalar_select %p18, %s19, %s20
    %p24 = pneg %p18
    %p25 = scmp.eq.s32.totalorder %s9, 1
    %p26 = por %p24, %p25
    %p27 = scmp.ne.s32.totalorder %s19, %s22
    %p28 = scmp.eq.s32.totalorder %s9, 0
    %p29 = por %p27, %p28
    %p30 = scmp.ne.s32.totalorder %s19, %s22
    %p31 = scmp.eq.s32.totalorder %s14, 1
    %p32 = por %p30, %p31
    %p33 = scmp.ne.s32.totalorder %s22, %s23
    %p34 = scmp.eq.s32.totalorder %s14, 0
    %p35 = por %p33, %p34
    %p36 = scmp.ne.s32.totalorder %s22, %s23
    %p37 = scmp.eq.s32.totalorder %s15, 1
    %p38 = por %p36, %p37
    %p40 = scmp.ne.s32.totalorder %s23, %s39
    %p41 = scmp.eq.s32.totalorder %s15, 0
    %p42 = por %p40, %p41
    %s44 = sadd.s32 %s43, 1
    %p47 = scmp.eq.s32.totalorder %s9, 1
    %p48 = scmp.ne.s32.totalorder %s43, %s45
    %p49 = scmp.eq.s32.totalorder %s9, 0
    %p50 = por %p48, %p49
    %p51 = scmp.ne.s32.totalorder %s43, %s45
    %p52 = scmp.eq.s32.totalorder %s14, 1
    %p53 = por %p51, %p52
    %p54 = scmp.ne.s32.totalorder %s45, %s46
    %p55 = scmp.eq.s32.totalorder %s14, 0
    %p56 = por %p54, %p55
    %p57 = scmp.ne.s32.totalorder %s45, %s46
    %p58 = scmp.eq.s32.totalorder %s15, 1
    %p59 = por %p57, %p58
    %p61 = scmp.ne.s32.totalorder %s46, %s60
    %p62 = scmp.eq.s32.totalorder %s15, 0
    %p63 = por %p61, %p62
    %s65 = sadd.s32 %s64, 1
    %p68 = scmp.eq.s32.totalorder %s9, 1
    %p69 = scmp.ne.s32.totalorder %s64, %s66
    %p70 = scmp.eq.s32.totalorder %s9, 0
    %p71 = por %p69, %p70
    %p72 = scmp.ne.s32.totalorder %s64, %s66
    %p73 = scmp.eq.s32.totalorder %s14, 1
    %p74 = por %p72, %p73
    %p75 = scmp.ne.s32.totalorder %s66, %s67
    %p76 = scmp.eq.s32.totalorder %s14, 0
    %p77 = por %p75, %p76
    %p78 = scmp.ne.s32.totalorder %s66, %s67
    %p79 = scmp.eq.s32.totalorder %s15, 1
    %p80 = por %p78, %p79
    %p82 = scmp.ne.s32.totalorder %s67, %s81
    %p83 = scmp.eq.s32.totalorder %s15, 0
    %p84 = por %p82, %p83
    %s85 = ssub.s32 %s9, %s16
    %p86 = scmp.eq.s32.totalorder %s85, 0
    %s88 = sadd.s32 %s87, 1
    %s89 = scalar_select %p86, %s87, %s88
    %p92 = pneg %p86
    %p93 = scmp.eq.s32.totalorder %s9, 1
    %p94 = por %p92, %p93
    %p95 = scmp.ne.s32.totalorder %s87, %s90
    %p96 = scmp.eq.s32.totalorder %s9, 0
    %p97 = por %p95, %p96
    %p98 = scmp.ne.s32.totalorder %s87, %s90
    %p99 = scmp.eq.s32.totalorder %s14, 1
    %p100 = por %p98, %p99
    %p101 = scmp.ne.s32.totalorder %s90, %s91
    %p102 = scmp.eq.s32.totalorder %s14, 0
    %p103 = por %p101, %p102
    %p104 = scmp.ne.s32.totalorder %s90, %s91
    %p105 = scmp.eq.s32.totalorder %s15, 1
    %p106 = por %p104, %p105
    %p108 = scmp.ne.s32.totalorder %s91, %s107
    %p109 = scmp.eq.s32.totalorder %s15, 0
    %p110 = por %p108, %p109
    %p111 = scmp.le.s32.totalorder 1, %s9
    %p112 = scmp.lt.s32.totalorder %s9, 3
    %p113 = pnand %p111, %p112
    %p114 = pneg %p113
    // Predicated region
    $region9: #{unet_up_block_forward.5} parent=5 // pred_check
      _
    $region10: #{unet_up_block_forward.5} parent=5 // pred_check_branch
      %116 = sbr.rel (%p113) target = $region12
    $region11: #{unet_up_block_forward.5} parent=5 // pred_region
      %s117 = ssub.s32 %s9, 1
      // Predicated region
      $region13: #{unet_up_block_forward.5} parent=11 // pred_check
        %p118 = pneg %p56
      $region14: #{unet_up_block_forward.5} parent=11 // pred_check_branch
        %120 = sbr.rel (%p118) target = $region16
      $region15: #{unet_up_block_forward.5} parent=11 // pred_region
        _
      $region16: #{unet_up_block_forward.5} parent=11 // pred_fallthru
        _
      // Predicated region
      $region17: #{unet_up_block_forward.5} parent=11 // pred_check
        %p121 = pneg %p77
      $region18: #{unet_up_block_forward.5} parent=11 // pred_check_branch
        %123 = sbr.rel (%p121) target = $region20
      $region19: #{unet_up_block_forward.5} parent=11 // pred_region
        _
      $region20: #{unet_up_block_forward.5} parent=11 // pred_fallthru
        _
    $region12: #{unet_up_block_forward.5} parent=5 // pred_fallthru
      _
    %p124 = scmp.lt.s32.totalorder %s9, 2
    // Predicated region
    $region21: #{unet_up_block_forward.5} parent=5 // pred_check
      %p125 = pneg %p124
    $region22: #{unet_up_block_forward.5} parent=5 // pred_check_branch
      %127 = sbr.rel (%p125) target = $region24
    $region23: #{unet_up_block_forward.5} parent=5 // pred_region
      // Predicated region
      $region25: #{unet_up_block_forward.5} parent=23 // pred_check
        %p128 = pneg %p29
      $region26: #{unet_up_block_forward.5} parent=23 // pred_check_branch
        %130 = sbr.rel (%p128) target = $region28
      $region27: #{unet_up_block_forward.5} parent=23 // pred_region
        %p131 = scmp.lt.s32.totalorder %s9, 1
        %s132 = scalar_select %p131, %s9, 1
        %s133 = smul.addr %s132, 32
        %s134 = smul.addr %s133, 4
        %s135 = scalar_lea.vmem %s0, %s134
      $region28: #{unet_up_block_forward.5} parent=23 // pred_fallthru
        _
    $region24: #{unet_up_block_forward.5} parent=5 // pred_fallthru
      _
    %p136 = scmp.le.s32.totalorder 1, %s9
    %p137 = scmp.lt.s32.totalorder %s9, 3
    %p138 = pnand %p136, %p137
    %p139 = pneg %p138
    // Predicated region
    $region29: #{unet_up_block_forward.5} parent=5 // pred_check
      _
    $region30: #{unet_up_block_forward.5} parent=5 // pred_check_branch
      %141 = sbr.rel (%p138) target = $region32
    $region31: #{unet_up_block_forward.5} parent=5 // pred_region
      %s142 = ssub.s32 %s9, 1
      %p143 = scmp.lt.s32.totalorder %s14, 1
      %s144 = scalar_select %p143, %s14, 1
      %s145 = smul.addr %s144, 32
      %s146 = smul.addr %s145, 4
      %s147 = scalar_lea.vmem %s0, %s146
      %p148 = pneg %p35
      %p149 = pneg %p32
      %p150 = pneg %p56
      %p151 = pneg %p53
      %p152 = pneg %p77
      %p153 = pneg %p74
      %p154 = pneg %p103
      %p155 = pneg %p100
      %p156 = scmp.lt.s32.totalorder %s14, 1
      %s157 = scalar_select %p156, %s14, 1
      %s158 = smul.addr %s157, 32
      %s159 = smul.addr %s158, 8
      %s160 = scalar_lea.vmem %s3, %s159
      %p161 = scmp.lt.s32.totalorder %s14, 1
      %s162 = scalar_select %p161, %s14, 1
      %s163 = smul.addr %s162, 32
      %s164 = smul.addr %s163, 4
      %s165 = scalar_lea.vmem %s0, %s164
      %p166 = scmp.lt.s32.totalorder %s14, 1
      %s167 = scalar_select %p166, %s14, 1
      %s168 = smul.addr %s167, 32
      %s169 = smul.addr %s168, 8
      %s170 = scalar_lea.vmem %s3, %s169
      %v171 = vld [vmem:[%s165] sm:$0xf]
      %v172 = vld [vmem:[%s165 + $0x4] sm:$0xf]
      %v173 = vld [vmem:[%s165 + $0x8] sm:$0xf]
      %v174 = vld [vmem:[%s165 + $0xc] sm:$0xf]
      %v175 = vld [vmem:[%s165 + $0x10] sm:$0xf]
      %v176 = vld [vmem:[%s165 + $0x14] sm:$0xf]
      %v177 = vld [vmem:[%s165 + $0x18] sm:$0xf]
      %v178 = vld [vmem:[%s165 + $0x1c] sm:$0xf]
      %v179 = vld [vmem:[%s165 + $0x20] sm:$0xf]
      %v180 = vld [vmem:[%s165 + $0x24] sm:$0xf]
      %v181 = vld [vmem:[%s165 + $0x28] sm:$0xf]
      %v182 = vld [vmem:[%s165 + $0x2c] sm:$0xf]
      %v183 = vld [vmem:[%s165 + $0x30] sm:$0xf]
      %v184 = vld [vmem:[%s165 + $0x34] sm:$0xf]
      %v185 = vld [vmem:[%s165 + $0x38] sm:$0xf]
      %v186 = vld [vmem:[%s165 + $0x3c] sm:$0xf]
      %v187 = vld [vmem:[%s165 + $0x40] sm:$0xf]
      %v188 = vld [vmem:[%s165 + $0x44] sm:$0xf]
      %v189 = vld [vmem:[%s165 + $0x48] sm:$0xf]
      %v190 = vld [vmem:[%s165 + $0x4c] sm:$0xf]
      %v191 = vld [vmem:[%s165 + $0x50] sm:$0xf]
      %v192 = vld [vmem:[%s165 + $0x54] sm:$0xf]
      %v193 = vld [vmem:[%s165 + $0x58] sm:$0xf]
      %v194 = vld [vmem:[%s165 + $0x5c] sm:$0xf]
      %v195 = vld [vmem:[%s165 + $0x60] sm:$0xf]
      %v196 = vld [vmem:[%s165 + $0x64] sm:$0xf]
      %v197 = vld [vmem:[%s165 + $0x68] sm:$0xf]
      %v198 = vld [vmem:[%s165 + $0x6c] sm:$0xf]
      %v199 = vld [vmem:[%s165 + $0x70] sm:$0xf]
      %v200 = vld [vmem:[%s165 + $0x74] sm:$0xf]
      %v201 = vld [vmem:[%s165 + $0x78] sm:$0xf]
      %v202 = vld [vmem:[%s165 + $0x7c] sm:$0xf]
      %v203 = vunpack.c.l.bf16 %v171
      %v204 = vunpack.c.l.bf16 %v172
      %v205 = vunpack.c.l.bf16 %v173
      %v206 = vunpack.c.l.bf16 %v174
      %v207 = vunpack.c.l.bf16 %v175
      %v208 = vunpack.c.l.bf16 %v176
      %v209 = vunpack.c.l.bf16 %v177
      %v210 = vunpack.c.l.bf16 %v178
      %v211 = vunpack.c.l.bf16 %v179
      %v212 = vunpack.c.l.bf16 %v180
      %v213 = vunpack.c.l.bf16 %v181
      %v214 = vunpack.c.l.bf16 %v182
      %v215 = vunpack.c.l.bf16 %v183
      %v216 = vunpack.c.l.bf16 %v184
      %v217 = vunpack.c.l.bf16 %v185
      %v218 = vunpack.c.l.bf16 %v186
      %v219 = vunpack.c.l.bf16 %v187
      %v220 = vunpack.c.l.bf16 %v188
      %v221 = vunpack.c.l.bf16 %v189
      %v222 = vunpack.c.l.bf16 %v190
      %v223 = vunpack.c.l.bf16 %v191
      %v224 = vunpack.c.l.bf16 %v192
      %v225 = vunpack.c.l.bf16 %v193
      %v226 = vunpack.c.l.bf16 %v194
      %v227 = vunpack.c.l.bf16 %v195
      %v228 = vunpack.c.l.bf16 %v196
      %v229 = vunpack.c.l.bf16 %v197
      %v230 = vunpack.c.l.bf16 %v198
      %v231 = vunpack.c.l.bf16 %v199
      %v232 = vunpack.c.l.bf16 %v200
      %v233 = vunpack.c.l.bf16 %v201
      %v234 = vunpack.c.l.bf16 %v202
      %v235 = vld [vmem:[%s1] sm:$0x1]
      %v237 = vlaneseq
      %v238 = vshrl.u32 %v237, 7
      %v239 = vsub.s32 0, %v238
      %v240 = vrot.slane %v235, %v239
      %v242 = vmul.f32 %v203, %v240
      %v243 = vmul.f32 %v204, %v240
      %v244 = vmul.f32 %v205, %v240
      %v245 = vmul.f32 %v206, %v240
      %v246 = vmul.f32 %v207, %v240
      %v247 = vmul.f32 %v208, %v240
      %v248 = vmul.f32 %v209, %v240
      %v249 = vmul.f32 %v210, %v240
      %v250 = vmul.f32 %v211, %v240
      %v251 = vmul.f32 %v212, %v240
      %v252 = vmul.f32 %v213, %v240
      %v253 = vmul.f32 %v214, %v240
      %v254 = vmul.f32 %v215, %v240
      %v255 = vmul.f32 %v216, %v240
      %v256 = vmul.f32 %v217, %v240
      %v257 = vmul.f32 %v218, %v240
      %v258 = vmul.f32 %v219, %v240
      %v259 = vmul.f32 %v220, %v240
      %v260 = vmul.f32 %v221, %v240
      %v261 = vmul.f32 %v222, %v240
      %v262 = vmul.f32 %v223, %v240
      %v263 = vmul.f32 %v224, %v240
      %v264 = vmul.f32 %v225, %v240
      %v265 = vmul.f32 %v226, %v240
      %v266 = vmul.f32 %v227, %v240
      %v267 = vmul.f32 %v228, %v240
      %v268 = vmul.f32 %v229, %v240
      %v269 = vmul.f32 %v230, %v240
      %v270 = vmul.f32 %v231, %v240
      %v271 = vmul.f32 %v232, %v240
      %v272 = vmul.f32 %v233, %v240
      %v273 = vmul.f32 %v234, %v240
      %v274 = vld [vmem:[%s2] sm:$0x1]
      %v276 = vlaneseq
      %v277 = vshrl.u32 %v276, 7
      %v278 = vsub.s32 0, %v277
      %v279 = vrot.slane %v274, %v278
      %v281 = vadd.f32 %v242, %v279
      %v282 = vadd.f32 %v243, %v279
      %v283 = vadd.f32 %v244, %v279
      %v284 = vadd.f32 %v245, %v279
      %v285 = vadd.f32 %v246, %v279
      %v286 = vadd.f32 %v247, %v279
      %v287 = vadd.f32 %v248, %v279
      %v288 = vadd.f32 %v249, %v279
      %v289 = vadd.f32 %v250, %v279
      %v290 = vadd.f32 %v251, %v279
      %v291 = vadd.f32 %v252, %v279
      %v292 = vadd.f32 %v253, %v279
      %v293 = vadd.f32 %v254, %v279
      %v294 = vadd.f32 %v255, %v279
      %v295 = vadd.f32 %v256, %v279
      %v296 = vadd.f32 %v257, %v279
      %v297 = vadd.f32 %v258, %v279
      %v298 = vadd.f32 %v259, %v279
      %v299 = vadd.f32 %v260, %v279
      %v300 = vadd.f32 %v261, %v279
      %v301 = vadd.f32 %v262, %v279
      %v302 = vadd.f32 %v263, %v279
      %v303 = vadd.f32 %v264, %v279
      %v304 = vadd.f32 %v265, %v279
      %v305 = vadd.f32 %v266, %v279
      %v306 = vadd.f32 %v267, %v279
      %v307 = vadd.f32 %v268, %v279
      %v308 = vadd.f32 %v269, %v279
      %v309 = vadd.f32 %v270, %v279
      %v310 = vadd.f32 %v271, %v279
      %v311 = vadd.f32 %v272, %v279
      %v312 = vadd.f32 %v273, %v279
      %v313 = vmax.f32 %v281, 0.0
      %v314 = vmax.f32 %v282, 0.0
      %v315 = vmax.f32 %v283, 0.0
      %v316 = vmax.f32 %v284, 0.0
      %v317 = vmax.f32 %v285, 0.0
      %v318 = vmax.f32 %v286, 0.0
      %v319 = vmax.f32 %v287, 0.0
      %v320 = vmax.f32 %v288, 0.0
      %v321 = vmax.f32 %v289, 0.0
      %v322 = vmax.f32 %v290, 0.0
      %v323 = vmax.f32 %v291, 0.0
      %v324 = vmax.f32 %v292, 0.0
      %v325 = vmax.f32 %v293, 0.0
      %v326 = vmax.f32 %v294, 0.0
      %v327 = vmax.f32 %v295, 0.0
      %v328 = vmax.f32 %v296, 0.0
      %v329 = vmax.f32 %v297, 0.0
      %v330 = vmax.f32 %v298, 0.0
      %v331 = vmax.f32 %v299, 0.0
      %v332 = vmax.f32 %v300, 0.0
      %v333 = vmax.f32 %v301, 0.0
      %v334 = vmax.f32 %v302, 0.0
      %v335 = vmax.f32 %v303, 0.0
      %v336 = vmax.f32 %v304, 0.0
      %v337 = vmax.f32 %v305, 0.0
      %v338 = vmax.f32 %v306, 0.0
      %v339 = vmax.f32 %v307, 0.0
      %v340 = vmax.f32 %v308, 0.0
      %v341 = vmax.f32 %v309, 0.0
      %v342 = vmax.f32 %v310, 0.0
      %v343 = vmax.f32 %v311, 0.0
      %v344 = vmax.f32 %v312, 0.0
      %vm345 = vcmask 64512
      %346 = vst.msk [vmem:[%s170] sm:$0xff] %vm345, %v313
      %347 = vst.msk [vmem:[%s170 + $0x8] sm:$0xff] %vm345, %v314
      %348 = vst.msk [vmem:[%s170 + $0x10] sm:$0xff] %vm345, %v315
      %349 = vst.msk [vmem:[%s170 + $0x18] sm:$0xff] %vm345, %v316
      %350 = vst.msk [vmem:[%s170 + $0x20] sm:$0xff] %vm345, %v317
      %351 = vst.msk [vmem:[%s170 + $0x28] sm:$0xff] %vm345, %v318
      %352 = vst.msk [vmem:[%s170 + $0x30] sm:$0xff] %vm345, %v319
      %353 = vst.msk [vmem:[%s170 + $0x38] sm:$0xff] %vm345, %v320
      %354 = vst.msk [vmem:[%s170 + $0x40] sm:$0xff] %vm345, %v321
      %355 = vst.msk [vmem:[%s170 + $0x48] sm:$0xff] %vm345, %v322
      %356 = vst.msk [vmem:[%s170 + $0x50] sm:$0xff] %vm345, %v323
      %357 = vst.msk [vmem:[%s170 + $0x58] sm:$0xff] %vm345, %v324
      %358 = vst.msk [vmem:[%s170 + $0x60] sm:$0xff] %vm345, %v325
      %359 = vst.msk [vmem:[%s170 + $0x68] sm:$0xff] %vm345, %v326
      %360 = vst.msk [vmem:[%s170 + $0x70] sm:$0xff] %vm345, %v327
      %361 = vst.msk [vmem:[%s170 + $0x78] sm:$0xff] %vm345, %v328
      %362 = vst.msk [vmem:[%s170 + $0x80] sm:$0xff] %vm345, %v329
      %363 = vst.msk [vmem:[%s170 + $0x88] sm:$0xff] %vm345, %v330
      %364 = vst.msk [vmem:[%s170 + $0x90] sm:$0xff] %vm345, %v331
      %365 = vst.msk [vmem:[%s170 + $0x98] sm:$0xff] %vm345, %v332
      %366 = vst.msk [vmem:[%s170 + $0xa0] sm:$0xff] %vm345, %v333
      %367 = vst.msk [vmem:[%s170 + $0xa8] sm:$0xff] %vm345, %v334
      %368 = vst.msk [vmem:[%s170 + $0xb0] sm:$0xff] %vm345, %v335
      %369 = vst.msk [vmem:[%s170 + $0xb8] sm:$0xff] %vm345, %v336
      %370 = vst.msk [vmem:[%s170 + $0xc0] sm:$0xff] %vm345, %v337
      %371 = vst.msk [vmem:[%s170 + $0xc8] sm:$0xff] %vm345, %v338
      %372 = vst.msk [vmem:[%s170 + $0xd0] sm:$0xff] %vm345, %v339
      %373 = vst.msk [vmem:[%s170 + $0xd8] sm:$0xff] %vm345, %v340
      %374 = vst.msk [vmem:[%s170 + $0xe0] sm:$0xff] %vm345, %v341
      %375 = vst.msk [vmem:[%s170 + $0xe8] sm:$0xff] %vm345, %v342
      %376 = vst.msk [vmem:[%s170 + $0xf0] sm:$0xff] %vm345, %v343
      %377 = vst.msk [vmem:[%s170 + $0xf8] sm:$0xff] %vm345, %v344
      %p378 = scmp.lt.s32.totalorder %s14, 1
      %s379 = scalar_select %p378, %s14, 1
      %s380 = smul.addr %s379, 32
      %s381 = smul.addr %s380, 8
      %s382 = scalar_lea.vmem %s3, %s381
      // Predicated region
      $region33: #{unet_up_block_forward.5} parent=31 // pred_check
        %p383 = pneg %p100
      $region34: #{unet_up_block_forward.5} parent=31 // pred_check_branch
        %385 = sbr.rel (%p383) target = $region36
      $region35: #{unet_up_block_forward.5} parent=31 // pred_region
        _
      $region36: #{unet_up_block_forward.5} parent=31 // pred_fallthru
        _
    $region32: #{unet_up_block_forward.5} parent=5 // pred_fallthru
      _
    %p386 = scmp.le.s32.totalorder 2, %s9
    // Predicated region
    $region37: #{unet_up_block_forward.5} parent=5 // pred_check
      %p387 = pneg %p386
    $region38: #{unet_up_block_forward.5} parent=5 // pred_check_branch
      %389 = sbr.rel (%p387) target = $region40
    $region39: #{unet_up_block_forward.5} parent=5 // pred_region
      %s390 = ssub.s32 %s9, 2
      // Predicated region
      $region41: #{unet_up_block_forward.5} parent=39 // pred_check
        %p391 = pneg %p106
      $region42: #{unet_up_block_forward.5} parent=39 // pred_check_branch
        %393 = sbr.rel (%p391) target = $region44
      $region43: #{unet_up_block_forward.5} parent=39 // pred_region
        %p394 = scmp.lt.s32.totalorder %s15, 1
        %s395 = scalar_select %p394, %s15, 1
        %s396 = smul.addr %s395, 32
        %s397 = smul.addr %s396, 8
        %s398 = scalar_lea.vmem %s3, %s397
      $region44: #{unet_up_block_forward.5} parent=39 // pred_fallthru
        _
    $region40: #{unet_up_block_forward.5} parent=5 // pred_fallthru
      _
  $region6: #{unet_up_block_forward.5} parent=0 // loop_footer
    %s13 = sadd.s32 1, %s9
  $region7: #{unet_up_block_forward.5} parent=0 // loop_footer_branch
    %8 = sbr.rel target = $region3
  $region8: #{unet_up_block_forward.5} parent=0 // loop_exit
    _

// kernel: unet_up_block_forward.4
$region0: #{unet_up_block_forward.4}
  #allocation0 [shape = 'u32[]', space=smem, size = 0x4, offset = 0x4, fixed_abs, tag = 'smem constant byte address 0x4 - core index']
  #allocation1 [shape = 'u32[144,128]{1,0:T(1,128)}', space=vmem, size = 0x12000, scoped, tag = 'internal scratch']
  #allocation2 [shape = 'f32[18,32,128]{2,1,0:T(8,128)}', space=vmem, size = 0x48000, scoped, tag = 'scratch operand']
  %s0 = inlined_call_operand.vmem [shape: bf16[2,16,16,128], index: 0, kind: input, shape index: {}]
  %s1 = inlined_call_operand.vmem [shape: f32[1,128], index: 1, kind: input, shape index: {}]
  %s2 = inlined_call_operand.vmem [shape: f32[1,128], index: 2, kind: input, shape index: {}]
  %s3 = inlined_call_operand.vmem [shape: bf16[9,128,128], index: 3, kind: input, shape index: {}]
  %s4 = inlined_call_operand.vmem [shape: bf16[2,16,16,128], index: 4, kind: output, shape index: {0}]
  %s5 = inlined_call_operand.vmem [shape: f32[2,8,128], index: 5, kind: output, shape index: {1}]
  %s6 = inlined_call_operand.vmem [shape: f32[2,8,128], index: 6, kind: output, shape index: {2}]
  %7 = xla_tuple %s4, %s5, %s6
  %s8 = sld [smem:[#allocation0]]
  $region65: #{unet_up_block_forward.4} parent=0
    _
  %s10 = ssub.s32 1, %s8
  %s11 = scalar_select 0, %s10, %s8
  loop: start=0, step=1, limit=4
  $region2: #{unet_up_block_forward.4} parent=0 // loop_pre_header
    _
  $region3: #{unet_up_block_forward.4} parent=0 // loop_header
    %s13 = sphi 0, %s17
    %p14 = scmp.ge.s32.totalorder %s13, 4
    %s23 = sphi 0, %s25
    %s26 = sphi 0, %s23
    %s27 = sphi 0, %s26
    %s43 = sphi 0, %s27
    %s47 = sphi 0, %s47
    %s49 = sphi 0, %s47
    %s50 = sphi 0, %s49
    %s64 = sphi 0, %s50
    %s68 = sphi 0, %s68
    %s70 = sphi 0, %s68
    %s71 = sphi 0, %s70
    %s85 = sphi 0, %s71
    %s89 = sphi 0, %s89
    %s91 = sphi 0, %s89
    %s92 = sphi 0, %s91
    %s106 = sphi 0, %s92
    %s112 = sphi 0, %s114
    %s115 = sphi 0, %s112
    %s116 = sphi 0, %s115
    %s132 = sphi 0, %s116
    %s138 = sphi 0, %s140
    %s141 = sphi 0, %s138
    %s142 = sphi 0, %s141
    %s158 = sphi 0, %s142
    %s164 = sphi 0, %s166
    %s167 = sphi 0, %s164
    %s168 = sphi 0, %s167
    %s184 = sphi 0, %s168
  $region4: #{unet_up_block_forward.4} parent=0 // loop_header_branch
    %16 = sbr.rel (%p14) target = $region8
  $region5: #{unet_up_block_forward.4} parent=0 // loop_body
    %s18 = ssub.s32 %s13, 1
    %s19 = ssub.s32 %s13, 2
    %s20 = sadd.s32 %s13, 1
    %s21 = ssub.s32 %s13, %s20
    %p22 = scmp.eq.s32.totalorder %s21, 0
    %s24 = sadd.s32 %s23, 1
    %s25 = scalar_select %p22, %s23, %s24
    %p28 = pneg %p22
    %p29 = scmp.eq.s32.totalorder %s13, 1
    %p30 = por %p28, %p29
    %p31 = scmp.ne.s32.totalorder %s23, %s26
    %p32 = scmp.eq.s32.totalorder %s13, 0
    %p33 = por %p31, %p32
    %p34 = scmp.ne.s32.totalorder %s23, %s26
    %p35 = scmp.eq.s32.totalorder %s18, 1
    %p36 = por %p34, %p35
    %p37 = scmp.ne.s32.totalorder %s26, %s27
    %p38 = scmp.eq.s32.totalorder %s18, 0
    %p39 = por %p37, %p38
    %p40 = scmp.ne.s32.totalorder %s26, %s27
    %p41 = scmp.eq.s32.totalorder %s19, 1
    %p42 = por %p40, %p41
    %p44 = scmp.ne.s32.totalorder %s27, %s43
    %p45 = scmp.eq.s32.totalorder %s19, 0
    %p46 = por %p44, %p45
    %s48 = sadd.s32 %s47, 1
    %p51 = scmp.eq.s32.totalorder %s13, 1
    %p52 = scmp.ne.s32.totalorder %s47, %s49
    %p53 = scmp.eq.s32.totalorder %s13, 0
    %p54 = por %p52, %p53
    %p55 = scmp.ne.s32.totalorder %s47, %s49
    %p56 = scmp.eq.s32.totalorder %s18, 1
    %p57 = por %p55, %p56
    %p58 = scmp.ne.s32.totalorder %s49, %s50
    %p59 = scmp.eq.s32.totalorder %s18, 0
    %p60 = por %p58, %p59
    %p61 = scmp.ne.s32.totalorder %s49, %s50
    %p62 = scmp.eq.s32.totalorder %s19, 1
    %p63 = por %p61, %p62
    %p65 = scmp.ne.s32.totalorder %s50, %s64
    %p66 = scmp.eq.s32.totalorder %s19, 0
    %p67 = por %p65, %p66
    %s69 = sadd.s32 %s68, 1
    %p72 = scmp.eq.s32.totalorder %s13, 1
    %p73 = scmp.ne.s32.totalorder %s68, %s70
    %p74 = scmp.eq.s32.totalorder %s13, 0
    %p75 = por %p73, %p74
    %p76 = scmp.ne.s32.totalorder %s68, %s70
    %p77 = scmp.eq.s32.totalorder %s18, 1
    %p78 = por %p76, %p77
    %p79 = scmp.ne.s32.totalorder %s70, %s71
    %p80 = scmp.eq.s32.totalorder %s18, 0
    %p81 = por %p79, %p80
    %p82 = scmp.ne.s32.totalorder %s70, %s71
    %p83 = scmp.eq.s32.totalorder %s19, 1
    %p84 = por %p82, %p83
    %p86 = scmp.ne.s32.totalorder %s71, %s85
    %p87 = scmp.eq.s32.totalorder %s19, 0
    %p88 = por %p86, %p87
    %s90 = sadd.s32 %s89, 1
    %p93 = scmp.eq.s32.totalorder %s13, 1
    %p94 = scmp.ne.s32.totalorder %s89, %s91
    %p95 = scmp.eq.s32.totalorder %s13, 0
    %p96 = por %p94, %p95
    %p97 = scmp.ne.s32.totalorder %s89, %s91
    %p98 = scmp.eq.s32.totalorder %s18, 1
    %p99 = por %p97, %p98
    %p100 = scmp.ne.s32.totalorder %s91, %s92
    %p101 = scmp.eq.s32.totalorder %s18, 0
    %p102 = por %p100, %p101
    %p103 = scmp.ne.s32.totalorder %s91, %s92
    %p104 = scmp.eq.s32.totalorder %s19, 1
    %p105 = por %p103, %p104
    %p107 = scmp.ne.s32.totalorder %s92, %s106
    %p108 = scmp.eq.s32.totalorder %s19, 0
    %p109 = por %p107, %p108
    %s110 = ssub.s32 %s13, %s20
    %p111 = scmp.eq.s32.totalorder %s110, 0
    %s113 = sadd.s32 %s112, 1
    %s114 = scalar_select %p111, %s112, %s113
    %p117 = pneg %p111
    %p118 = scmp.eq.s32.totalorder %s13, 1
    %p119 = por %p117, %p118
    %p120 = scmp.ne.s32.totalorder %s112, %s115
    %p121 = scmp.eq.s32.totalorder %s13, 0
    %p122 = por %p120, %p121
    %p123 = scmp.ne.s32.totalorder %s112, %s115
    %p124 = scmp.eq.s32.totalorder %s18, 1
    %p125 = por %p123, %p124
    %p126 = scmp.ne.s32.totalorder %s115, %s116
    %p127 = scmp.eq.s32.totalorder %s18, 0
    %p128 = por %p126, %p127
    %p129 = scmp.ne.s32.totalorder %s115, %s116
    %p130 = scmp.eq.s32.totalorder %s19, 1
    %p131 = por %p129, %p130
    %p133 = scmp.ne.s32.totalorder %s116, %s132
    %p134 = scmp.eq.s32.totalorder %s19, 0
    %p135 = por %p133, %p134
    %s136 = ssub.s32 %s13, %s20
    %p137 = scmp.eq.s32.totalorder %s136, 0
    %s139 = sadd.s32 %s138, 1
    %s140 = scalar_select %p137, %s138, %s139
    %p143 = pneg %p137
    %p144 = scmp.eq.s32.totalorder %s13, 1
    %p145 = por %p143, %p144
    %p146 = scmp.ne.s32.totalorder %s138, %s141
    %p147 = scmp.eq.s32.totalorder %s13, 0
    %p148 = por %p146, %p147
    %p149 = scmp.ne.s32.totalorder %s138, %s141
    %p150 = scmp.eq.s32.totalorder %s18, 1
    %p151 = por %p149, %p150
    %p152 = scmp.ne.s32.totalorder %s141, %s142
    %p153 = scmp.eq.s32.totalorder %s18, 0
    %p154 = por %p152, %p153
    %p155 = scmp.ne.s32.totalorder %s141, %s142
    %p156 = scmp.eq.s32.totalorder %s19, 1
    %p157 = por %p155, %p156
    %p159 = scmp.ne.s32.totalorder %s142, %s158
    %p160 = scmp.eq.s32.totalorder %s19, 0
    %p161 = por %p159, %p160
    %s162 = ssub.s32 %s13, %s20
    %p163 = scmp.eq.s32.totalorder %s162, 0
    %s165 = sadd.s32 %s164, 1
    %s166 = scalar_select %p163, %s164, %s165
    %p169 = pneg %p163
    %p170 = scmp.eq.s32.totalorder %s13, 1
    %p171 = por %p169, %p170
    %p172 = scmp.ne.s32.totalorder %s164, %s167
    %p173 = scmp.eq.s32.totalorder %s13, 0
    %p174 = por %p172, %p173
    %p175 = scmp.ne.s32.totalorder %s164, %s167
    %p176 = scmp.eq.s32.totalorder %s18, 1
    %p177 = por %p175, %p176
    %p178 = scmp.ne.s32.totalorder %s167, %s168
    %p179 = scmp.eq.s32.totalorder %s18, 0
    %p180 = por %p178, %p179
    %p181 = scmp.ne.s32.totalorder %s167, %s168
    %p182 = scmp.eq.s32.totalorder %s19, 1
    %p183 = por %p181, %p182
    %p185 = scmp.ne.s32.totalorder %s168, %s184
    %p186 = scmp.eq.s32.totalorder %s19, 0
    %p187 = por %p185, %p186
    %p188 = scmp.le.s32.totalorder 1, %s13
    %p189 = scmp.lt.s32.totalorder %s13, 3
    %p190 = pnand %p188, %p189
    %p191 = pneg %p190
    // Predicated region
    $region9: #{unet_up_block_forward.4} parent=5 // pred_check
      _
    $region10: #{unet_up_block_forward.4} parent=5 // pred_check_branch
      %193 = sbr.rel (%p190) target = $region12
    $region11: #{unet_up_block_forward.4} parent=5 // pred_region
      %s194 = ssub.s32 %s13, 1
      // Predicated region
      $region13: #{unet_up_block_forward.4} parent=11 // pred_check
        %p195 = pneg %p60
      $region14: #{unet_up_block_forward.4} parent=11 // pred_check_branch
        %197 = sbr.rel (%p195) target = $region16
      $region15: #{unet_up_block_forward.4} parent=11 // pred_region
        _
      $region16: #{unet_up_block_forward.4} parent=11 // pred_fallthru
        _
      // Predicated region
      $region17: #{unet_up_block_forward.4} parent=11 // pred_check
        %p198 = pneg %p81
      $region18: #{unet_up_block_forward.4} parent=11 // pred_check_branch
        %200 = sbr.rel (%p198) target = $region20
      $region19: #{unet_up_block_forward.4} parent=11 // pred_region
        _
      $region20: #{unet_up_block_forward.4} parent=11 // pred_fallthru
        _
      // Predicated region
      $region21: #{unet_up_block_forward.4} parent=11 // pred_check
        %p201 = pneg %p102
      $region22: #{unet_up_block_forward.4} parent=11 // pred_check_branch
        %203 = sbr.rel (%p201) target = $region24
      $region23: #{unet_up_block_forward.4} parent=11 // pred_region
        _
      $region24: #{unet_up_block_forward.4} parent=11 // pred_fallthru
        _
    $region12: #{unet_up_block_forward.4} parent=5 // pred_fallthru
      _
    %p204 = scmp.lt.s32.totalorder %s13, 2
    // Predicated region
    $region25: #{unet_up_block_forward.4} parent=5 // pred_check
      %p205 = pneg %p204
    $region26: #{unet_up_block_forward.4} parent=5 // pred_check_branch
      %207 = sbr.rel (%p205) target = $region28
    $region27: #{unet_up_block_forward.4} parent=5 // pred_region
      // Predicated region
      $region29: #{unet_up_block_forward.4} parent=27 // pred_check
        %p208 = pneg %p33
      $region30: #{unet_up_block_forward.4} parent=27 // pred_check_branch
        %210 = sbr.rel (%p208) target = $region32
      $region31: #{unet_up_block_forward.4} parent=27 // pred_region
        %p211 = scmp.lt.s32.totalorder %s13, 1
        %s212 = scalar_select %p211, %s13, 1
        %s213 = smul.addr %s212, 32
        %s214 = smul.addr %s213, 4
        %s215 = scalar_lea.vmem %s0, %s214
      $region32: #{unet_up_block_forward.4} parent=27 // pred_fallthru
        _
    $region28: #{unet_up_block_forward.4} parent=5 // pred_fallthru
      _
    %p216 = scmp.le.s32.totalorder 1, %s13
    %p217 = scmp.lt.s32.totalorder %s13, 3
    %p218 = pnand %p216, %p217
    %p219 = pneg %p218
    // Predicated region
    $region33: #{unet_up_block_forward.4} parent=5 // pred_check
      _
    $region34: #{unet_up_block_forward.4} parent=5 // pred_check_branch
      %221 = sbr.rel (%p218) target = $region36
    $region35: #{unet_up_block_forward.4} parent=5 // pred_region
      %s222 = ssub.s32 %s13, 1
      %p223 = scmp.lt.s32.totalorder %s18, 1
      %s224 = scalar_select %p223, %s18, 1
      %s225 = smul.addr %s224, 32
      %s226 = smul.addr %s225, 4
      %s227 = scalar_lea.vmem %s0, %s226
      %p228 = pneg %p39
      %p229 = pneg %p36
      %p230 = pneg %p60
      %p231 = pneg %p57
      %p232 = pneg %p81
      %p233 = pneg %p78
      %p234 = pneg %p102
      %p235 = pneg %p99
      %p236 = pneg %p128
      %p237 = pneg %p125
      %p238 = scmp.lt.s32.totalorder %s18, 1
      %s239 = scalar_select %p238, %s18, 1
      %s240 = smul.addr %s239, 32
      %s241 = smul.addr %s240, 4
      %s242 = scalar_lea.vmem %s4, %s241
      %p243 = pneg %p154
      %p244 = pneg %p151
      %p245 = scmp.lt.s32.totalorder %s18, 1
      %s246 = scalar_select %p245, %s18, 1
      %s247 = smul.addr %s246, 8
      %s248 = scalar_lea.vmem %s5, %s247
      %p249 = pneg %p180
      %p250 = pneg %p177
      %p251 = scmp.lt.s32.totalorder %s18, 1
      %s252 = scalar_select %p251, %s18, 1
      %s253 = smul.addr %s252, 8
      %s254 = scalar_lea.vmem %s6, %s253
      %p255 = scmp.lt.s32.totalorder %s18, 1
      %s256 = scalar_select %p255, %s18, 1
      %s257 = smul.addr %s256, 32
      %s258 = smul.addr %s257, 4
      %s259 = scalar_lea.vmem %s0, %s258
      %p260 = scmp.lt.s32.totalorder %s18, 1
      %s261 = scalar_select %p260, %s18, 1
      %s262 = smul.addr %s261, 32
      %s263 = smul.addr %s262, 4
      %s264 = scalar_lea.vmem %s4, %s263
      %p265 = scmp.lt.s32.totalorder %s18, 1
      %s266 = scalar_select %p265, %s18, 1
      %s267 = smul.addr %s266, 8
      %s268 = scalar_lea.vmem %s5, %s267
      %p269 = scmp.lt.s32.totalorder %s18, 1
      %s270 = scalar_select %p269, %s18, 1
      %s271 = smul.addr %s270, 8
      %s272 = scalar_lea.vmem %s6, %s271
      %274 = vst [vmem:[#allocation2] sm:$0xff] 0.0
      %275 = vst [vmem:[#allocation2 + $0x8] sm:$0xff] 0.0
      %276 = vst [vmem:[#allocation2 + $0x10] sm:$0xff] 0.0
      %277 = vst [vmem:[#allocation2 + $0x18] sm:$0xff] 0.0
      %s278 = scalar_lea.vmem [#allocation2], 544
      %279 = vst [vmem:[%s278] sm:$0xff] 0.0
      %280 = vst [vmem:[%s278 + $0x8] sm:$0xff] 0.0
      %281 = vst [vmem:[%s278 + $0x10] sm:$0xff] 0.0
      %282 = vst [vmem:[%s278 + $0x18] sm:$0xff] 0.0
      %283 = vst [vmem:[#allocation2] sm:$0xff] 0.0
      %284 = vst [vmem:[#allocation2 + $0x20] sm:$0xff] 0.0
      %285 = vst [vmem:[#allocation2 + $0x40] sm:$0xff] 0.0
      %286 = vst [vmem:[#allocation2 + $0x60] sm:$0xff] 0.0
      %287 = vst [vmem:[#allocation2 + $0x80] sm:$0xff] 0.0
      %288 = vst [vmem:[#allocation2 + $0xa0] sm:$0xff] 0.0
      %289 = vst [vmem:[#allocation2 + $0xc0] sm:$0xff] 0.0
      %290 = vst [vmem:[#allocation2 + $0xe0] sm:$0xff] 0.0
      %291 = vst [vmem:[#allocation2 + $0x100] sm:$0xff] 0.0
      %292 = vst [vmem:[#allocation2 + $0x120] sm:$0xff] 0.0
      %293 = vst [vmem:[#allocation2 + $0x140] sm:$0xff] 0.0
      %294 = vst [vmem:[#allocation2 + $0x160] sm:$0xff] 0.0
      %295 = vst [vmem:[#allocation2 + $0x180] sm:$0xff] 0.0
      %296 = vst [vmem:[#allocation2 + $0x1a0] sm:$0xff] 0.0
      %297 = vst [vmem:[#allocation2 + $0x1c0] sm:$0xff] 0.0
      %298 = vst [vmem:[#allocation2 + $0x1e0] sm:$0xff] 0.0
      %299 = vst [vmem:[#allocation2 + $0x200] sm:$0xff] 0.0
      %300 = vst [vmem:[#allocation2 + $0x220] sm:$0xff] 0.0
      %301 = vst [vmem:[#allocation2 + $0x18] sm:$0xff] 0.0
      %302 = vst [vmem:[#allocation2 + $0x38] sm:$0xff] 0.0
      %303 = vst [vmem:[#allocation2 + $0x58] sm:$0xff] 0.0
      %304 = vst [vmem:[#allocation2 + $0x78] sm:$0xff] 0.0
      %305 = vst [vmem:[#allocation2 + $0x98] sm:$0xff] 0.0
      %306 = vst [vmem:[#allocation2 + $0xb8] sm:$0xff] 0.0
      %307 = vst [vmem:[#allocation2 + $0xd8] sm:$0xff] 0.0
      %308 = vst [vmem:[#allocation2 + $0xf8] sm:$0xff] 0.0
      %309 = vst [vmem:[#allocation2 + $0x118] sm:$0xff] 0.0
      %310 = vst [vmem:[#allocation2 + $0x138] sm:$0xff] 0.0
      %311 = vst [vmem:[#allocation2 + $0x158] sm:$0xff] 0.0
      %312 = vst [vmem:[#allocation2 + $0x178] sm:$0xff] 0.0
      %313 = vst [vmem:[#allocation2 + $0x198] sm:$0xff] 0.0
      %314 = vst [vmem:[#allocation2 + $0x1b8] sm:$0xff] 0.0
      %315 = vst [vmem:[#allocation2 + $0x1d8] sm:$0xff] 0.0
      %316 = vst [vmem:[#allocation2 + $0x1f8] sm:$0xff] 0.0
      %317 = vst [vmem:[#allocation2 + $0x218] sm:$0xff] 0.0
      %318 = vst [vmem:[#allocation2 + $0x238] sm:$0xff] 0.0
      %v319 = vld [vmem:[%s259] sm:$0xf]
      %v320 = vld [vmem:[%s259 + $0x4] sm:$0xf]
      %v321 = vld [vmem:[%s259 + $0x8] sm:$0xf]
      %v322 = vld [vmem:[%s259 + $0xc] sm:$0xf]
      %v323 = vld [vmem:[%s259 + $0x10] sm:$0xf]
      %v324 = vld [vmem:[%s259 + $0x14] sm:$0xf]
      %v325 = vld [vmem:[%s259 + $0x18] sm:$0xf]
      %v326 = vld [vmem:[%s259 + $0x1c] sm:$0xf]
      %v327 = vld [vmem:[%s259 + $0x20] sm:$0xf]
      %v328 = vld [vmem:[%s259 + $0x24] sm:$0xf]
      %v329 = vld [vmem:[%s259 + $0x28] sm:$0xf]
      %v330 = vld [vmem:[%s259 + $0x2c] sm:$0xf]
      %v331 = vld [vmem:[%s259 + $0x30] sm:$0xf]
      %v332 = vld [vmem:[%s259 + $0x34] sm:$0xf]
      %v333 = vld [vmem:[%s259 + $0x38] sm:$0xf]
      %v334 = vld [vmem:[%s259 + $0x3c] sm:$0xf]
      %v335 = vld [vmem:[%s259 + $0x40] sm:$0xf]
      %v336 = vld [vmem:[%s259 + $0x44] sm:$0xf]
      %v337 = vld [vmem:[%s259 + $0x48] sm:$0xf]
      %v338 = vld [vmem:[%s259 + $0x4c] sm:$0xf]
      %v339 = vld [vmem:[%s259 + $0x50] sm:$0xf]
      %v340 = vld [vmem:[%s259 + $0x54] sm:$0xf]
      %v341 = vld [vmem:[%s259 + $0x58] sm:$0xf]
      %v342 = vld [vmem:[%s259 + $0x5c] sm:$0xf]
      %v343 = vld [vmem:[%s259 + $0x60] sm:$0xf]
      %v344 = vld [vmem:[%s259 + $0x64] sm:$0xf]
      %v345 = vld [vmem:[%s259 + $0x68] sm:$0xf]
      %v346 = vld [vmem:[%s259 + $0x6c] sm:$0xf]
      %v347 = vld [vmem:[%s259 + $0x70] sm:$0xf]
      %v348 = vld [vmem:[%s259 + $0x74] sm:$0xf]
      %v349 = vld [vmem:[%s259 + $0x78] sm:$0xf]
      %v350 = vld [vmem:[%s259 + $0x7c] sm:$0xf]
      %v351 = vunpack.c.l.bf16 %v319
      %v352 = vunpack.c.l.bf16 %v320
      %v353 = vunpack.c.l.bf16 %v321
      %v354 = vunpack.c.l.bf16 %v322
      %v355 = vunpack.c.l.bf16 %v323
      %v356 = vunpack.c.l.bf16 %v324
      %v357 = vunpack.c.l.bf16 %v325
      %v358 = vunpack.c.l.bf16 %v326
      %v359 = vunpack.c.l.bf16 %v327
      %v360 = vunpack.c.l.bf16 %v328
      %v361 = vunpack.c.l.bf16 %v329
      %v362 = vunpack.c.l.bf16 %v330
      %v363 = vunpack.c.l.bf16 %v331
      %v364 = vunpack.c.l.bf16 %v332
      %v365 = vunpack.c.l.bf16 %v333
      %v366 = vunpack.c.l.bf16 %v334
      %v367 = vunpack.c.l.bf16 %v335
      %v368 = vunpack.c.l.bf16 %v336
      %v369 = vunpack.c.l.bf16 %v337
      %v370 = vunpack.c.l.bf16 %v338
      %v371 = vunpack.c.l.bf16 %v339
      %v372 = vunpack.c.l.bf16 %v340
      %v373 = vunpack.c.l.bf16 %v341
      %v374 = vunpack.c.l.bf16 %v342
      %v375 = vunpack.c.l.bf16 %v343
      %v376 = vunpack.c.l.bf16 %v344
      %v377 = vunpack.c.l.bf16 %v345
      %v378 = vunpack.c.l.bf16 %v346
      %v379 = vunpack.c.l.bf16 %v347
      %v380 = vunpack.c.l.bf16 %v348
      %v381 = vunpack.c.l.bf16 %v349
      %v382 = vunpack.c.l.bf16 %v350
      %v383 = vld [vmem:[%s1] sm:$0x1]
      %v385 = vlaneseq
      %v386 = vshrl.u32 %v385, 7
      %v387 = vsub.s32 0, %v386
      %v388 = vrot.slane %v383, %v387
      %v390 = vmul.f32 %v351, %v388
      %v391 = vmul.f32 %v352, %v388
      %v392 = vmul.f32 %v353, %v388
      %v393 = vmul.f32 %v354, %v388
      %v394 = vmul.f32 %v355, %v388
      %v395 = vmul.f32 %v356, %v388
      %v396 = vmul.f32 %v357, %v388
      %v397 = vmul.f32 %v358, %v388
      %v398 = vmul.f32 %v359, %v388
      %v399 = vmul.f32 %v360, %v388
      %v400 = vmul.f32 %v361, %v388
      %v401 = vmul.f32 %v362, %v388
      %v402 = vmul.f32 %v363, %v388
      %v403 = vmul.f32 %v364, %v388
      %v404 = vmul.f32 %v365, %v388
      %v405 = vmul.f32 %v366, %v388
      %v406 = vmul.f32 %v367, %v388
      %v407 = vmul.f32 %v368, %v388
      %v408 = vmul.f32 %v369, %v388
      %v409 = vmul.f32 %v370, %v388
      %v410 = vmul.f32 %v371, %v388
      %v411 = vmul.f32 %v372, %v388
      %v412 = vmul.f32 %v373, %v388
      %v413 = vmul.f32 %v374, %v388
      %v414 = vmul.f32 %v375, %v388
      %v415 = vmul.f32 %v376, %v388
      %v416 = vmul.f32 %v377, %v388
      %v417 = vmul.f32 %v378, %v388
      %v418 = vmul.f32 %v379, %v388
      %v419 = vmul.f32 %v380, %v388
      %v420 = vmul.f32 %v381, %v388
      %v421 = vmul.f32 %v382, %v388
      %v422 = vld [vmem:[%s2] sm:$0x1]
      %v424 = vlaneseq
      %v425 = vshrl.u32 %v424, 7
      %v426 = vsub.s32 0, %v425
      %v427 = vrot.slane %v422, %v426
      %v429 = vadd.f32 %v390, %v427
      %v430 = vadd.f32 %v391, %v427
      %v431 = vadd.f32 %v392, %v427
      %v432 = vadd.f32 %v393, %v427
      %v433 = vadd.f32 %v394, %v427
      %v434 = vadd.f32 %v395, %v427
      %v435 = vadd.f32 %v396, %v427
      %v436 = vadd.f32 %v397, %v427
      %v437 = vadd.f32 %v398, %v427
      %v438 = vadd.f32 %v399, %v427
      %v439 = vadd.f32 %v400, %v427
      %v440 = vadd.f32 %v401, %v427
      %v441 = vadd.f32 %v402, %v427
      %v442 = vadd.f32 %v403, %v427
      %v443 = vadd.f32 %v404, %v427
      %v444 = vadd.f32 %v405, %v427
      %v445 = vadd.f32 %v406, %v427
      %v446 = vadd.f32 %v407, %v427
      %v447 = vadd.f32 %v408, %v427
      %v448 = vadd.f32 %v409, %v427
      %v449 = vadd.f32 %v410, %v427
      %v450 = vadd.f32 %v411, %v427
      %v451 = vadd.f32 %v412, %v427
      %v452 = vadd.f32 %v413, %v427
      %v453 = vadd.f32 %v414, %v427
      %v454 = vadd.f32 %v415, %v427
      %v455 = vadd.f32 %v416, %v427
      %v456 = vadd.f32 %v417, %v427
      %v457 = vadd.f32 %v418, %v427
      %v458 = vadd.f32 %v419, %v427
      %v459 = vadd.f32 %v420, %v427
      %v460 = vadd.f32 %v421, %v427
      %v461 = vmax.f32 %v429, 0.0
      %v462 = vmax.f32 %v430, 0.0
      %v463 = vmax.f32 %v431, 0.0
      %v464 = vmax.f32 %v432, 0.0
      %v465 = vmax.f32 %v433, 0.0
      %v466 = vmax.f32 %v434, 0.0
      %v467 = vmax.f32 %v435, 0.0
      %v468 = vmax.f32 %v436, 0.0
      %v469 = vmax.f32 %v437, 0.0
      %v470 = vmax.f32 %v438, 0.0
      %v471 = vmax.f32 %v439, 0.0
      %v472 = vmax.f32 %v440, 0.0
      %v473 = vmax.f32 %v441, 0.0
      %v474 = vmax.f32 %v442, 0.0
      %v475 = vmax.f32 %v443, 0.0
      %v476 = vmax.f32 %v444, 0.0
      %v477 = vmax.f32 %v445, 0.0
      %v478 = vmax.f32 %v446, 0.0
      %v479 = vmax.f32 %v447, 0.0
      %v480 = vmax.f32 %v448, 0.0
      %v481 = vmax.f32 %v449, 0.0
      %v482 = vmax.f32 %v450, 0.0
      %v483 = vmax.f32 %v451, 0.0
      %v484 = vmax.f32 %v452, 0.0
      %v485 = vmax.f32 %v453, 0.0
      %v486 = vmax.f32 %v454, 0.0
      %v487 = vmax.f32 %v455, 0.0
      %v488 = vmax.f32 %v456, 0.0
      %v489 = vmax.f32 %v457, 0.0
      %v490 = vmax.f32 %v458, 0.0
      %v491 = vmax.f32 %v459, 0.0
      %v492 = vmax.f32 %v460, 0.0
      %s493 = scalar_lea.vmem [#allocation2], 32
      %494 = vst [vmem:[%s493 + $0x8] sm:$0xff] %v461
      %495 = vst [vmem:[%s493 + $0x10] sm:$0xff] %v462
      %496 = vst [vmem:[%s493 + $0x28] sm:$0xff] %v463
      %497 = vst [vmem:[%s493 + $0x30] sm:$0xff] %v464
      %498 = vst [vmem:[%s493 + $0x48] sm:$0xff] %v465
      %499 = vst [vmem:[%s493 + $0x50] sm:$0xff] %v466
      %500 = vst [vmem:[%s493 + $0x68] sm:$0xff] %v467
      %501 = vst [vmem:[%s493 + $0x70] sm:$0xff] %v468
      %502 = vst [vmem:[%s493 + $0x88] sm:$0xff] %v469
      %503 = vst [vmem:[%s493 + $0x90] sm:$0xff] %v470
      %504 = vst [vmem:[%s493 + $0xa8] sm:$0xff] %v471
      %505 = vst [vmem:[%s493 + $0xb0] sm:$0xff] %v472
      %506 = vst [vmem:[%s493 + $0xc8] sm:$0xff] %v473
      %507 = vst [vmem:[%s493 + $0xd0] sm:$0xff] %v474
      %508 = vst [vmem:[%s493 + $0xe8] sm:$0xff] %v475
      %509 = vst [vmem:[%s493 + $0xf0] sm:$0xff] %v476
      %510 = vst [vmem:[%s493 + $0x108] sm:$0xff] %v477
      %511 = vst [vmem:[%s493 + $0x110] sm:$0xff] %v478
      %512 = vst [vmem:[%s493 + $0x128] sm:$0xff] %v479
      %513 = vst [vmem:[%s493 + $0x130] sm:$0xff] %v480
      %514 = vst [vmem:[%s493 + $0x148] sm:$0xff] %v481
      %515 = vst [vmem:[%s493 + $0x150] sm:$0xff] %v482
      %516 = vst [vmem:[%s493 + $0x168] sm:$0xff] %v483
      %517 = vst [vmem:[%s493 + $0x170] sm:$0xff] %v484
      %518 = vst [vmem:[%s493 + $0x188] sm:$0xff] %v485
      %519 = vst [vmem:[%s493 + $0x190] sm:$0xff] %v486
      %520 = vst [vmem:[%s493 + $0x1a8] sm:$0xff] %v487
      %521 = vst [vmem:[%s493 + $0x1b0] sm:$0xff] %v488
      %522 = vst [vmem:[%s493 + $0x1c8] sm:$0xff] %v489
      %523 = vst [vmem:[%s493 + $0x1d0] sm:$0xff] %v490
      %524 = vst [vmem:[%s493 + $0x1e8] sm:$0xff] %v491
      %525 = vst [vmem:[%s493 + $0x1f0] sm:$0xff] %v492
      %v526 = vld [vmem:[#allocation2 + $0x7] sm:$0xff]
      %v527 = vld [vmem:[#allocation2 + $0xf] sm:$0xff]
      %v528 = vld [vmem:[#allocation2 + $0x27] sm:$0xff]
      %v529 = vld [vmem:[#allocation2 + $0x2f] sm:$0xff]
      %v530 = vld [vmem:[#allocation2 + $0x47] sm:$0xff]
      %v531 = vld [vmem:[#allocation2 + $0x4f] sm:$0xff]
      %v532 = vld [vmem:[#allocation2 + $0x67] sm:$0xff]
      %v533 = vld [vmem:[#allocation2 + $0x6f] sm:$0xff]
      %v534 = vld [vmem:[#allocation2 + $0x87] sm:$0xff]
      %v535 = vld [vmem:[#allocation2 + $0x8f] sm:$0xff]
      %v536 = vld [vmem:[#allocation2 + $0xa7] sm:$0xff]
      %v537 = vld [vmem:[#allocation2 + $0xaf] sm:$0xff]
      %v538 = vld [vmem:[#allocation2 + $0xc7] sm:$0xff]
      %v539 = vld [vmem:[#allocation2 + $0xcf] sm:$0xff]
      %v540 = vld [vmem:[#allocation2 + $0xe7] sm:$0xff]
      %v541 = vld [vmem:[#allocation2 + $0xef] sm:$0xff]
      %v542 = vld [vmem:[#allocation2 + $0x107] sm:$0xff]
      %v543 = vld [vmem:[#allocation2 + $0x10f] sm:$0xff]
      %v544 = vld [vmem:[#allocation2 + $0x127] sm:$0xff]
      %v545 = vld [vmem:[#allocation2 + $0x12f] sm:$0xff]
      %v546 = vld [vmem:[#allocation2 + $0x147] sm:$0xff]
      %v547 = vld [vmem:[#allocation2 + $0x14f] sm:$0xff]
      %v548 = vld [vmem:[#allocation2 + $0x167] sm:$0xff]
      %v549 = vld [vmem:[#allocation2 + $0x16f] sm:$0xff]
      %v550 = vld [vmem:[#allocation2 + $0x187] sm:$0xff]
      %v551 = vld [vmem:[#allocation2 + $0x18f] sm:$0xff]
      %v552 = vld [vmem:[#allocation2 + $0x1a7] sm:$0xff]
      %v553 = vld [vmem:[#allocation2 + $0x1af] sm:$0xff]
      %v554 = vld [vmem:[#allocation2 + $0x1c7] sm:$0xff]
      %v555 = vld [vmem:[#allocation2 + $0x1cf] sm:$0xff]
      %v556 = vld [vmem:[#allocation2 + $0x1e7] sm:$0xff]
      %v557 = vld [vmem:[#allocation2 + $0x1ef] sm:$0xff]
      %v558 = vpack.c.bf16 %v527, %v526
      %v559 = vpack.c.bf16 %v529, %v528
      %v560 = vpack.c.bf16 %v531, %v530
      %v561 = vpack.c.bf16 %v533, %v532
      %v562 = vpack.c.bf16 %v535, %v534
      %v563 = vpack.c.bf16 %v537, %v536
      %v564 = vpack.c.bf16 %v539, %v538
      %v565 = vpack.c.bf16 %v541, %v540
      %v566 = vpack.c.bf16 %v543, %v542
      %v567 = vpack.c.bf16 %v545, %v544
      %v568 = vpack.c.bf16 %v547, %v546
      %v569 = vpack.c.bf16 %v549, %v548
      %v570 = vpack.c.bf16 %v551, %v550
      %v571 = vpack.c.bf16 %v553, %v552
      %v572 = vpack.c.bf16 %v555, %v554
      %v573 = vpack.c.bf16 %v557, %v556
      %v574 = vld [vmem:[%s3] sm:$0xf]
      %v575 = vld [vmem:[%s3 + $0x4] sm:$0xf]
      %v576 = vld [vmem:[%s3 + $0x8] sm:$0xf]
      %v577 = vld [vmem:[%s3 + $0xc] sm:$0xf]
      %v578 = vld [vmem:[%s3 + $0x10] sm:$0xf]
      %v579 = vld [vmem:[%s3 + $0x14] sm:$0xf]
      %v580 = vld [vmem:[%s3 + $0x18] sm:$0xf]
      %v581 = vld [vmem:[%s3 + $0x1c] sm:$0xf]
      %v582 = vld [vmem:[%s3 + $0x20] sm:$0xf]
      %v583 = vld [vmem:[%s3 + $0x24] sm:$0xf]
      %v584 = vld [vmem:[%s3 + $0x28] sm:$0xf]
      %v585 = vld [vmem:[%s3 + $0x2c] sm:$0xf]
      %v586 = vld [vmem:[%s3 + $0x30] sm:$0xf]
      %v587 = vld [vmem:[%s3 + $0x34] sm:$0xf]
      %v588 = vld [vmem:[%s3 + $0x38] sm:$0xf]
      %v589 = vld [vmem:[%s3 + $0x3c] sm:$0xf]
      %v590 = vld [vmem:[#allocation2 + $0x8] sm:$0xff]
      %v591 = vld [vmem:[#allocation2 + $0x10] sm:$0xff]
      %v592 = vld [vmem:[#allocation2 + $0x28] sm:$0xff]
      %v593 = vld [vmem:[#allocation2 + $0x30] sm:$0xff]
      %v594 = vld [vmem:[#allocation2 + $0x48] sm:$0xff]
      %v595 = vld [vmem:[#allocation2 + $0x50] sm:$0xff]
      %v596 = vld [vmem:[#allocation2 + $0x68] sm:$0xff]
      %v597 = vld [vmem:[#allocation2 + $0x70] sm:$0xff]
      %v598 = vld [vmem:[#allocation2 + $0x88] sm:$0xff]
      %v599 = vld [vmem:[#allocation2 + $0x90] sm:$0xff]
      %v600 = vld [vmem:[#allocation2 + $0xa8] sm:$0xff]
      %v601 = vld [vmem:[#allocation2 + $0xb0] sm:$0xff]
      %v602 = vld [vmem:[#allocation2 + $0xc8] sm:$0xff]
      %v603 = vld [vmem:[#allocation2 + $0xd0] sm:$0xff]
      %v604 = vld [vmem:[#allocation2 + $0xe8] sm:$0xff]
      %v605 = vld [vmem:[#allocation2 + $0xf0] sm:$0xff]
      %v606 = vld [vmem:[#allocation2 + $0x108] sm:$0xff]
      %v607 = vld [vmem:[#allocation2 + $0x110] sm:$0xff]
      %v608 = vld [vmem:[#allocation2 + $0x128] sm:$0xff]
      %v609 = vld [vmem:[#allocation2 + $0x130] sm:$0xff]
      %v610 = vld [vmem:[#allocation2 + $0x148] sm:$0xff]
      %v611 = vld [vmem:[#allocation2 + $0x150] sm:$0xff]
      %v612 = vld [vmem:[#allocation2 + $0x168] sm:$0xff]
      %v613 = vld [vmem:[#allocation2 + $0x170] sm:$0xff]
      %v614 = vld [vmem:[#allocation2 + $0x188] sm:$0xff]
      %v615 = vld [vmem:[#allocation2 + $0x190] sm:$0xff]
      %v616 = vld [vmem:[#allocation2 + $0x1a8] sm:$0xff]
      %v617 = vld [vmem:[#allocation2 + $0x1b0] sm:$0xff]
      %v618 = vld [vmem:[#allocation2 + $0x1c8] sm:$0xff]
      %v619 = vld [vmem:[#allocation2 + $0x1d0] sm:$0xff]
      %v620 = vld [vmem:[#allocation2 + $0x1e8] sm:$0xff]
      %v621 = vld [vmem:[#allocation2 + $0x1f0] sm:$0xff]
      %v622 = vpack.c.bf16 %v591, %v590
      %v623 = vpack.c.bf16 %v593, %v592
      %v624 = vpack.c.bf16 %v595, %v594
      %v625 = vpack.c.bf16 %v597, %v596
      %v626 = vpack.c.bf16 %v599, %v598
      %v627 = vpack.c.bf16 %v601, %v600
      %v628 = vpack.c.bf16 %v603, %v602
      %v629 = vpack.c.bf16 %v605, %v604
      %v630 = vpack.c.bf16 %v607, %v606
      %v631 = vpack.c.bf16 %v609, %v608
      %v632 = vpack.c.bf16 %v611, %v610
      %v633 = vpack.c.bf16 %v613, %v612
      %v634 = vpack.c.bf16 %v615, %v614
      %v635 = vpack.c.bf16 %v617, %v616
      %v636 = vpack.c.bf16 %v619, %v618
      %v637 = vpack.c.bf16 %v621, %v620
      %s638 = scalar_lea.vmem %s3, 64
      %v639 = vld [vmem:[%s638] sm:$0xf]
      %v640 = vld [vmem:[%s638 + $0x4] sm:$0xf]
      %v641 = vld [vmem:[%s638 + $0x8] sm:$0xf]
      %v642 = vld [vmem:[%s638 + $0xc] sm:$0xf]
      %v643 = vld [vmem:[%s638 + $0x10] sm:$0xf]
      %v644 = vld [vmem:[%s638 + $0x14] sm:$0xf]
      %v645 = vld [vmem:[%s638 + $0x18] sm:$0xf]
      %v646 = vld [vmem:[%s638 + $0x1c] sm:$0xf]
      %v647 = vld [vmem:[%s638 + $0x20] sm:$0xf]
      %v648 = vld [vmem:[%s638 + $0x24] sm:$0xf]
      %v649 = vld [vmem:[%s638 + $0x28] sm:$0xf]
      %v650 = vld [vmem:[%s638 + $0x2c] sm:$0xf]
      %v651 = vld [vmem:[%s638 + $0x30] sm:$0xf]
      %v652 = vld [vmem:[%s638 + $0x34] sm:$0xf]
      %v653 = vld [vmem:[%s638 + $0x38] sm:$0xf]
      %v654 = vld [vmem:[%s638 + $0x3c] sm:$0xf]
      %v671 = vunpack.c.l.b16 %v639
      %v672 = vunpack.c.l.b16 %v640
      %v673 = vunpack.c.l.b16 %v641
      %v674 = vunpack.c.l.b16 %v642
      %v675 = vunpack.c.l.b16 %v643
      %v676 = vunpack.c.l.b16 %v644
      %v677 = vunpack.c.l.b16 %v645
      %v678 = vunpack.c.l.b16 %v646
      %v679 = vunpack.c.l.b16 %v647
      %v680 = vunpack.c.l.b16 %v648
      %v681 = vunpack.c.l.b16 %v649
      %v682 = vunpack.c.l.b16 %v650
      %v683 = vunpack.c.l.b16 %v651
      %v684 = vunpack.c.l.b16 %v652
      %v685 = vunpack.c.l.b16 %v653
      %v686 = vunpack.c.l.b16 %v654
      %v687 = vpack.c.b16 %v672, %v671
      %v688 = vpack.c.b16 %v674, %v673
      %v689 = vpack.c.b16 %v676, %v675
      %v690 = vpack.c.b16 %v678, %v677
      %v691 = vpack.c.b16 %v680, %v679
      %v692 = vpack.c.b16 %v682, %v681
      %v693 = vpack.c.b16 %v684, %v683
      %v694 = vpack.c.b16 %v686, %v685
      %703 = vmatprep.subr.bf16.mxu0 0
      %704 = vmatpush1.bf16.msra.mxu0 %v687
      %705 = vmatprep.subr.bf16.mxu0 0
      %706 = vmatpush1.bf16.msra.mxu0 %v688
      %707 = vmatprep.subr.bf16.mxu0 0
      %708 = vmatpush1.bf16.msra.mxu0 %v689
      %709 = vmatprep.subr.bf16.mxu0 0
      %710 = vmatpush1.bf16.msra.mxu0 %v690
      %711 = vmatprep.subr.bf16.mxu0 0
      %712 = vmatpush1.bf16.msra.mxu0 %v691
      %713 = vmatprep.subr.bf16.mxu0 0
      %714 = vmatpush1.bf16.msra.mxu0 %v692
      %715 = vmatprep.subr.bf16.mxu0 0
      %716 = vmatpush1.bf16.msra.mxu0 %v693
      %717 = vmatprep.subr.bf16.mxu0 0
      %718 = vmatpush1.bf16.msra.mxu0 %v694
      %719 = vmatprep.subr.bf16.mxu0 0
      %720 = vmatpush1.bf16.msra.mxu0 0
      %721 = vmatprep.subr.bf16.mxu0 0
      %722 = vmatpush1.bf16.msra.mxu0 0
      %723 = vmatprep.subr.bf16.mxu0 0
      %724 = vmatpush1.bf16.msra.mxu0 0
      %725 = vmatprep.subr.bf16.mxu0 0
      %726 = vmatpush1.bf16.msra.mxu0 0
      %727 = vmatprep.subr.bf16.mxu0 0
      %728 = vmatpush1.bf16.msra.mxu0 0
      %729 = vmatprep.subr.bf16.mxu0 0
      %730 = vmatpush1.bf16.msra.mxu0 0
      %731 = vmatprep.subr.bf16.mxu0 0
      %732 = vmatpush1.bf16.msra.mxu0 0
      %733 = vmatprep.subr.bf16.mxu0 0
      %734 = vmatpush1.bf16.msra.mxu0 0
      %735 = vmatprep.mubr.bf16.mxu0 0
      %736 = vmatmul.mubr.bf16.gmra.mrb[0].mxu0 %v622
      %v737 = vpop.f32.mrb[0].mxu0
      %v738 = vadd.f32 0.0, %v737
      %v739 = vpop.f32.mrb[0].mxu0
      %v740 = vpop.f32.mrb[0].mxu0
      %v741 = vadd.f32 0.0, %v740
      %v742 = vpop.f32.mrb[0].mxu0
      %743 = vmatprep.mubr.bf16.mxu0 0
      %744 = vmatmul.mubr.bf16.gmra.mrb[0].mxu0 %v623
      %v745 = vpop.f32.mrb[0].mxu0
      %v746 = vadd.f32 0.0, %v745
      %v747 = vpop.f32.mrb[0].mxu0
      %v748 = vpop.f32.mrb[0].mxu0
      %v749 = vadd.f32 0.0, %v748
      %v750 = vpop.f32.mrb[0].mxu0
      %751 = vmatprep.mubr.bf16.mxu0 0
      %752 = vmatmul.mubr.bf16.gmra.mrb[0].mxu0 %v624
      %v753 = vpop.f32.mrb[0].mxu0
      %v754 = vadd.f32 0.0, %v753
      %v755 = vpop.f32.mrb[0].mxu0
      %v756 = vpop.f32.mrb[0].mxu0
      %v757 = vadd.f32 0.0, %v756
      %v758 = vpop.f32.mrb[0].mxu0
      %759 = vmatprep.mubr.bf16.mxu0 0
      %760 = vmatmul.mubr.bf16.gmra.mrb[0].mxu0 %v625
      %v761 = vpop.f32.mrb[0].mxu0
      %v762 = vadd.f32 0.0, %v761
      %v763 = vpop.f32.mrb[0].mxu0
      %v764 = vpop.f32.mrb[0].mxu0
      %v765 = vadd.f32 0.0, %v764
      %v766 = vpop.f32.mrb[0].mxu0
      %767 = vmatprep.mubr.bf16.mxu0 0
      %768 = vmatmul.mubr.bf16.gmra.mrb[0].mxu0 %v626
      %v769 = vpop.f32.mrb[0].mxu0
      %v770 = vadd.f32 0.0, %v769
      %v771 = vpop.f32.mrb[0].mxu0
      %v772 = vpop.f32.mrb[0].mxu0
      %v773 = vadd.f32 0.0, %v772
      %v774 = vpop.f32.mrb[0].mxu0
      %775 = vmatprep.mubr.bf16.mxu0 0
      %776 = vmatmul.mubr.bf16.gmra.mrb[0].mxu0 %v627
      %v777 = vpop.f32.mrb[0].mxu0
      %v778 = vadd.f32 0.0, %v777
      %v779 = vpop.f32.mrb[0].mxu0
      %v780 = vpop.f32.mrb[0].mxu0
      %v781 = vadd.f32 0.0, %v780
      %v782 = vpop.f32.mrb[0].mxu0
      %783 = vmatprep.mubr.bf16.mxu0 0
      %784 = vmatmul.mubr.bf16.gmra.mrb[0].mxu0 %v628
      %v785 = vpop.f32.mrb[0].mxu0
      %v786 = vadd.f32 0.0, %v785
      %v787 = vpop.f32.mrb[0].mxu0
      %v788 = vpop.f32.mrb[0].mxu0
      %v789 = vadd.f32 0.0, %v788
      %v790 = vpop.f32.mrb[0].mxu0
      %791 = vmatprep.mubr.bf16.mxu0 0
      %792 = vmatmul.mubr.bf16.gmra.mrb[0].mxu0 %v629
      %v793 = vpop.f32.mrb[0].mxu0
      %v794 = vadd.f32 0.0, %v793
      %v795 = vpop.f32.mrb[0].mxu0
      %v796 = vpop.f32.mrb[0].mxu0
      %v797 = vadd.f32 0.0, %v796
      %v798 = vpop.f32.mrb[0].mxu0
      %799 = vmatprep.mubr.bf16.mxu0 0
      %800 = vmatmul.mubr.bf16.gmra.mrb[0].mxu0 %v630
      %v801 = vpop.f32.mrb[0].mxu0
      %v802 = vadd.f32 0.0, %v801
      %v803 = vpop.f32.mrb[0].mxu0
      %v804 = vpop.f32.mrb[0].mxu0
      %v805 = vadd.f32 0.0, %v804
      %v806 = vpop.f32.mrb[0].mxu0
      %807 = vmatprep.mubr.bf16.mxu0 0
      %808 = vmatmul.mubr.bf16.gmra.mrb[0].mxu0 %v631
      %v809 = vpop.f32.mrb[0].mxu0
      %v810 = vadd.f32 0.0, %v809
      %v811 = vpop.f32.mrb[0].mxu0
      %v812 = vpop.f32.mrb[0].mxu0
      %v813 = vadd.f32 0.0, %v812
      %v814 = vpop.f32.mrb[0].mxu0
      %815 = vmatprep.mubr.bf16.mxu0 0
      %816 = vmatmul.mubr.bf16.gmra.mrb[0].mxu0 %v632
      %v817 = vpop.f32.mrb[0].mxu0
      %v818 = vadd.f32 0.0, %v817
      %v819 = vpop.f32.mrb[0].mxu0
      %v820 = vpop.f32.mrb[0].mxu0
      %v821 = vadd.f32 0.0, %v820
      %v822 = vpop.f32.mrb[0].mxu0
      %823 = vmatprep.mubr.bf16.mxu0 0
      %824 = vmatmul.mubr.bf16.gmra.mrb[0].mxu0 %v633
      %v825 = vpop.f32.mrb[0].mxu0
      %v826 = vadd.f32 0.0, %v825
      %v827 = vpop.f32.mrb[0].mxu0
      %v828 = vpop.f32.mrb[0].mxu0
      %v829 = vadd.f32 0.0, %v828
      %v830 = vpop.f32.mrb[0].mxu0
      %831 = vmatprep.mubr.bf16.mxu0 0
      %832 = vmatmul.mubr.bf16.gmra.mrb[0].mxu0 %v634
      %v833 = vpop.f32.mrb[0].mxu0
      %v834 = vadd.f32 0.0, %v833
      %v835 = vpop.f32.mrb[0].mxu0
      %v836 = vpop.f32.mrb[0].mxu0
      %v837 = vadd.f32 0.0, %v836
      %v838 = vpop.f32.mrb[0].mxu0
      %839 = vmatprep.mubr.bf16.mxu0 0
      %840 = vmatmul.mubr.bf16.gmra.mrb[0].mxu0 %v635
      %v841 = vpop.f32.mrb[0].mxu0
      %v842 = vadd.f32 0.0, %v841
      %v843 = vpop.f32.mrb[0].mxu0
      %v844 = vpop.f32.mrb[0].mxu0
      %v845 = vadd.f32 0.0, %v844
      %v846 = vpop.f32.mrb[0].mxu0
      %847 = vmatprep.mubr.bf16.mxu0 0
      %848 = vmatmul.mubr.bf16.gmra.mrb[0].mxu0 %v636
      %v849 = vpop.f32.mrb[0].mxu0
      %v850 = vadd.f32 0.0, %v849
      %v851 = vpop.f32.mrb[0].mxu0
      %v852 = vpop.f32.mrb[0].mxu0
      %v853 = vadd.f32 0.0, %v852
      %v854 = vpop.f32.mrb[0].mxu0
      %855 = vmatprep.mubr.bf16.mxu0 0
      %856 = vmatmul.mubr.bf16.gmra.mrb[0].mxu0 %v637
      %v857 = vpop.f32.mrb[0].mxu0
      %v858 = vadd.f32 0.0, %v857
      %v859 = vpop.f32.mrb[0].mxu0
      %v860 = vpop.f32.mrb[0].mxu0
      %v861 = vadd.f32 0.0, %v860
      %v862 = vpop.f32.mrb[0].mxu0
      %863 = vdwg.mxu0
      %v880 = vunpack.c.l.b16 %v574
      %v881 = vunpack.c.l.b16 %v575
      %v882 = vunpack.c.l.b16 %v576
      %v883 = vunpack.c.l.b16 %v577
      %v884 = vunpack.c.l.b16 %v578
      %v885 = vunpack.c.l.b16 %v579
      %v886 = vunpack.c.l.b16 %v580
      %v887 = vunpack.c.l.b16 %v581
      %v888 = vunpack.c.l.b16 %v582
      %v889 = vunpack.c.l.b16 %v583
      %v890 = vunpack.c.l.b16 %v584
      %v891 = vunpack.c.l.b16 %v585
      %v892 = vunpack.c.l.b16 %v586
      %v893 = vunpack.c.l.b16 %v587
      %v894 = vunpack.c.l.b16 %v588
      %v895 = vunpack.c.l.b16 %v589
      %v896 = vpack.c.b16 %v881, %v880
      %v897 = vpack.c.b16 %v883, %v882
      %v898 = vpack.c.b16 %v885, %v884
      %v899 = vpack.c.b16 %v887, %v886
      %v900 = vpack.c.b16 %v889, %v888
      %v901 = vpack.c.b16 %v891, %v890
      %v902 = vpack.c.b16 %v893, %v892
      %v903 = vpack.c.b16 %v895, %v894
      %912 = vmatprep.subr.bf16.mxu0 0
      %913 = vmatpush1.bf16.msra.mxu0 %v896
      %914 = vmatprep.subr.bf16.mxu0 0
      %915 = vmatpush1.bf16.msra.mxu0 %v897
      %916 = vmatprep.subr.bf16.mxu0 0
      %917 = vmatpush1.bf16.msra.mxu0 %v898
      %918 = vmatprep.subr.bf16.mxu0 0
      %919 = vmatpush1.bf16.msra.mxu0 %v899
      %920 = vmatprep.subr.bf16.mxu0 0
      %921 = vmatpush1.bf16.msra.mxu0 %v900
      %922 = vmatprep.subr.bf16.mxu0 0
      %923 = vmatpush1.bf16.msra.mxu0 %v901
      %924 = vmatprep.subr.bf16.mxu0 0
      %925 = vmatpush1.bf16.msra.mxu0 %v902
      %926 = vmatprep.subr.bf16.mxu0 0
      %927 = vmatpush1.bf16.msra.mxu0 %v903
      %928 = vmatprep.subr.bf16.mxu0 0
      %929 = vmatpush1.bf16.msra.mxu0 0
      %930 = vmatprep.subr.bf16.mxu0 0
      %931 = vmatpush1.bf16.msra.mxu0 0
      %932 = vmatprep.subr.bf16.mxu0 0
      %933 = vmatpush1.bf16.msra.mxu0 0
      %934 = vmatprep.subr.bf16.mxu0 0
      %935 = vmatpush1.bf16.msra.mxu0 0
      %936 = vmatprep.subr.bf16.mxu0 0
      %937 = vmatpush1.bf16.msra.mxu0 0
      %938 = vmatprep.subr.bf16.mxu0 0
      %939 = vmatpush1.bf16.msra.mxu0 0
      %940 = vmatprep.subr.bf16.mxu0 0
      %941 = vmatpush1.bf16.msra.mxu0 0
      %942 = vmatprep.subr.bf16.mxu0 0
      %943 = vmatpush1.bf16.msra.mxu0 0
      %944 = vmatprep.mubr.bf16.mxu0 0
      %945 = vmatmul.mubr.bf16.gmra.mrb[0].mxu0 %v558
      %v946 = vpop.f32.mrb[0].mxu0
      %v947 = vadd.f32 %v738, %v946
      %v948 = vpop.f32.mrb[0].mxu0
      %v949 = vpop.f32.mrb[0].mxu0
      %v950 = vadd.f32 %v741, %v949
      %v951 = vpop.f32.mrb[0].mxu0
      %952 = vmatprep.mubr.bf16.mxu0 0
      %953 = vmatmul.mubr.bf16.gmra.mrb[0].mxu0 %v559
      %v954 = vpop.f32.mrb[0].mxu0
      %v955 = vadd.f32 %v746, %v954
      %v956 = vpop.f32.mrb[0].mxu0
      %v957 = vpop.f32.mrb[0].mxu0
      %v958 = vadd.f32 %v749, %v957
      %v959 = vpop.f32.mrb[0].mxu0
      %960 = vmatprep.mubr.bf16.mxu0 0
      %961 = vmatmul.mubr.bf16.gmra.mrb[0].mxu0 %v560
      %v962 = vpop.f32.mrb[0].mxu0
      %v963 = vadd.f32 %v754, %v962
      %v964 = vpop.f32.mrb[0].mxu0
      %v965 = vpop.f32.mrb[0].mxu0
      %v966 = vadd.f32 %v757, %v965
      %v967 = vpop.f32.mrb[0].mxu0
      %968 = vmatprep.mubr.bf16.mxu0 0
      %969 = vmatmul.mubr.bf16.gmra.mrb[0].mxu0 %v561
      %v970 = vpop.f32.mrb[0].mxu0
      %v971 = vadd.f32 %v762, %v970
      %v972 = vpop.f32.mrb[0].mxu0
      %v973 = vpop.f32.mrb[0].mxu0
      %v974 = vadd.f32 %v765, %v973
      %v975 = vpop.f32.mrb[0].mxu0
      %976 = vmatprep.mubr.bf16.mxu0 0
      %977 = vmatmul.mubr.bf16.gmra.mrb[0].mxu0 %v562
      %v978 = vpop.f32.mrb[0].mxu0
      %v979 = vadd.f32 %v770, %v978
      %v980 = vpop.f32.mrb[0].mxu0
      %v981 = vpop.f32.mrb[0].mxu0
      %v982 = vadd.f32 %v773, %v981
      %v983 = vpop.f32.mrb[0].mxu0
      %984 = vmatprep.mubr.bf16.mxu0 0
      %985 = vmatmul.mubr.bf16.gmra.mrb[0].mxu0 %v563
      %v986 = vpop.f32.mrb[0].mxu0
      %v987 = vadd.f32 %v778, %v986
      %v988 = vpop.f32.mrb[0].mxu0
      %v989 = vpop.f32.mrb[0].mxu0
      %v990 = vadd.f32 %v781, %v989
      %v991 = vpop.f32.mrb[0].mxu0
      %992 = vmatprep.mubr.bf16.mxu0 0
      %993 = vmatmul.mubr.bf16.gmra.mrb[0].mxu0 %v564
      %v994 = vpop.f32.mrb[0].mxu0
      %v995 = vadd.f32 %v786, %v994
      %v996 = vpop.f32.mrb[0].mxu0
      %v997 = vpop.f32.mrb[0].mxu0
      %v998 = vadd.f32 %v789, %v997
      %v999 = vpop.f32.mrb[0].mxu0
      %1000 = vmatprep.mubr.bf16.mxu0 0
      %1001 = vmatmul.mubr.bf16.gmra.mrb[0].mxu0 %v565
      %v1002 = vpop.f32.mrb[0].mxu0
      %v1003 = vadd.f32 %v794, %v1002
      %v1004 = vpop.f32.mrb[0].mxu0
      %v1005 = vpop.f32.mrb[0].mxu0
      %v1006 = vadd.f32 %v797, %v1005
      %v1007 = vpop.f32.mrb[0].mxu0
      %1008 = vmatprep.mubr.bf16.mxu0 0
      %1009 = vmatmul.mubr.bf16.gmra.mrb[0].mxu0 %v566
      %v1010 = vpop.f32.mrb[0].mxu0
      %v1011 = vadd.f32 %v802, %v1010
      %v1012 = vpop.f32.mrb[0].mxu0
      %v1013 = vpop.f32.mrb[0].mxu0
      %v1014 = vadd.f32 %v805, %v1013
      %v1015 = vpop.f32.mrb[0].mxu0
      %1016 = vmatprep.mubr.bf16.mxu0 0
      %1017 = vmatmul.mubr.bf16.gmra.mrb[0].mxu0 %v567
      %v1018 = vpop.f32.mrb[0].mxu0
      %v1019 = vadd.f32 %v810, %v1018
      %v1020 = vpop.f32.mrb[0].mxu0
      %v1021 = vpop.f32.mrb[0].mxu0
      %v1022 = vadd.f32 %v813, %v1021
      %v1023 = vpop.f32.mrb[0].mxu0
      %1024 = vmatprep.mubr.bf16.mxu0 0
      %1025 = vmatmul.mubr.bf16.gmra.mrb[0].mxu0 %v568
      %v1026 = vpop.f32.mrb[0].mxu0
      %v1027 = vadd.f32 %v818, %v1026
      %v1028 = vpop.f32.mrb[0].mxu0
      %v1029 = vpop.f32.mrb[0].mxu0
      %v1030 = vadd.f32 %v821, %v1029
      %v1031 = vpop.f32.mrb[0].mxu0
      %1032 = vmatprep.mubr.bf16.mxu0 0
      %1033 = vmatmul.mubr.bf16.gmra.mrb[0].mxu0 %v569
      %v1034 = vpop.f32.mrb[0].mxu0
      %v1035 = vadd.f32 %v826, %v1034
      %v1036 = vpop.f32.mrb[0].mxu0
      %v1037 = vpop.f32.mrb[0].mxu0
      %v1038 = vadd.f32 %v829, %v1037
      %v1039 = vpop.f32.mrb[0].mxu0
      %1040 = vmatprep.mubr.bf16.mxu0 0
      %1041 = vmatmul.mubr.bf16.gmra.mrb[0].mxu0 %v570
      %v1042 = vpop.f32.mrb[0].mxu0
      %v1043 = vadd.f32 %v834, %v1042
      %v1044 = vpop.f32.mrb[0].mxu0
      %v1045 = vpop.f32.mrb[0].mxu0
      %v1046 = vadd.f32 %v837, %v1045
      %v1047 = vpop.f32.mrb[0].mxu0
      %1048 = vmatprep.mubr.bf16.mxu0 0
      %1049 = vmatmul.mubr.bf16.gmra.mrb[0].mxu0 %v571
      %v1050 = vpop.f32.mrb[0].mxu0
      %v1051 = vadd.f32 %v842, %v1050
      %v1052 = vpop.f32.mrb[0].mxu0
      %v1053 = vpop.f32.mrb[0].mxu0
      %v1054 = vadd.f32 %v845, %v1053
      %v1055 = vpop.f32.mrb[0].mxu0
      %1056 = vmatprep.mubr.bf16.mxu0 0
      %1057 = vmatmul.mubr.bf16.gmra.mrb[0].mxu0 %v572
      %v1058 = vpop.f32.mrb[0].mxu0
      %v1059 = vadd.f32 %v850, %v1058
      %v1060 = vpop.f32.mrb[0].mxu0
      %v1061 = vpop.f32.mrb[0].mxu0
      %v1062 = vadd.f32 %v853, %v1061
      %v1063 = vpop.f32.mrb[0].mxu0
      %1064 = vmatprep.mubr.bf16.mxu0 0
      %1065 = vmatmul.mubr.bf16.gmra.mrb[0].mxu0 %v573
      %v1066 = vpop.f32.mrb[0].mxu0
      %v1067 = vadd.f32 %v858, %v1066
      %v1068 = vpop.f32.mrb[0].mxu0
      %v1069 = vpop.f32.mrb[0].mxu0
      %v1070 = vadd.f32 %v861, %v1069
      %v1071 = vpop.f32.mrb[0].mxu0
      %1072 = vdwg.mxu0
      %v1073 = vld [vmem:[#allocation2 + $0x9] sm:$0xff]
      %v1074 = vld [vmem:[#allocation2 + $0x11] sm:$0xff]
      %v1075 = vld [vmem:[#allocation2 + $0x29] sm:$0xff]
      %v1076 = vld [vmem:[#allocation2 + $0x31] sm:$0xff]
      %v1077 = vld [vmem:[#allocation2 + $0x49] sm:$0xff]
      %v1078 = vld [vmem:[#allocation2 + $0x51] sm:$0xff]
      %v1079 = vld [vmem:[#allocation2 + $0x69] sm:$0xff]
      %v1080 = vld [vmem:[#allocation2 + $0x71] sm:$0xff]
      %v1081 = vld [vmem:[#allocation2 + $0x89] sm:$0xff]
      %v1082 = vld [vmem:[#allocation2 + $0x91] sm:$0xff]
      %v1083 = vld [vmem:[#allocation2 + $0xa9] sm:$0xff]
      %v1084 = vld [vmem:[#allocation2 + $0xb1] sm:$0xff]
      %v1085 = vld [vmem:[#allocation2 + $0xc9] sm:$0xff]
      %v1086 = vld [vmem:[#allocation2 + $0xd1] sm:$0xff]
      %v1087 = vld [vmem:[#allocation2 + $0xe9] sm:$0xff]
      %v1088 = vld [vmem:[#allocation2 + $0xf1] sm:$0xff]
      %v1089 = vld [vmem:[#allocation2 + $0x109] sm:$0xff]
      %v1090 = vld [vmem:[#allocation2 + $0x111] sm:$0xff]
      %v1091 = vld [vmem:[#allocation2 + $0x129] sm:$0xff]
      %v1092 = vld [vmem:[#allocation2 + $0x131] sm:$0xff]
      %v1093 = vld [vmem:[#allocation2 + $0x149] sm:$0xff]
      %v1094 = vld [vmem:[#allocation2 + $0x151] sm:$0xff]
      %v1095 = vld [vmem:[#allocation2 + $0x169] sm:$0xff]
      %v1096 = vld [vmem:[#allocation2 + $0x171] sm:$0xff]
      %v1097 = vld [vmem:[#allocation2 + $0x189] sm:$0xff]
      %v1098 = vld [vmem:[#allocation2 + $0x191] sm:$0xff]
      %v1099 = vld [vmem:[#allocation2 + $0x1a9] sm:$0xff]
      %v1100 = vld [vmem:[#allocation2 + $0x1b1] sm:$0xff]
      %v1101 = vld [vmem:[#allocation2 + $0x1c9] sm:$0xff]
      %v1102 = vld [vmem:[#allocation2 + $0x1d1] sm:$0xff]
      %v1103 = vld [vmem:[#allocation2 + $0x1e9] sm:$0xff]
      %v1104 = vld [vmem:[#allocation2 + $0x1f1] sm:$0xff]
      %v1105 = vpack.c.bf16 %v1074, %v1073
      %v1106 = vpack.c.bf16 %v1076, %v1075
      %v1107 = vpack.c.bf16 %v1078, %v1077
      %v1108 = vpack.c.bf16 %v1080, %v1079
      %v1109 = vpack.c.bf16 %v1082, %v1081
      %v1110 = vpack.c.bf16 %v1084, %v1083
      %v1111 = vpack.c.bf16 %v1086, %v1085
      %v1112 = vpack.c.bf16 %v1088, %v1087
      %v1113 = vpack.c.bf16 %v1090, %v1089
      %v1114 = vpack.c.bf16 %v1092, %v1091
      %v1115 = vpack.c.bf16 %v1094, %v1093
      %v1116 = vpack.c.bf16 %v1096, %v1095
      %v1117 = vpack.c.bf16 %v1098, %v1097
      %v1118 = vpack.c.bf16 %v1100, %v1099
      %v1119 = vpack.c.bf16 %v1102, %v1101
      %v1120 = vpack.c.bf16 %v1104, %v1103
      %s1121 = scalar_lea.vmem %s3, 128
      %v1122 = vld [vmem:[%s1121] sm:$0xf]
      %v1123 = vld [vmem:[%s1121 + $0x4] sm:$0xf]
      %v1124 = vld [vmem:[%s1121 + $0x8] sm:$0xf]
      %v1125 = vld [vmem:[%s1121 + $0xc] sm:$0xf]
      %v1126 = vld [vmem:[%s1121 + $0x10] sm:$0xf]
      %v1127 = vld [vmem:[%s1121 + $0x14] sm:$0xf]
      %v1128 = vld [vmem:[%s1121 + $0x18] sm:$0xf]
      %v1129 = vld [vmem:[%s1121 + $0x1c] sm:$0xf]
      %v1130 = vld [vmem:[%s1121 + $0x20] sm:$0xf]
      %v1131 = vld [vmem:[%s1121 + $0x24] sm:$0xf]
      %v1132 = vld [vmem:[%s1121 + $0x28] sm:$0xf]
      %v1133 = vld [vmem:[%s1121 + $0x2c] sm:$0xf]
      %v1134 = vld [vmem:[%s1121 + $0x30] sm:$0xf]
      %v1135 = vld [vmem:[%s1121 + $0x34] sm:$0xf]
      %v1136 = vld [vmem:[%s1121 + $0x38] sm:$0xf]
      %v1137 = vld [vmem:[%s1121 + $0x3c] sm:$0xf]
      %v1154 = vunpack.c.l.b16 %v1122
      %v1155 = vunpack.c.l.b16 %v1123
      %v1156 = vunpack.c.l.b16 %v1124
      %v1157 = vunpack.c.l.b16 %v1125
      %v1158 = vunpack.c.l.b16 %v1126
      %v1159 = vunpack.c.l.b16 %v1127
      %v1160 = vunpack.c.l.b16 %v1128
      %v1161 = vunpack.c.l.b16 %v1129
      %v1162 = vunpack.c.l.b16 %v1130
      %v1163 = vunpack.c.l.b16 %v1131
      %v1164 = vunpack.c.l.b16 %v1132
      %v1165 = vunpack.c.l.b16 %v1133
      %v1166 = vunpack.c.l.b16 %v1134
      %v1167 = vunpack.c.l.b16 %v1135
      %v1168 = vunpack.c.l.b16 %v1136
      %v1169 = vunpack.c.l.b16 %v1137
      %v1170 = vpack.c.b16 %v1155, %v1154
      %v1171 = vpack.c.b16 %v1157, %v1156
      %v1172 = vpack.c.b16 %v1159, %v1158
      %v1173 = vpack.c.b16 %v1161, %v1160
      %v1174 = vpack.c.b16 %v1163, %v1162
      %v1175 = vpack.c.b16 %v1165, %v1164
      %v1176 = vpack.c.b16 %v1167, %v1166
      %v1177 = vpack.c.b16 %v1169, %v1168
      %1186 = vmatprep.subr.bf16.mxu0 0
      %1187 = vmatpush1.bf16.msra.mxu0 %v1170
      %1188 = vmatprep.subr.bf16.mxu0 0
      %1189 = vmatpush1.bf16.msra.mxu0 %v1171
      %1190 = vmatprep.subr.bf16.mxu0 0
      %1191 = vmatpush1.bf16.msra.mxu0 %v1172
      %1192 = vmatprep.subr.bf16.mxu0 0
      %1193 = vmatpush1.bf16.msra.mxu0 %v1173
      %1194 = vmatprep.subr.bf16.mxu0 0
      %1195 = vmatpush1.bf16.msra.mxu0 %v1174
      %1196 = vmatprep.subr.bf16.mxu0 0
      %1197 = vmatpush1.bf16.msra.mxu0 %v1175
      %1198 = vmatprep.subr.bf16.mxu0 0
      %1199 = vmatpush1.bf16.msra.mxu0 %v1176
      %1200 = vmatprep.subr.bf16.mxu0 0
      %1201 = vmatpush1.bf16.msra.mxu0 %v1177
      %1202 = vmatprep.subr.bf16.mxu0 0
      %1203 = vmatpush1.bf16.msra.mxu0 0
      %1204 = vmatprep.subr.bf16.mxu0 0
      %1205 = vmatpush1.bf16.msra.mxu0 0
      %1206 = vmatprep.subr.bf16.mxu0 0
      %1207 = vmatpush1.bf16.msra.mxu0 0
      %1208 = vmatprep.subr.bf16.mxu0 0
      %1209 = vmatpush1.bf16.msra.mxu0 0
      %1210 = vmatprep.subr.bf16.mxu0 0
      %1211 = vmatpush1.bf16.msra.mxu0 0
      %1212 = vmatprep.subr.bf16.mxu0 0
      %1213 = vmatpush1.bf16.msra.mxu0 0
      %1214 = vmatprep.subr.bf16.mxu0 0
      %1215 = vmatpush1.bf16.msra.mxu0 0
      %1216 = vmatprep.subr.bf16.mxu0 0
      %1217 = vmatpush1.bf16.msra.mxu0 0
      %1218 = vmatprep.mubr.bf16.mxu0 0
      %1219 = vmatmul.mubr.bf16.gmra.mrb[0].mxu0 %v1105
      %v1220 = vpop.f32.mrb[0].mxu0
      %v1221 = vadd.f32 0.0, %v1220
      %v1222 = vpop.f32.mrb[0].mxu0
      %v1223 = vpop.f32.mrb[0].mxu0
      %v1224 = vadd.f32 0.0, %v1223
      %v1225 = vpop.f32.mrb[0].mxu0
      %1226 = vmatprep.mubr.bf16.mxu0 0
      %1227 = vmatmul.mubr.bf16.gmra.mrb[0].mxu0 %v1106
      %v1228 = vpop.f32.mrb[0].mxu0
      %v1229 = vadd.f32 0.0, %v1228
      %v1230 = vpop.f32.mrb[0].mxu0
      %v1231 = vpop.f32.mrb[0].mxu0
      %v1232 = vadd.f32 0.0, %v1231
      %v1233 = vpop.f32.mrb[0].mxu0
      %1234 = vmatprep.mubr.bf16.mxu0 0
      %1235 = vmatmul.mubr.bf16.gmra.mrb[0].mxu0 %v1107
      %v1236 = vpop.f32.mrb[0].mxu0
      %v1237 = vadd.f32 0.0, %v1236
      %v1238 = vpop.f32.mrb[0].mxu0
      %v1239 = vpop.f32.mrb[0].mxu0
      %v1240 = vadd.f32 0.0, %v1239
      %v1241 = vpop.f32.mrb[0].mxu0
      %1242 = vmatprep.mubr.bf16.mxu0 0
      %1243 = vmatmul.mubr.bf16.gmra.mrb[0].mxu0 %v1108
      %v1244 = vpop.f32.mrb[0].mxu0
      %v1245 = vadd.f32 0.0, %v1244
      %v1246 = vpop.f32.mrb[0].mxu0
      %v1247 = vpop.f32.mrb[0].mxu0
      %v1248 = vadd.f32 0.0, %v1247
      %v1249 = vpop.f32.mrb[0].mxu0
      %1250 = vmatprep.mubr.bf16.mxu0 0
      %1251 = vmatmul.mubr.bf16.gmra.mrb[0].mxu0 %v1109
      %v1252 = vpop.f32.mrb[0].mxu0
      %v1253 = vadd.f32 0.0, %v1252
      %v1254 = vpop.f32.mrb[0].mxu0
      %v1255 = vpop.f32.mrb[0].mxu0
      %v1256 = vadd.f32 0.0, %v1255
      %v1257 = vpop.f32.mrb[0].mxu0
      %1258 = vmatprep.mubr.bf16.mxu0 0
      %1259 = vmatmul.mubr.bf16.gmra.mrb[0].mxu0 %v1110
      %v1260 = vpop.f32.mrb[0].mxu0
      %v1261 = vadd.f32 0.0, %v1260
      %v1262 = vpop.f32.mrb[0].mxu0
      %v1263 = vpop.f32.mrb[0].mxu0
      %v1264 = vadd.f32 0.0, %v1263
      %v1265 = vpop.f32.mrb[0].mxu0
      %1266 = vmatprep.mubr.bf16.mxu0 0
      %1267 = vmatmul.mubr.bf16.gmra.mrb[0].mxu0 %v1111
      %v1268 = vpop.f32.mrb[0].mxu0
      %v1269 = vadd.f32 0.0, %v1268
      %v1270 = vpop.f32.mrb[0].mxu0
      %v1271 = vpop.f32.mrb[0].mxu0
      %v1272 = vadd.f32 0.0, %v1271
      %v1273 = vpop.f32.mrb[0].mxu0
      %1274 = vmatprep.mubr.bf16.mxu0 0
      %1275 = vmatmul.mubr.bf16.gmra.mrb[0].mxu0 %v1112
      %v1276 = vpop.f32.mrb[0].mxu0
      %v1277 = vadd.f32 0.0, %v1276
      %v1278 = vpop.f32.mrb[0].mxu0
      %v1279 = vpop.f32.mrb[0].mxu0
      %v1280 = vadd.f32 0.0, %v1279
      %v1281 = vpop.f32.mrb[0].mxu0
      %1282 = vmatprep.mubr.bf16.mxu0 0
      %1283 = vmatmul.mubr.bf16.gmra.mrb[0].mxu0 %v1113
      %v1284 = vpop.f32.mrb[0].mxu0
      %v1285 = vadd.f32 0.0, %v1284
      %v1286 = vpop.f32.mrb[0].mxu0
      %v1287 = vpop.f32.mrb[0].mxu0
      %v1288 = vadd.f32 0.0, %v1287
      %v1289 = vpop.f32.mrb[0].mxu0
      %1290 = vmatprep.mubr.bf16.mxu0 0
      %1291 = vmatmul.mubr.bf16.gmra.mrb[0].mxu0 %v1114
      %v1292 = vpop.f32.mrb[0].mxu0
      %v1293 = vadd.f32 0.0, %v1292
      %v1294 = vpop.f32.mrb[0].mxu0
      %v1295 = vpop.f32.mrb[0].mxu0
      %v1296 = vadd.f32 0.0, %v1295
      %v1297 = vpop.f32.mrb[0].mxu0
      %1298 = vmatprep.mubr.bf16.mxu0 0
      %1299 = vmatmul.mubr.bf16.gmra.mrb[0].mxu0 %v1115
      %v1300 = vpop.f32.mrb[0].mxu0
      %v1301 = vadd.f32 0.0, %v1300
      %v1302 = vpop.f32.mrb[0].mxu0
      %v1303 = vpop.f32.mrb[0].mxu0
      %v1304 = vadd.f32 0.0, %v1303
      %v1305 = vpop.f32.mrb[0].mxu0
      %1306 = vmatprep.mubr.bf16.mxu0 0
      %1307 = vmatmul.mubr.bf16.gmra.mrb[0].mxu0 %v1116
      %v1308 = vpop.f32.mrb[0].mxu0
      %v1309 = vadd.f32 0.0, %v1308
      %v1310 = vpop.f32.mrb[0].mxu0
      %v1311 = vpop.f32.mrb[0].mxu0
      %v1312 = vadd.f32 0.0, %v1311
      %v1313 = vpop.f32.mrb[0].mxu0
      %1314 = vmatprep.mubr.bf16.mxu0 0
      %1315 = vmatmul.mubr.bf16.gmra.mrb[0].mxu0 %v1117
      %v1316 = vpop.f32.mrb[0].mxu0
      %v1317 = vadd.f32 0.0, %v1316
      %v1318 = vpop.f32.mrb[0].mxu0
      %v1319 = vpop.f32.mrb[0].mxu0
      %v1320 = vadd.f32 0.0, %v1319
      %v1321 = vpop.f32.mrb[0].mxu0
      %1322 = vmatprep.mubr.bf16.mxu0 0
      %1323 = vmatmul.mubr.bf16.gmra.mrb[0].mxu0 %v1118
      %v1324 = vpop.f32.mrb[0].mxu0
      %v1325 = vadd.f32 0.0, %v1324
      %v1326 = vpop.f32.mrb[0].mxu0
      %v1327 = vpop.f32.mrb[0].mxu0
      %v1328 = vadd.f32 0.0, %v1327
      %v1329 = vpop.f32.mrb[0].mxu0
      %1330 = vmatprep.mubr.bf16.mxu0 0
      %1331 = vmatmul.mubr.bf16.gmra.mrb[0].mxu0 %v1119
      %v1332 = vpop.f32.mrb[0].mxu0
      %v1333 = vadd.f32 0.0, %v1332
      %v1334 = vpop.f32.mrb[0].mxu0
      %v1335 = vpop.f32.mrb[0].mxu0
      %v1336 = vadd.f32 0.0, %v1335
      %v1337 = vpop.f32.mrb[0].mxu0
      %1338 = vmatprep.mubr.bf16.mxu0 0
      %1339 = vmatmul.mubr.bf16.gmra.mrb[0].mxu0 %v1120
      %v1340 = vpop.f32.mrb[0].mxu0
      %v1341 = vadd.f32 0.0, %v1340
      %v1342 = vpop.f32.mrb[0].mxu0
      %v1343 = vpop.f32.mrb[0].mxu0
      %v1344 = vadd.f32 0.0, %v1343
      %v1345 = vpop.f32.mrb[0].mxu0
      %1346 = vdwg.mxu0
      %v1347 = vadd.f32 %v947, %v1221
      %v1348 = vadd.f32 %v950, %v1224
      %v1349 = vadd.f32 %v955, %v1229
      %v1350 = vadd.f32 %v958, %v1232
      %v1351 = vadd.f32 %v963, %v1237
      %v1352 = vadd.f32 %v966, %v1240
      %v1353 = vadd.f32 %v971, %v1245
      %v1354 = vadd.f32 %v974, %v1248
      %v1355 = vadd.f32 %v979, %v1253
      %v1356 = vadd.f32 %v982, %v1256
      %v1357 = vadd.f32 %v987, %v1261
      %v1358 = vadd.f32 %v990, %v1264
      %v1359 = vadd.f32 %v995, %v1269
      %v1360 = vadd.f32 %v998, %v1272
      %v1361 = vadd.f32 %v1003, %v1277
      %v1362 = vadd.f32 %v1006, %v1280
      %v1363 = vadd.f32 %v1011, %v1285
      %v1364 = vadd.f32 %v1014, %v1288
      %v1365 = vadd.f32 %v1019, %v1293
      %v1366 = vadd.f32 %v1022, %v1296
      %v1367 = vadd.f32 %v1027, %v1301
      %v1368 = vadd.f32 %v1030, %v1304
      %v1369 = vadd.f32 %v1035, %v1309
      %v1370 = vadd.f32 %v1038, %v1312
      %v1371 = vadd.f32 %v1043, %v1317
      %v1372 = vadd.f32 %v1046, %v1320
      %v1373 = vadd.f32 %v1051, %v1325
      %v1374 = vadd.f32 %v1054, %v1328
      %v1375 = vadd.f32 %v1059, %v1333
      %v1376 = vadd.f32 %v1062, %v1336
      %v1377 = vadd.f32 %v1067, %v1341
      %v1378 = vadd.f32 %v1070, %v1344
      %v1379 = vld [vmem:[%s493 + $0x7] sm:$0xff]
      %v1380 = vld [vmem:[%s493 + $0xf] sm:$0xff]
      %v1381 = vld [vmem:[%s493 + $0x27] sm:$0xff]
      %v1382 = vld [vmem:[%s493 + $0x2f] sm:$0xff]
      %v1383 = vld [vmem:[%s493 + $0x47] sm:$0xff]
      %v1384 = vld [vmem:[%s493 + $0x4f] sm:$0xff]
      %v1385 = vld [vmem:[%s493 + $0x67] sm:$0xff]
      %v1386 = vld [vmem:[%s493 + $0x6f] sm:$0xff]
      %v1387 = vld [vmem:[%s493 + $0x87] sm:$0xff]
      %v1388 = vld [vmem:[%s493 + $0x8f] sm:$0xff]
      %v1389 = vld [vmem:[%s493 + $0xa7] sm:$0xff]
      %v1390 = vld [vmem:[%s493 + $0xaf] sm:$0xff]
      %v1391 = vld [vmem:[%s493 + $0xc7] sm:$0xff]
      %v1392 = vld [vmem:[%s493 + $0xcf] sm:$0xff]
      %v1393 = vld [vmem:[%s493 + $0xe7] sm:$0xff]
      %v1394 = vld [vmem:[%s493 + $0xef] sm:$0xff]
      %v1395 = vld [vmem:[%s493 + $0x107] sm:$0xff]
      %v1396 = vld [vmem:[%s493 + $0x10f] sm:$0xff]
      %v1397 = vld [vmem:[%s493 + $0x127] sm:$0xff]
      %v1398 = vld [vmem:[%s493 + $0x12f] sm:$0xff]
      %v1399 = vld [vmem:[%s493 + $0x147] sm:$0xff]
      %v1400 = vld [vmem:[%s493 + $0x14f] sm:$0xff]
      %v1401 = vld [vmem:[%s493 + $0x167] sm:$0xff]
      %v1402 = vld [vmem:[%s493 + $0x16f] sm:$0xff]
      %v1403 = vld [vmem:[%s493 + $0x187] sm:$0xff]
      %v1404 = vld [vmem:[%s493 + $0x18f] sm:$0xff]
      %v1405 = vld [vmem:[%s493 + $0x1a7] sm:$0xff]
      %v1406 = vld [vmem:[%s493 + $0x1af] sm:$0xff]
      %v1407 = vld [vmem:[%s493 + $0x1c7] sm:$0xff]
      %v1408 = vld [vmem:[%s493 + $0x1cf] sm:$0xff]
      %v1409 = vld [vmem:[%s493 + $0x1e7] sm:$0xff]
      %v1410 = vld [vmem:[%s493 + $0x1ef] sm:$0xff]
      %v1411 = vpack.c.bf16 %v1380, %v1379
      %v1412 = vpack.c.bf16 %v1382, %v1381
      %v1413 = vpack.c.bf16 %v1384, %v1383
      %v1414 = vpack.c.bf16 %v1386, %v1385
      %v1415 = vpack.c.bf16 %v1388, %v1387
      %v1416 = vpack.c.bf16 %v1390, %v1389
      %v1417 = vpack.c.bf16 %v1392, %v1391
      %v1418 = vpack.c.bf16 %v1394, %v1393
      %v1419 = vpack.c.bf16 %v1396, %v1395
      %v1420 = vpack.c.bf16 %v1398, %v1397
      %v1421 = vpack.c.bf16 %v1400, %v1399
      %v1422 = vpack.c.bf16 %v1402, %v1401
      %v1423 = vpack.c.bf16 %v1404, %v1403
      %v1424 = vpack.c.bf16 %v1406, %v1405
      %v1425 = vpack.c.bf16 %v1408, %v1407
      %v1426 = vpack.c.bf16 %v1410, %v1409
      %s1427 = scalar_lea.vmem %s3, 192
      %v1428 = vld [vmem:[%s1427] sm:$0xf]
      %v1429 = vld [vmem:[%s1427 + $0x4] sm:$0xf]
      %v1430 = vld [vmem:[%s1427 + $0x8] sm:$0xf]
      %v1431 = vld [vmem:[%s1427 + $0xc] sm:$0xf]
      %v1432 = vld [vmem:[%s1427 + $0x10] sm:$0xf]
      %v1433 = vld [vmem:[%s1427 + $0x14] sm:$0xf]
      %v1434 = vld [vmem:[%s1427 + $0x18] sm:$0xf]
      %v1435 = vld [vmem:[%s1427 + $0x1c] sm:$0xf]
      %v1436 = vld [vmem:[%s1427 + $0x20] sm:$0xf]
      %v1437 = vld [vmem:[%s1427 + $0x24] sm:$0xf]
      %v1438 = vld [vmem:[%s1427 + $0x28] sm:$0xf]
      %v1439 = vld [vmem:[%s1427 + $0x2c] sm:$0xf]
      %v1440 = vld [vmem:[%s1427 + $0x30] sm:$0xf]
      %v1441 = vld [vmem:[%s1427 + $0x34] sm:$0xf]
      %v1442 = vld [vmem:[%s1427 + $0x38] sm:$0xf]
      %v1443 = vld [vmem:[%s1427 + $0x3c] sm:$0xf]
      %v1460 = vunpack.c.l.b16 %v1428
      %v1461 = vunpack.c.l.b16 %v1429
      %v1462 = vunpack.c.l.b16 %v1430
      %v1463 = vunpack.c.l.b16 %v1431
      %v1464 = vunpack.c.l.b16 %v1432
      %v1465 = vunpack.c.l.b16 %v1433
      %v1466 = vunpack.c.l.b16 %v1434
      %v1467 = vunpack.c.l.b16 %v1435
      %v1468 = vunpack.c.l.b16 %v1436
      %v1469 = vunpack.c.l.b16 %v1437
      %v1470 = vunpack.c.l.b16 %v1438
      %v1471 = vunpack.c.l.b16 %v1439
      %v1472 = vunpack.c.l.b16 %v1440
      %v1473 = vunpack.c.l.b16 %v1441
      %v1474 = vunpack.c.l.b16 %v1442
      %v1475 = vunpack.c.l.b16 %v1443
      %v1476 = vpack.c.b16 %v1461, %v1460
      %v1477 = vpack.c.b16 %v1463, %v1462
      %v1478 = vpack.c.b16 %v1465, %v1464
      %v1479 = vpack.c.b16 %v1467, %v1466
      %v1480 = vpack.c.b16 %v1469, %v1468
      %v1481 = vpack.c.b16 %v1471, %v1470
      %v1482 = vpack.c.b16 %v1473, %v1472
      %v1483 = vpack.c.b16 %v1475, %v1474
      %1492 = vmatprep.subr.bf16.mxu0 0
      %1493 = vmatpush1.bf16.msra.mxu0 %v1476
      %1494 = vmatprep.subr.bf16.mxu0 0
      %1495 = vmatpush1.bf16.msra.mxu0 %v1477
      %1496 = vmatprep.subr.bf16.mxu0 0
      %1497 = vmatpush1.bf16.msra.mxu0 %v1478
      %1498 = vmatprep.subr.bf16.mxu0 0
      %1499 = vmatpush1.bf16.msra.mxu0 %v1479
      %1500 = vmatprep.subr.bf16.mxu0 0
      %1501 = vmatpush1.bf16.msra.mxu0 %v1480
      %1502 = vmatprep.subr.bf16.mxu0 0
      %1503 = vmatpush1.bf16.msra.mxu0 %v1481
      %1504 = vmatprep.subr.bf16.mxu0 0
      %1505 = vmatpush1.bf16.msra.mxu0 %v1482
      %1506 = vmatprep.subr.bf16.mxu0 0
      %1507 = vmatpush1.bf16.msra.mxu0 %v1483
      %1508 = vmatprep.subr.bf16.mxu0 0
      %1509 = vmatpush1.bf16.msra.mxu0 0
      %1510 = vmatprep.subr.bf16.mxu0 0
      %1511 = vmatpush1.bf16.msra.mxu0 0
      %1512 = vmatprep.subr.bf16.mxu0 0
      %1513 = vmatpush1.bf16.msra.mxu0 0
      %1514 = vmatprep.subr.bf16.mxu0 0
      %1515 = vmatpush1.bf16.msra.mxu0 0
      %1516 = vmatprep.subr.bf16.mxu0 0
      %1517 = vmatpush1.bf16.msra.mxu0 0
      %1518 = vmatprep.subr.bf16.mxu0 0
      %1519 = vmatpush1.bf16.msra.mxu0 0
      %1520 = vmatprep.subr.bf16.mxu0 0
      %1521 = vmatpush1.bf16.msra.mxu0 0
      %1522 = vmatprep.subr.bf16.mxu0 0
      %1523 = vmatpush1.bf16.msra.mxu0 0
      %1524 = vmatprep.mubr.bf16.mxu0 0
      %1525 = vmatmul.mubr.bf16.gmra.mrb[0].mxu0 %v1411
      %v1526 = vpop.f32.mrb[0].mxu0
      %v1527 = vadd.f32 0.0, %v1526
      %v1528 = vpop.f32.mrb[0].mxu0
      %v1529 = vpop.f32.mrb[0].mxu0
      %v1530 = vadd.f32 0.0, %v1529
      %v1531 = vpop.f32.mrb[0].mxu0
      %1532 = vmatprep.mubr.bf16.mxu0 0
      %1533 = vmatmul.mubr.bf16.gmra.mrb[0].mxu0 %v1412
      %v1534 = vpop.f32.mrb[0].mxu0
      %v1535 = vadd.f32 0.0, %v1534
      %v1536 = vpop.f32.mrb[0].mxu0
      %v1537 = vpop.f32.mrb[0].mxu0
      %v1538 = vadd.f32 0.0, %v1537
      %v1539 = vpop.f32.mrb[0].mxu0
      %1540 = vmatprep.mubr.bf16.mxu0 0
      %1541 = vmatmul.mubr.bf16.gmra.mrb[0].mxu0 %v1413
      %v1542 = vpop.f32.mrb[0].mxu0
      %v1543 = vadd.f32 0.0, %v1542
      %v1544 = vpop.f32.mrb[0].mxu0
      %v1545 = vpop.f32.mrb[0].mxu0
      %v1546 = vadd.f32 0.0, %v1545
      %v1547 = vpop.f32.mrb[0].mxu0
      %1548 = vmatprep.mubr.bf16.mxu0 0
      %1549 = vmatmul.mubr.bf16.gmra.mrb[0].mxu0 %v1414
      %v1550 = vpop.f32.mrb[0].mxu0
      %v1551 = vadd.f32 0.0, %v1550
      %v1552 = vpop.f32.mrb[0].mxu0
      %v1553 = vpop.f32.mrb[0].mxu0
      %v1554 = vadd.f32 0.0, %v1553
      %v1555 = vpop.f32.mrb[0].mxu0
      %1556 = vmatprep.mubr.bf16.mxu0 0
      %1557 = vmatmul.mubr.bf16.gmra.mrb[0].mxu0 %v1415
      %v1558 = vpop.f32.mrb[0].mxu0
      %v1559 = vadd.f32 0.0, %v1558
      %v1560 = vpop.f32.mrb[0].mxu0
      %v1561 = vpop.f32.mrb[0].mxu0
      %v1562 = vadd.f32 0.0, %v1561
      %v1563 = vpop.f32.mrb[0].mxu0
      %1564 = vmatprep.mubr.bf16.mxu0 0
      %1565 = vmatmul.mubr.bf16.gmra.mrb[0].mxu0 %v1416
      %v1566 = vpop.f32.mrb[0].mxu0
      %v1567 = vadd.f32 0.0, %v1566
      %v1568 = vpop.f32.mrb[0].mxu0
      %v1569 = vpop.f32.mrb[0].mxu0
      %v1570 = vadd.f32 0.0, %v1569
      %v1571 = vpop.f32.mrb[0].mxu0
      %1572 = vmatprep.mubr.bf16.mxu0 0
      %1573 = vmatmul.mubr.bf16.gmra.mrb[0].mxu0 %v1417
      %v1574 = vpop.f32.mrb[0].mxu0
      %v1575 = vadd.f32 0.0, %v1574
      %v1576 = vpop.f32.mrb[0].mxu0
      %v1577 = vpop.f32.mrb[0].mxu0
      %v1578 = vadd.f32 0.0, %v1577
      %v1579 = vpop.f32.mrb[0].mxu0
      %1580 = vmatprep.mubr.bf16.mxu0 0
      %1581 = vmatmul.mubr.bf16.gmra.mrb[0].mxu0 %v1418
      %v1582 = vpop.f32.mrb[0].mxu0
      %v1583 = vadd.f32 0.0, %v1582
      %v1584 = vpop.f32.mrb[0].mxu0
      %v1585 = vpop.f32.mrb[0].mxu0
      %v1586 = vadd.f32 0.0, %v1585
      %v1587 = vpop.f32.mrb[0].mxu0
      %1588 = vmatprep.mubr.bf16.mxu0 0
      %1589 = vmatmul.mubr.bf16.gmra.mrb[0].mxu0 %v1419
      %v1590 = vpop.f32.mrb[0].mxu0
      %v1591 = vadd.f32 0.0, %v1590
      %v1592 = vpop.f32.mrb[0].mxu0
      %v1593 = vpop.f32.mrb[0].mxu0
      %v1594 = vadd.f32 0.0, %v1593
      %v1595 = vpop.f32.mrb[0].mxu0
      %1596 = vmatprep.mubr.bf16.mxu0 0
      %1597 = vmatmul.mubr.bf16.gmra.mrb[0].mxu0 %v1420
      %v1598 = vpop.f32.mrb[0].mxu0
      %v1599 = vadd.f32 0.0, %v1598
      %v1600 = vpop.f32.mrb[0].mxu0
      %v1601 = vpop.f32.mrb[0].mxu0
      %v1602 = vadd.f32 0.0, %v1601
      %v1603 = vpop.f32.mrb[0].mxu0
      %1604 = vmatprep.mubr.bf16.mxu0 0
      %1605 = vmatmul.mubr.bf16.gmra.mrb[0].mxu0 %v1421
      %v1606 = vpop.f32.mrb[0].mxu0
      %v1607 = vadd.f32 0.0, %v1606
      %v1608 = vpop.f32.mrb[0].mxu0
      %v1609 = vpop.f32.mrb[0].mxu0
      %v1610 = vadd.f32 0.0, %v1609
      %v1611 = vpop.f32.mrb[0].mxu0
      %1612 = vmatprep.mubr.bf16.mxu0 0
      %1613 = vmatmul.mubr.bf16.gmra.mrb[0].mxu0 %v1422
      %v1614 = vpop.f32.mrb[0].mxu0
      %v1615 = vadd.f32 0.0, %v1614
      %v1616 = vpop.f32.mrb[0].mxu0
      %v1617 = vpop.f32.mrb[0].mxu0
      %v1618 = vadd.f32 0.0, %v1617
      %v1619 = vpop.f32.mrb[0].mxu0
      %1620 = vmatprep.mubr.bf16.mxu0 0
      %1621 = vmatmul.mubr.bf16.gmra.mrb[0].mxu0 %v1423
      %v1622 = vpop.f32.mrb[0].mxu0
      %v1623 = vadd.f32 0.0, %v1622
      %v1624 = vpop.f32.mrb[0].mxu0
      %v1625 = vpop.f32.mrb[0].mxu0
      %v1626 = vadd.f32 0.0, %v1625
      %v1627 = vpop.f32.mrb[0].mxu0
      %1628 = vmatprep.mubr.bf16.mxu0 0
      %1629 = vmatmul.mubr.bf16.gmra.mrb[0].mxu0 %v1424
      %v1630 = vpop.f32.mrb[0].mxu0
      %v1631 = vadd.f32 0.0, %v1630
      %v1632 = vpop.f32.mrb[0].mxu0
      %v1633 = vpop.f32.mrb[0].mxu0
      %v1634 = vadd.f32 0.0, %v1633
      %v1635 = vpop.f32.mrb[0].mxu0
      %1636 = vmatprep.mubr.bf16.mxu0 0
      %1637 = vmatmul.mubr.bf16.gmra.mrb[0].mxu0 %v1425
      %v1638 = vpop.f32.mrb[0].mxu0
      %v1639 = vadd.f32 0.0, %v1638
      %v1640 = vpop.f32.mrb[0].mxu0
      %v1641 = vpop.f32.mrb[0].mxu0
      %v1642 = vadd.f32 0.0, %v1641
      %v1643 = vpop.f32.mrb[0].mxu0
      %1644 = vmatprep.mubr.bf16.mxu0 0
      %1645 = vmatmul.mubr.bf16.gmra.mrb[0].mxu0 %v1426
      %v1646 = vpop.f32.mrb[0].mxu0
      %v1647 = vadd.f32 0.0, %v1646
      %v1648 = vpop.f32.mrb[0].mxu0
      %v1649 = vpop.f32.mrb[0].mxu0
      %v1650 = vadd.f32 0.0, %v1649
      %v1651 = vpop.f32.mrb[0].mxu0
      %1652 = vdwg.mxu0
      %v1653 = vadd.f32 %v1347, %v1527
      %v1654 = vadd.f32 %v1348, %v1530
      %v1655 = vadd.f32 %v1349, %v1535
      %v1656 = vadd.f32 %v1350, %v1538
      %v1657 = vadd.f32 %v1351, %v1543
      %v1658 = vadd.f32 %v1352, %v1546
      %v1659 = vadd.f32 %v1353, %v1551
      %v1660 = vadd.f32 %v1354, %v1554
      %v1661 = vadd.f32 %v1355, %v1559
      %v1662 = vadd.f32 %v1356, %v1562
      %v1663 = vadd.f32 %v1357, %v1567
      %v1664 = vadd.f32 %v1358, %v1570
      %v1665 = vadd.f32 %v1359, %v1575
      %v1666 = vadd.f32 %v1360, %v1578
      %v1667 = vadd.f32 %v1361, %v1583
      %v1668 = vadd.f32 %v1362, %v1586
      %v1669 = vadd.f32 %v1363, %v1591
      %v1670 = vadd.f32 %v1364, %v1594
      %v1671 = vadd.f32 %v1365, %v1599
      %v1672 = vadd.f32 %v1366, %v1602
      %v1673 = vadd.f32 %v1367, %v1607
      %v1674 = vadd.f32 %v1368, %v1610
      %v1675 = vadd.f32 %v1369, %v1615
      %v1676 = vadd.f32 %v1370, %v1618
      %v1677 = vadd.f32 %v1371, %v1623
      %v1678 = vadd.f32 %v1372, %v1626
      %v1679 = vadd.f32 %v1373, %v1631
      %v1680 = vadd.f32 %v1374, %v1634
      %v1681 = vadd.f32 %v1375, %v1639
      %v1682 = vadd.f32 %v1376, %v1642
      %v1683 = vadd.f32 %v1377, %v1647
      %v1684 = vadd.f32 %v1378, %v1650
      %v1685 = vld [vmem:[%s493 + $0x8] sm:$0xff]
      %v1686 = vld [vmem:[%s493 + $0x10] sm:$0xff]
      %v1687 = vld [vmem:[%s493 + $0x28] sm:$0xff]
      %v1688 = vld [vmem:[%s493 + $0x30] sm:$0xff]
      %v1689 = vld [vmem:[%s493 + $0x48] sm:$0xff]
      %v1690 = vld [vmem:[%s493 + $0x50] sm:$0xff]
      %v1691 = vld [vmem:[%s493 + $0x68] sm:$0xff]
      %v1692 = vld [vmem:[%s493 + $0x70] sm:$0xff]
      %v1693 = vld [vmem:[%s493 + $0x88] sm:$0xff]
      %v1694 = vld [vmem:[%s493 + $0x90] sm:$0xff]
      %v1695 = vld [vmem:[%s493 + $0xa8] sm:$0xff]
      %v1696 = vld [vmem:[%s493 + $0xb0] sm:$0xff]
      %v1697 = vld [vmem:[%s493 + $0xc8] sm:$0xff]
      %v1698 = vld [vmem:[%s493 + $0xd0] sm:$0xff]
      %v1699 = vld [vmem:[%s493 + $0xe8] sm:$0xff]
      %v1700 = vld [vmem:[%s493 + $0xf0] sm:$0xff]
      %v1701 = vld [vmem:[%s493 + $0x108] sm:$0xff]
      %v1702 = vld [vmem:[%s493 + $0x110] sm:$0xff]
      %v1703 = vld [vmem:[%s493 + $0x128] sm:$0xff]
      %v1704 = vld [vmem:[%s493 + $0x130] sm:$0xff]
      %v1705 = vld [vmem:[%s493 + $0x148] sm:$0xff]
      %v1706 = vld [vmem:[%s493 + $0x150] sm:$0xff]
      %v1707 = vld [vmem:[%s493 + $0x168] sm:$0xff]
      %v1708 = vld [vmem:[%s493 + $0x170] sm:$0xff]
      %v1709 = vld [vmem:[%s493 + $0x188] sm:$0xff]
      %v1710 = vld [vmem:[%s493 + $0x190] sm:$0xff]
      %v1711 = vld [vmem:[%s493 + $0x1a8] sm:$0xff]
      %v1712 = vld [vmem:[%s493 + $0x1b0] sm:$0xff]
      %v1713 = vld [vmem:[%s493 + $0x1c8] sm:$0xff]
      %v1714 = vld [vmem:[%s493 + $0x1d0] sm:$0xff]
      %v1715 = vld [vmem:[%s493 + $0x1e8] sm:$0xff]
      %v1716 = vld [vmem:[%s493 + $0x1f0] sm:$0xff]
      %v1717 = vpack.c.bf16 %v1686, %v1685
      %v1718 = vpack.c.bf16 %v1688, %v1687
      %v1719 = vpack.c.bf16 %v1690, %v1689
      %v1720 = vpack.c.bf16 %v1692, %v1691
      %v1721 = vpack.c.bf16 %v1694, %v1693
      %v1722 = vpack.c.bf16 %v1696, %v1695
      %v1723 = vpack.c.bf16 %v1698, %v1697
      %v1724 = vpack.c.bf16 %v1700, %v1699
      %v1725 = vpack.c.bf16 %v1702, %v1701
      %v1726 = vpack.c.bf16 %v1704, %v1703
      %v1727 = vpack.c.bf16 %v1706, %v1705
      %v1728 = vpack.c.bf16 %v1708, %v1707
      %v1729 = vpack.c.bf16 %v1710, %v1709
      %v1730 = vpack.c.bf16 %v1712, %v1711
      %v1731 = vpack.c.bf16 %v1714, %v1713
      %v1732 = vpack.c.bf16 %v1716, %v1715
      %s1733 = scalar_lea.vmem %s3, 256
      %v1734 = vld [vmem:[%s1733] sm:$0xf]
      %v1735 = vld [vmem:[%s1733 + $0x4] sm:$0xf]
      %v1736 = vld [vmem:[%s1733 + $0x8] sm:$0xf]
      %v1737 = vld [vmem:[%s1733 + $0xc] sm:$0xf]
      %v1738 = vld [vmem:[%s1733 + $0x10] sm:$0xf]
      %v1739 = vld [vmem:[%s1733 + $0x14] sm:$0xf]
      %v1740 = vld [vmem:[%s1733 + $0x18] sm:$0xf]
      %v1741 = vld [vmem:[%s1733 + $0x1c] sm:$0xf]
      %v1742 = vld [vmem:[%s1733 + $0x20] sm:$0xf]
      %v1743 = vld [vmem:[%s1733 + $0x24] sm:$0xf]
      %v1744 = vld [vmem:[%s1733 + $0x28] sm:$0xf]
      %v1745 = vld [vmem:[%s1733 + $0x2c] sm:$0xf]
      %v1746 = vld [vmem:[%s1733 + $0x30] sm:$0xf]
      %v1747 = vld [vmem:[%s1733 + $0x34] sm:$0xf]
      %v1748 = vld [vmem:[%s1733 + $0x38] sm:$0xf]
      %v1749 = vld [vmem:[%s1733 + $0x3c] sm:$0xf]
      %v1766 = vunpack.c.l.b16 %v1734
      %v1767 = vunpack.c.l.b16 %v1735
      %v1768 = vunpack.c.l.b16 %v1736
      %v1769 = vunpack.c.l.b16 %v1737
      %v1770 = vunpack.c.l.b16 %v1738
      %v1771 = vunpack.c.l.b16 %v1739
      %v1772 = vunpack.c.l.b16 %v1740
      %v1773 = vunpack.c.l.b16 %v1741
      %v1774 = vunpack.c.l.b16 %v1742
      %v1775 = vunpack.c.l.b16 %v1743
      %v1776 = vunpack.c.l.b16 %v1744
      %v1777 = vunpack.c.l.b16 %v1745
      %v1778 = vunpack.c.l.b16 %v1746
      %v1779 = vunpack.c.l.b16 %v1747
      %v1780 = vunpack.c.l.b16 %v1748
      %v1781 = vunpack.c.l.b16 %v1749
      %v1782 = vpack.c.b16 %v1767, %v1766
      %v1783 = vpack.c.b16 %v1769, %v1768
      %v1784 = vpack.c.b16 %v1771, %v1770
      %v1785 = vpack.c.b16 %v1773, %v1772
      %v1786 = vpack.c.b16 %v1775, %v1774
      %v1787 = vpack.c.b16 %v1777, %v1776
      %v1788 = vpack.c.b16 %v1779, %v1778
      %v1789 = vpack.c.b16 %v1781, %v1780
      %1798 = vmatprep.subr.bf16.mxu0 0
      %1799 = vmatpush1.bf16.msra.mxu0 %v1782
      %1800 = vmatprep.subr.bf16.mxu0 0
      %1801 = vmatpush1.bf16.msra.mxu0 %v1783
      %1802 = vmatprep.subr.bf16.mxu0 0
      %1803 = vmatpush1.bf16.msra.mxu0 %v1784
      %1804 = vmatprep.subr.bf16.mxu0 0
      %1805 = vmatpush1.bf16.msra.mxu0 %v1785
      %1806 = vmatprep.subr.bf16.mxu0 0
      %1807 = vmatpush1.bf16.msra.mxu0 %v1786
      %1808 = vmatprep.subr.bf16.mxu0 0
      %1809 = vmatpush1.bf16.msra.mxu0 %v1787
      %1810 = vmatprep.subr.bf16.mxu0 0
      %1811 = vmatpush1.bf16.msra.mxu0 %v1788
      %1812 = vmatprep.subr.bf16.mxu0 0
      %1813 = vmatpush1.bf16.msra.mxu0 %v1789
      %1814 = vmatprep.subr.bf16.mxu0 0
      %1815 = vmatpush1.bf16.msra.mxu0 0
      %1816 = vmatprep.subr.bf16.mxu0 0
      %1817 = vmatpush1.bf16.msra.mxu0 0
      %1818 = vmatprep.subr.bf16.mxu0 0
      %1819 = vmatpush1.bf16.msra.mxu0 0
      %1820 = vmatprep.subr.bf16.mxu0 0
      %1821 = vmatpush1.bf16.msra.mxu0 0
      %1822 = vmatprep.subr.bf16.mxu0 0
      %1823 = vmatpush1.bf16.msra.mxu0 0
      %1824 = vmatprep.subr.bf16.mxu0 0
      %1825 = vmatpush1.bf16.msra.mxu0 0
      %1826 = vmatprep.subr.bf16.mxu0 0
      %1827 = vmatpush1.bf16.msra.mxu0 0
      %1828 = vmatprep.subr.bf16.mxu0 0
      %1829 = vmatpush1.bf16.msra.mxu0 0
      %1830 = vmatprep.mubr.bf16.mxu0 0
      %1831 = vmatmul.mubr.bf16.gmra.mrb[0].mxu0 %v1717
      %v1832 = vpop.f32.mrb[0].mxu0
      %v1833 = vadd.f32 0.0, %v1832
      %v1834 = vpop.f32.mrb[0].mxu0
      %v1835 = vpop.f32.mrb[0].mxu0
      %v1836 = vadd.f32 0.0, %v1835
      %v1837 = vpop.f32.mrb[0].mxu0
      %1838 = vmatprep.mubr.bf16.mxu0 0
      %1839 = vmatmul.mubr.bf16.gmra.mrb[0].mxu0 %v1718
      %v1840 = vpop.f32.mrb[0].mxu0
      %v1841 = vadd.f32 0.0, %v1840
      %v1842 = vpop.f32.mrb[0].mxu0
      %v1843 = vpop.f32.mrb[0].mxu0
      %v1844 = vadd.f32 0.0, %v1843
      %v1845 = vpop.f32.mrb[0].mxu0
      %1846 = vmatprep.mubr.bf16.mxu0 0
      %1847 = vmatmul.mubr.bf16.gmra.mrb[0].mxu0 %v1719
      %v1848 = vpop.f32.mrb[0].mxu0
      %v1849 = vadd.f32 0.0, %v1848
      %v1850 = vpop.f32.mrb[0].mxu0
      %v1851 = vpop.f32.mrb[0].mxu0
      %v1852 = vadd.f32 0.0, %v1851
      %v1853 = vpop.f32.mrb[0].mxu0
      %1854 = vmatprep.mubr.bf16.mxu0 0
      %1855 = vmatmul.mubr.bf16.gmra.mrb[0].mxu0 %v1720
      %v1856 = vpop.f32.mrb[0].mxu0
      %v1857 = vadd.f32 0.0, %v1856
      %v1858 = vpop.f32.mrb[0].mxu0
      %v1859 = vpop.f32.mrb[0].mxu0
      %v1860 = vadd.f32 0.0, %v1859
      %v1861 = vpop.f32.mrb[0].mxu0
      %1862 = vmatprep.mubr.bf16.mxu0 0
      %1863 = vmatmul.mubr.bf16.gmra.mrb[0].mxu0 %v1721
      %v1864 = vpop.f32.mrb[0].mxu0
      %v1865 = vadd.f32 0.0, %v1864
      %v1866 = vpop.f32.mrb[0].mxu0
      %v1867 = vpop.f32.mrb[0].mxu0
      %v1868 = vadd.f32 0.0, %v1867
      %v1869 = vpop.f32.mrb[0].mxu0
      %1870 = vmatprep.mubr.bf16.mxu0 0
      %1871 = vmatmul.mubr.bf16.gmra.mrb[0].mxu0 %v1722
      %v1872 = vpop.f32.mrb[0].mxu0
      %v1873 = vadd.f32 0.0, %v1872
      %v1874 = vpop.f32.mrb[0].mxu0
      %v1875 = vpop.f32.mrb[0].mxu0
      %v1876 = vadd.f32 0.0, %v1875
      %v1877 = vpop.f32.mrb[0].mxu0
      %1878 = vmatprep.mubr.bf16.mxu0 0
      %1879 = vmatmul.mubr.bf16.gmra.mrb[0].mxu0 %v1723
      %v1880 = vpop.f32.mrb[0].mxu0
      %v1881 = vadd.f32 0.0, %v1880
      %v1882 = vpop.f32.mrb[0].mxu0
      %v1883 = vpop.f32.mrb[0].mxu0
      %v1884 = vadd.f32 0.0, %v1883
      %v1885 = vpop.f32.mrb[0].mxu0
      %1886 = vmatprep.mubr.bf16.mxu0 0
      %1887 = vmatmul.mubr.bf16.gmra.mrb[0].mxu0 %v1724
      %v1888 = vpop.f32.mrb[0].mxu0
      %v1889 = vadd.f32 0.0, %v1888
      %v1890 = vpop.f32.mrb[0].mxu0
      %v1891 = vpop.f32.mrb[0].mxu0
      %v1892 = vadd.f32 0.0, %v1891
      %v1893 = vpop.f32.mrb[0].mxu0
      %1894 = vmatprep.mubr.bf16.mxu0 0
      %1895 = vmatmul.mubr.bf16.gmra.mrb[0].mxu0 %v1725
      %v1896 = vpop.f32.mrb[0].mxu0
      %v1897 = vadd.f32 0.0, %v1896
      %v1898 = vpop.f32.mrb[0].mxu0
      %v1899 = vpop.f32.mrb[0].mxu0
      %v1900 = vadd.f32 0.0, %v1899
      %v1901 = vpop.f32.mrb[0].mxu0
      %1902 = vmatprep.mubr.bf16.mxu0 0
      %1903 = vmatmul.mubr.bf16.gmra.mrb[0].mxu0 %v1726
      %v1904 = vpop.f32.mrb[0].mxu0
      %v1905 = vadd.f32 0.0, %v1904
      %v1906 = vpop.f32.mrb[0].mxu0
      %v1907 = vpop.f32.mrb[0].mxu0
      %v1908 = vadd.f32 0.0, %v1907
      %v1909 = vpop.f32.mrb[0].mxu0
      %1910 = vmatprep.mubr.bf16.mxu0 0
      %1911 = vmatmul.mubr.bf16.gmra.mrb[0].mxu0 %v1727
      %v1912 = vpop.f32.mrb[0].mxu0
      %v1913 = vadd.f32 0.0, %v1912
      %v1914 = vpop.f32.mrb[0].mxu0
      %v1915 = vpop.f32.mrb[0].mxu0
      %v1916 = vadd.f32 0.0, %v1915
      %v1917 = vpop.f32.mrb[0].mxu0
      %1918 = vmatprep.mubr.bf16.mxu0 0
      %1919 = vmatmul.mubr.bf16.gmra.mrb[0].mxu0 %v1728
      %v1920 = vpop.f32.mrb[0].mxu0
      %v1921 = vadd.f32 0.0, %v1920
      %v1922 = vpop.f32.mrb[0].mxu0
      %v1923 = vpop.f32.mrb[0].mxu0
      %v1924 = vadd.f32 0.0, %v1923
      %v1925 = vpop.f32.mrb[0].mxu0
      %1926 = vmatprep.mubr.bf16.mxu0 0
      %1927 = vmatmul.mubr.bf16.gmra.mrb[0].mxu0 %v1729
      %v1928 = vpop.f32.mrb[0].mxu0
      %v1929 = vadd.f32 0.0, %v1928
      %v1930 = vpop.f32.mrb[0].mxu0
      %v1931 = vpop.f32.mrb[0].mxu0
      %v1932 = vadd.f32 0.0, %v1931
      %v1933 = vpop.f32.mrb[0].mxu0
      %1934 = vmatprep.mubr.bf16.mxu0 0
      %1935 = vmatmul.mubr.bf16.gmra.mrb[0].mxu0 %v1730
      %v1936 = vpop.f32.mrb[0].mxu0
      %v1937 = vadd.f32 0.0, %v1936
      %v1938 = vpop.f32.mrb[0].mxu0
      %v1939 = vpop.f32.mrb[0].mxu0
      %v1940 = vadd.f32 0.0, %v1939
      %v1941 = vpop.f32.mrb[0].mxu0
      %1942 = vmatprep.mubr.bf16.mxu0 0
      %1943 = vmatmul.mubr.bf16.gmra.mrb[0].mxu0 %v1731
      %v1944 = vpop.f32.mrb[0].mxu0
      %v1945 = vadd.f32 0.0, %v1944
      %v1946 = vpop.f32.mrb[0].mxu0
      %v1947 = vpop.f32.mrb[0].mxu0
      %v1948 = vadd.f32 0.0, %v1947
      %v1949 = vpop.f32.mrb[0].mxu0
      %1950 = vmatprep.mubr.bf16.mxu0 0
      %1951 = vmatmul.mubr.bf16.gmra.mrb[0].mxu0 %v1732
      %v1952 = vpop.f32.mrb[0].mxu0
      %v1953 = vadd.f32 0.0, %v1952
      %v1954 = vpop.f32.mrb[0].mxu0
      %v1955 = vpop.f32.mrb[0].mxu0
      %v1956 = vadd.f32 0.0, %v1955
      %v1957 = vpop.f32.mrb[0].mxu0
      %1958 = vdwg.mxu0
      %v1959 = vadd.f32 %v1653, %v1833
      %v1960 = vadd.f32 %v1654, %v1836
      %v1961 = vadd.f32 %v1655, %v1841
      %v1962 = vadd.f32 %v1656, %v1844
      %v1963 = vadd.f32 %v1657, %v1849
      %v1964 = vadd.f32 %v1658, %v1852
      %v1965 = vadd.f32 %v1659, %v1857
      %v1966 = vadd.f32 %v1660, %v1860
      %v1967 = vadd.f32 %v1661, %v1865
      %v1968 = vadd.f32 %v1662, %v1868
      %v1969 = vadd.f32 %v1663, %v1873
      %v1970 = vadd.f32 %v1664, %v1876
      %v1971 = vadd.f32 %v1665, %v1881
      %v1972 = vadd.f32 %v1666, %v1884
      %v1973 = vadd.f32 %v1667, %v1889
      %v1974 = vadd.f32 %v1668, %v1892
      %v1975 = vadd.f32 %v1669, %v1897
      %v1976 = vadd.f32 %v1670, %v1900
      %v1977 = vadd.f32 %v1671, %v1905
      %v1978 = vadd.f32 %v1672, %v1908
      %v1979 = vadd.f32 %v1673, %v1913
      %v1980 = vadd.f32 %v1674, %v1916
      %v1981 = vadd.f32 %v1675, %v1921
      %v1982 = vadd.f32 %v1676, %v1924
      %v1983 = vadd.f32 %v1677, %v1929
      %v1984 = vadd.f32 %v1678, %v1932
      %v1985 = vadd.f32 %v1679, %v1937
      %v1986 = vadd.f32 %v1680, %v1940
      %v1987 = vadd.f32 %v1681, %v1945
      %v1988 = vadd.f32 %v1682, %v1948
      %v1989 = vadd.f32 %v1683, %v1953
      %v1990 = vadd.f32 %v1684, %v1956
      %v1991 = vld [vmem:[%s493 + $0x9] sm:$0xff]
      %v1992 = vld [vmem:[%s493 + $0x11] sm:$0xff]
      %v1993 = vld [vmem:[%s493 + $0x29] sm:$0xff]
      %v1994 = vld [vmem:[%s493 + $0x31] sm:$0xff]
      %v1995 = vld [vmem:[%s493 + $0x49] sm:$0xff]
      %v1996 = vld [vmem:[%s493 + $0x51] sm:$0xff]
      %v1997 = vld [vmem:[%s493 + $0x69] sm:$0xff]
      %v1998 = vld [vmem:[%s493 + $0x71] sm:$0xff]
      %v1999 = vld [vmem:[%s493 + $0x89] sm:$0xff]
      %v2000 = vld [vmem:[%s493 + $0x91] sm:$0xff]
      %v2001 = vld [vmem:[%s493 + $0xa9] sm:$0xff]
      %v2002 = vld [vmem:[%s493 + $0xb1] sm:$0xff]
      %v2003 = vld [vmem:[%s493 + $0xc9] sm:$0xff]
      %v2004 = vld [vmem:[%s493 + $0xd1] sm:$0xff]
      %v2005 = vld [vmem:[%s493 + $0xe9] sm:$0xff]
      %v2006 = vld [vmem:[%s493 + $0xf1] sm:$0xff]
      %v2007 = vld [vmem:[%s493 + $0x109] sm:$0xff]
      %v2008 = vld [vmem:[%s493 + $0x111] sm:$0xff]
      %v2009 = vld [vmem:[%s493 + $0x129] sm:$0xff]
      %v2010 = vld [vmem:[%s493 + $0x131] sm:$0xff]
      %v2011 = vld [vmem:[%s493 + $0x149] sm:$0xff]
      %v2012 = vld [vmem:[%s493 + $0x151] sm:$0xff]
      %v2013 = vld [vmem:[%s493 + $0x169] sm:$0xff]
      %v2014 = vld [vmem:[%s493 + $0x171] sm:$0xff]
      %v2015 = vld [vmem:[%s493 + $0x189] sm:$0xff]
      %v2016 = vld [vmem:[%s493 + $0x191] sm:$0xff]
      %v2017 = vld [vmem:[%s493 + $0x1a9] sm:$0xff]
      %v2018 = vld [vmem:[%s493 + $0x1b1] sm:$0xff]
      %v2019 = vld [vmem:[%s493 + $0x1c9] sm:$0xff]
      %v2020 = vld [vmem:[%s493 + $0x1d1] sm:$0xff]
      %v2021 = vld [vmem:[%s493 + $0x1e9] sm:$0xff]
      %v2022 = vld [vmem:[%s493 + $0x1f1] sm:$0xff]
      %v2023 = vpack.c.bf16 %v1992, %v1991
      %v2024 = vpack.c.bf16 %v1994, %v1993
      %v2025 = vpack.c.bf16 %v1996, %v1995
      %v2026 = vpack.c.bf16 %v1998, %v1997
      %v2027 = vpack.c.bf16 %v2000, %v1999
      %v2028 = vpack.c.bf16 %v2002, %v2001
      %v2029 = vpack.c.bf16 %v2004, %v2003
      %v2030 = vpack.c.bf16 %v2006, %v2005
      %v2031 = vpack.c.bf16 %v2008, %v2007
      %v2032 = vpack.c.bf16 %v2010, %v2009
      %v2033 = vpack.c.bf16 %v2012, %v2011
      %v2034 = vpack.c.bf16 %v2014, %v2013
      %v2035 = vpack.c.bf16 %v2016, %v2015
      %v2036 = vpack.c.bf16 %v2018, %v2017
      %v2037 = vpack.c.bf16 %v2020, %v2019
      %v2038 = vpack.c.bf16 %v2022, %v2021
      %s2039 = scalar_lea.vmem %s3, 320
      %v2040 = vld [vmem:[%s2039] sm:$0xf]
      %v2041 = vld [vmem:[%s2039 + $0x4] sm:$0xf]
      %v2042 = vld [vmem:[%s2039 + $0x8] sm:$0xf]
      %v2043 = vld [vmem:[%s2039 + $0xc] sm:$0xf]
      %v2044 = vld [vmem:[%s2039 + $0x10] sm:$0xf]
      %v2045 = vld [vmem:[%s2039 + $0x14] sm:$0xf]
      %v2046 = vld [vmem:[%s2039 + $0x18] sm:$0xf]
      %v2047 = vld [vmem:[%s2039 + $0x1c] sm:$0xf]
      %v2048 = vld [vmem:[%s2039 + $0x20] sm:$0xf]
      %v2049 = vld [vmem:[%s2039 + $0x24] sm:$0xf]
      %v2050 = vld [vmem:[%s2039 + $0x28] sm:$0xf]
      %v2051 = vld [vmem:[%s2039 + $0x2c] sm:$0xf]
      %v2052 = vld [vmem:[%s2039 + $0x30] sm:$0xf]
      %v2053 = vld [vmem:[%s2039 + $0x34] sm:$0xf]
      %v2054 = vld [vmem:[%s2039 + $0x38] sm:$0xf]
      %v2055 = vld [vmem:[%s2039 + $0x3c] sm:$0xf]
      %v2072 = vunpack.c.l.b16 %v2040
      %v2073 = vunpack.c.l.b16 %v2041
      %v2074 = vunpack.c.l.b16 %v2042
      %v2075 = vunpack.c.l.b16 %v2043
      %v2076 = vunpack.c.l.b16 %v2044
      %v2077 = vunpack.c.l.b16 %v2045
      %v2078 = vunpack.c.l.b16 %v2046
      %v2079 = vunpack.c.l.b16 %v2047
      %v2080 = vunpack.c.l.b16 %v2048
      %v2081 = vunpack.c.l.b16 %v2049
      %v2082 = vunpack.c.l.b16 %v2050
      %v2083 = vunpack.c.l.b16 %v2051
      %v2084 = vunpack.c.l.b16 %v2052
      %v2085 = vunpack.c.l.b16 %v2053
      %v2086 = vunpack.c.l.b16 %v2054
      %v2087 = vunpack.c.l.b16 %v2055
      %v2088 = vpack.c.b16 %v2073, %v2072
      %v2089 = vpack.c.b16 %v2075, %v2074
      %v2090 = vpack.c.b16 %v2077, %v2076
      %v2091 = vpack.c.b16 %v2079, %v2078
      %v2092 = vpack.c.b16 %v2081, %v2080
      %v2093 = vpack.c.b16 %v2083, %v2082
      %v2094 = vpack.c.b16 %v2085, %v2084
      %v2095 = vpack.c.b16 %v2087, %v2086
      %2104 = vmatprep.subr.bf16.mxu0 0
      %2105 = vmatpush1.bf16.msra.mxu0 %v2088
      %2106 = vmatprep.subr.bf16.mxu0 0
      %2107 = vmatpush1.bf16.msra.mxu0 %v2089
      %2108 = vmatprep.subr.bf16.mxu0 0
      %2109 = vmatpush1.bf16.msra.mxu0 %v2090
      %2110 = vmatprep.subr.bf16.mxu0 0
      %2111 = vmatpush1.bf16.msra.mxu0 %v2091
      %2112 = vmatprep.subr.bf16.mxu0 0
      %2113 = vmatpush1.bf16.msra.mxu0 %v2092
      %2114 = vmatprep.subr.bf16.mxu0 0
      %2115 = vmatpush1.bf16.msra.mxu0 %v2093
      %2116 = vmatprep.subr.bf16.mxu0 0
      %2117 = vmatpush1.bf16.msra.mxu0 %v2094
      %2118 = vmatprep.subr.bf16.mxu0 0
      %2119 = vmatpush1.bf16.msra.mxu0 %v2095
      %2120 = vmatprep.subr.bf16.mxu0 0
      %2121 = vmatpush1.bf16.msra.mxu0 0
      %2122 = vmatprep.subr.bf16.mxu0 0
      %2123 = vmatpush1.bf16.msra.mxu0 0
      %2124 = vmatprep.subr.bf16.mxu0 0
      %2125 = vmatpush1.bf16.msra.mxu0 0
      %2126 = vmatprep.subr.bf16.mxu0 0
      %2127 = vmatpush1.bf16.msra.mxu0 0
      %2128 = vmatprep.subr.bf16.mxu0 0
      %2129 = vmatpush1.bf16.msra.mxu0 0
      %2130 = vmatprep.subr.bf16.mxu0 0
      %2131 = vmatpush1.bf16.msra.mxu0 0
      %2132 = vmatprep.subr.bf16.mxu0 0
      %2133 = vmatpush1.bf16.msra.mxu0 0
      %2134 = vmatprep.subr.bf16.mxu0 0
      %2135 = vmatpush1.bf16.msra.mxu0 0
      %2136 = vmatprep.mubr.bf16.mxu0 0
      %2137 = vmatmul.mubr.bf16.gmra.mrb[0].mxu0 %v2023
      %v2138 = vpop.f32.mrb[0].mxu0
      %v2139 = vadd.f32 0.0, %v2138
      %v2140 = vpop.f32.mrb[0].mxu0
      %v2141 = vpop.f32.mrb[0].mxu0
      %v2142 = vadd.f32 0.0, %v2141
      %v2143 = vpop.f32.mrb[0].mxu0
      %2144 = vmatprep.mubr.bf16.mxu0 0
      %2145 = vmatmul.mubr.bf16.gmra.mrb[0].mxu0 %v2024
      %v2146 = vpop.f32.mrb[0].mxu0
      %v2147 = vadd.f32 0.0, %v2146
      %v2148 = vpop.f32.mrb[0].mxu0
      %v2149 = vpop.f32.mrb[0].mxu0
      %v2150 = vadd.f32 0.0, %v2149
      %v2151 = vpop.f32.mrb[0].mxu0
      %2152 = vmatprep.mubr.bf16.mxu0 0
      %2153 = vmatmul.mubr.bf16.gmra.mrb[0].mxu0 %v2025
      %v2154 = vpop.f32.mrb[0].mxu0
      %v2155 = vadd.f32 0.0, %v2154
      %v2156 = vpop.f32.mrb[0].mxu0
      %v2157 = vpop.f32.mrb[0].mxu0
      %v2158 = vadd.f32 0.0, %v2157
      %v2159 = vpop.f32.mrb[0].mxu0
      %2160 = vmatprep.mubr.bf16.mxu0 0
      %2161 = vmatmul.mubr.bf16.gmra.mrb[0].mxu0 %v2026
      %v2162 = vpop.f32.mrb[0].mxu0
      %v2163 = vadd.f32 0.0, %v2162
      %v2164 = vpop.f32.mrb[0].mxu0
      %v2165 = vpop.f32.mrb[0].mxu0
      %v2166 = vadd.f32 0.0, %v2165
      %v2167 = vpop.f32.mrb[0].mxu0
      %2168 = vmatprep.mubr.bf16.mxu0 0
      %2169 = vmatmul.mubr.bf16.gmra.mrb[0].mxu0 %v2027
      %v2170 = vpop.f32.mrb[0].mxu0
      %v2171 = vadd.f32 0.0, %v2170
      %v2172 = vpop.f32.mrb[0].mxu0
      %v2173 = vpop.f32.mrb[0].mxu0
      %v2174 = vadd.f32 0.0, %v2173
      %v2175 = vpop.f32.mrb[0].mxu0
      %2176 = vmatprep.mubr.bf16.mxu0 0
      %2177 = vmatmul.mubr.bf16.gmra.mrb[0].mxu0 %v2028
      %v2178 = vpop.f32.mrb[0].mxu0
      %v2179 = vadd.f32 0.0, %v2178
      %v2180 = vpop.f32.mrb[0].mxu0
      %v2181 = vpop.f32.mrb[0].mxu0
      %v2182 = vadd.f32 0.0, %v2181
      %v2183 = vpop.f32.mrb[0].mxu0
      %2184 = vmatprep.mubr.bf16.mxu0 0
      %2185 = vmatmul.mubr.bf16.gmra.mrb[0].mxu0 %v2029
      %v2186 = vpop.f32.mrb[0].mxu0
      %v2187 = vadd.f32 0.0, %v2186
      %v2188 = vpop.f32.mrb[0].mxu0
      %v2189 = vpop.f32.mrb[0].mxu0
      %v2190 = vadd.f32 0.0, %v2189
      %v2191 = vpop.f32.mrb[0].mxu0
      %2192 = vmatprep.mubr.bf16.mxu0 0
      %2193 = vmatmul.mubr.bf16.gmra.mrb[0].mxu0 %v2030
      %v2194 = vpop.f32.mrb[0].mxu0
      %v2195 = vadd.f32 0.0, %v2194
      %v2196 = vpop.f32.mrb[0].mxu0
      %v2197 = vpop.f32.mrb[0].mxu0
      %v2198 = vadd.f32 0.0, %v2197
      %v2199 = vpop.f32.mrb[0].mxu0
      %2200 = vmatprep.mubr.bf16.mxu0 0
      %2201 = vmatmul.mubr.bf16.gmra.mrb[0].mxu0 %v2031
      %v2202 = vpop.f32.mrb[0].mxu0
      %v2203 = vadd.f32 0.0, %v2202
      %v2204 = vpop.f32.mrb[0].mxu0
      %v2205 = vpop.f32.mrb[0].mxu0
      %v2206 = vadd.f32 0.0, %v2205
      %v2207 = vpop.f32.mrb[0].mxu0
      %2208 = vmatprep.mubr.bf16.mxu0 0
      %2209 = vmatmul.mubr.bf16.gmra.mrb[0].mxu0 %v2032
      %v2210 = vpop.f32.mrb[0].mxu0
      %v2211 = vadd.f32 0.0, %v2210
      %v2212 = vpop.f32.mrb[0].mxu0
      %v2213 = vpop.f32.mrb[0].mxu0
      %v2214 = vadd.f32 0.0, %v2213
      %v2215 = vpop.f32.mrb[0].mxu0
      %2216 = vmatprep.mubr.bf16.mxu0 0
      %2217 = vmatmul.mubr.bf16.gmra.mrb[0].mxu0 %v2033
      %v2218 = vpop.f32.mrb[0].mxu0
      %v2219 = vadd.f32 0.0, %v2218
      %v2220 = vpop.f32.mrb[0].mxu0
      %v2221 = vpop.f32.mrb[0].mxu0
      %v2222 = vadd.f32 0.0, %v2221
      %v2223 = vpop.f32.mrb[0].mxu0
      %2224 = vmatprep.mubr.bf16.mxu0 0
      %2225 = vmatmul.mubr.bf16.gmra.mrb[0].mxu0 %v2034
      %v2226 = vpop.f32.mrb[0].mxu0
      %v2227 = vadd.f32 0.0, %v2226
      %v2228 = vpop.f32.mrb[0].mxu0
      %v2229 = vpop.f32.mrb[0].mxu0
      %v2230 = vadd.f32 0.0, %v2229
      %v2231 = vpop.f32.mrb[0].mxu0
      %2232 = vmatprep.mubr.bf16.mxu0 0
      %2233 = vmatmul.mubr.bf16.gmra.mrb[0].mxu0 %v2035
      %v2234 = vpop.f32.mrb[0].mxu0
      %v2235 = vadd.f32 0.0, %v2234
      %v2236 = vpop.f32.mrb[0].mxu0
      %v2237 = vpop.f32.mrb[0].mxu0
      %v2238 = vadd.f32 0.0, %v2237
      %v2239 = vpop.f32.mrb[0].mxu0
      %2240 = vmatprep.mubr.bf16.mxu0 0
      %2241 = vmatmul.mubr.bf16.gmra.mrb[0].mxu0 %v2036
      %v2242 = vpop.f32.mrb[0].mxu0
      %v2243 = vadd.f32 0.0, %v2242
      %v2244 = vpop.f32.mrb[0].mxu0
      %v2245 = vpop.f32.mrb[0].mxu0
      %v2246 = vadd.f32 0.0, %v2245
      %v2247 = vpop.f32.mrb[0].mxu0
      %2248 = vmatprep.mubr.bf16.mxu0 0
      %2249 = vmatmul.mubr.bf16.gmra.mrb[0].mxu0 %v2037
      %v2250 = vpop.f32.mrb[0].mxu0
      %v2251 = vadd.f32 0.0, %v2250
      %v2252 = vpop.f32.mrb[0].mxu0
      %v2253 = vpop.f32.mrb[0].mxu0
      %v2254 = vadd.f32 0.0, %v2253
      %v2255 = vpop.f32.mrb[0].mxu0
      %2256 = vmatprep.mubr.bf16.mxu0 0
      %2257 = vmatmul.mubr.bf16.gmra.mrb[0].mxu0 %v2038
      %v2258 = vpop.f32.mrb[0].mxu0
      %v2259 = vadd.f32 0.0, %v2258
      %v2260 = vpop.f32.mrb[0].mxu0
      %v2261 = vpop.f32.mrb[0].mxu0
      %v2262 = vadd.f32 0.0, %v2261
      %v2263 = vpop.f32.mrb[0].mxu0
      %2264 = vdwg.mxu0
      %v2265 = vadd.f32 %v1959, %v2139
      %v2266 = vadd.f32 %v1960, %v2142
      %v2267 = vadd.f32 %v1961, %v2147
      %v2268 = vadd.f32 %v1962, %v2150
      %v2269 = vadd.f32 %v1963, %v2155
      %v2270 = vadd.f32 %v1964, %v2158
      %v2271 = vadd.f32 %v1965, %v2163
      %v2272 = vadd.f32 %v1966, %v2166
      %v2273 = vadd.f32 %v1967, %v2171
      %v2274 = vadd.f32 %v1968, %v2174
      %v2275 = vadd.f32 %v1969, %v2179
      %v2276 = vadd.f32 %v1970, %v2182
      %v2277 = vadd.f32 %v1971, %v2187
      %v2278 = vadd.f32 %v1972, %v2190
      %v2279 = vadd.f32 %v1973, %v2195
      %v2280 = vadd.f32 %v1974, %v2198
      %v2281 = vadd.f32 %v1975, %v2203
      %v2282 = vadd.f32 %v1976, %v2206
      %v2283 = vadd.f32 %v1977, %v2211
      %v2284 = vadd.f32 %v1978, %v2214
      %v2285 = vadd.f32 %v1979, %v2219
      %v2286 = vadd.f32 %v1980, %v2222
      %v2287 = vadd.f32 %v1981, %v2227
      %v2288 = vadd.f32 %v1982, %v2230
      %v2289 = vadd.f32 %v1983, %v2235
      %v2290 = vadd.f32 %v1984, %v2238
      %v2291 = vadd.f32 %v1985, %v2243
      %v2292 = vadd.f32 %v1986, %v2246
      %v2293 = vadd.f32 %v1987, %v2251
      %v2294 = vadd.f32 %v1988, %v2254
      %v2295 = vadd.f32 %v1989, %v2259
      %v2296 = vadd.f32 %v1990, %v2262
      %s2297 = scalar_lea.vmem [#allocation2], 64
      %v2298 = vld [vmem:[%s2297 + $0x7] sm:$0xff]
      %v2299 = vld [vmem:[%s2297 + $0xf] sm:$0xff]
      %v2300 = vld [vmem:[%s2297 + $0x27] sm:$0xff]
      %v2301 = vld [vmem:[%s2297 + $0x2f] sm:$0xff]
      %v2302 = vld [vmem:[%s2297 + $0x47] sm:$0xff]
      %v2303 = vld [vmem:[%s2297 + $0x4f] sm:$0xff]
      %v2304 = vld [vmem:[%s2297 + $0x67] sm:$0xff]
      %v2305 = vld [vmem:[%s2297 + $0x6f] sm:$0xff]
      %v2306 = vld [vmem:[%s2297 + $0x87] sm:$0xff]
      %v2307 = vld [vmem:[%s2297 + $0x8f] sm:$0xff]
      %v2308 = vld [vmem:[%s2297 + $0xa7] sm:$0xff]
      %v2309 = vld [vmem:[%s2297 + $0xaf] sm:$0xff]
      %v2310 = vld [vmem:[%s2297 + $0xc7] sm:$0xff]
      %v2311 = vld [vmem:[%s2297 + $0xcf] sm:$0xff]
      %v2312 = vld [vmem:[%s2297 + $0xe7] sm:$0xff]
      %v2313 = vld [vmem:[%s2297 + $0xef] sm:$0xff]
      %v2314 = vld [vmem:[%s2297 + $0x107] sm:$0xff]
      %v2315 = vld [vmem:[%s2297 + $0x10f] sm:$0xff]
      %v2316 = vld [vmem:[%s2297 + $0x127] sm:$0xff]
      %v2317 = vld [vmem:[%s2297 + $0x12f] sm:$0xff]
      %v2318 = vld [vmem:[%s2297 + $0x147] sm:$0xff]
      %v2319 = vld [vmem:[%s2297 + $0x14f] sm:$0xff]
      %v2320 = vld [vmem:[%s2297 + $0x167] sm:$0xff]
      %v2321 = vld [vmem:[%s2297 + $0x16f] sm:$0xff]
      %v2322 = vld [vmem:[%s2297 + $0x187] sm:$0xff]
      %v2323 = vld [vmem:[%s2297 + $0x18f] sm:$0xff]
      %v2324 = vld [vmem:[%s2297 + $0x1a7] sm:$0xff]
      %v2325 = vld [vmem:[%s2297 + $0x1af] sm:$0xff]
      %v2326 = vld [vmem:[%s2297 + $0x1c7] sm:$0xff]
      %v2327 = vld [vmem:[%s2297 + $0x1cf] sm:$0xff]
      %v2328 = vld [vmem:[%s2297 + $0x1e7] sm:$0xff]
      %v2329 = vld [vmem:[%s2297 + $0x1ef] sm:$0xff]
      %v2330 = vpack.c.bf16 %v2299, %v2298
      %v2331 = vpack.c.bf16 %v2301, %v2300
      %v2332 = vpack.c.bf16 %v2303, %v2302
      %v2333 = vpack.c.bf16 %v2305, %v2304
      %v2334 = vpack.c.bf16 %v2307, %v2306
      %v2335 = vpack.c.bf16 %v2309, %v2308
      %v2336 = vpack.c.bf16 %v2311, %v2310
      %v2337 = vpack.c.bf16 %v2313, %v2312
      %v2338 = vpack.c.bf16 %v2315, %v2314
      %v2339 = vpack.c.bf16 %v2317, %v2316
      %v2340 = vpack.c.bf16 %v2319, %v2318
      %v2341 = vpack.c.bf16 %v2321, %v2320
      %v2342 = vpack.c.bf16 %v2323, %v2322
      %v2343 = vpack.c.bf16 %v2325, %v2324
      %v2344 = vpack.c.bf16 %v2327, %v2326
      %v2345 = vpack.c.bf16 %v2329, %v2328
      %s2346 = scalar_lea.vmem %s3, 384
      %v2347 = vld [vmem:[%s2346] sm:$0xf]
      %v2348 = vld [vmem:[%s2346 + $0x4] sm:$0xf]
      %v2349 = vld [vmem:[%s2346 + $0x8] sm:$0xf]
      %v2350 = vld [vmem:[%s2346 + $0xc] sm:$0xf]
      %v2351 = vld [vmem:[%s2346 + $0x10] sm:$0xf]
      %v2352 = vld [vmem:[%s2346 + $0x14] sm:$0xf]
      %v2353 = vld [vmem:[%s2346 + $0x18] sm:$0xf]
      %v2354 = vld [vmem:[%s2346 + $0x1c] sm:$0xf]
      %v2355 = vld [vmem:[%s2346 + $0x20] sm:$0xf]
      %v2356 = vld [vmem:[%s2346 + $0x24] sm:$0xf]
      %v2357 = vld [vmem:[%s2346 + $0x28] sm:$0xf]
      %v2358 = vld [vmem:[%s2346 + $0x2c] sm:$0xf]
      %v2359 = vld [vmem:[%s2346 + $0x30] sm:$0xf]
      %v2360 = vld [vmem:[%s2346 + $0x34] sm:$0xf]
      %v2361 = vld [vmem:[%s2346 + $0x38] sm:$0xf]
      %v2362 = vld [vmem:[%s2346 + $0x3c] sm:$0xf]
      %v2379 = vunpack.c.l.b16 %v2347
      %v2380 = vunpack.c.l.b16 %v2348
      %v2381 = vunpack.c.l.b16 %v2349
      %v2382 = vunpack.c.l.b16 %v2350
      %v2383 = vunpack.c.l.b16 %v2351
      %v2384 = vunpack.c.l.b16 %v2352
      %v2385 = vunpack.c.l.b16 %v2353
      %v2386 = vunpack.c.l.b16 %v2354
      %v2387 = vunpack.c.l.b16 %v2355
      %v2388 = vunpack.c.l.b16 %v2356
      %v2389 = vunpack.c.l.b16 %v2357
      %v2390 = vunpack.c.l.b16 %v2358
      %v2391 = vunpack.c.l.b16 %v2359
      %v2392 = vunpack.c.l.b16 %v2360
      %v2393 = vunpack.c.l.b16 %v2361
      %v2394 = vunpack.c.l.b16 %v2362
      %v2395 = vpack.c.b16 %v2380, %v2379
      %v2396 = vpack.c.b16 %v2382, %v2381
      %v2397 = vpack.c.b16 %v2384, %v2383
      %v2398 = vpack.c.b16 %v2386, %v2385
      %v2399 = vpack.c.b16 %v2388, %v2387
      %v2400 = vpack.c.b16 %v2390, %v2389
      %v2401 = vpack.c.b16 %v2392, %v2391
      %v2402 = vpack.c.b16 %v2394, %v2393
      %2411 = vmatprep.subr.bf16.mxu0 0
      %2412 = vmatpush1.bf16.msra.mxu0 %v2395
      %2413 = vmatprep.subr.bf16.mxu0 0
      %2414 = vmatpush1.bf16.msra.mxu0 %v2396
      %2415 = vmatprep.subr.bf16.mxu0 0
      %2416 = vmatpush1.bf16.msra.mxu0 %v2397
      %2417 = vmatprep.subr.bf16.mxu0 0
      %2418 = vmatpush1.bf16.msra.mxu0 %v2398
      %2419 = vmatprep.subr.bf16.mxu0 0
      %2420 = vmatpush1.bf16.msra.mxu0 %v2399
      %2421 = vmatprep.subr.bf16.mxu0 0
      %2422 = vmatpush1.bf16.msra.mxu0 %v2400
      %2423 = vmatprep.subr.bf16.mxu0 0
      %2424 = vmatpush1.bf16.msra.mxu0 %v2401
      %2425 = vmatprep.subr.bf16.mxu0 0
      %2426 = vmatpush1.bf16.msra.mxu0 %v2402
      %2427 = vmatprep.subr.bf16.mxu0 0
      %2428 = vmatpush1.bf16.msra.mxu0 0
      %2429 = vmatprep.subr.bf16.mxu0 0
      %2430 = vmatpush1.bf16.msra.mxu0 0
      %2431 = vmatprep.subr.bf16.mxu0 0
      %2432 = vmatpush1.bf16.msra.mxu0 0
      %2433 = vmatprep.subr.bf16.mxu0 0
      %2434 = vmatpush1.bf16.msra.mxu0 0
      %2435 = vmatprep.subr.bf16.mxu0 0
      %2436 = vmatpush1.bf16.msra.mxu0 0
      %2437 = vmatprep.subr.bf16.mxu0 0
      %2438 = vmatpush1.bf16.msra.mxu0 0
      %2439 = vmatprep.subr.bf16.mxu0 0
      %2440 = vmatpush1.bf16.msra.mxu0 0
      %2441 = vmatprep.subr.bf16.mxu0 0
      %2442 = vmatpush1.bf16.msra.mxu0 0
      %2443 = vmatprep.mubr.bf16.mxu0 0
      %2444 = vmatmul.mubr.bf16.gmra.mrb[0].mxu0 %v2330
      %v2445 = vpop.f32.mrb[0].mxu0
      %v2446 = vadd.f32 0.0, %v2445
      %v2447 = vpop.f32.mrb[0].mxu0
      %v2448 = vpop.f32.mrb[0].mxu0
      %v2449 = vadd.f32 0.0, %v2448
      %v2450 = vpop.f32.mrb[0].mxu0
      %2451 = vmatprep.mubr.bf16.mxu0 0
      %2452 = vmatmul.mubr.bf16.gmra.mrb[0].mxu0 %v2331
      %v2453 = vpop.f32.mrb[0].mxu0
      %v2454 = vadd.f32 0.0, %v2453
      %v2455 = vpop.f32.mrb[0].mxu0
      %v2456 = vpop.f32.mrb[0].mxu0
      %v2457 = vadd.f32 0.0, %v2456
      %v2458 = vpop.f32.mrb[0].mxu0
      %2459 = vmatprep.mubr.bf16.mxu0 0
      %2460 = vmatmul.mubr.bf16.gmra.mrb[0].mxu0 %v2332
      %v2461 = vpop.f32.mrb[0].mxu0
      %v2462 = vadd.f32 0.0, %v2461
      %v2463 = vpop.f32.mrb[0].mxu0
      %v2464 = vpop.f32.mrb[0].mxu0
      %v2465 = vadd.f32 0.0, %v2464
      %v2466 = vpop.f32.mrb[0].mxu0
      %2467 = vmatprep.mubr.bf16.mxu0 0
      %2468 = vmatmul.mubr.bf16.gmra.mrb[0].mxu0 %v2333
      %v2469 = vpop.f32.mrb[0].mxu0
      %v2470 = vadd.f32 0.0, %v2469
      %v2471 = vpop.f32.mrb[0].mxu0
      %v2472 = vpop.f32.mrb[0].mxu0
      %v2473 = vadd.f32 0.0, %v2472
      %v2474 = vpop.f32.mrb[0].mxu0
      %2475 = vmatprep.mubr.bf16.mxu0 0
      %2476 = vmatmul.mubr.bf16.gmra.mrb[0].mxu0 %v2334
      %v2477 = vpop.f32.mrb[0].mxu0
      %v2478 = vadd.f32 0.0, %v2477
      %v2479 = vpop.f32.mrb[0].mxu0
      %v2480 = vpop.f32.mrb[0].mxu0
      %v2481 = vadd.f32 0.0, %v2480
      %v2482 = vpop.f32.mrb[0].mxu0
      %2483 = vmatprep.mubr.bf16.mxu0 0
      %2484 = vmatmul.mubr.bf16.gmra.mrb[0].mxu0 %v2335
      %v2485 = vpop.f32.mrb[0].mxu0
      %v2486 = vadd.f32 0.0, %v2485
      %v2487 = vpop.f32.mrb[0].mxu0
      %v2488 = vpop.f32.mrb[0].mxu0
      %v2489 = vadd.f32 0.0, %v2488
      %v2490 = vpop.f32.mrb[0].mxu0
      %2491 = vmatprep.mubr.bf16.mxu0 0
      %2492 = vmatmul.mubr.bf16.gmra.mrb[0].mxu0 %v2336
      %v2493 = vpop.f32.mrb[0].mxu0
      %v2494 = vadd.f32 0.0, %v2493
      %v2495 = vpop.f32.mrb[0].mxu0
      %v2496 = vpop.f32.mrb[0].mxu0
      %v2497 = vadd.f32 0.0, %v2496
      %v2498 = vpop.f32.mrb[0].mxu0
      %2499 = vmatprep.mubr.bf16.mxu0 0
      %2500 = vmatmul.mubr.bf16.gmra.mrb[0].mxu0 %v2337
      %v2501 = vpop.f32.mrb[0].mxu0
      %v2502 = vadd.f32 0.0, %v2501
      %v2503 = vpop.f32.mrb[0].mxu0
      %v2504 = vpop.f32.mrb[0].mxu0
      %v2505 = vadd.f32 0.0, %v2504
      %v2506 = vpop.f32.mrb[0].mxu0
      %2507 = vmatprep.mubr.bf16.mxu0 0
      %2508 = vmatmul.mubr.bf16.gmra.mrb[0].mxu0 %v2338
      %v2509 = vpop.f32.mrb[0].mxu0
      %v2510 = vadd.f32 0.0, %v2509
      %v2511 = vpop.f32.mrb[0].mxu0
      %v2512 = vpop.f32.mrb[0].mxu0
      %v2513 = vadd.f32 0.0, %v2512
      %v2514 = vpop.f32.mrb[0].mxu0
      %2515 = vmatprep.mubr.bf16.mxu0 0
      %2516 = vmatmul.mubr.bf16.gmra.mrb[0].mxu0 %v2339
      %v2517 = vpop.f32.mrb[0].mxu0
      %v2518 = vadd.f32 0.0, %v2517
      %v2519 = vpop.f32.mrb[0].mxu0
      %v2520 = vpop.f32.mrb[0].mxu0
      %v2521 = vadd.f32 0.0, %v2520
      %v2522 = vpop.f32.mrb[0].mxu0
      %2523 = vmatprep.mubr.bf16.mxu0 0
      %2524 = vmatmul.mubr.bf16.gmra.mrb[0].mxu0 %v2340
      %v2525 = vpop.f32.mrb[0].mxu0
      %v2526 = vadd.f32 0.0, %v2525
      %v2527 = vpop.f32.mrb[0].mxu0
      %v2528 = vpop.f32.mrb[0].mxu0
      %v2529 = vadd.f32 0.0, %v2528
      %v2530 = vpop.f32.mrb[0].mxu0
      %2531 = vmatprep.mubr.bf16.mxu0 0
      %2532 = vmatmul.mubr.bf16.gmra.mrb[0].mxu0 %v2341
      %v2533 = vpop.f32.mrb[0].mxu0
      %v2534 = vadd.f32 0.0, %v2533
      %v2535 = vpop.f32.mrb[0].mxu0
      %v2536 = vpop.f32.mrb[0].mxu0
      %v2537 = vadd.f32 0.0, %v2536
      %v2538 = vpop.f32.mrb[0].mxu0
      %2539 = vmatprep.mubr.bf16.mxu0 0
      %2540 = vmatmul.mubr.bf16.gmra.mrb[0].mxu0 %v2342
      %v2541 = vpop.f32.mrb[0].mxu0
      %v2542 = vadd.f32 0.0, %v2541
      %v2543 = vpop.f32.mrb[0].mxu0
      %v2544 = vpop.f32.mrb[0].mxu0
      %v2545 = vadd.f32 0.0, %v2544
      %v2546 = vpop.f32.mrb[0].mxu0
      %2547 = vmatprep.mubr.bf16.mxu0 0
      %2548 = vmatmul.mubr.bf16.gmra.mrb[0].mxu0 %v2343
      %v2549 = vpop.f32.mrb[0].mxu0
      %v2550 = vadd.f32 0.0, %v2549
      %v2551 = vpop.f32.mrb[0].mxu0
      %v2552 = vpop.f32.mrb[0].mxu0
      %v2553 = vadd.f32 0.0, %v2552
      %v2554 = vpop.f32.mrb[0].mxu0
      %2555 = vmatprep.mubr.bf16.mxu0 0
      %2556 = vmatmul.mubr.bf16.gmra.mrb[0].mxu0 %v2344
      %v2557 = vpop.f32.mrb[0].mxu0
      %v2558 = vadd.f32 0.0, %v2557
      %v2559 = vpop.f32.mrb[0].mxu0
      %v2560 = vpop.f32.mrb[0].mxu0
      %v2561 = vadd.f32 0.0, %v2560
      %v2562 = vpop.f32.mrb[0].mxu0
      %2563 = vmatprep.mubr.bf16.mxu0 0
      %2564 = vmatmul.mubr.bf16.gmra.mrb[0].mxu0 %v2345
      %v2565 = vpop.f32.mrb[0].mxu0
      %v2566 = vadd.f32 0.0, %v2565
      %v2567 = vpop.f32.mrb[0].mxu0
      %v2568 = vpop.f32.mrb[0].mxu0
      %v2569 = vadd.f32 0.0, %v2568
      %v2570 = vpop.f32.mrb[0].mxu0
      %2571 = vdwg.mxu0
      %v2572 = vadd.f32 %v2265, %v2446
      %v2573 = vadd.f32 %v2266, %v2449
      %v2574 = vadd.f32 %v2267, %v2454
      %v2575 = vadd.f32 %v2268, %v2457
      %v2576 = vadd.f32 %v2269, %v2462
      %v2577 = vadd.f32 %v2270, %v2465
      %v2578 = vadd.f32 %v2271, %v2470
      %v2579 = vadd.f32 %v2272, %v2473
      %v2580 = vadd.f32 %v2273, %v2478
      %v2581 = vadd.f32 %v2274, %v2481
      %v2582 = vadd.f32 %v2275, %v2486
      %v2583 = vadd.f32 %v2276, %v2489
      %v2584 = vadd.f32 %v2277, %v2494
      %v2585 = vadd.f32 %v2278, %v2497
      %v2586 = vadd.f32 %v2279, %v2502
      %v2587 = vadd.f32 %v2280, %v2505
      %v2588 = vadd.f32 %v2281, %v2510
      %v2589 = vadd.f32 %v2282, %v2513
      %v2590 = vadd.f32 %v2283, %v2518
      %v2591 = vadd.f32 %v2284, %v2521
      %v2592 = vadd.f32 %v2285, %v2526
      %v2593 = vadd.f32 %v2286, %v2529
      %v2594 = vadd.f32 %v2287, %v2534
      %v2595 = vadd.f32 %v2288, %v2537
      %v2596 = vadd.f32 %v2289, %v2542
      %v2597 = vadd.f32 %v2290, %v2545
      %v2598 = vadd.f32 %v2291, %v2550
      %v2599 = vadd.f32 %v2292, %v2553
      %v2600 = vadd.f32 %v2293, %v2558
      %v2601 = vadd.f32 %v2294, %v2561
      %v2602 = vadd.f32 %v2295, %v2566
      %v2603 = vadd.f32 %v2296, %v2569
      %v2604 = vld [vmem:[%s2297 + $0x8] sm:$0xff]
      %v2605 = vld [vmem:[%s2297 + $0x10] sm:$0xff]
      %v2606 = vld [vmem:[%s2297 + $0x28] sm:$0xff]
      %v2607 = vld [vmem:[%s2297 + $0x30] sm:$0xff]
      %v2608 = vld [vmem:[%s2297 + $0x48] sm:$0xff]
      %v2609 = vld [vmem:[%s2297 + $0x50] sm:$0xff]
      %v2610 = vld [vmem:[%s2297 + $0x68] sm:$0xff]
      %v2611 = vld [vmem:[%s2297 + $0x70] sm:$0xff]
      %v2612 = vld [vmem:[%s2297 + $0x88] sm:$0xff]
      %v2613 = vld [vmem:[%s2297 + $0x90] sm:$0xff]
      %v2614 = vld [vmem:[%s2297 + $0xa8] sm:$0xff]
      %v2615 = vld [vmem:[%s2297 + $0xb0] sm:$0xff]
      %v2616 = vld [vmem:[%s2297 + $0xc8] sm:$0xff]
      %v2617 = vld [vmem:[%s2297 + $0xd0] sm:$0xff]
      %v2618 = vld [vmem:[%s2297 + $0xe8] sm:$0xff]
      %v2619 = vld [vmem:[%s2297 + $0xf0] sm:$0xff]
      %v2620 = vld [vmem:[%s2297 + $0x108] sm:$0xff]
      %v2621 = vld [vmem:[%s2297 + $0x110] sm:$0xff]
      %v2622 = vld [vmem:[%s2297 + $0x128] sm:$0xff]
      %v2623 = vld [vmem:[%s2297 + $0x130] sm:$0xff]
      %v2624 = vld [vmem:[%s2297 + $0x148] sm:$0xff]
      %v2625 = vld [vmem:[%s2297 + $0x150] sm:$0xff]
      %v2626 = vld [vmem:[%s2297 + $0x168] sm:$0xff]
      %v2627 = vld [vmem:[%s2297 + $0x170] sm:$0xff]
      %v2628 = vld [vmem:[%s2297 + $0x188] sm:$0xff]
      %v2629 = vld [vmem:[%s2297 + $0x190] sm:$0xff]
      %v2630 = vld [vmem:[%s2297 + $0x1a8] sm:$0xff]
      %v2631 = vld [vmem:[%s2297 + $0x1b0] sm:$0xff]
      %v2632 = vld [vmem:[%s2297 + $0x1c8] sm:$0xff]
      %v2633 = vld [vmem:[%s2297 + $0x1d0] sm:$0xff]
      %v2634 = vld [vmem:[%s2297 + $0x1e8] sm:$0xff]
      %v2635 = vld [vmem:[%s2297 + $0x1f0] sm:$0xff]
      %v2636 = vpack.c.bf16 %v2605, %v2604
      %v2637 = vpack.c.bf16 %v2607, %v2606
      %v2638 = vpack.c.bf16 %v2609, %v2608
      %v2639 = vpack.c.bf16 %v2611, %v2610
      %v2640 = vpack.c.bf16 %v2613, %v2612
      %v2641 = vpack.c.bf16 %v2615, %v2614
      %v2642 = vpack.c.bf16 %v2617, %v2616
      %v2643 = vpack.c.bf16 %v2619, %v2618
      %v2644 = vpack.c.bf16 %v2621, %v2620
      %v2645 = vpack.c.bf16 %v2623, %v2622
      %v2646 = vpack.c.bf16 %v2625, %v2624
      %v2647 = vpack.c.bf16 %v2627, %v2626
      %v2648 = vpack.c.bf16 %v2629, %v2628
      %v2649 = vpack.c.bf16 %v2631, %v2630
      %v2650 = vpack.c.bf16 %v2633, %v2632
      %v2651 = vpack.c.bf16 %v2635, %v2634
      %s2652 = scalar_lea.vmem %s3, 448
      %v2653 = vld [vmem:[%s2652] sm:$0xf]
      %v2654 = vld [vmem:[%s2652 + $0x4] sm:$0xf]
      %v2655 = vld [vmem:[%s2652 + $0x8] sm:$0xf]
      %v2656 = vld [vmem:[%s2652 + $0xc] sm:$0xf]
      %v2657 = vld [vmem:[%s2652 + $0x10] sm:$0xf]
      %v2658 = vld [vmem:[%s2652 + $0x14] sm:$0xf]
      %v2659 = vld [vmem:[%s2652 + $0x18] sm:$0xf]
      %v2660 = vld [vmem:[%s2652 + $0x1c] sm:$0xf]
      %v2661 = vld [vmem:[%s2652 + $0x20] sm:$0xf]
      %v2662 = vld [vmem:[%s2652 + $0x24] sm:$0xf]
      %v2663 = vld [vmem:[%s2652 + $0x28] sm:$0xf]
      %v2664 = vld [vmem:[%s2652 + $0x2c] sm:$0xf]
      %v2665 = vld [vmem:[%s2652 + $0x30] sm:$0xf]
      %v2666 = vld [vmem:[%s2652 + $0x34] sm:$0xf]
      %v2667 = vld [vmem:[%s2652 + $0x38] sm:$0xf]
      %v2668 = vld [vmem:[%s2652 + $0x3c] sm:$0xf]
      %v2685 = vunpack.c.l.b16 %v2653
      %v2686 = vunpack.c.l.b16 %v2654
      %v2687 = vunpack.c.l.b16 %v2655
      %v2688 = vunpack.c.l.b16 %v2656
      %v2689 = vunpack.c.l.b16 %v2657
      %v2690 = vunpack.c.l.b16 %v2658
      %v2691 = vunpack.c.l.b16 %v2659
      %v2692 = vunpack.c.l.b16 %v2660
      %v2693 = vunpack.c.l.b16 %v2661
      %v2694 = vunpack.c.l.b16 %v2662
      %v2695 = vunpack.c.l.b16 %v2663
      %v2696 = vunpack.c.l.b16 %v2664
      %v2697 = vunpack.c.l.b16 %v2665
      %v2698 = vunpack.c.l.b16 %v2666
      %v2699 = vunpack.c.l.b16 %v2667
      %v2700 = vunpack.c.l.b16 %v2668
      %v2701 = vpack.c.b16 %v2686, %v2685
      %v2702 = vpack.c.b16 %v2688, %v2687
      %v2703 = vpack.c.b16 %v2690, %v2689
      %v2704 = vpack.c.b16 %v2692, %v2691
      %v2705 = vpack.c.b16 %v2694, %v2693
      %v2706 = vpack.c.b16 %v2696, %v2695
      %v2707 = vpack.c.b16 %v2698, %v2697
      %v2708 = vpack.c.b16 %v2700, %v2699
      %2717 = vmatprep.subr.bf16.mxu0 0
      %2718 = vmatpush1.bf16.msra.mxu0 %v2701
      %2719 = vmatprep.subr.bf16.mxu0 0
      %2720 = vmatpush1.bf16.msra.mxu0 %v2702
      %2721 = vmatprep.subr.bf16.mxu0 0
      %2722 = vmatpush1.bf16.msra.mxu0 %v2703
      %2723 = vmatprep.subr.bf16.mxu0 0
      %2724 = vmatpush1.bf16.msra.mxu0 %v2704
      %2725 = vmatprep.subr.bf16.mxu0 0
      %2726 = vmatpush1.bf16.msra.mxu0 %v2705
      %2727 = vmatprep.subr.bf16.mxu0 0
      %2728 = vmatpush1.bf16.msra.mxu0 %v2706
      %2729 = vmatprep.subr.bf16.mxu0 0
      %2730 = vmatpush1.bf16.msra.mxu0 %v2707
      %2731 = vmatprep.subr.bf16.mxu0 0
      %2732 = vmatpush1.bf16.msra.mxu0 %v2708
      %2733 = vmatprep.subr.bf16.mxu0 0
      %2734 = vmatpush1.bf16.msra.mxu0 0
      %2735 = vmatprep.subr.bf16.mxu0 0
      %2736 = vmatpush1.bf16.msra.mxu0 0
      %2737 = vmatprep.subr.bf16.mxu0 0
      %2738 = vmatpush1.bf16.msra.mxu0 0
      %2739 = vmatprep.subr.bf16.mxu0 0
      %2740 = vmatpush1.bf16.msra.mxu0 0
      %2741 = vmatprep.subr.bf16.mxu0 0
      %2742 = vmatpush1.bf16.msra.mxu0 0
      %2743 = vmatprep.subr.bf16.mxu0 0
      %2744 = vmatpush1.bf16.msra.mxu0 0
      %2745 = vmatprep.subr.bf16.mxu0 0
      %2746 = vmatpush1.bf16.msra.mxu0 0
      %2747 = vmatprep.subr.bf16.mxu0 0
      %2748 = vmatpush1.bf16.msra.mxu0 0
      %2749 = vmatprep.mubr.bf16.mxu0 0
      %2750 = vmatmul.mubr.bf16.gmra.mrb[0].mxu0 %v2636
      %v2751 = vpop.f32.mrb[0].mxu0
      %v2752 = vadd.f32 0.0, %v2751
      %v2753 = vpop.f32.mrb[0].mxu0
      %v2754 = vpop.f32.mrb[0].mxu0
      %v2755 = vadd.f32 0.0, %v2754
      %v2756 = vpop.f32.mrb[0].mxu0
      %2757 = vmatprep.mubr.bf16.mxu0 0
      %2758 = vmatmul.mubr.bf16.gmra.mrb[0].mxu0 %v2637
      %v2759 = vpop.f32.mrb[0].mxu0
      %v2760 = vadd.f32 0.0, %v2759
      %v2761 = vpop.f32.mrb[0].mxu0
      %v2762 = vpop.f32.mrb[0].mxu0
      %v2763 = vadd.f32 0.0, %v2762
      %v2764 = vpop.f32.mrb[0].mxu0
      %2765 = vmatprep.mubr.bf16.mxu0 0
      %2766 = vmatmul.mubr.bf16.gmra.mrb[0].mxu0 %v2638
      %v2767 = vpop.f32.mrb[0].mxu0
      %v2768 = vadd.f32 0.0, %v2767
      %v2769 = vpop.f32.mrb[0].mxu0
      %v2770 = vpop.f32.mrb[0].mxu0
      %v2771 = vadd.f32 0.0, %v2770
      %v2772 = vpop.f32.mrb[0].mxu0
      %2773 = vmatprep.mubr.bf16.mxu0 0
      %2774 = vmatmul.mubr.bf16.gmra.mrb[0].mxu0 %v2639
      %v2775 = vpop.f32.mrb[0].mxu0
      %v2776 = vadd.f32 0.0, %v2775
      %v2777 = vpop.f32.mrb[0].mxu0
      %v2778 = vpop.f32.mrb[0].mxu0
      %v2779 = vadd.f32 0.0, %v2778
      %v2780 = vpop.f32.mrb[0].mxu0
      %2781 = vmatprep.mubr.bf16.mxu0 0
      %2782 = vmatmul.mubr.bf16.gmra.mrb[0].mxu0 %v2640
      %v2783 = vpop.f32.mrb[0].mxu0
      %v2784 = vadd.f32 0.0, %v2783
      %v2785 = vpop.f32.mrb[0].mxu0
      %v2786 = vpop.f32.mrb[0].mxu0
      %v2787 = vadd.f32 0.0, %v2786
      %v2788 = vpop.f32.mrb[0].mxu0
      %2789 = vmatprep.mubr.bf16.mxu0 0
      %2790 = vmatmul.mubr.bf16.gmra.mrb[0].mxu0 %v2641
      %v2791 = vpop.f32.mrb[0].mxu0
      %v2792 = vadd.f32 0.0, %v2791
      %v2793 = vpop.f32.mrb[0].mxu0
      %v2794 = vpop.f32.mrb[0].mxu0
      %v2795 = vadd.f32 0.0, %v2794
      %v2796 = vpop.f32.mrb[0].mxu0
      %2797 = vmatprep.mubr.bf16.mxu0 0
      %2798 = vmatmul.mubr.bf16.gmra.mrb[0].mxu0 %v2642
      %v2799 = vpop.f32.mrb[0].mxu0
      %v2800 = vadd.f32 0.0, %v2799
      %v2801 = vpop.f32.mrb[0].mxu0
      %v2802 = vpop.f32.mrb[0].mxu0
      %v2803 = vadd.f32 0.0, %v2802
      %v2804 = vpop.f32.mrb[0].mxu0
      %2805 = vmatprep.mubr.bf16.mxu0 0
      %2806 = vmatmul.mubr.bf16.gmra.mrb[0].mxu0 %v2643
      %v2807 = vpop.f32.mrb[0].mxu0
      %v2808 = vadd.f32 0.0, %v2807
      %v2809 = vpop.f32.mrb[0].mxu0
      %v2810 = vpop.f32.mrb[0].mxu0
      %v2811 = vadd.f32 0.0, %v2810
      %v2812 = vpop.f32.mrb[0].mxu0
      %2813 = vmatprep.mubr.bf16.mxu0 0
      %2814 = vmatmul.mubr.bf16.gmra.mrb[0].mxu0 %v2644
      %v2815 = vpop.f32.mrb[0].mxu0
      %v2816 = vadd.f32 0.0, %v2815
      %v2817 = vpop.f32.mrb[0].mxu0
      %v2818 = vpop.f32.mrb[0].mxu0
      %v2819 = vadd.f32 0.0, %v2818
      %v2820 = vpop.f32.mrb[0].mxu0
      %2821 = vmatprep.mubr.bf16.mxu0 0
      %2822 = vmatmul.mubr.bf16.gmra.mrb[0].mxu0 %v2645
      %v2823 = vpop.f32.mrb[0].mxu0
      %v2824 = vadd.f32 0.0, %v2823
      %v2825 = vpop.f32.mrb[0].mxu0
      %v2826 = vpop.f32.mrb[0].mxu0
      %v2827 = vadd.f32 0.0, %v2826
      %v2828 = vpop.f32.mrb[0].mxu0
      %2829 = vmatprep.mubr.bf16.mxu0 0
      %2830 = vmatmul.mubr.bf16.gmra.mrb[0].mxu0 %v2646
      %v2831 = vpop.f32.mrb[0].mxu0
      %v2832 = vadd.f32 0.0, %v2831
      %v2833 = vpop.f32.mrb[0].mxu0
      %v2834 = vpop.f32.mrb[0].mxu0
      %v2835 = vadd.f32 0.0, %v2834
      %v2836 = vpop.f32.mrb[0].mxu0
      %2837 = vmatprep.mubr.bf16.mxu0 0
      %2838 = vmatmul.mubr.bf16.gmra.mrb[0].mxu0 %v2647
      %v2839 = vpop.f32.mrb[0].mxu0
      %v2840 = vadd.f32 0.0, %v2839
      %v2841 = vpop.f32.mrb[0].mxu0
      %v2842 = vpop.f32.mrb[0].mxu0
      %v2843 = vadd.f32 0.0, %v2842
      %v2844 = vpop.f32.mrb[0].mxu0
      %2845 = vmatprep.mubr.bf16.mxu0 0
      %2846 = vmatmul.mubr.bf16.gmra.mrb[0].mxu0 %v2648
      %v2847 = vpop.f32.mrb[0].mxu0
      %v2848 = vadd.f32 0.0, %v2847
      %v2849 = vpop.f32.mrb[0].mxu0
      %v2850 = vpop.f32.mrb[0].mxu0
      %v2851 = vadd.f32 0.0, %v2850
      %v2852 = vpop.f32.mrb[0].mxu0
      %2853 = vmatprep.mubr.bf16.mxu0 0
      %2854 = vmatmul.mubr.bf16.gmra.mrb[0].mxu0 %v2649
      %v2855 = vpop.f32.mrb[0].mxu0
      %v2856 = vadd.f32 0.0, %v2855
      %v2857 = vpop.f32.mrb[0].mxu0
      %v2858 = vpop.f32.mrb[0].mxu0
      %v2859 = vadd.f32 0.0, %v2858
      %v2860 = vpop.f32.mrb[0].mxu0
      %2861 = vmatprep.mubr.bf16.mxu0 0
      %2862 = vmatmul.mubr.bf16.gmra.mrb[0].mxu0 %v2650
      %v2863 = vpop.f32.mrb[0].mxu0
      %v2864 = vadd.f32 0.0, %v2863
      %v2865 = vpop.f32.mrb[0].mxu0
      %v2866 = vpop.f32.mrb[0].mxu0
      %v2867 = vadd.f32 0.0, %v2866
      %v2868 = vpop.f32.mrb[0].mxu0
      %2869 = vmatprep.mubr.bf16.mxu0 0
      %2870 = vmatmul.mubr.bf16.gmra.mrb[0].mxu0 %v2651
      %v2871 = vpop.f32.mrb[0].mxu0
      %v2872 = vadd.f32 0.0, %v2871
      %v2873 = vpop.f32.mrb[0].mxu0
      %v2874 = vpop.f32.mrb[0].mxu0
      %v2875 = vadd.f32 0.0, %v2874
      %v2876 = vpop.f32.mrb[0].mxu0
      %2877 = vdwg.mxu0
      %v2878 = vadd.f32 %v2572, %v2752
      %v2879 = vadd.f32 %v2573, %v2755
      %v2880 = vadd.f32 %v2574, %v2760
      %v2881 = vadd.f32 %v2575, %v2763
      %v2882 = vadd.f32 %v2576, %v2768
      %v2883 = vadd.f32 %v2577, %v2771
      %v2884 = vadd.f32 %v2578, %v2776
      %v2885 = vadd.f32 %v2579, %v2779
      %v2886 = vadd.f32 %v2580, %v2784
      %v2887 = vadd.f32 %v2581, %v2787
      %v2888 = vadd.f32 %v2582, %v2792
      %v2889 = vadd.f32 %v2583, %v2795
      %v2890 = vadd.f32 %v2584, %v2800
      %v2891 = vadd.f32 %v2585, %v2803
      %v2892 = vadd.f32 %v2586, %v2808
      %v2893 = vadd.f32 %v2587, %v2811
      %v2894 = vadd.f32 %v2588, %v2816
      %v2895 = vadd.f32 %v2589, %v2819
      %v2896 = vadd.f32 %v2590, %v2824
      %v2897 = vadd.f32 %v2591, %v2827
      %v2898 = vadd.f32 %v2592, %v2832
      %v2899 = vadd.f32 %v2593, %v2835
      %v2900 = vadd.f32 %v2594, %v2840
      %v2901 = vadd.f32 %v2595, %v2843
      %v2902 = vadd.f32 %v2596, %v2848
      %v2903 = vadd.f32 %v2597, %v2851
      %v2904 = vadd.f32 %v2598, %v2856
      %v2905 = vadd.f32 %v2599, %v2859
      %v2906 = vadd.f32 %v2600, %v2864
      %v2907 = vadd.f32 %v2601, %v2867
      %v2908 = vadd.f32 %v2602, %v2872
      %v2909 = vadd.f32 %v2603, %v2875
      %v2910 = vld [vmem:[%s2297 + $0x9] sm:$0xff]
      %v2911 = vld [vmem:[%s2297 + $0x11] sm:$0xff]
      %v2912 = vld [vmem:[%s2297 + $0x29] sm:$0xff]
      %v2913 = vld [vmem:[%s2297 + $0x31] sm:$0xff]
      %v2914 = vld [vmem:[%s2297 + $0x49] sm:$0xff]
      %v2915 = vld [vmem:[%s2297 + $0x51] sm:$0xff]
      %v2916 = vld [vmem:[%s2297 + $0x69] sm:$0xff]
      %v2917 = vld [vmem:[%s2297 + $0x71] sm:$0xff]
      %v2918 = vld [vmem:[%s2297 + $0x89] sm:$0xff]
      %v2919 = vld [vmem:[%s2297 + $0x91] sm:$0xff]
      %v2920 = vld [vmem:[%s2297 + $0xa9] sm:$0xff]
      %v2921 = vld [vmem:[%s2297 + $0xb1] sm:$0xff]
      %v2922 = vld [vmem:[%s2297 + $0xc9] sm:$0xff]
      %v2923 = vld [vmem:[%s2297 + $0xd1] sm:$0xff]
      %v2924 = vld [vmem:[%s2297 + $0xe9] sm:$0xff]
      %v2925 = vld [vmem:[%s2297 + $0xf1] sm:$0xff]
      %v2926 = vld [vmem:[%s2297 + $0x109] sm:$0xff]
      %v2927 = vld [vmem:[%s2297 + $0x111] sm:$0xff]
      %v2928 = vld [vmem:[%s2297 + $0x129] sm:$0xff]
      %v2929 = vld [vmem:[%s2297 + $0x131] sm:$0xff]
      %v2930 = vld [vmem:[%s2297 + $0x149] sm:$0xff]
      %v2931 = vld [vmem:[%s2297 + $0x151] sm:$0xff]
      %v2932 = vld [vmem:[%s2297 + $0x169] sm:$0xff]
      %v2933 = vld [vmem:[%s2297 + $0x171] sm:$0xff]
      %v2934 = vld [vmem:[%s2297 + $0x189] sm:$0xff]
      %v2935 = vld [vmem:[%s2297 + $0x191] sm:$0xff]
      %v2936 = vld [vmem:[%s2297 + $0x1a9] sm:$0xff]
      %v2937 = vld [vmem:[%s2297 + $0x1b1] sm:$0xff]
      %v2938 = vld [vmem:[%s2297 + $0x1c9] sm:$0xff]
      %v2939 = vld [vmem:[%s2297 + $0x1d1] sm:$0xff]
      %v2940 = vld [vmem:[%s2297 + $0x1e9] sm:$0xff]
      %v2941 = vld [vmem:[%s2297 + $0x1f1] sm:$0xff]
      %v2942 = vpack.c.bf16 %v2911, %v2910
      %v2943 = vpack.c.bf16 %v2913, %v2912
      %v2944 = vpack.c.bf16 %v2915, %v2914
      %v2945 = vpack.c.bf16 %v2917, %v2916
      %v2946 = vpack.c.bf16 %v2919, %v2918
      %v2947 = vpack.c.bf16 %v2921, %v2920
      %v2948 = vpack.c.bf16 %v2923, %v2922
      %v2949 = vpack.c.bf16 %v2925, %v2924
      %v2950 = vpack.c.bf16 %v2927, %v2926
      %v2951 = vpack.c.bf16 %v2929, %v2928
      %v2952 = vpack.c.bf16 %v2931, %v2930
      %v2953 = vpack.c.bf16 %v2933, %v2932
      %v2954 = vpack.c.bf16 %v2935, %v2934
      %v2955 = vpack.c.bf16 %v2937, %v2936
      %v2956 = vpack.c.bf16 %v2939, %v2938
      %v2957 = vpack.c.bf16 %v2941, %v2940
      %s2958 = scalar_lea.vmem %s3, 512
      %v2959 = vld [vmem:[%s2958] sm:$0xf]
      %v2960 = vld [vmem:[%s2958 + $0x4] sm:$0xf]
      %v2961 = vld [vmem:[%s2958 + $0x8] sm:$0xf]
      %v2962 = vld [vmem:[%s2958 + $0xc] sm:$0xf]
      %v2963 = vld [vmem:[%s2958 + $0x10] sm:$0xf]
      %v2964 = vld [vmem:[%s2958 + $0x14] sm:$0xf]
      %v2965 = vld [vmem:[%s2958 + $0x18] sm:$0xf]
      %v2966 = vld [vmem:[%s2958 + $0x1c] sm:$0xf]
      %v2967 = vld [vmem:[%s2958 + $0x20] sm:$0xf]
      %v2968 = vld [vmem:[%s2958 + $0x24] sm:$0xf]
      %v2969 = vld [vmem:[%s2958 + $0x28] sm:$0xf]
      %v2970 = vld [vmem:[%s2958 + $0x2c] sm:$0xf]
      %v2971 = vld [vmem:[%s2958 + $0x30] sm:$0xf]
      %v2972 = vld [vmem:[%s2958 + $0x34] sm:$0xf]
      %v2973 = vld [vmem:[%s2958 + $0x38] sm:$0xf]
      %v2974 = vld [vmem:[%s2958 + $0x3c] sm:$0xf]
      %v2991 = vunpack.c.l.b16 %v2959
      %v2992 = vunpack.c.l.b16 %v2960
      %v2993 = vunpack.c.l.b16 %v2961
      %v2994 = vunpack.c.l.b16 %v2962
      %v2995 = vunpack.c.l.b16 %v2963
      %v2996 = vunpack.c.l.b16 %v2964
      %v2997 = vunpack.c.l.b16 %v2965
      %v2998 = vunpack.c.l.b16 %v2966
      %v2999 = vunpack.c.l.b16 %v2967
      %v3000 = vunpack.c.l.b16 %v2968
      %v3001 = vunpack.c.l.b16 %v2969
      %v3002 = vunpack.c.l.b16 %v2970
      %v3003 = vunpack.c.l.b16 %v2971
      %v3004 = vunpack.c.l.b16 %v2972
      %v3005 = vunpack.c.l.b16 %v2973
      %v3006 = vunpack.c.l.b16 %v2974
      %v3007 = vpack.c.b16 %v2992, %v2991
      %v3008 = vpack.c.b16 %v2994, %v2993
      %v3009 = vpack.c.b16 %v2996, %v2995
      %v3010 = vpack.c.b16 %v2998, %v2997
      %v3011 = vpack.c.b16 %v3000, %v2999
      %v3012 = vpack.c.b16 %v3002, %v3001
      %v3013 = vpack.c.b16 %v3004, %v3003
      %v3014 = vpack.c.b16 %v3006, %v3005
      %3023 = vmatprep.subr.bf16.mxu0 0
      %3024 = vmatpush1.bf16.msra.mxu0 %v3007
      %3025 = vmatprep.subr.bf16.mxu0 0
      %3026 = vmatpush1.bf16.msra.mxu0 %v3008
      %3027 = vmatprep.subr.bf16.mxu0 0
      %3028 = vmatpush1.bf16.msra.mxu0 %v3009
      %3029 = vmatprep.subr.bf16.mxu0 0
      %3030 = vmatpush1.bf16.msra.mxu0 %v3010
      %3031 = vmatprep.subr.bf16.mxu0 0
      %3032 = vmatpush1.bf16.msra.mxu0 %v3011
      %3033 = vmatprep.subr.bf16.mxu0 0
      %3034 = vmatpush1.bf16.msra.mxu0 %v3012
      %3035 = vmatprep.subr.bf16.mxu0 0
      %3036 = vmatpush1.bf16.msra.mxu0 %v3013
      %3037 = vmatprep.subr.bf16.mxu0 0
      %3038 = vmatpush1.bf16.msra.mxu0 %v3014
      %3039 = vmatprep.subr.bf16.mxu0 0
      %3040 = vmatpush1.bf16.msra.mxu0 0
      %3041 = vmatprep.subr.bf16.mxu0 0
      %3042 = vmatpush1.bf16.msra.mxu0 0
      %3043 = vmatprep.subr.bf16.mxu0 0
      %3044 = vmatpush1.bf16.msra.mxu0 0
      %3045 = vmatprep.subr.bf16.mxu0 0
      %3046 = vmatpush1.bf16.msra.mxu0 0
      %3047 = vmatprep.subr.bf16.mxu0 0
      %3048 = vmatpush1.bf16.msra.mxu0 0
      %3049 = vmatprep.subr.bf16.mxu0 0
      %3050 = vmatpush1.bf16.msra.mxu0 0
      %3051 = vmatprep.subr.bf16.mxu0 0
      %3052 = vmatpush1.bf16.msra.mxu0 0
      %3053 = vmatprep.subr.bf16.mxu0 0
      %3054 = vmatpush1.bf16.msra.mxu0 0
      %3055 = vmatprep.mubr.bf16.mxu0 0
      %3056 = vmatmul.mubr.bf16.gmra.mrb[0].mxu0 %v2942
      %v3057 = vpop.f32.mrb[0].mxu0
      %v3058 = vadd.f32 0.0, %v3057
      %v3059 = vpop.f32.mrb[0].mxu0
      %v3060 = vpop.f32.mrb[0].mxu0
      %v3061 = vadd.f32 0.0, %v3060
      %v3062 = vpop.f32.mrb[0].mxu0
      %3063 = vmatprep.mubr.bf16.mxu0 0
      %3064 = vmatmul.mubr.bf16.gmra.mrb[0].mxu0 %v2943
      %v3065 = vpop.f32.mrb[0].mxu0
      %v3066 = vadd.f32 0.0, %v3065
      %v3067 = vpop.f32.mrb[0].mxu0
      %v3068 = vpop.f32.mrb[0].mxu0
      %v3069 = vadd.f32 0.0, %v3068
      %v3070 = vpop.f32.mrb[0].mxu0
      %3071 = vmatprep.mubr.bf16.mxu0 0
      %3072 = vmatmul.mubr.bf16.gmra.mrb[0].mxu0 %v2944
      %v3073 = vpop.f32.mrb[0].mxu0
      %v3074 = vadd.f32 0.0, %v3073
      %v3075 = vpop.f32.mrb[0].mxu0
      %v3076 = vpop.f32.mrb[0].mxu0
      %v3077 = vadd.f32 0.0, %v3076
      %v3078 = vpop.f32.mrb[0].mxu0
      %3079 = vmatprep.mubr.bf16.mxu0 0
      %3080 = vmatmul.mubr.bf16.gmra.mrb[0].mxu0 %v2945
      %v3081 = vpop.f32.mrb[0].mxu0
      %v3082 = vadd.f32 0.0, %v3081
      %v3083 = vpop.f32.mrb[0].mxu0
      %v3084 = vpop.f32.mrb[0].mxu0
      %v3085 = vadd.f32 0.0, %v3084
      %v3086 = vpop.f32.mrb[0].mxu0
      %3087 = vmatprep.mubr.bf16.mxu0 0
      %3088 = vmatmul.mubr.bf16.gmra.mrb[0].mxu0 %v2946
      %v3089 = vpop.f32.mrb[0].mxu0
      %v3090 = vadd.f32 0.0, %v3089
      %v3091 = vpop.f32.mrb[0].mxu0
      %v3092 = vpop.f32.mrb[0].mxu0
      %v3093 = vadd.f32 0.0, %v3092
      %v3094 = vpop.f32.mrb[0].mxu0
      %3095 = vmatprep.mubr.bf16.mxu0 0
      %3096 = vmatmul.mubr.bf16.gmra.mrb[0].mxu0 %v2947
      %v3097 = vpop.f32.mrb[0].mxu0
      %v3098 = vadd.f32 0.0, %v3097
      %v3099 = vpop.f32.mrb[0].mxu0
      %v3100 = vpop.f32.mrb[0].mxu0
      %v3101 = vadd.f32 0.0, %v3100
      %v3102 = vpop.f32.mrb[0].mxu0
      %3103 = vmatprep.mubr.bf16.mxu0 0
      %3104 = vmatmul.mubr.bf16.gmra.mrb[0].mxu0 %v2948
      %v3105 = vpop.f32.mrb[0].mxu0
      %v3106 = vadd.f32 0.0, %v3105
      %v3107 = vpop.f32.mrb[0].mxu0
      %v3108 = vpop.f32.mrb[0].mxu0
      %v3109 = vadd.f32 0.0, %v3108
      %v3110 = vpop.f32.mrb[0].mxu0
      %3111 = vmatprep.mubr.bf16.mxu0 0
      %3112 = vmatmul.mubr.bf16.gmra.mrb[0].mxu0 %v2949
      %v3113 = vpop.f32.mrb[0].mxu0
      %v3114 = vadd.f32 0.0, %v3113
      %v3115 = vpop.f32.mrb[0].mxu0
      %v3116 = vpop.f32.mrb[0].mxu0
      %v3117 = vadd.f32 0.0, %v3116
      %v3118 = vpop.f32.mrb[0].mxu0
      %3119 = vmatprep.mubr.bf16.mxu0 0
      %3120 = vmatmul.mubr.bf16.gmra.mrb[0].mxu0 %v2950
      %v3121 = vpop.f32.mrb[0].mxu0
      %v3122 = vadd.f32 0.0, %v3121
      %v3123 = vpop.f32.mrb[0].mxu0
      %v3124 = vpop.f32.mrb[0].mxu0
      %v3125 = vadd.f32 0.0, %v3124
      %v3126 = vpop.f32.mrb[0].mxu0
      %3127 = vmatprep.mubr.bf16.mxu0 0
      %3128 = vmatmul.mubr.bf16.gmra.mrb[0].mxu0 %v2951
      %v3129 = vpop.f32.mrb[0].mxu0
      %v3130 = vadd.f32 0.0, %v3129
      %v3131 = vpop.f32.mrb[0].mxu0
      %v3132 = vpop.f32.mrb[0].mxu0
      %v3133 = vadd.f32 0.0, %v3132
      %v3134 = vpop.f32.mrb[0].mxu0
      %3135 = vmatprep.mubr.bf16.mxu0 0
      %3136 = vmatmul.mubr.bf16.gmra.mrb[0].mxu0 %v2952
      %v3137 = vpop.f32.mrb[0].mxu0
      %v3138 = vadd.f32 0.0, %v3137
      %v3139 = vpop.f32.mrb[0].mxu0
      %v3140 = vpop.f32.mrb[0].mxu0
      %v3141 = vadd.f32 0.0, %v3140
      %v3142 = vpop.f32.mrb[0].mxu0
      %3143 = vmatprep.mubr.bf16.mxu0 0
      %3144 = vmatmul.mubr.bf16.gmra.mrb[0].mxu0 %v2953
      %v3145 = vpop.f32.mrb[0].mxu0
      %v3146 = vadd.f32 0.0, %v3145
      %v3147 = vpop.f32.mrb[0].mxu0
      %v3148 = vpop.f32.mrb[0].mxu0
      %v3149 = vadd.f32 0.0, %v3148
      %v3150 = vpop.f32.mrb[0].mxu0
      %3151 = vmatprep.mubr.bf16.mxu0 0
      %3152 = vmatmul.mubr.bf16.gmra.mrb[0].mxu0 %v2954
      %v3153 = vpop.f32.mrb[0].mxu0
      %v3154 = vadd.f32 0.0, %v3153
      %v3155 = vpop.f32.mrb[0].mxu0
      %v3156 = vpop.f32.mrb[0].mxu0
      %v3157 = vadd.f32 0.0, %v3156
      %v3158 = vpop.f32.mrb[0].mxu0
      %3159 = vmatprep.mubr.bf16.mxu0 0
      %3160 = vmatmul.mubr.bf16.gmra.mrb[0].mxu0 %v2955
      %v3161 = vpop.f32.mrb[0].mxu0
      %v3162 = vadd.f32 0.0, %v3161
      %v3163 = vpop.f32.mrb[0].mxu0
      %v3164 = vpop.f32.mrb[0].mxu0
      %v3165 = vadd.f32 0.0, %v3164
      %v3166 = vpop.f32.mrb[0].mxu0
      %3167 = vmatprep.mubr.bf16.mxu0 0
      %3168 = vmatmul.mubr.bf16.gmra.mrb[0].mxu0 %v2956
      %v3169 = vpop.f32.mrb[0].mxu0
      %v3170 = vadd.f32 0.0, %v3169
      %v3171 = vpop.f32.mrb[0].mxu0
      %v3172 = vpop.f32.mrb[0].mxu0
      %v3173 = vadd.f32 0.0, %v3172
      %v3174 = vpop.f32.mrb[0].mxu0
      %3175 = vmatprep.mubr.bf16.mxu0 0
      %3176 = vmatmul.mubr.bf16.gmra.mrb[0].mxu0 %v2957
      %v3177 = vpop.f32.mrb[0].mxu0
      %v3178 = vadd.f32 0.0, %v3177
      %v3179 = vpop.f32.mrb[0].mxu0
      %v3180 = vpop.f32.mrb[0].mxu0
      %v3181 = vadd.f32 0.0, %v3180
      %v3182 = vpop.f32.mrb[0].mxu0
      %3183 = vdwg.mxu0
      %v3184 = vadd.f32 %v2878, %v3058
      %v3185 = vadd.f32 %v2879, %v3061
      %v3186 = vadd.f32 %v2880, %v3066
      %v3187 = vadd.f32 %v2881, %v3069
      %v3188 = vadd.f32 %v2882, %v3074
      %v3189 = vadd.f32 %v2883, %v3077
      %v3190 = vadd.f32 %v2884, %v3082
      %v3191 = vadd.f32 %v2885, %v3085
      %v3192 = vadd.f32 %v2886, %v3090
      %v3193 = vadd.f32 %v2887, %v3093
      %v3194 = vadd.f32 %v2888, %v3098
      %v3195 = vadd.f32 %v2889, %v3101
      %v3196 = vadd.f32 %v2890, %v3106
      %v3197 = vadd.f32 %v2891, %v3109
      %v3198 = vadd.f32 %v2892, %v3114
      %v3199 = vadd.f32 %v2893, %v3117
      %v3200 = vadd.f32 %v2894, %v3122
      %v3201 = vadd.f32 %v2895, %v3125
      %v3202 = vadd.f32 %v2896, %v3130
      %v3203 = vadd.f32 %v2897, %v3133
      %v3204 = vadd.f32 %v2898, %v3138
      %v3205 = vadd.f32 %v2899, %v3141
      %v3206 = vadd.f32 %v2900, %v3146
      %v3207 = vadd.f32 %v2901, %v3149
      %v3208 = vadd.f32 %v2902, %v3154
      %v3209 = vadd.f32 %v2903, %v3157
      %v3210 = vadd.f32 %v2904, %v3162
      %v3211 = vadd.f32 %v2905, %v3165
      %v3212 = vadd.f32 %v2906, %v3170
      %v3213 = vadd.f32 %v2907, %v3173
      %v3214 = vadd.f32 %v2908, %v3178
      %v3215 = vadd.f32 %v2909, %v3181
      %v3216 = vpack.c.bf16 %v3185, %v3184
      %v3217 = vpack.c.bf16 %v3187, %v3186
      %v3218 = vpack.c.bf16 %v3189, %v3188
      %v3219 = vpack.c.bf16 %v3191, %v3190
      %v3220 = vpack.c.bf16 %v3193, %v3192
      %v3221 = vpack.c.bf16 %v3195, %v3194
      %v3222 = vpack.c.bf16 %v3197, %v3196
      %v3223 = vpack.c.bf16 %v3199, %v3198
      %v3224 = vpack.c.bf16 %v3201, %v3200
      %v3225 = vpack.c.bf16 %v3203, %v3202
      %v3226 = vpack.c.bf16 %v3205, %v3204
      %v3227 = vpack.c.bf16 %v3207, %v3206
      %v3228 = vpack.c.bf16 %v3209, %v3208
      %v3229 = vpack.c.bf16 %v3211, %v3210
      %v3230 = vpack.c.bf16 %v3213, %v3212
      %v3231 = vpack.c.bf16 %v3215, %v3214
      %v3248 = vunpack.c.l.b16 %v3216
      %v3249 = vunpack.c.h.b16 %v3216
      %v3250 = vunpack.c.l.b16 %v3217
      %v3251 = vunpack.c.h.b16 %v3217
      %v3252 = vunpack.c.l.b16 %v3218
      %v3253 = vunpack.c.h.b16 %v3218
      %v3254 = vunpack.c.l.b16 %v3219
      %v3255 = vunpack.c.h.b16 %v3219
      %v3256 = vunpack.c.l.b16 %v3220
      %v3257 = vunpack.c.h.b16 %v3220
      %v3258 = vunpack.c.l.b16 %v3221
      %v3259 = vunpack.c.h.b16 %v3221
      %v3260 = vunpack.c.l.b16 %v3222
      %v3261 = vunpack.c.h.b16 %v3222
      %v3262 = vunpack.c.l.b16 %v3223
      %v3263 = vunpack.c.h.b16 %v3223
      %v3264 = vunpack.c.l.b16 %v3224
      %v3265 = vunpack.c.h.b16 %v3224
      %v3266 = vunpack.c.l.b16 %v3225
      %v3267 = vunpack.c.h.b16 %v3225
      %v3268 = vunpack.c.l.b16 %v3226
      %v3269 = vunpack.c.h.b16 %v3226
      %v3270 = vunpack.c.l.b16 %v3227
      %v3271 = vunpack.c.h.b16 %v3227
      %v3272 = vunpack.c.l.b16 %v3228
      %v3273 = vunpack.c.h.b16 %v3228
      %v3274 = vunpack.c.l.b16 %v3229
      %v3275 = vunpack.c.h.b16 %v3229
      %v3276 = vunpack.c.l.b16 %v3230
      %v3277 = vunpack.c.h.b16 %v3230
      %v3278 = vunpack.c.l.b16 %v3231
      %v3279 = vunpack.c.h.b16 %v3231
      %v3280 = vpack.c.b16 %v3248, %v3248
      %v3281 = vpack.c.b16 %v3249, %v3249
      %v3282 = vpack.c.b16 %v3250, %v3250
      %v3283 = vpack.c.b16 %v3251, %v3251
      %v3284 = vpack.c.b16 %v3252, %v3252
      %v3285 = vpack.c.b16 %v3253, %v3253
      %v3286 = vpack.c.b16 %v3254, %v3254
      %v3287 = vpack.c.b16 %v3255, %v3255
      %v3288 = vpack.c.b16 %v3256, %v3256
      %v3289 = vpack.c.b16 %v3257, %v3257
      %v3290 = vpack.c.b16 %v3258, %v3258
      %v3291 = vpack.c.b16 %v3259, %v3259
      %v3292 = vpack.c.b16 %v3260, %v3260
      %v3293 = vpack.c.b16 %v3261, %v3261
      %v3294 = vpack.c.b16 %v3262, %v3262
      %v3295 = vpack.c.b16 %v3263, %v3263
      %v3296 = vpack.c.b16 %v3264, %v3264
      %v3297 = vpack.c.b16 %v3265, %v3265
      %v3298 = vpack.c.b16 %v3266, %v3266
      %v3299 = vpack.c.b16 %v3267, %v3267
      %v3300 = vpack.c.b16 %v3268, %v3268
      %v3301 = vpack.c.b16 %v3269, %v3269
      %v3302 = vpack.c.b16 %v3270, %v3270
      %v3303 = vpack.c.b16 %v3271, %v3271
      %v3304 = vpack.c.b16 %v3272, %v3272
      %v3305 = vpack.c.b16 %v3273, %v3273
      %v3306 = vpack.c.b16 %v3274, %v3274
      %v3307 = vpack.c.b16 %v3275, %v3275
      %v3308 = vpack.c.b16 %v3276, %v3276
      %v3309 = vpack.c.b16 %v3277, %v3277
      %v3310 = vpack.c.b16 %v3278, %v3278
      %v3311 = vpack.c.b16 %v3279, %v3279
      %3344 = vst [vmem:[%s264] sm:$0xf] %v3280
      %3345 = vst [vmem:[%s264 + $0x4] sm:$0xf] %v3281
      %3346 = vst [vmem:[%s264 + $0x8] sm:$0xf] %v3282
      %3347 = vst [vmem:[%s264 + $0xc] sm:$0xf] %v3283
      %3348 = vst [vmem:[%s264 + $0x10] sm:$0xf] %v3284
      %3349 = vst [vmem:[%s264 + $0x14] sm:$0xf] %v3285
      %3350 = vst [vmem:[%s264 + $0x18] sm:$0xf] %v3286
      %3351 = vst [vmem:[%s264 + $0x1c] sm:$0xf] %v3287
      %3352 = vst [vmem:[%s264 + $0x20] sm:$0xf] %v3288
      %3353 = vst [vmem:[%s264 + $0x24] sm:$0xf] %v3289
      %3354 = vst [vmem:[%s264 + $0x28] sm:$0xf] %v3290
      %3355 = vst [vmem:[%s264 + $0x2c] sm:$0xf] %v3291
      %3356 = vst [vmem:[%s264 + $0x30] sm:$0xf] %v3292
      %3357 = vst [vmem:[%s264 + $0x34] sm:$0xf] %v3293
      %3358 = vst [vmem:[%s264 + $0x38] sm:$0xf] %v3294
      %3359 = vst [vmem:[%s264 + $0x3c] sm:$0xf] %v3295
      %3360 = vst [vmem:[%s264 + $0x40] sm:$0xf] %v3296
      %3361 = vst [vmem:[%s264 + $0x44] sm:$0xf] %v3297
      %3362 = vst [vmem:[%s264 + $0x48] sm:$0xf] %v3298
      %3363 = vst [vmem:[%s264 + $0x4c] sm:$0xf] %v3299
      %3364 = vst [vmem:[%s264 + $0x50] sm:$0xf] %v3300
      %3365 = vst [vmem:[%s264 + $0x54] sm:$0xf] %v3301
      %3366 = vst [vmem:[%s264 + $0x58] sm:$0xf] %v3302
      %3367 = vst [vmem:[%s264 + $0x5c] sm:$0xf] %v3303
      %3368 = vst [vmem:[%s264 + $0x60] sm:$0xf] %v3304
      %3369 = vst [vmem:[%s264 + $0x64] sm:$0xf] %v3305
      %3370 = vst [vmem:[%s264 + $0x68] sm:$0xf] %v3306
      %3371 = vst [vmem:[%s264 + $0x6c] sm:$0xf] %v3307
      %3372 = vst [vmem:[%s264 + $0x70] sm:$0xf] %v3308
      %3373 = vst [vmem:[%s264 + $0x74] sm:$0xf] %v3309
      %3374 = vst [vmem:[%s264 + $0x78] sm:$0xf] %v3310
      %3375 = vst [vmem:[%s264 + $0x7c] sm:$0xf] %v3311
      %v3376 = vadd.f32 %v3184, %v3185
      %v3377 = vadd.f32 %v3376, %v3186
      %v3378 = vadd.f32 %v3377, %v3187
      %v3379 = vadd.f32 %v3378, %v3188
      %v3380 = vadd.f32 %v3379, %v3189
      %v3381 = vadd.f32 %v3380, %v3190
      %v3382 = vadd.f32 %v3381, %v3191
      %v3383 = vadd.f32 %v3382, %v3192
      %v3384 = vadd.f32 %v3383, %v3193
      %v3385 = vadd.f32 %v3384, %v3194
      %v3386 = vadd.f32 %v3385, %v3195
      %v3387 = vadd.f32 %v3386, %v3196
      %v3388 = vadd.f32 %v3387, %v3197
      %v3389 = vadd.f32 %v3388, %v3198
      %v3390 = vadd.f32 %v3389, %v3199
      %v3391 = vadd.f32 %v3390, %v3200
      %v3392 = vadd.f32 %v3391, %v3201
      %v3393 = vadd.f32 %v3392, %v3202
      %v3394 = vadd.f32 %v3393, %v3203
      %v3395 = vadd.f32 %v3394, %v3204
      %v3396 = vadd.f32 %v3395, %v3205
      %v3397 = vadd.f32 %v3396, %v3206
      %v3398 = vadd.f32 %v3397, %v3207
      %v3399 = vadd.f32 %v3398, %v3208
      %v3400 = vadd.f32 %v3399, %v3209
      %v3401 = vadd.f32 %v3400, %v3210
      %v3402 = vadd.f32 %v3401, %v3211
      %v3403 = vadd.f32 %v3402, %v3212
      %v3404 = vadd.f32 %v3403, %v3213
      %v3405 = vadd.f32 %v3404, %v3214
      %v3406 = vadd.f32 %v3405, %v3215
      %v3407 = vmul.f32 %v3184, %v3184
      %v3408 = vmul.f32 %v3185, %v3185
      %v3409 = vmul.f32 %v3186, %v3186
      %v3410 = vmul.f32 %v3187, %v3187
      %v3411 = vmul.f32 %v3188, %v3188
      %v3412 = vmul.f32 %v3189, %v3189
      %v3413 = vmul.f32 %v3190, %v3190
      %v3414 = vmul.f32 %v3191, %v3191
      %v3415 = vmul.f32 %v3192, %v3192
      %v3416 = vmul.f32 %v3193, %v3193
      %v3417 = vmul.f32 %v3194, %v3194
      %v3418 = vmul.f32 %v3195, %v3195
      %v3419 = vmul.f32 %v3196, %v3196
      %v3420 = vmul.f32 %v3197, %v3197
      %v3421 = vmul.f32 %v3198, %v3198
      %v3422 = vmul.f32 %v3199, %v3199
      %v3423 = vmul.f32 %v3200, %v3200
      %v3424 = vmul.f32 %v3201, %v3201
      %v3425 = vmul.f32 %v3202, %v3202
      %v3426 = vmul.f32 %v3203, %v3203
      %v3427 = vmul.f32 %v3204, %v3204
      %v3428 = vmul.f32 %v3205, %v3205
      %v3429 = vmul.f32 %v3206, %v3206
      %v3430 = vmul.f32 %v3207, %v3207
      %v3431 = vmul.f32 %v3208, %v3208
      %v3432 = vmul.f32 %v3209, %v3209
      %v3433 = vmul.f32 %v3210, %v3210
      %v3434 = vmul.f32 %v3211, %v3211
      %v3435 = vmul.f32 %v3212, %v3212
      %v3436 = vmul.f32 %v3213, %v3213
      %v3437 = vmul.f32 %v3214, %v3214
      %v3438 = vmul.f32 %v3215, %v3215
      %v3439 = vadd.f32 %v3407, %v3408
      %v3440 = vadd.f32 %v3439, %v3409
      %v3441 = vadd.f32 %v3440, %v3410
      %v3442 = vadd.f32 %v3441, %v3411
      %v3443 = vadd.f32 %v3442, %v3412
      %v3444 = vadd.f32 %v3443, %v3413
      %v3445 = vadd.f32 %v3444, %v3414
      %v3446 = vadd.f32 %v3445, %v3415
      %v3447 = vadd.f32 %v3446, %v3416
      %v3448 = vadd.f32 %v3447, %v3417
      %v3449 = vadd.f32 %v3448, %v3418
      %v3450 = vadd.f32 %v3449, %v3419
      %v3451 = vadd.f32 %v3450, %v3420
      %v3452 = vadd.f32 %v3451, %v3421
      %v3453 = vadd.f32 %v3452, %v3422
      %v3454 = vadd.f32 %v3453, %v3423
      %v3455 = vadd.f32 %v3454, %v3424
      %v3456 = vadd.f32 %v3455, %v3425
      %v3457 = vadd.f32 %v3456, %v3426
      %v3458 = vadd.f32 %v3457, %v3427
      %v3459 = vadd.f32 %v3458, %v3428
      %v3460 = vadd.f32 %v3459, %v3429
      %v3461 = vadd.f32 %v3460, %v3430
      %v3462 = vadd.f32 %v3461, %v3431
      %v3463 = vadd.f32 %v3462, %v3432
      %v3464 = vadd.f32 %v3463, %v3433
      %v3465 = vadd.f32 %v3464, %v3434
      %v3466 = vadd.f32 %v3465, %v3435
      %v3467 = vadd.f32 %v3466, %v3436
      %v3468 = vadd.f32 %v3467, %v3437
      %v3469 = vadd.f32 %v3468, %v3438
      %3470 = vst [vmem:[%s268] sm:$0xff] %v3406
      %3471 = vst [vmem:[%s272] sm:$0xff] %v3469
      %p3472 = scmp.lt.s32.totalorder %s18, 1
      %s3473 = scalar_select %p3472, %s18, 1
      %s3474 = smul.addr %s3473, 32
      %s3475 = smul.addr %s3474, 4
      %s3476 = scalar_lea.vmem %s4, %s3475
      %p3477 = scmp.lt.s32.totalorder %s18, 1
      %s3478 = scalar_select %p3477, %s18, 1
      %s3479 = smul.addr %s3478, 8
      %s3480 = scalar_lea.vmem %s5, %s3479
      %p3481 = scmp.lt.s32.totalorder %s18, 1
      %s3482 = scalar_select %p3481, %s18, 1
      %s3483 = smul.addr %s3482, 8
      %s3484 = scalar_lea.vmem %s6, %s3483
      // Predicated region
      $region37: #{unet_up_block_forward.4} parent=35 // pred_check
        %p3485 = pneg %p125
      $region38: #{unet_up_block_forward.4} parent=35 // pred_check_branch
        %3487 = sbr.rel (%p3485) target = $region40
      $region39: #{unet_up_block_forward.4} parent=35 // pred_region
        _
      $region40: #{unet_up_block_forward.4} parent=35 // pred_fallthru
        _
      // Predicated region
      $region41: #{unet_up_block_forward.4} parent=35 // pred_check
        %p3488 = pneg %p151
      $region42: #{unet_up_block_forward.4} parent=35 // pred_check_branch
        %3490 = sbr.rel (%p3488) target = $region44
      $region43: #{unet_up_block_forward.4} parent=35 // pred_region
        _
      $region44: #{unet_up_block_forward.4} parent=35 // pred_fallthru
        _
      // Predicated region
      $region45: #{unet_up_block_forward.4} parent=35 // pred_check
        %p3491 = pneg %p177
      $region46: #{unet_up_block_forward.4} parent=35 // pred_check_branch
        %3493 = sbr.rel (%p3491) target = $region48
      $region47: #{unet_up_block_forward.4} parent=35 // pred_region
        _
      $region48: #{unet_up_block_forward.4} parent=35 // pred_fallthru
        _
    $region36: #{unet_up_block_forward.4} parent=5 // pred_fallthru
      _
    %p3494 = scmp.le.s32.totalorder 2, %s13
    // Predicated region
    $region49: #{unet_up_block_forward.4} parent=5 // pred_check
      %p3495 = pneg %p3494
    $region50: #{unet_up_block_forward.4} parent=5 // pred_check_branch
      %3497 = sbr.rel (%p3495) target = $region52
    $region51: #{unet_up_block_forward.4} parent=5 // pred_region
      %s3498 = ssub.s32 %s13, 2
      // Predicated region
      $region53: #{unet_up_block_forward.4} parent=51 // pred_check
        %p3499 = pneg %p131
      $region54: #{unet_up_block_forward.4} parent=51 // pred_check_branch
        %3501 = sbr.rel (%p3499) target = $region56
      $region55: #{unet_up_block_forward.4} parent=51 // pred_region
        %p3502 = scmp.lt.s32.totalorder %s19, 1
        %s3503 = scalar_select %p3502, %s19, 1
        %s3504 = smul.addr %s3503, 32
        %s3505 = smul.addr %s3504, 4
        %s3506 = scalar_lea.vmem %s4, %s3505
      $region56: #{unet_up_block_forward.4} parent=51 // pred_fallthru
        _
      // Predicated region
      $region57: #{unet_up_block_forward.4} parent=51 // pred_check
        %p3507 = pneg %p157
      $region58: #{unet_up_block_forward.4} parent=51 // pred_check_branch
        %3509 = sbr.rel (%p3507) target = $region60
      $region59: #{unet_up_block_forward.4} parent=51 // pred_region
        %p3510 = scmp.lt.s32.totalorder %s19, 1
        %s3511 = scalar_select %p3510, %s19, 1
        %s3512 = smul.addr %s3511, 8
        %s3513 = scalar_lea.vmem %s5, %s3512
      $region60: #{unet_up_block_forward.4} parent=51 // pred_fallthru
        _
      // Predicated region
      $region61: #{unet_up_block_forward.4} parent=51 // pred_check
        %p3514 = pneg %p183
      $region62: #{unet_up_block_forward.4} parent=51 // pred_check_branch
        %3516 = sbr.rel (%p3514) target = $region64
      $region63: #{unet_up_block_forward.4} parent=51 // pred_region
        %p3517 = scmp.lt.s32.totalorder %s19, 1
        %s3518 = scalar_select %p3517, %s19, 1
        %s3519 = smul.addr %s3518, 8
        %s3520 = scalar_lea.vmem %s6, %s3519
      $region64: #{unet_up_block_forward.4} parent=51 // pred_fallthru
        _
    $region52: #{unet_up_block_forward.4} parent=5 // pred_fallthru
      _
  $region6: #{unet_up_block_forward.4} parent=0 // loop_footer
    %s17 = sadd.s32 1, %s13
  $region7: #{unet_up_block_forward.4} parent=0 // loop_footer_branch
    %12 = sbr.rel target = $region3
  $region8: #{unet_up_block_forward.4} parent=0 // loop_exit
    _

// kernel: unet_up_block_forward.3
$region0: #{unet_up_block_forward.3}
  #allocation0 [shape = 'u32[]', space=smem, size = 0x4, offset = 0x4, fixed_abs, tag = 'smem constant byte address 0x4 - core index']
  #allocation1 [shape = 'u32[144,128]{1,0:T(1,128)}', space=vmem, size = 0x12000, scoped, tag = 'internal scratch']
  #allocation2 [shape = 'f32[18,32,128]{2,1,0:T(8,128)}', space=vmem, size = 0x48000, scoped, tag = 'scratch operand']
  %s0 = inlined_call_operand.vmem [shape: f32[2,16,16,8], index: 0, kind: input, shape index: {}]
  %s1 = inlined_call_operand.vmem [shape: f32[2,16,16,4], index: 1, kind: input, shape index: {}]
  %s2 = inlined_call_operand.vmem [shape: bf16[9,128,128], index: 2, kind: input, shape index: {}]
  %s3 = inlined_call_operand.vmem [shape: bf16[2,16,16,128], index: 3, kind: output, shape index: {0}]
  %s4 = inlined_call_operand.vmem [shape: f32[2,8,128], index: 4, kind: output, shape index: {1}]
  %s5 = inlined_call_operand.vmem [shape: f32[2,8,128], index: 5, kind: output, shape index: {2}]
  %6 = xla_tuple %s3, %s4, %s5
  %s7 = sld [smem:[#allocation0]]
  $region61: #{unet_up_block_forward.3} parent=0
    _
  %s9 = ssub.s32 1, %s7
  %s10 = scalar_select 0, %s9, %s7
  loop: start=0, step=1, limit=4
  $region2: #{unet_up_block_forward.3} parent=0 // loop_pre_header
    _
  $region3: #{unet_up_block_forward.3} parent=0 // loop_header
    %s12 = sphi 0, %s16
    %p13 = scmp.ge.s32.totalorder %s12, 4
    %s22 = sphi 0, %s24
    %s25 = sphi 0, %s22
    %s26 = sphi 0, %s25
    %s42 = sphi 0, %s26
    %s48 = sphi 0, %s50
    %s51 = sphi 0, %s48
    %s52 = sphi 0, %s51
    %s68 = sphi 0, %s52
    %s72 = sphi 0, %s72
    %s74 = sphi 0, %s72
    %s75 = sphi 0, %s74
    %s89 = sphi 0, %s75
    %s95 = sphi 0, %s97
    %s98 = sphi 0, %s95
    %s99 = sphi 0, %s98
    %s115 = sphi 0, %s99
    %s121 = sphi 0, %s123
    %s124 = sphi 0, %s121
    %s125 = sphi 0, %s124
    %s141 = sphi 0, %s125
    %s147 = sphi 0, %s149
    %s150 = sphi 0, %s147
    %s151 = sphi 0, %s150
    %s167 = sphi 0, %s151
  $region4: #{unet_up_block_forward.3} parent=0 // loop_header_branch
    %15 = sbr.rel (%p13) target = $region8
  $region5: #{unet_up_block_forward.3} parent=0 // loop_body
    %s17 = ssub.s32 %s12, 1
    %s18 = ssub.s32 %s12, 2
    %s19 = sadd.s32 %s12, 1
    %s20 = ssub.s32 %s12, %s19
    %p21 = scmp.eq.s32.totalorder %s20, 0
    %s23 = sadd.s32 %s22, 1
    %s24 = scalar_select %p21, %s22, %s23
    %p27 = pneg %p21
    %p28 = scmp.eq.s32.totalorder %s12, 1
    %p29 = por %p27, %p28
    %p30 = scmp.ne.s32.totalorder %s22, %s25
    %p31 = scmp.eq.s32.totalorder %s12, 0
    %p32 = por %p30, %p31
    %p33 = scmp.ne.s32.totalorder %s22, %s25
    %p34 = scmp.eq.s32.totalorder %s17, 1
    %p35 = por %p33, %p34
    %p36 = scmp.ne.s32.totalorder %s25, %s26
    %p37 = scmp.eq.s32.totalorder %s17, 0
    %p38 = por %p36, %p37
    %p39 = scmp.ne.s32.totalorder %s25, %s26
    %p40 = scmp.eq.s32.totalorder %s18, 1
    %p41 = por %p39, %p40
    %p43 = scmp.ne.s32.totalorder %s26, %s42
    %p44 = scmp.eq.s32.totalorder %s18, 0
    %p45 = por %p43, %p44
    %s46 = ssub.s32 %s12, %s19
    %p47 = scmp.eq.s32.totalorder %s46, 0
    %s49 = sadd.s32 %s48, 1
    %s50 = scalar_select %p47, %s48, %s49
    %p53 = pneg %p47
    %p54 = scmp.eq.s32.totalorder %s12, 1
    %p55 = por %p53, %p54
    %p56 = scmp.ne.s32.totalorder %s48, %s51
    %p57 = scmp.eq.s32.totalorder %s12, 0
    %p58 = por %p56, %p57
    %p59 = scmp.ne.s32.totalorder %s48, %s51
    %p60 = scmp.eq.s32.totalorder %s17, 1
    %p61 = por %p59, %p60
    %p62 = scmp.ne.s32.totalorder %s51, %s52
    %p63 = scmp.eq.s32.totalorder %s17, 0
    %p64 = por %p62, %p63
    %p65 = scmp.ne.s32.totalorder %s51, %s52
    %p66 = scmp.eq.s32.totalorder %s18, 1
    %p67 = por %p65, %p66
    %p69 = scmp.ne.s32.totalorder %s52, %s68
    %p70 = scmp.eq.s32.totalorder %s18, 0
    %p71 = por %p69, %p70
    %s73 = sadd.s32 %s72, 1
    %p76 = scmp.eq.s32.totalorder %s12, 1
    %p77 = scmp.ne.s32.totalorder %s72, %s74
    %p78 = scmp.eq.s32.totalorder %s12, 0
    %p79 = por %p77, %p78
    %p80 = scmp.ne.s32.totalorder %s72, %s74
    %p81 = scmp.eq.s32.totalorder %s17, 1
    %p82 = por %p80, %p81
    %p83 = scmp.ne.s32.totalorder %s74, %s75
    %p84 = scmp.eq.s32.totalorder %s17, 0
    %p85 = por %p83, %p84
    %p86 = scmp.ne.s32.totalorder %s74, %s75
    %p87 = scmp.eq.s32.totalorder %s18, 1
    %p88 = por %p86, %p87
    %p90 = scmp.ne.s32.totalorder %s75, %s89
    %p91 = scmp.eq.s32.totalorder %s18, 0
    %p92 = por %p90, %p91
    %s93 = ssub.s32 %s12, %s19
    %p94 = scmp.eq.s32.totalorder %s93, 0
    %s96 = sadd.s32 %s95, 1
    %s97 = scalar_select %p94, %s95, %s96
    %p100 = pneg %p94
    %p101 = scmp.eq.s32.totalorder %s12, 1
    %p102 = por %p100, %p101
    %p103 = scmp.ne.s32.totalorder %s95, %s98
    %p104 = scmp.eq.s32.totalorder %s12, 0
    %p105 = por %p103, %p104
    %p106 = scmp.ne.s32.totalorder %s95, %s98
    %p107 = scmp.eq.s32.totalorder %s17, 1
    %p108 = por %p106, %p107
    %p109 = scmp.ne.s32.totalorder %s98, %s99
    %p110 = scmp.eq.s32.totalorder %s17, 0
    %p111 = por %p109, %p110
    %p112 = scmp.ne.s32.totalorder %s98, %s99
    %p113 = scmp.eq.s32.totalorder %s18, 1
    %p114 = por %p112, %p113
    %p116 = scmp.ne.s32.totalorder %s99, %s115
    %p117 = scmp.eq.s32.totalorder %s18, 0
    %p118 = por %p116, %p117
    %s119 = ssub.s32 %s12, %s19
    %p120 = scmp.eq.s32.totalorder %s119, 0
    %s122 = sadd.s32 %s121, 1
    %s123 = scalar_select %p120, %s121, %s122
    %p126 = pneg %p120
    %p127 = scmp.eq.s32.totalorder %s12, 1
    %p128 = por %p126, %p127
    %p129 = scmp.ne.s32.totalorder %s121, %s124
    %p130 = scmp.eq.s32.totalorder %s12, 0
    %p131 = por %p129, %p130
    %p132 = scmp.ne.s32.totalorder %s121, %s124
    %p133 = scmp.eq.s32.totalorder %s17, 1
    %p134 = por %p132, %p133
    %p135 = scmp.ne.s32.totalorder %s124, %s125
    %p136 = scmp.eq.s32.totalorder %s17, 0
    %p137 = por %p135, %p136
    %p138 = scmp.ne.s32.totalorder %s124, %s125
    %p139 = scmp.eq.s32.totalorder %s18, 1
    %p140 = por %p138, %p139
    %p142 = scmp.ne.s32.totalorder %s125, %s141
    %p143 = scmp.eq.s32.totalorder %s18, 0
    %p144 = por %p142, %p143
    %s145 = ssub.s32 %s12, %s19
    %p146 = scmp.eq.s32.totalorder %s145, 0
    %s148 = sadd.s32 %s147, 1
    %s149 = scalar_select %p146, %s147, %s148
    %p152 = pneg %p146
    %p153 = scmp.eq.s32.totalorder %s12, 1
    %p154 = por %p152, %p153
    %p155 = scmp.ne.s32.totalorder %s147, %s150
    %p156 = scmp.eq.s32.totalorder %s12, 0
    %p157 = por %p155, %p156
    %p158 = scmp.ne.s32.totalorder %s147, %s150
    %p159 = scmp.eq.s32.totalorder %s17, 1
    %p160 = por %p158, %p159
    %p161 = scmp.ne.s32.totalorder %s150, %s151
    %p162 = scmp.eq.s32.totalorder %s17, 0
    %p163 = por %p161, %p162
    %p164 = scmp.ne.s32.totalorder %s150, %s151
    %p165 = scmp.eq.s32.totalorder %s18, 1
    %p166 = por %p164, %p165
    %p168 = scmp.ne.s32.totalorder %s151, %s167
    %p169 = scmp.eq.s32.totalorder %s18, 0
    %p170 = por %p168, %p169
    %p171 = scmp.le.s32.totalorder 1, %s12
    %p172 = scmp.lt.s32.totalorder %s12, 3
    %p173 = pnand %p171, %p172
    %p174 = pneg %p173
    // Predicated region
    $region9: #{unet_up_block_forward.3} parent=5 // pred_check
      _
    $region10: #{unet_up_block_forward.3} parent=5 // pred_check_branch
      %176 = sbr.rel (%p173) target = $region12
    $region11: #{unet_up_block_forward.3} parent=5 // pred_region
      %s177 = ssub.s32 %s12, 1
      // Predicated region
      $region13: #{unet_up_block_forward.3} parent=11 // pred_check
        %p178 = pneg %p85
      $region14: #{unet_up_block_forward.3} parent=11 // pred_check_branch
        %180 = sbr.rel (%p178) target = $region16
      $region15: #{unet_up_block_forward.3} parent=11 // pred_region
        _
      $region16: #{unet_up_block_forward.3} parent=11 // pred_fallthru
        _
    $region12: #{unet_up_block_forward.3} parent=5 // pred_fallthru
      _
    %p181 = scmp.lt.s32.totalorder %s12, 2
    // Predicated region
    $region17: #{unet_up_block_forward.3} parent=5 // pred_check
      %p182 = pneg %p181
    $region18: #{unet_up_block_forward.3} parent=5 // pred_check_branch
      %184 = sbr.rel (%p182) target = $region20
    $region19: #{unet_up_block_forward.3} parent=5 // pred_region
      // Predicated region
      $region21: #{unet_up_block_forward.3} parent=19 // pred_check
        %p185 = pneg %p32
      $region22: #{unet_up_block_forward.3} parent=19 // pred_check_branch
        %187 = sbr.rel (%p185) target = $region24
      $region23: #{unet_up_block_forward.3} parent=19 // pred_region
        %p188 = scmp.lt.s32.totalorder %s12, 1
        %s189 = scalar_select %p188, %s12, 1
        %s190 = smul.addr %s189, 32
        %s191 = smul.addr %s190, 8
        %s192 = scalar_lea.vmem %s0, %s191
      $region24: #{unet_up_block_forward.3} parent=19 // pred_fallthru
        _
      // Predicated region
      $region25: #{unet_up_block_forward.3} parent=19 // pred_check
        %p193 = pneg %p58
      $region26: #{unet_up_block_forward.3} parent=19 // pred_check_branch
        %195 = sbr.rel (%p193) target = $region28
      $region27: #{unet_up_block_forward.3} parent=19 // pred_region
        %p196 = scmp.lt.s32.totalorder %s12, 1
        %s197 = scalar_select %p196, %s12, 1
        %s198 = smul.addr %s197, 32
        %s199 = smul.addr %s198, 8
        %s200 = scalar_lea.vmem %s1, %s199
      $region28: #{unet_up_block_forward.3} parent=19 // pred_fallthru
        _
    $region20: #{unet_up_block_forward.3} parent=5 // pred_fallthru
      _
    %p201 = scmp.le.s32.totalorder 1, %s12
    %p202 = scmp.lt.s32.totalorder %s12, 3
    %p203 = pnand %p201, %p202
    %p204 = pneg %p203
    // Predicated region
    $region29: #{unet_up_block_forward.3} parent=5 // pred_check
      _
    $region30: #{unet_up_block_forward.3} parent=5 // pred_check_branch
      %206 = sbr.rel (%p203) target = $region32
    $region31: #{unet_up_block_forward.3} parent=5 // pred_region
      %s207 = ssub.s32 %s12, 1
      %p208 = scmp.lt.s32.totalorder %s17, 1
      %s209 = scalar_select %p208, %s17, 1
      %s210 = smul.addr %s209, 32
      %s211 = smul.addr %s210, 8
      %s212 = scalar_lea.vmem %s0, %s211
      %p213 = pneg %p38
      %p214 = pneg %p35
      %p215 = scmp.lt.s32.totalorder %s17, 1
      %s216 = scalar_select %p215, %s17, 1
      %s217 = smul.addr %s216, 32
      %s218 = smul.addr %s217, 8
      %s219 = scalar_lea.vmem %s1, %s218
      %p220 = pneg %p64
      %p221 = pneg %p61
      %p222 = pneg %p85
      %p223 = pneg %p82
      %p224 = pneg %p111
      %p225 = pneg %p108
      %p226 = scmp.lt.s32.totalorder %s17, 1
      %s227 = scalar_select %p226, %s17, 1
      %s228 = smul.addr %s227, 32
      %s229 = smul.addr %s228, 4
      %s230 = scalar_lea.vmem %s3, %s229
      %p231 = pneg %p137
      %p232 = pneg %p134
      %p233 = scmp.lt.s32.totalorder %s17, 1
      %s234 = scalar_select %p233, %s17, 1
      %s235 = smul.addr %s234, 8
      %s236 = scalar_lea.vmem %s4, %s235
      %p237 = pneg %p163
      %p238 = pneg %p160
      %p239 = scmp.lt.s32.totalorder %s17, 1
      %s240 = scalar_select %p239, %s17, 1
      %s241 = smul.addr %s240, 8
      %s242 = scalar_lea.vmem %s5, %s241
      %p243 = scmp.lt.s32.totalorder %s17, 1
      %s244 = scalar_select %p243, %s17, 1
      %s245 = smul.addr %s244, 32
      %s246 = smul.addr %s245, 8
      %s247 = scalar_lea.vmem %s0, %s246
      %p248 = scmp.lt.s32.totalorder %s17, 1
      %s249 = scalar_select %p248, %s17, 1
      %s250 = smul.addr %s249, 32
      %s251 = smul.addr %s250, 8
      %s252 = scalar_lea.vmem %s1, %s251
      %p253 = scmp.lt.s32.totalorder %s17, 1
      %s254 = scalar_select %p253, %s17, 1
      %s255 = smul.addr %s254, 32
      %s256 = smul.addr %s255, 4
      %s257 = scalar_lea.vmem %s3, %s256
      %p258 = scmp.lt.s32.totalorder %s17, 1
      %s259 = scalar_select %p258, %s17, 1
      %s260 = smul.addr %s259, 8
      %s261 = scalar_lea.vmem %s4, %s260
      %p262 = scmp.lt.s32.totalorder %s17, 1
      %s263 = scalar_select %p262, %s17, 1
      %s264 = smul.addr %s263, 8
      %s265 = scalar_lea.vmem %s5, %s264
      %267 = vst [vmem:[#allocation2] sm:$0xff] 0.0
      %268 = vst [vmem:[#allocation2 + $0x8] sm:$0xff] 0.0
      %269 = vst [vmem:[#allocation2 + $0x10] sm:$0xff] 0.0
      %270 = vst [vmem:[#allocation2 + $0x18] sm:$0xff] 0.0
      %s271 = scalar_lea.vmem [#allocation2], 544
      %272 = vst [vmem:[%s271] sm:$0xff] 0.0
      %273 = vst [vmem:[%s271 + $0x8] sm:$0xff] 0.0
      %274 = vst [vmem:[%s271 + $0x10] sm:$0xff] 0.0
      %275 = vst [vmem:[%s271 + $0x18] sm:$0xff] 0.0
      %276 = vst [vmem:[#allocation2] sm:$0xff] 0.0
      %277 = vst [vmem:[#allocation2 + $0x20] sm:$0xff] 0.0
      %278 = vst [vmem:[#allocation2 + $0x40] sm:$0xff] 0.0
      %279 = vst [vmem:[#allocation2 + $0x60] sm:$0xff] 0.0
      %280 = vst [vmem:[#allocation2 + $0x80] sm:$0xff] 0.0
      %281 = vst [vmem:[#allocation2 + $0xa0] sm:$0xff] 0.0
      %282 = vst [vmem:[#allocation2 + $0xc0] sm:$0xff] 0.0
      %283 = vst [vmem:[#allocation2 + $0xe0] sm:$0xff] 0.0
      %284 = vst [vmem:[#allocation2 + $0x100] sm:$0xff] 0.0
      %285 = vst [vmem:[#allocation2 + $0x120] sm:$0xff] 0.0
      %286 = vst [vmem:[#allocation2 + $0x140] sm:$0xff] 0.0
      %287 = vst [vmem:[#allocation2 + $0x160] sm:$0xff] 0.0
      %288 = vst [vmem:[#allocation2 + $0x180] sm:$0xff] 0.0
      %289 = vst [vmem:[#allocation2 + $0x1a0] sm:$0xff] 0.0
      %290 = vst [vmem:[#allocation2 + $0x1c0] sm:$0xff] 0.0
      %291 = vst [vmem:[#allocation2 + $0x1e0] sm:$0xff] 0.0
      %292 = vst [vmem:[#allocation2 + $0x200] sm:$0xff] 0.0
      %293 = vst [vmem:[#allocation2 + $0x220] sm:$0xff] 0.0
      %294 = vst [vmem:[#allocation2 + $0x18] sm:$0xff] 0.0
      %295 = vst [vmem:[#allocation2 + $0x38] sm:$0xff] 0.0
      %296 = vst [vmem:[#allocation2 + $0x58] sm:$0xff] 0.0
      %297 = vst [vmem:[#allocation2 + $0x78] sm:$0xff] 0.0
      %298 = vst [vmem:[#allocation2 + $0x98] sm:$0xff] 0.0
      %299 = vst [vmem:[#allocation2 + $0xb8] sm:$0xff] 0.0
      %300 = vst [vmem:[#allocation2 + $0xd8] sm:$0xff] 0.0
      %301 = vst [vmem:[#allocation2 + $0xf8] sm:$0xff] 0.0
      %302 = vst [vmem:[#allocation2 + $0x118] sm:$0xff] 0.0
      %303 = vst [vmem:[#allocation2 + $0x138] sm:$0xff] 0.0
      %304 = vst [vmem:[#allocation2 + $0x158] sm:$0xff] 0.0
      %305 = vst [vmem:[#allocation2 + $0x178] sm:$0xff] 0.0
      %306 = vst [vmem:[#allocation2 + $0x198] sm:$0xff] 0.0
      %307 = vst [vmem:[#allocation2 + $0x1b8] sm:$0xff] 0.0
      %308 = vst [vmem:[#allocation2 + $0x1d8] sm:$0xff] 0.0
      %309 = vst [vmem:[#allocation2 + $0x1f8] sm:$0xff] 0.0
      %310 = vst [vmem:[#allocation2 + $0x218] sm:$0xff] 0.0
      %311 = vst [vmem:[#allocation2 + $0x238] sm:$0xff] 0.0
      %v312 = vld [vmem:[%s247] sm:$0xff]
      %v313 = vld [vmem:[%s247 + $0x8] sm:$0xff]
      %v314 = vld [vmem:[%s247 + $0x10] sm:$0xff]
      %v315 = vld [vmem:[%s247 + $0x18] sm:$0xff]
      %v316 = vld [vmem:[%s247 + $0x20] sm:$0xff]
      %v317 = vld [vmem:[%s247 + $0x28] sm:$0xff]
      %v318 = vld [vmem:[%s247 + $0x30] sm:$0xff]
      %v319 = vld [vmem:[%s247 + $0x38] sm:$0xff]
      %v320 = vld [vmem:[%s247 + $0x40] sm:$0xff]
      %v321 = vld [vmem:[%s247 + $0x48] sm:$0xff]
      %v322 = vld [vmem:[%s247 + $0x50] sm:$0xff]
      %v323 = vld [vmem:[%s247 + $0x58] sm:$0xff]
      %v324 = vld [vmem:[%s247 + $0x60] sm:$0xff]
      %v325 = vld [vmem:[%s247 + $0x68] sm:$0xff]
      %v326 = vld [vmem:[%s247 + $0x70] sm:$0xff]
      %v327 = vld [vmem:[%s247 + $0x78] sm:$0xff]
      %v328 = vld [vmem:[%s247 + $0x80] sm:$0xff]
      %v329 = vld [vmem:[%s247 + $0x88] sm:$0xff]
      %v330 = vld [vmem:[%s247 + $0x90] sm:$0xff]
      %v331 = vld [vmem:[%s247 + $0x98] sm:$0xff]
      %v332 = vld [vmem:[%s247 + $0xa0] sm:$0xff]
      %v333 = vld [vmem:[%s247 + $0xa8] sm:$0xff]
      %v334 = vld [vmem:[%s247 + $0xb0] sm:$0xff]
      %v335 = vld [vmem:[%s247 + $0xb8] sm:$0xff]
      %v336 = vld [vmem:[%s247 + $0xc0] sm:$0xff]
      %v337 = vld [vmem:[%s247 + $0xc8] sm:$0xff]
      %v338 = vld [vmem:[%s247 + $0xd0] sm:$0xff]
      %v339 = vld [vmem:[%s247 + $0xd8] sm:$0xff]
      %v340 = vld [vmem:[%s247 + $0xe0] sm:$0xff]
      %v341 = vld [vmem:[%s247 + $0xe8] sm:$0xff]
      %v342 = vld [vmem:[%s247 + $0xf0] sm:$0xff]
      %v343 = vld [vmem:[%s247 + $0xf8] sm:$0xff]
      %s344 = scalar_lea.vmem [#allocation2], 32
      %vm345 = vcmask 64512
      %346 = vst.msk [vmem:[%s344 + $0x8] sm:$0xff] %vm345, %v312
      %347 = vst.msk [vmem:[%s344 + $0x10] sm:$0xff] %vm345, %v313
      %348 = vst.msk [vmem:[%s344 + $0x28] sm:$0xff] %vm345, %v314
      %349 = vst.msk [vmem:[%s344 + $0x30] sm:$0xff] %vm345, %v315
      %350 = vst.msk [vmem:[%s344 + $0x48] sm:$0xff] %vm345, %v316
      %351 = vst.msk [vmem:[%s344 + $0x50] sm:$0xff] %vm345, %v317
      %352 = vst.msk [vmem:[%s344 + $0x68] sm:$0xff] %vm345, %v318
      %353 = vst.msk [vmem:[%s344 + $0x70] sm:$0xff] %vm345, %v319
      %354 = vst.msk [vmem:[%s344 + $0x88] sm:$0xff] %vm345, %v320
      %355 = vst.msk [vmem:[%s344 + $0x90] sm:$0xff] %vm345, %v321
      %356 = vst.msk [vmem:[%s344 + $0xa8] sm:$0xff] %vm345, %v322
      %357 = vst.msk [vmem:[%s344 + $0xb0] sm:$0xff] %vm345, %v323
      %358 = vst.msk [vmem:[%s344 + $0xc8] sm:$0xff] %vm345, %v324
      %359 = vst.msk [vmem:[%s344 + $0xd0] sm:$0xff] %vm345, %v325
      %360 = vst.msk [vmem:[%s344 + $0xe8] sm:$0xff] %vm345, %v326
      %361 = vst.msk [vmem:[%s344 + $0xf0] sm:$0xff] %vm345, %v327
      %362 = vst.msk [vmem:[%s344 + $0x108] sm:$0xff] %vm345, %v328
      %363 = vst.msk [vmem:[%s344 + $0x110] sm:$0xff] %vm345, %v329
      %364 = vst.msk [vmem:[%s344 + $0x128] sm:$0xff] %vm345, %v330
      %365 = vst.msk [vmem:[%s344 + $0x130] sm:$0xff] %vm345, %v331
      %366 = vst.msk [vmem:[%s344 + $0x148] sm:$0xff] %vm345, %v332
      %367 = vst.msk [vmem:[%s344 + $0x150] sm:$0xff] %vm345, %v333
      %368 = vst.msk [vmem:[%s344 + $0x168] sm:$0xff] %vm345, %v334
      %369 = vst.msk [vmem:[%s344 + $0x170] sm:$0xff] %vm345, %v335
      %370 = vst.msk [vmem:[%s344 + $0x188] sm:$0xff] %vm345, %v336
      %371 = vst.msk [vmem:[%s344 + $0x190] sm:$0xff] %vm345, %v337
      %372 = vst.msk [vmem:[%s344 + $0x1a8] sm:$0xff] %vm345, %v338
      %373 = vst.msk [vmem:[%s344 + $0x1b0] sm:$0xff] %vm345, %v339
      %374 = vst.msk [vmem:[%s344 + $0x1c8] sm:$0xff] %vm345, %v340
      %375 = vst.msk [vmem:[%s344 + $0x1d0] sm:$0xff] %vm345, %v341
      %376 = vst.msk [vmem:[%s344 + $0x1e8] sm:$0xff] %vm345, %v342
      %377 = vst.msk [vmem:[%s344 + $0x1f0] sm:$0xff] %vm345, %v343
      %v378 = vld [vmem:[%s252] sm:$0xff]
      %v379 = vld [vmem:[%s252 + $0x8] sm:$0xff]
      %v380 = vld [vmem:[%s252 + $0x10] sm:$0xff]
      %v381 = vld [vmem:[%s252 + $0x18] sm:$0xff]
      %v382 = vld [vmem:[%s252 + $0x20] sm:$0xff]
      %v383 = vld [vmem:[%s252 + $0x28] sm:$0xff]
      %v384 = vld [vmem:[%s252 + $0x30] sm:$0xff]
      %v385 = vld [vmem:[%s252 + $0x38] sm:$0xff]
      %v386 = vld [vmem:[%s252 + $0x40] sm:$0xff]
      %v387 = vld [vmem:[%s252 + $0x48] sm:$0xff]
      %v388 = vld [vmem:[%s252 + $0x50] sm:$0xff]
      %v389 = vld [vmem:[%s252 + $0x58] sm:$0xff]
      %v390 = vld [vmem:[%s252 + $0x60] sm:$0xff]
      %v391 = vld [vmem:[%s252 + $0x68] sm:$0xff]
      %v392 = vld [vmem:[%s252 + $0x70] sm:$0xff]
      %v393 = vld [vmem:[%s252 + $0x78] sm:$0xff]
      %v394 = vld [vmem:[%s252 + $0x80] sm:$0xff]
      %v395 = vld [vmem:[%s252 + $0x88] sm:$0xff]
      %v396 = vld [vmem:[%s252 + $0x90] sm:$0xff]
      %v397 = vld [vmem:[%s252 + $0x98] sm:$0xff]
      %v398 = vld [vmem:[%s252 + $0xa0] sm:$0xff]
      %v399 = vld [vmem:[%s252 + $0xa8] sm:$0xff]
      %v400 = vld [vmem:[%s252 + $0xb0] sm:$0xff]
      %v401 = vld [vmem:[%s252 + $0xb8] sm:$0xff]
      %v402 = vld [vmem:[%s252 + $0xc0] sm:$0xff]
      %v403 = vld [vmem:[%s252 + $0xc8] sm:$0xff]
      %v404 = vld [vmem:[%s252 + $0xd0] sm:$0xff]
      %v405 = vld [vmem:[%s252 + $0xd8] sm:$0xff]
      %v406 = vld [vmem:[%s252 + $0xe0] sm:$0xff]
      %v407 = vld [vmem:[%s252 + $0xe8] sm:$0xff]
      %v408 = vld [vmem:[%s252 + $0xf0] sm:$0xff]
      %v409 = vld [vmem:[%s252 + $0xf8] sm:$0xff]
      %442 = vrot.lane.b32.xlu0 %v378, 8
      %v443 = vpop.permute.xlu0 %442
      %444 = vrot.lane.b32.xlu0 %v379, 8
      %v445 = vpop.permute.xlu0 %444
      %446 = vrot.lane.b32.xlu0 %v380, 8
      %v447 = vpop.permute.xlu0 %446
      %448 = vrot.lane.b32.xlu0 %v381, 8
      %v449 = vpop.permute.xlu0 %448
      %450 = vrot.lane.b32.xlu0 %v382, 8
      %v451 = vpop.permute.xlu0 %450
      %452 = vrot.lane.b32.xlu0 %v383, 8
      %v453 = vpop.permute.xlu0 %452
      %454 = vrot.lane.b32.xlu0 %v384, 8
      %v455 = vpop.permute.xlu0 %454
      %456 = vrot.lane.b32.xlu0 %v385, 8
      %v457 = vpop.permute.xlu0 %456
      %458 = vrot.lane.b32.xlu0 %v386, 8
      %v459 = vpop.permute.xlu0 %458
      %460 = vrot.lane.b32.xlu0 %v387, 8
      %v461 = vpop.permute.xlu0 %460
      %462 = vrot.lane.b32.xlu0 %v388, 8
      %v463 = vpop.permute.xlu0 %462
      %464 = vrot.lane.b32.xlu0 %v389, 8
      %v465 = vpop.permute.xlu0 %464
      %466 = vrot.lane.b32.xlu0 %v390, 8
      %v467 = vpop.permute.xlu0 %466
      %468 = vrot.lane.b32.xlu0 %v391, 8
      %v469 = vpop.permute.xlu0 %468
      %470 = vrot.lane.b32.xlu0 %v392, 8
      %v471 = vpop.permute.xlu0 %470
      %472 = vrot.lane.b32.xlu0 %v393, 8
      %v473 = vpop.permute.xlu0 %472
      %474 = vrot.lane.b32.xlu0 %v394, 8
      %v475 = vpop.permute.xlu0 %474
      %476 = vrot.lane.b32.xlu0 %v395, 8
      %v477 = vpop.permute.xlu0 %476
      %478 = vrot.lane.b32.xlu0 %v396, 8
      %v479 = vpop.permute.xlu0 %478
      %480 = vrot.lane.b32.xlu0 %v397, 8
      %v481 = vpop.permute.xlu0 %480
      %482 = vrot.lane.b32.xlu0 %v398, 8
      %v483 = vpop.permute.xlu0 %482
      %484 = vrot.lane.b32.xlu0 %v399, 8
      %v485 = vpop.permute.xlu0 %484
      %486 = vrot.lane.b32.xlu0 %v400, 8
      %v487 = vpop.permute.xlu0 %486
      %488 = vrot.lane.b32.xlu0 %v401, 8
      %v489 = vpop.permute.xlu0 %488
      %490 = vrot.lane.b32.xlu0 %v402, 8
      %v491 = vpop.permute.xlu0 %490
      %492 = vrot.lane.b32.xlu0 %v403, 8
      %v493 = vpop.permute.xlu0 %492
      %494 = vrot.lane.b32.xlu0 %v404, 8
      %v495 = vpop.permute.xlu0 %494
      %496 = vrot.lane.b32.xlu0 %v405, 8
      %v497 = vpop.permute.xlu0 %496
      %498 = vrot.lane.b32.xlu0 %v406, 8
      %v499 = vpop.permute.xlu0 %498
      %500 = vrot.lane.b32.xlu0 %v407, 8
      %v501 = vpop.permute.xlu0 %500
      %502 = vrot.lane.b32.xlu0 %v408, 8
      %v503 = vpop.permute.xlu0 %502
      %504 = vrot.lane.b32.xlu0 %v409, 8
      %v505 = vpop.permute.xlu0 %504
      %vm538 = vcmask 97344
      %539 = vst.msk [vmem:[%s344 + $0x8] sm:$0xff] %vm538, %v443
      %540 = vst.msk [vmem:[%s344 + $0x10] sm:$0xff] %vm538, %v445
      %541 = vst.msk [vmem:[%s344 + $0x28] sm:$0xff] %vm538, %v447
      %542 = vst.msk [vmem:[%s344 + $0x30] sm:$0xff] %vm538, %v449
      %543 = vst.msk [vmem:[%s344 + $0x48] sm:$0xff] %vm538, %v451
      %544 = vst.msk [vmem:[%s344 + $0x50] sm:$0xff] %vm538, %v453
      %545 = vst.msk [vmem:[%s344 + $0x68] sm:$0xff] %vm538, %v455
      %546 = vst.msk [vmem:[%s344 + $0x70] sm:$0xff] %vm538, %v457
      %547 = vst.msk [vmem:[%s344 + $0x88] sm:$0xff] %vm538, %v459
      %548 = vst.msk [vmem:[%s344 + $0x90] sm:$0xff] %vm538, %v461
      %549 = vst.msk [vmem:[%s344 + $0xa8] sm:$0xff] %vm538, %v463
      %550 = vst.msk [vmem:[%s344 + $0xb0] sm:$0xff] %vm538, %v465
      %551 = vst.msk [vmem:[%s344 + $0xc8] sm:$0xff] %vm538, %v467
      %552 = vst.msk [vmem:[%s344 + $0xd0] sm:$0xff] %vm538, %v469
      %553 = vst.msk [vmem:[%s344 + $0xe8] sm:$0xff] %vm538, %v471
      %554 = vst.msk [vmem:[%s344 + $0xf0] sm:$0xff] %vm538, %v473
      %555 = vst.msk [vmem:[%s344 + $0x108] sm:$0xff] %vm538, %v475
      %556 = vst.msk [vmem:[%s344 + $0x110] sm:$0xff] %vm538, %v477
      %557 = vst.msk [vmem:[%s344 + $0x128] sm:$0xff] %vm538, %v479
      %558 = vst.msk [vmem:[%s344 + $0x130] sm:$0xff] %vm538, %v481
      %559 = vst.msk [vmem:[%s344 + $0x148] sm:$0xff] %vm538, %v483
      %560 = vst.msk [vmem:[%s344 + $0x150] sm:$0xff] %vm538, %v485
      %561 = vst.msk [vmem:[%s344 + $0x168] sm:$0xff] %vm538, %v487
      %562 = vst.msk [vmem:[%s344 + $0x170] sm:$0xff] %vm538, %v489
      %563 = vst.msk [vmem:[%s344 + $0x188] sm:$0xff] %vm538, %v491
      %564 = vst.msk [vmem:[%s344 + $0x190] sm:$0xff] %vm538, %v493
      %565 = vst.msk [vmem:[%s344 + $0x1a8] sm:$0xff] %vm538, %v495
      %566 = vst.msk [vmem:[%s344 + $0x1b0] sm:$0xff] %vm538, %v497
      %567 = vst.msk [vmem:[%s344 + $0x1c8] sm:$0xff] %vm538, %v499
      %568 = vst.msk [vmem:[%s344 + $0x1d0] sm:$0xff] %vm538, %v501
      %569 = vst.msk [vmem:[%s344 + $0x1e8] sm:$0xff] %vm538, %v503
      %570 = vst.msk [vmem:[%s344 + $0x1f0] sm:$0xff] %vm538, %v505
      %vm571 = vcmask 1047648
      %572 = vst.msk [vmem:[%s344 + $0x8] sm:$0xff] %vm571, 0.0
      %573 = vst.msk [vmem:[%s344 + $0x10] sm:$0xff] %vm571, 0.0
      %574 = vst.msk [vmem:[%s344 + $0x28] sm:$0xff] %vm571, 0.0
      %575 = vst.msk [vmem:[%s344 + $0x30] sm:$0xff] %vm571, 0.0
      %576 = vst.msk [vmem:[%s344 + $0x48] sm:$0xff] %vm571, 0.0
      %577 = vst.msk [vmem:[%s344 + $0x50] sm:$0xff] %vm571, 0.0
      %578 = vst.msk [vmem:[%s344 + $0x68] sm:$0xff] %vm571, 0.0
      %579 = vst.msk [vmem:[%s344 + $0x70] sm:$0xff] %vm571, 0.0
      %580 = vst.msk [vmem:[%s344 + $0x88] sm:$0xff] %vm571, 0.0
      %581 = vst.msk [vmem:[%s344 + $0x90] sm:$0xff] %vm571, 0.0
      %582 = vst.msk [vmem:[%s344 + $0xa8] sm:$0xff] %vm571, 0.0
      %583 = vst.msk [vmem:[%s344 + $0xb0] sm:$0xff] %vm571, 0.0
      %584 = vst.msk [vmem:[%s344 + $0xc8] sm:$0xff] %vm571, 0.0
      %585 = vst.msk [vmem:[%s344 + $0xd0] sm:$0xff] %vm571, 0.0
      %586 = vst.msk [vmem:[%s344 + $0xe8] sm:$0xff] %vm571, 0.0
      %587 = vst.msk [vmem:[%s344 + $0xf0] sm:$0xff] %vm571, 0.0
      %588 = vst.msk [vmem:[%s344 + $0x108] sm:$0xff] %vm571, 0.0
      %589 = vst.msk [vmem:[%s344 + $0x110] sm:$0xff] %vm571, 0.0
      %590 = vst.msk [vmem:[%s344 + $0x128] sm:$0xff] %vm571, 0.0
      %591 = vst.msk [vmem:[%s344 + $0x130] sm:$0xff] %vm571, 0.0
      %592 = vst.msk [vmem:[%s344 + $0x148] sm:$0xff] %vm571, 0.0
      %593 = vst.msk [vmem:[%s344 + $0x150] sm:$0xff] %vm571, 0.0
      %594 = vst.msk [vmem:[%s344 + $0x168] sm:$0xff] %vm571, 0.0
      %595 = vst.msk [vmem:[%s344 + $0x170] sm:$0xff] %vm571, 0.0
      %596 = vst.msk [vmem:[%s344 + $0x188] sm:$0xff] %vm571, 0.0
      %597 = vst.msk [vmem:[%s344 + $0x190] sm:$0xff] %vm571, 0.0
      %598 = vst.msk [vmem:[%s344 + $0x1a8] sm:$0xff] %vm571, 0.0
      %599 = vst.msk [vmem:[%s344 + $0x1b0] sm:$0xff] %vm571, 0.0
      %600 = vst.msk [vmem:[%s344 + $0x1c8] sm:$0xff] %vm571, 0.0
      %601 = vst.msk [vmem:[%s344 + $0x1d0] sm:$0xff] %vm571, 0.0
      %602 = vst.msk [vmem:[%s344 + $0x1e8] sm:$0xff] %vm571, 0.0
      %603 = vst.msk [vmem:[%s344 + $0x1f0] sm:$0xff] %vm571, 0.0
      %v604 = vld [vmem:[#allocation2 + $0x7] sm:$0xff]
      %v605 = vld [vmem:[#allocation2 + $0xf] sm:$0xff]
      %v606 = vld [vmem:[#allocation2 + $0x27] sm:$0xff]
      %v607 = vld [vmem:[#allocation2 + $0x2f] sm:$0xff]
      %v608 = vld [vmem:[#allocation2 + $0x47] sm:$0xff]
      %v609 = vld [vmem:[#allocation2 + $0x4f] sm:$0xff]
      %v610 = vld [vmem:[#allocation2 + $0x67] sm:$0xff]
      %v611 = vld [vmem:[#allocation2 + $0x6f] sm:$0xff]
      %v612 = vld [vmem:[#allocation2 + $0x87] sm:$0xff]
      %v613 = vld [vmem:[#allocation2 + $0x8f] sm:$0xff]
      %v614 = vld [vmem:[#allocation2 + $0xa7] sm:$0xff]
      %v615 = vld [vmem:[#allocation2 + $0xaf] sm:$0xff]
      %v616 = vld [vmem:[#allocation2 + $0xc7] sm:$0xff]
      %v617 = vld [vmem:[#allocation2 + $0xcf] sm:$0xff]
      %v618 = vld [vmem:[#allocation2 + $0xe7] sm:$0xff]
      %v619 = vld [vmem:[#allocation2 + $0xef] sm:$0xff]
      %v620 = vld [vmem:[#allocation2 + $0x107] sm:$0xff]
      %v621 = vld [vmem:[#allocation2 + $0x10f] sm:$0xff]
      %v622 = vld [vmem:[#allocation2 + $0x127] sm:$0xff]
      %v623 = vld [vmem:[#allocation2 + $0x12f] sm:$0xff]
      %v624 = vld [vmem:[#allocation2 + $0x147] sm:$0xff]
      %v625 = vld [vmem:[#allocation2 + $0x14f] sm:$0xff]
      %v626 = vld [vmem:[#allocation2 + $0x167] sm:$0xff]
      %v627 = vld [vmem:[#allocation2 + $0x16f] sm:$0xff]
      %v628 = vld [vmem:[#allocation2 + $0x187] sm:$0xff]
      %v629 = vld [vmem:[#allocation2 + $0x18f] sm:$0xff]
      %v630 = vld [vmem:[#allocation2 + $0x1a7] sm:$0xff]
      %v631 = vld [vmem:[#allocation2 + $0x1af] sm:$0xff]
      %v632 = vld [vmem:[#allocation2 + $0x1c7] sm:$0xff]
      %v633 = vld [vmem:[#allocation2 + $0x1cf] sm:$0xff]
      %v634 = vld [vmem:[#allocation2 + $0x1e7] sm:$0xff]
      %v635 = vld [vmem:[#allocation2 + $0x1ef] sm:$0xff]
      %v636 = vpack.c.bf16 %v605, %v604
      %v637 = vpack.c.bf16 %v607, %v606
      %v638 = vpack.c.bf16 %v609, %v608
      %v639 = vpack.c.bf16 %v611, %v610
      %v640 = vpack.c.bf16 %v613, %v612
      %v641 = vpack.c.bf16 %v615, %v614
      %v642 = vpack.c.bf16 %v617, %v616
      %v643 = vpack.c.bf16 %v619, %v618
      %v644 = vpack.c.bf16 %v621, %v620
      %v645 = vpack.c.bf16 %v623, %v622
      %v646 = vpack.c.bf16 %v625, %v624
      %v647 = vpack.c.bf16 %v627, %v626
      %v648 = vpack.c.bf16 %v629, %v628
      %v649 = vpack.c.bf16 %v631, %v630
      %v650 = vpack.c.bf16 %v633, %v632
      %v651 = vpack.c.bf16 %v635, %v634
      %v652 = vld [vmem:[%s2] sm:$0xf]
      %v653 = vld [vmem:[%s2 + $0x4] sm:$0xf]
      %v654 = vld [vmem:[%s2 + $0x8] sm:$0xf]
      %v655 = vld [vmem:[%s2 + $0xc] sm:$0xf]
      %v656 = vld [vmem:[%s2 + $0x10] sm:$0xf]
      %v657 = vld [vmem:[%s2 + $0x14] sm:$0xf]
      %v658 = vld [vmem:[%s2 + $0x18] sm:$0xf]
      %v659 = vld [vmem:[%s2 + $0x1c] sm:$0xf]
      %v660 = vld [vmem:[%s2 + $0x20] sm:$0xf]
      %v661 = vld [vmem:[%s2 + $0x24] sm:$0xf]
      %v662 = vld [vmem:[%s2 + $0x28] sm:$0xf]
      %v663 = vld [vmem:[%s2 + $0x2c] sm:$0xf]
      %v664 = vld [vmem:[%s2 + $0x30] sm:$0xf]
      %v665 = vld [vmem:[%s2 + $0x34] sm:$0xf]
      %v666 = vld [vmem:[%s2 + $0x38] sm:$0xf]
      %v667 = vld [vmem:[%s2 + $0x3c] sm:$0xf]
      %v668 = vld [vmem:[#allocation2 + $0x8] sm:$0xff]
      %v669 = vld [vmem:[#allocation2 + $0x10] sm:$0xff]
      %v670 = vld [vmem:[#allocation2 + $0x28] sm:$0xff]
      %v671 = vld [vmem:[#allocation2 + $0x30] sm:$0xff]
      %v672 = vld [vmem:[#allocation2 + $0x48] sm:$0xff]
      %v673 = vld [vmem:[#allocation2 + $0x50] sm:$0xff]
      %v674 = vld [vmem:[#allocation2 + $0x68] sm:$0xff]
      %v675 = vld [vmem:[#allocation2 + $0x70] sm:$0xff]
      %v676 = vld [vmem:[#allocation2 + $0x88] sm:$0xff]
      %v677 = vld [vmem:[#allocation2 + $0x90] sm:$0xff]
      %v678 = vld [vmem:[#allocation2 + $0xa8] sm:$0xff]
      %v679 = vld [vmem:[#allocation2 + $0xb0] sm:$0xff]
      %v680 = vld [vmem:[#allocation2 + $0xc8] sm:$0xff]
      %v681 = vld [vmem:[#allocation2 + $0xd0] sm:$0xff]
      %v682 = vld [vmem:[#allocation2 + $0xe8] sm:$0xff]
      %v683 = vld [vmem:[#allocation2 + $0xf0] sm:$0xff]
      %v684 = vld [vmem:[#allocation2 + $0x108] sm:$0xff]
      %v685 = vld [vmem:[#allocation2 + $0x110] sm:$0xff]
      %v686 = vld [vmem:[#allocation2 + $0x128] sm:$0xff]
      %v687 = vld [vmem:[#allocation2 + $0x130] sm:$0xff]
      %v688 = vld [vmem:[#allocation2 + $0x148] sm:$0xff]
      %v689 = vld [vmem:[#allocation2 + $0x150] sm:$0xff]
      %v690 = vld [vmem:[#allocation2 + $0x168] sm:$0xff]
      %v691 = vld [vmem:[#allocation2 + $0x170] sm:$0xff]
      %v692 = vld [vmem:[#allocation2 + $0x188] sm:$0xff]
      %v693 = vld [vmem:[#allocation2 + $0x190] sm:$0xff]
      %v694 = vld [vmem:[#allocation2 + $0x1a8] sm:$0xff]
      %v695 = vld [vmem:[#allocation2 + $0x1b0] sm:$0xff]
      %v696 = vld [vmem:[#allocation2 + $0x1c8] sm:$0xff]
      %v697 = vld [vmem:[#allocation2 + $0x1d0] sm:$0xff]
      %v698 = vld [vmem:[#allocation2 + $0x1e8] sm:$0xff]
      %v699 = vld [vmem:[#allocation2 + $0x1f0] sm:$0xff]
      %v700 = vpack.c.bf16 %v669, %v668
      %v701 = vpack.c.bf16 %v671, %v670
      %v702 = vpack.c.bf16 %v673, %v672
      %v703 = vpack.c.bf16 %v675, %v674
      %v704 = vpack.c.bf16 %v677, %v676
      %v705 = vpack.c.bf16 %v679, %v678
      %v706 = vpack.c.bf16 %v681, %v680
      %v707 = vpack.c.bf16 %v683, %v682
      %v708 = vpack.c.bf16 %v685, %v684
      %v709 = vpack.c.bf16 %v687, %v686
      %v710 = vpack.c.bf16 %v689, %v688
      %v711 = vpack.c.bf16 %v691, %v690
      %v712 = vpack.c.bf16 %v693, %v692
      %v713 = vpack.c.bf16 %v695, %v694
      %v714 = vpack.c.bf16 %v697, %v696
      %v715 = vpack.c.bf16 %v699, %v698
      %s716 = scalar_lea.vmem %s2, 64
      %v717 = vld [vmem:[%s716] sm:$0xf]
      %v718 = vld [vmem:[%s716 + $0x4] sm:$0xf]
      %v719 = vld [vmem:[%s716 + $0x8] sm:$0xf]
      %v720 = vld [vmem:[%s716 + $0xc] sm:$0xf]
      %v721 = vld [vmem:[%s716 + $0x10] sm:$0xf]
      %v722 = vld [vmem:[%s716 + $0x14] sm:$0xf]
      %v723 = vld [vmem:[%s716 + $0x18] sm:$0xf]
      %v724 = vld [vmem:[%s716 + $0x1c] sm:$0xf]
      %v725 = vld [vmem:[%s716 + $0x20] sm:$0xf]
      %v726 = vld [vmem:[%s716 + $0x24] sm:$0xf]
      %v727 = vld [vmem:[%s716 + $0x28] sm:$0xf]
      %v728 = vld [vmem:[%s716 + $0x2c] sm:$0xf]
      %v729 = vld [vmem:[%s716 + $0x30] sm:$0xf]
      %v730 = vld [vmem:[%s716 + $0x34] sm:$0xf]
      %v731 = vld [vmem:[%s716 + $0x38] sm:$0xf]
      %v732 = vld [vmem:[%s716 + $0x3c] sm:$0xf]
      %v749 = vunpack.c.l.b16 %v717
      %v750 = vunpack.c.l.b16 %v718
      %v751 = vunpack.c.l.b16 %v719
      %v752 = vunpack.c.l.b16 %v720
      %v753 = vunpack.c.l.b16 %v721
      %v754 = vunpack.c.l.b16 %v722
      %v755 = vunpack.c.l.b16 %v723
      %v756 = vunpack.c.l.b16 %v724
      %v757 = vunpack.c.l.b16 %v725
      %v758 = vunpack.c.l.b16 %v726
      %v759 = vunpack.c.l.b16 %v727
      %v760 = vunpack.c.l.b16 %v728
      %v761 = vunpack.c.l.b16 %v729
      %v762 = vunpack.c.l.b16 %v730
      %v763 = vunpack.c.l.b16 %v731
      %v764 = vunpack.c.l.b16 %v732
      %v765 = vpack.c.b16 %v750, %v749
      %v766 = vpack.c.b16 %v752, %v751
      %v767 = vpack.c.b16 %v754, %v753
      %v768 = vpack.c.b16 %v756, %v755
      %v769 = vpack.c.b16 %v758, %v757
      %v770 = vpack.c.b16 %v760, %v759
      %v771 = vpack.c.b16 %v762, %v761
      %v772 = vpack.c.b16 %v764, %v763
      %781 = vmatprep.subr.bf16.mxu0 0
      %782 = vmatpush1.bf16.msra.mxu0 %v765
      %783 = vmatprep.subr.bf16.mxu0 0
      %784 = vmatpush1.bf16.msra.mxu0 %v766
      %785 = vmatprep.subr.bf16.mxu0 0
      %786 = vmatpush1.bf16.msra.mxu0 %v767
      %787 = vmatprep.subr.bf16.mxu0 0
      %788 = vmatpush1.bf16.msra.mxu0 %v768
      %789 = vmatprep.subr.bf16.mxu0 0
      %790 = vmatpush1.bf16.msra.mxu0 %v769
      %791 = vmatprep.subr.bf16.mxu0 0
      %792 = vmatpush1.bf16.msra.mxu0 %v770
      %793 = vmatprep.subr.bf16.mxu0 0
      %794 = vmatpush1.bf16.msra.mxu0 %v771
      %795 = vmatprep.subr.bf16.mxu0 0
      %796 = vmatpush1.bf16.msra.mxu0 %v772
      %797 = vmatprep.subr.bf16.mxu0 0
      %798 = vmatpush1.bf16.msra.mxu0 0
      %799 = vmatprep.subr.bf16.mxu0 0
      %800 = vmatpush1.bf16.msra.mxu0 0
      %801 = vmatprep.subr.bf16.mxu0 0
      %802 = vmatpush1.bf16.msra.mxu0 0
      %803 = vmatprep.subr.bf16.mxu0 0
      %804 = vmatpush1.bf16.msra.mxu0 0
      %805 = vmatprep.subr.bf16.mxu0 0
      %806 = vmatpush1.bf16.msra.mxu0 0
      %807 = vmatprep.subr.bf16.mxu0 0
      %808 = vmatpush1.bf16.msra.mxu0 0
      %809 = vmatprep.subr.bf16.mxu0 0
      %810 = vmatpush1.bf16.msra.mxu0 0
      %811 = vmatprep.subr.bf16.mxu0 0
      %812 = vmatpush1.bf16.msra.mxu0 0
      %813 = vmatprep.mubr.bf16.mxu0 0
      %814 = vmatmul.mubr.bf16.gmra.mrb[0].mxu0 %v700
      %v815 = vpop.f32.mrb[0].mxu0
      %v816 = vadd.f32 0.0, %v815
      %v817 = vpop.f32.mrb[0].mxu0
      %v818 = vpop.f32.mrb[0].mxu0
      %v819 = vadd.f32 0.0, %v818
      %v820 = vpop.f32.mrb[0].mxu0
      %821 = vmatprep.mubr.bf16.mxu0 0
      %822 = vmatmul.mubr.bf16.gmra.mrb[0].mxu0 %v701
      %v823 = vpop.f32.mrb[0].mxu0
      %v824 = vadd.f32 0.0, %v823
      %v825 = vpop.f32.mrb[0].mxu0
      %v826 = vpop.f32.mrb[0].mxu0
      %v827 = vadd.f32 0.0, %v826
      %v828 = vpop.f32.mrb[0].mxu0
      %829 = vmatprep.mubr.bf16.mxu0 0
      %830 = vmatmul.mubr.bf16.gmra.mrb[0].mxu0 %v702
      %v831 = vpop.f32.mrb[0].mxu0
      %v832 = vadd.f32 0.0, %v831
      %v833 = vpop.f32.mrb[0].mxu0
      %v834 = vpop.f32.mrb[0].mxu0
      %v835 = vadd.f32 0.0, %v834
      %v836 = vpop.f32.mrb[0].mxu0
      %837 = vmatprep.mubr.bf16.mxu0 0
      %838 = vmatmul.mubr.bf16.gmra.mrb[0].mxu0 %v703
      %v839 = vpop.f32.mrb[0].mxu0
      %v840 = vadd.f32 0.0, %v839
      %v841 = vpop.f32.mrb[0].mxu0
      %v842 = vpop.f32.mrb[0].mxu0
      %v843 = vadd.f32 0.0, %v842
      %v844 = vpop.f32.mrb[0].mxu0
      %845 = vmatprep.mubr.bf16.mxu0 0
      %846 = vmatmul.mubr.bf16.gmra.mrb[0].mxu0 %v704
      %v847 = vpop.f32.mrb[0].mxu0
      %v848 = vadd.f32 0.0, %v847
      %v849 = vpop.f32.mrb[0].mxu0
      %v850 = vpop.f32.mrb[0].mxu0
      %v851 = vadd.f32 0.0, %v850
      %v852 = vpop.f32.mrb[0].mxu0
      %853 = vmatprep.mubr.bf16.mxu0 0
      %854 = vmatmul.mubr.bf16.gmra.mrb[0].mxu0 %v705
      %v855 = vpop.f32.mrb[0].mxu0
      %v856 = vadd.f32 0.0, %v855
      %v857 = vpop.f32.mrb[0].mxu0
      %v858 = vpop.f32.mrb[0].mxu0
      %v859 = vadd.f32 0.0, %v858
      %v860 = vpop.f32.mrb[0].mxu0
      %861 = vmatprep.mubr.bf16.mxu0 0
      %862 = vmatmul.mubr.bf16.gmra.mrb[0].mxu0 %v706
      %v863 = vpop.f32.mrb[0].mxu0
      %v864 = vadd.f32 0.0, %v863
      %v865 = vpop.f32.mrb[0].mxu0
      %v866 = vpop.f32.mrb[0].mxu0
      %v867 = vadd.f32 0.0, %v866
      %v868 = vpop.f32.mrb[0].mxu0
      %869 = vmatprep.mubr.bf16.mxu0 0
      %870 = vmatmul.mubr.bf16.gmra.mrb[0].mxu0 %v707
      %v871 = vpop.f32.mrb[0].mxu0
      %v872 = vadd.f32 0.0, %v871
      %v873 = vpop.f32.mrb[0].mxu0
      %v874 = vpop.f32.mrb[0].mxu0
      %v875 = vadd.f32 0.0, %v874
      %v876 = vpop.f32.mrb[0].mxu0
      %877 = vmatprep.mubr.bf16.mxu0 0
      %878 = vmatmul.mubr.bf16.gmra.mrb[0].mxu0 %v708
      %v879 = vpop.f32.mrb[0].mxu0
      %v880 = vadd.f32 0.0, %v879
      %v881 = vpop.f32.mrb[0].mxu0
      %v882 = vpop.f32.mrb[0].mxu0
      %v883 = vadd.f32 0.0, %v882
      %v884 = vpop.f32.mrb[0].mxu0
      %885 = vmatprep.mubr.bf16.mxu0 0
      %886 = vmatmul.mubr.bf16.gmra.mrb[0].mxu0 %v709
      %v887 = vpop.f32.mrb[0].mxu0
      %v888 = vadd.f32 0.0, %v887
      %v889 = vpop.f32.mrb[0].mxu0
      %v890 = vpop.f32.mrb[0].mxu0
      %v891 = vadd.f32 0.0, %v890
      %v892 = vpop.f32.mrb[0].mxu0
      %893 = vmatprep.mubr.bf16.mxu0 0
      %894 = vmatmul.mubr.bf16.gmra.mrb[0].mxu0 %v710
      %v895 = vpop.f32.mrb[0].mxu0
      %v896 = vadd.f32 0.0, %v895
      %v897 = vpop.f32.mrb[0].mxu0
      %v898 = vpop.f32.mrb[0].mxu0
      %v899 = vadd.f32 0.0, %v898
      %v900 = vpop.f32.mrb[0].mxu0
      %901 = vmatprep.mubr.bf16.mxu0 0
      %902 = vmatmul.mubr.bf16.gmra.mrb[0].mxu0 %v711
      %v903 = vpop.f32.mrb[0].mxu0
      %v904 = vadd.f32 0.0, %v903
      %v905 = vpop.f32.mrb[0].mxu0
      %v906 = vpop.f32.mrb[0].mxu0
      %v907 = vadd.f32 0.0, %v906
      %v908 = vpop.f32.mrb[0].mxu0
      %909 = vmatprep.mubr.bf16.mxu0 0
      %910 = vmatmul.mubr.bf16.gmra.mrb[0].mxu0 %v712
      %v911 = vpop.f32.mrb[0].mxu0
      %v912 = vadd.f32 0.0, %v911
      %v913 = vpop.f32.mrb[0].mxu0
      %v914 = vpop.f32.mrb[0].mxu0
      %v915 = vadd.f32 0.0, %v914
      %v916 = vpop.f32.mrb[0].mxu0
      %917 = vmatprep.mubr.bf16.mxu0 0
      %918 = vmatmul.mubr.bf16.gmra.mrb[0].mxu0 %v713
      %v919 = vpop.f32.mrb[0].mxu0
      %v920 = vadd.f32 0.0, %v919
      %v921 = vpop.f32.mrb[0].mxu0
      %v922 = vpop.f32.mrb[0].mxu0
      %v923 = vadd.f32 0.0, %v922
      %v924 = vpop.f32.mrb[0].mxu0
      %925 = vmatprep.mubr.bf16.mxu0 0
      %926 = vmatmul.mubr.bf16.gmra.mrb[0].mxu0 %v714
      %v927 = vpop.f32.mrb[0].mxu0
      %v928 = vadd.f32 0.0, %v927
      %v929 = vpop.f32.mrb[0].mxu0
      %v930 = vpop.f32.mrb[0].mxu0
      %v931 = vadd.f32 0.0, %v930
      %v932 = vpop.f32.mrb[0].mxu0
      %933 = vmatprep.mubr.bf16.mxu0 0
      %934 = vmatmul.mubr.bf16.gmra.mrb[0].mxu0 %v715
      %v935 = vpop.f32.mrb[0].mxu0
      %v936 = vadd.f32 0.0, %v935
      %v937 = vpop.f32.mrb[0].mxu0
      %v938 = vpop.f32.mrb[0].mxu0
      %v939 = vadd.f32 0.0, %v938
      %v940 = vpop.f32.mrb[0].mxu0
      %941 = vdwg.mxu0
      %v958 = vunpack.c.l.b16 %v652
      %v959 = vunpack.c.l.b16 %v653
      %v960 = vunpack.c.l.b16 %v654
      %v961 = vunpack.c.l.b16 %v655
      %v962 = vunpack.c.l.b16 %v656
      %v963 = vunpack.c.l.b16 %v657
      %v964 = vunpack.c.l.b16 %v658
      %v965 = vunpack.c.l.b16 %v659
      %v966 = vunpack.c.l.b16 %v660
      %v967 = vunpack.c.l.b16 %v661
      %v968 = vunpack.c.l.b16 %v662
      %v969 = vunpack.c.l.b16 %v663
      %v970 = vunpack.c.l.b16 %v664
      %v971 = vunpack.c.l.b16 %v665
      %v972 = vunpack.c.l.b16 %v666
      %v973 = vunpack.c.l.b16 %v667
      %v974 = vpack.c.b16 %v959, %v958
      %v975 = vpack.c.b16 %v961, %v960
      %v976 = vpack.c.b16 %v963, %v962
      %v977 = vpack.c.b16 %v965, %v964
      %v978 = vpack.c.b16 %v967, %v966
      %v979 = vpack.c.b16 %v969, %v968
      %v980 = vpack.c.b16 %v971, %v970
      %v981 = vpack.c.b16 %v973, %v972
      %990 = vmatprep.subr.bf16.mxu0 0
      %991 = vmatpush1.bf16.msra.mxu0 %v974
      %992 = vmatprep.subr.bf16.mxu0 0
      %993 = vmatpush1.bf16.msra.mxu0 %v975
      %994 = vmatprep.subr.bf16.mxu0 0
      %995 = vmatpush1.bf16.msra.mxu0 %v976
      %996 = vmatprep.subr.bf16.mxu0 0
      %997 = vmatpush1.bf16.msra.mxu0 %v977
      %998 = vmatprep.subr.bf16.mxu0 0
      %999 = vmatpush1.bf16.msra.mxu0 %v978
      %1000 = vmatprep.subr.bf16.mxu0 0
      %1001 = vmatpush1.bf16.msra.mxu0 %v979
      %1002 = vmatprep.subr.bf16.mxu0 0
      %1003 = vmatpush1.bf16.msra.mxu0 %v980
      %1004 = vmatprep.subr.bf16.mxu0 0
      %1005 = vmatpush1.bf16.msra.mxu0 %v981
      %1006 = vmatprep.subr.bf16.mxu0 0
      %1007 = vmatpush1.bf16.msra.mxu0 0
      %1008 = vmatprep.subr.bf16.mxu0 0
      %1009 = vmatpush1.bf16.msra.mxu0 0
      %1010 = vmatprep.subr.bf16.mxu0 0
      %1011 = vmatpush1.bf16.msra.mxu0 0
      %1012 = vmatprep.subr.bf16.mxu0 0
      %1013 = vmatpush1.bf16.msra.mxu0 0
      %1014 = vmatprep.subr.bf16.mxu0 0
      %1015 = vmatpush1.bf16.msra.mxu0 0
      %1016 = vmatprep.subr.bf16.mxu0 0
      %1017 = vmatpush1.bf16.msra.mxu0 0
      %1018 = vmatprep.subr.bf16.mxu0 0
      %1019 = vmatpush1.bf16.msra.mxu0 0
      %1020 = vmatprep.subr.bf16.mxu0 0
      %1021 = vmatpush1.bf16.msra.mxu0 0
      %1022 = vmatprep.mubr.bf16.mxu0 0
      %1023 = vmatmul.mubr.bf16.gmra.mrb[0].mxu0 %v636
      %v1024 = vpop.f32.mrb[0].mxu0
      %v1025 = vadd.f32 %v816, %v1024
      %v1026 = vpop.f32.mrb[0].mxu0
      %v1027 = vpop.f32.mrb[0].mxu0
      %v1028 = vadd.f32 %v819, %v1027
      %v1029 = vpop.f32.mrb[0].mxu0
      %1030 = vmatprep.mubr.bf16.mxu0 0
      %1031 = vmatmul.mubr.bf16.gmra.mrb[0].mxu0 %v637
      %v1032 = vpop.f32.mrb[0].mxu0
      %v1033 = vadd.f32 %v824, %v1032
      %v1034 = vpop.f32.mrb[0].mxu0
      %v1035 = vpop.f32.mrb[0].mxu0
      %v1036 = vadd.f32 %v827, %v1035
      %v1037 = vpop.f32.mrb[0].mxu0
      %1038 = vmatprep.mubr.bf16.mxu0 0
      %1039 = vmatmul.mubr.bf16.gmra.mrb[0].mxu0 %v638
      %v1040 = vpop.f32.mrb[0].mxu0
      %v1041 = vadd.f32 %v832, %v1040
      %v1042 = vpop.f32.mrb[0].mxu0
      %v1043 = vpop.f32.mrb[0].mxu0
      %v1044 = vadd.f32 %v835, %v1043
      %v1045 = vpop.f32.mrb[0].mxu0
      %1046 = vmatprep.mubr.bf16.mxu0 0
      %1047 = vmatmul.mubr.bf16.gmra.mrb[0].mxu0 %v639
      %v1048 = vpop.f32.mrb[0].mxu0
      %v1049 = vadd.f32 %v840, %v1048
      %v1050 = vpop.f32.mrb[0].mxu0
      %v1051 = vpop.f32.mrb[0].mxu0
      %v1052 = vadd.f32 %v843, %v1051
      %v1053 = vpop.f32.mrb[0].mxu0
      %1054 = vmatprep.mubr.bf16.mxu0 0
      %1055 = vmatmul.mubr.bf16.gmra.mrb[0].mxu0 %v640
      %v1056 = vpop.f32.mrb[0].mxu0
      %v1057 = vadd.f32 %v848, %v1056
      %v1058 = vpop.f32.mrb[0].mxu0
      %v1059 = vpop.f32.mrb[0].mxu0
      %v1060 = vadd.f32 %v851, %v1059
      %v1061 = vpop.f32.mrb[0].mxu0
      %1062 = vmatprep.mubr.bf16.mxu0 0
      %1063 = vmatmul.mubr.bf16.gmra.mrb[0].mxu0 %v641
      %v1064 = vpop.f32.mrb[0].mxu0
      %v1065 = vadd.f32 %v856, %v1064
      %v1066 = vpop.f32.mrb[0].mxu0
      %v1067 = vpop.f32.mrb[0].mxu0
      %v1068 = vadd.f32 %v859, %v1067
      %v1069 = vpop.f32.mrb[0].mxu0
      %1070 = vmatprep.mubr.bf16.mxu0 0
      %1071 = vmatmul.mubr.bf16.gmra.mrb[0].mxu0 %v642
      %v1072 = vpop.f32.mrb[0].mxu0
      %v1073 = vadd.f32 %v864, %v1072
      %v1074 = vpop.f32.mrb[0].mxu0
      %v1075 = vpop.f32.mrb[0].mxu0
      %v1076 = vadd.f32 %v867, %v1075
      %v1077 = vpop.f32.mrb[0].mxu0
      %1078 = vmatprep.mubr.bf16.mxu0 0
      %1079 = vmatmul.mubr.bf16.gmra.mrb[0].mxu0 %v643
      %v1080 = vpop.f32.mrb[0].mxu0
      %v1081 = vadd.f32 %v872, %v1080
      %v1082 = vpop.f32.mrb[0].mxu0
      %v1083 = vpop.f32.mrb[0].mxu0
      %v1084 = vadd.f32 %v875, %v1083
      %v1085 = vpop.f32.mrb[0].mxu0
      %1086 = vmatprep.mubr.bf16.mxu0 0
      %1087 = vmatmul.mubr.bf16.gmra.mrb[0].mxu0 %v644
      %v1088 = vpop.f32.mrb[0].mxu0
      %v1089 = vadd.f32 %v880, %v1088
      %v1090 = vpop.f32.mrb[0].mxu0
      %v1091 = vpop.f32.mrb[0].mxu0
      %v1092 = vadd.f32 %v883, %v1091
      %v1093 = vpop.f32.mrb[0].mxu0
      %1094 = vmatprep.mubr.bf16.mxu0 0
      %1095 = vmatmul.mubr.bf16.gmra.mrb[0].mxu0 %v645
      %v1096 = vpop.f32.mrb[0].mxu0
      %v1097 = vadd.f32 %v888, %v1096
      %v1098 = vpop.f32.mrb[0].mxu0
      %v1099 = vpop.f32.mrb[0].mxu0
      %v1100 = vadd.f32 %v891, %v1099
      %v1101 = vpop.f32.mrb[0].mxu0
      %1102 = vmatprep.mubr.bf16.mxu0 0
      %1103 = vmatmul.mubr.bf16.gmra.mrb[0].mxu0 %v646
      %v1104 = vpop.f32.mrb[0].mxu0
      %v1105 = vadd.f32 %v896, %v1104
      %v1106 = vpop.f32.mrb[0].mxu0
      %v1107 = vpop.f32.mrb[0].mxu0
      %v1108 = vadd.f32 %v899, %v1107
      %v1109 = vpop.f32.mrb[0].mxu0
      %1110 = vmatprep.mubr.bf16.mxu0 0
      %1111 = vmatmul.mubr.bf16.gmra.mrb[0].mxu0 %v647
      %v1112 = vpop.f32.mrb[0].mxu0
      %v1113 = vadd.f32 %v904, %v1112
      %v1114 = vpop.f32.mrb[0].mxu0
      %v1115 = vpop.f32.mrb[0].mxu0
      %v1116 = vadd.f32 %v907, %v1115
      %v1117 = vpop.f32.mrb[0].mxu0
      %1118 = vmatprep.mubr.bf16.mxu0 0
      %1119 = vmatmul.mubr.bf16.gmra.mrb[0].mxu0 %v648
      %v1120 = vpop.f32.mrb[0].mxu0
      %v1121 = vadd.f32 %v912, %v1120
      %v1122 = vpop.f32.mrb[0].mxu0
      %v1123 = vpop.f32.mrb[0].mxu0
      %v1124 = vadd.f32 %v915, %v1123
      %v1125 = vpop.f32.mrb[0].mxu0
      %1126 = vmatprep.mubr.bf16.mxu0 0
      %1127 = vmatmul.mubr.bf16.gmra.mrb[0].mxu0 %v649
      %v1128 = vpop.f32.mrb[0].mxu0
      %v1129 = vadd.f32 %v920, %v1128
      %v1130 = vpop.f32.mrb[0].mxu0
      %v1131 = vpop.f32.mrb[0].mxu0
      %v1132 = vadd.f32 %v923, %v1131
      %v1133 = vpop.f32.mrb[0].mxu0
      %1134 = vmatprep.mubr.bf16.mxu0 0
      %1135 = vmatmul.mubr.bf16.gmra.mrb[0].mxu0 %v650
      %v1136 = vpop.f32.mrb[0].mxu0
      %v1137 = vadd.f32 %v928, %v1136
      %v1138 = vpop.f32.mrb[0].mxu0
      %v1139 = vpop.f32.mrb[0].mxu0
      %v1140 = vadd.f32 %v931, %v1139
      %v1141 = vpop.f32.mrb[0].mxu0
      %1142 = vmatprep.mubr.bf16.mxu0 0
      %1143 = vmatmul.mubr.bf16.gmra.mrb[0].mxu0 %v651
      %v1144 = vpop.f32.mrb[0].mxu0
      %v1145 = vadd.f32 %v936, %v1144
      %v1146 = vpop.f32.mrb[0].mxu0
      %v1147 = vpop.f32.mrb[0].mxu0
      %v1148 = vadd.f32 %v939, %v1147
      %v1149 = vpop.f32.mrb[0].mxu0
      %1150 = vdwg.mxu0
      %v1151 = vld [vmem:[#allocation2 + $0x9] sm:$0xff]
      %v1152 = vld [vmem:[#allocation2 + $0x11] sm:$0xff]
      %v1153 = vld [vmem:[#allocation2 + $0x29] sm:$0xff]
      %v1154 = vld [vmem:[#allocation2 + $0x31] sm:$0xff]
      %v1155 = vld [vmem:[#allocation2 + $0x49] sm:$0xff]
      %v1156 = vld [vmem:[#allocation2 + $0x51] sm:$0xff]
      %v1157 = vld [vmem:[#allocation2 + $0x69] sm:$0xff]
      %v1158 = vld [vmem:[#allocation2 + $0x71] sm:$0xff]
      %v1159 = vld [vmem:[#allocation2 + $0x89] sm:$0xff]
      %v1160 = vld [vmem:[#allocation2 + $0x91] sm:$0xff]
      %v1161 = vld [vmem:[#allocation2 + $0xa9] sm:$0xff]
      %v1162 = vld [vmem:[#allocation2 + $0xb1] sm:$0xff]
      %v1163 = vld [vmem:[#allocation2 + $0xc9] sm:$0xff]
      %v1164 = vld [vmem:[#allocation2 + $0xd1] sm:$0xff]
      %v1165 = vld [vmem:[#allocation2 + $0xe9] sm:$0xff]
      %v1166 = vld [vmem:[#allocation2 + $0xf1] sm:$0xff]
      %v1167 = vld [vmem:[#allocation2 + $0x109] sm:$0xff]
      %v1168 = vld [vmem:[#allocation2 + $0x111] sm:$0xff]
      %v1169 = vld [vmem:[#allocation2 + $0x129] sm:$0xff]
      %v1170 = vld [vmem:[#allocation2 + $0x131] sm:$0xff]
      %v1171 = vld [vmem:[#allocation2 + $0x149] sm:$0xff]
      %v1172 = vld [vmem:[#allocation2 + $0x151] sm:$0xff]
      %v1173 = vld [vmem:[#allocation2 + $0x169] sm:$0xff]
      %v1174 = vld [vmem:[#allocation2 + $0x171] sm:$0xff]
      %v1175 = vld [vmem:[#allocation2 + $0x189] sm:$0xff]
      %v1176 = vld [vmem:[#allocation2 + $0x191] sm:$0xff]
      %v1177 = vld [vmem:[#allocation2 + $0x1a9] sm:$0xff]
      %v1178 = vld [vmem:[#allocation2 + $0x1b1] sm:$0xff]
      %v1179 = vld [vmem:[#allocation2 + $0x1c9] sm:$0xff]
      %v1180 = vld [vmem:[#allocation2 + $0x1d1] sm:$0xff]
      %v1181 = vld [vmem:[#allocation2 + $0x1e9] sm:$0xff]
      %v1182 = vld [vmem:[#allocation2 + $0x1f1] sm:$0xff]
      %v1183 = vpack.c.bf16 %v1152, %v1151
      %v1184 = vpack.c.bf16 %v1154, %v1153
      %v1185 = vpack.c.bf16 %v1156, %v1155
      %v1186 = vpack.c.bf16 %v1158, %v1157
      %v1187 = vpack.c.bf16 %v1160, %v1159
      %v1188 = vpack.c.bf16 %v1162, %v1161
      %v1189 = vpack.c.bf16 %v1164, %v1163
      %v1190 = vpack.c.bf16 %v1166, %v1165
      %v1191 = vpack.c.bf16 %v1168, %v1167
      %v1192 = vpack.c.bf16 %v1170, %v1169
      %v1193 = vpack.c.bf16 %v1172, %v1171
      %v1194 = vpack.c.bf16 %v1174, %v1173
      %v1195 = vpack.c.bf16 %v1176, %v1175
      %v1196 = vpack.c.bf16 %v1178, %v1177
      %v1197 = vpack.c.bf16 %v1180, %v1179
      %v1198 = vpack.c.bf16 %v1182, %v1181
      %s1199 = scalar_lea.vmem %s2, 128
      %v1200 = vld [vmem:[%s1199] sm:$0xf]
      %v1201 = vld [vmem:[%s1199 + $0x4] sm:$0xf]
      %v1202 = vld [vmem:[%s1199 + $0x8] sm:$0xf]
      %v1203 = vld [vmem:[%s1199 + $0xc] sm:$0xf]
      %v1204 = vld [vmem:[%s1199 + $0x10] sm:$0xf]
      %v1205 = vld [vmem:[%s1199 + $0x14] sm:$0xf]
      %v1206 = vld [vmem:[%s1199 + $0x18] sm:$0xf]
      %v1207 = vld [vmem:[%s1199 + $0x1c] sm:$0xf]
      %v1208 = vld [vmem:[%s1199 + $0x20] sm:$0xf]
      %v1209 = vld [vmem:[%s1199 + $0x24] sm:$0xf]
      %v1210 = vld [vmem:[%s1199 + $0x28] sm:$0xf]
      %v1211 = vld [vmem:[%s1199 + $0x2c] sm:$0xf]
      %v1212 = vld [vmem:[%s1199 + $0x30] sm:$0xf]
      %v1213 = vld [vmem:[%s1199 + $0x34] sm:$0xf]
      %v1214 = vld [vmem:[%s1199 + $0x38] sm:$0xf]
      %v1215 = vld [vmem:[%s1199 + $0x3c] sm:$0xf]
      %v1232 = vunpack.c.l.b16 %v1200
      %v1233 = vunpack.c.l.b16 %v1201
      %v1234 = vunpack.c.l.b16 %v1202
      %v1235 = vunpack.c.l.b16 %v1203
      %v1236 = vunpack.c.l.b16 %v1204
      %v1237 = vunpack.c.l.b16 %v1205
      %v1238 = vunpack.c.l.b16 %v1206
      %v1239 = vunpack.c.l.b16 %v1207
      %v1240 = vunpack.c.l.b16 %v1208
      %v1241 = vunpack.c.l.b16 %v1209
      %v1242 = vunpack.c.l.b16 %v1210
      %v1243 = vunpack.c.l.b16 %v1211
      %v1244 = vunpack.c.l.b16 %v1212
      %v1245 = vunpack.c.l.b16 %v1213
      %v1246 = vunpack.c.l.b16 %v1214
      %v1247 = vunpack.c.l.b16 %v1215
      %v1248 = vpack.c.b16 %v1233, %v1232
      %v1249 = vpack.c.b16 %v1235, %v1234
      %v1250 = vpack.c.b16 %v1237, %v1236
      %v1251 = vpack.c.b16 %v1239, %v1238
      %v1252 = vpack.c.b16 %v1241, %v1240
      %v1253 = vpack.c.b16 %v1243, %v1242
      %v1254 = vpack.c.b16 %v1245, %v1244
      %v1255 = vpack.c.b16 %v1247, %v1246
      %1264 = vmatprep.subr.bf16.mxu0 0
      %1265 = vmatpush1.bf16.msra.mxu0 %v1248
      %1266 = vmatprep.subr.bf16.mxu0 0
      %1267 = vmatpush1.bf16.msra.mxu0 %v1249
      %1268 = vmatprep.subr.bf16.mxu0 0
      %1269 = vmatpush1.bf16.msra.mxu0 %v1250
      %1270 = vmatprep.subr.bf16.mxu0 0
      %1271 = vmatpush1.bf16.msra.mxu0 %v1251
      %1272 = vmatprep.subr.bf16.mxu0 0
      %1273 = vmatpush1.bf16.msra.mxu0 %v1252
      %1274 = vmatprep.subr.bf16.mxu0 0
      %1275 = vmatpush1.bf16.msra.mxu0 %v1253
      %1276 = vmatprep.subr.bf16.mxu0 0
      %1277 = vmatpush1.bf16.msra.mxu0 %v1254
      %1278 = vmatprep.subr.bf16.mxu0 0
      %1279 = vmatpush1.bf16.msra.mxu0 %v1255
      %1280 = vmatprep.subr.bf16.mxu0 0
      %1281 = vmatpush1.bf16.msra.mxu0 0
      %1282 = vmatprep.subr.bf16.mxu0 0
      %1283 = vmatpush1.bf16.msra.mxu0 0
      %1284 = vmatprep.subr.bf16.mxu0 0
      %1285 = vmatpush1.bf16.msra.mxu0 0
      %1286 = vmatprep.subr.bf16.mxu0 0
      %1287 = vmatpush1.bf16.msra.mxu0 0
      %1288 = vmatprep.subr.bf16.mxu0 0
      %1289 = vmatpush1.bf16.msra.mxu0 0
      %1290 = vmatprep.subr.bf16.mxu0 0
      %1291 = vmatpush1.bf16.msra.mxu0 0
      %1292 = vmatprep.subr.bf16.mxu0 0
      %1293 = vmatpush1.bf16.msra.mxu0 0
      %1294 = vmatprep.subr.bf16.mxu0 0
      %1295 = vmatpush1.bf16.msra.mxu0 0
      %1296 = vmatprep.mubr.bf16.mxu0 0
      %1297 = vmatmul.mubr.bf16.gmra.mrb[0].mxu0 %v1183
      %v1298 = vpop.f32.mrb[0].mxu0
      %v1299 = vadd.f32 0.0, %v1298
      %v1300 = vpop.f32.mrb[0].mxu0
      %v1301 = vpop.f32.mrb[0].mxu0
      %v1302 = vadd.f32 0.0, %v1301
      %v1303 = vpop.f32.mrb[0].mxu0
      %1304 = vmatprep.mubr.bf16.mxu0 0
      %1305 = vmatmul.mubr.bf16.gmra.mrb[0].mxu0 %v1184
      %v1306 = vpop.f32.mrb[0].mxu0
      %v1307 = vadd.f32 0.0, %v1306
      %v1308 = vpop.f32.mrb[0].mxu0
      %v1309 = vpop.f32.mrb[0].mxu0
      %v1310 = vadd.f32 0.0, %v1309
      %v1311 = vpop.f32.mrb[0].mxu0
      %1312 = vmatprep.mubr.bf16.mxu0 0
      %1313 = vmatmul.mubr.bf16.gmra.mrb[0].mxu0 %v1185
      %v1314 = vpop.f32.mrb[0].mxu0
      %v1315 = vadd.f32 0.0, %v1314
      %v1316 = vpop.f32.mrb[0].mxu0
      %v1317 = vpop.f32.mrb[0].mxu0
      %v1318 = vadd.f32 0.0, %v1317
      %v1319 = vpop.f32.mrb[0].mxu0
      %1320 = vmatprep.mubr.bf16.mxu0 0
      %1321 = vmatmul.mubr.bf16.gmra.mrb[0].mxu0 %v1186
      %v1322 = vpop.f32.mrb[0].mxu0
      %v1323 = vadd.f32 0.0, %v1322
      %v1324 = vpop.f32.mrb[0].mxu0
      %v1325 = vpop.f32.mrb[0].mxu0
      %v1326 = vadd.f32 0.0, %v1325
      %v1327 = vpop.f32.mrb[0].mxu0
      %1328 = vmatprep.mubr.bf16.mxu0 0
      %1329 = vmatmul.mubr.bf16.gmra.mrb[0].mxu0 %v1187
      %v1330 = vpop.f32.mrb[0].mxu0
      %v1331 = vadd.f32 0.0, %v1330
      %v1332 = vpop.f32.mrb[0].mxu0
      %v1333 = vpop.f32.mrb[0].mxu0
      %v1334 = vadd.f32 0.0, %v1333
      %v1335 = vpop.f32.mrb[0].mxu0
      %1336 = vmatprep.mubr.bf16.mxu0 0
      %1337 = vmatmul.mubr.bf16.gmra.mrb[0].mxu0 %v1188
      %v1338 = vpop.f32.mrb[0].mxu0
      %v1339 = vadd.f32 0.0, %v1338
      %v1340 = vpop.f32.mrb[0].mxu0
      %v1341 = vpop.f32.mrb[0].mxu0
      %v1342 = vadd.f32 0.0, %v1341
      %v1343 = vpop.f32.mrb[0].mxu0
      %1344 = vmatprep.mubr.bf16.mxu0 0
      %1345 = vmatmul.mubr.bf16.gmra.mrb[0].mxu0 %v1189
      %v1346 = vpop.f32.mrb[0].mxu0
      %v1347 = vadd.f32 0.0, %v1346
      %v1348 = vpop.f32.mrb[0].mxu0
      %v1349 = vpop.f32.mrb[0].mxu0
      %v1350 = vadd.f32 0.0, %v1349
      %v1351 = vpop.f32.mrb[0].mxu0
      %1352 = vmatprep.mubr.bf16.mxu0 0
      %1353 = vmatmul.mubr.bf16.gmra.mrb[0].mxu0 %v1190
      %v1354 = vpop.f32.mrb[0].mxu0
      %v1355 = vadd.f32 0.0, %v1354
      %v1356 = vpop.f32.mrb[0].mxu0
      %v1357 = vpop.f32.mrb[0].mxu0
      %v1358 = vadd.f32 0.0, %v1357
      %v1359 = vpop.f32.mrb[0].mxu0
      %1360 = vmatprep.mubr.bf16.mxu0 0
      %1361 = vmatmul.mubr.bf16.gmra.mrb[0].mxu0 %v1191
      %v1362 = vpop.f32.mrb[0].mxu0
      %v1363 = vadd.f32 0.0, %v1362
      %v1364 = vpop.f32.mrb[0].mxu0
      %v1365 = vpop.f32.mrb[0].mxu0
      %v1366 = vadd.f32 0.0, %v1365
      %v1367 = vpop.f32.mrb[0].mxu0
      %1368 = vmatprep.mubr.bf16.mxu0 0
      %1369 = vmatmul.mubr.bf16.gmra.mrb[0].mxu0 %v1192
      %v1370 = vpop.f32.mrb[0].mxu0
      %v1371 = vadd.f32 0.0, %v1370
      %v1372 = vpop.f32.mrb[0].mxu0
      %v1373 = vpop.f32.mrb[0].mxu0
      %v1374 = vadd.f32 0.0, %v1373
      %v1375 = vpop.f32.mrb[0].mxu0
      %1376 = vmatprep.mubr.bf16.mxu0 0
      %1377 = vmatmul.mubr.bf16.gmra.mrb[0].mxu0 %v1193
      %v1378 = vpop.f32.mrb[0].mxu0
      %v1379 = vadd.f32 0.0, %v1378
      %v1380 = vpop.f32.mrb[0].mxu0
      %v1381 = vpop.f32.mrb[0].mxu0
      %v1382 = vadd.f32 0.0, %v1381
      %v1383 = vpop.f32.mrb[0].mxu0
      %1384 = vmatprep.mubr.bf16.mxu0 0
      %1385 = vmatmul.mubr.bf16.gmra.mrb[0].mxu0 %v1194
      %v1386 = vpop.f32.mrb[0].mxu0
      %v1387 = vadd.f32 0.0, %v1386
      %v1388 = vpop.f32.mrb[0].mxu0
      %v1389 = vpop.f32.mrb[0].mxu0
      %v1390 = vadd.f32 0.0, %v1389
      %v1391 = vpop.f32.mrb[0].mxu0
      %1392 = vmatprep.mubr.bf16.mxu0 0
      %1393 = vmatmul.mubr.bf16.gmra.mrb[0].mxu0 %v1195
      %v1394 = vpop.f32.mrb[0].mxu0
      %v1395 = vadd.f32 0.0, %v1394
      %v1396 = vpop.f32.mrb[0].mxu0
      %v1397 = vpop.f32.mrb[0].mxu0
      %v1398 = vadd.f32 0.0, %v1397
      %v1399 = vpop.f32.mrb[0].mxu0
      %1400 = vmatprep.mubr.bf16.mxu0 0
      %1401 = vmatmul.mubr.bf16.gmra.mrb[0].mxu0 %v1196
      %v1402 = vpop.f32.mrb[0].mxu0
      %v1403 = vadd.f32 0.0, %v1402
      %v1404 = vpop.f32.mrb[0].mxu0
      %v1405 = vpop.f32.mrb[0].mxu0
      %v1406 = vadd.f32 0.0, %v1405
      %v1407 = vpop.f32.mrb[0].mxu0
      %1408 = vmatprep.mubr.bf16.mxu0 0
      %1409 = vmatmul.mubr.bf16.gmra.mrb[0].mxu0 %v1197
      %v1410 = vpop.f32.mrb[0].mxu0
      %v1411 = vadd.f32 0.0, %v1410
      %v1412 = vpop.f32.mrb[0].mxu0
      %v1413 = vpop.f32.mrb[0].mxu0
      %v1414 = vadd.f32 0.0, %v1413
      %v1415 = vpop.f32.mrb[0].mxu0
      %1416 = vmatprep.mubr.bf16.mxu0 0
      %1417 = vmatmul.mubr.bf16.gmra.mrb[0].mxu0 %v1198
      %v1418 = vpop.f32.mrb[0].mxu0
      %v1419 = vadd.f32 0.0, %v1418
      %v1420 = vpop.f32.mrb[0].mxu0
      %v1421 = vpop.f32.mrb[0].mxu0
      %v1422 = vadd.f32 0.0, %v1421
      %v1423 = vpop.f32.mrb[0].mxu0
      %1424 = vdwg.mxu0
      %v1425 = vadd.f32 %v1025, %v1299
      %v1426 = vadd.f32 %v1028, %v1302
      %v1427 = vadd.f32 %v1033, %v1307
      %v1428 = vadd.f32 %v1036, %v1310
      %v1429 = vadd.f32 %v1041, %v1315
      %v1430 = vadd.f32 %v1044, %v1318
      %v1431 = vadd.f32 %v1049, %v1323
      %v1432 = vadd.f32 %v1052, %v1326
      %v1433 = vadd.f32 %v1057, %v1331
      %v1434 = vadd.f32 %v1060, %v1334
      %v1435 = vadd.f32 %v1065, %v1339
      %v1436 = vadd.f32 %v1068, %v1342
      %v1437 = vadd.f32 %v1073, %v1347
      %v1438 = vadd.f32 %v1076, %v1350
      %v1439 = vadd.f32 %v1081, %v1355
      %v1440 = vadd.f32 %v1084, %v1358
      %v1441 = vadd.f32 %v1089, %v1363
      %v1442 = vadd.f32 %v1092, %v1366
      %v1443 = vadd.f32 %v1097, %v1371
      %v1444 = vadd.f32 %v1100, %v1374
      %v1445 = vadd.f32 %v1105, %v1379
      %v1446 = vadd.f32 %v1108, %v1382
      %v1447 = vadd.f32 %v1113, %v1387
      %v1448 = vadd.f32 %v1116, %v1390
      %v1449 = vadd.f32 %v1121, %v1395
      %v1450 = vadd.f32 %v1124, %v1398
      %v1451 = vadd.f32 %v1129, %v1403
      %v1452 = vadd.f32 %v1132, %v1406
      %v1453 = vadd.f32 %v1137, %v1411
      %v1454 = vadd.f32 %v1140, %v1414
      %v1455 = vadd.f32 %v1145, %v1419
      %v1456 = vadd.f32 %v1148, %v1422
      %v1457 = vld [vmem:[%s344 + $0x7] sm:$0xff]
      %v1458 = vld [vmem:[%s344 + $0xf] sm:$0xff]
      %v1459 = vld [vmem:[%s344 + $0x27] sm:$0xff]
      %v1460 = vld [vmem:[%s344 + $0x2f] sm:$0xff]
      %v1461 = vld [vmem:[%s344 + $0x47] sm:$0xff]
      %v1462 = vld [vmem:[%s344 + $0x4f] sm:$0xff]
      %v1463 = vld [vmem:[%s344 + $0x67] sm:$0xff]
      %v1464 = vld [vmem:[%s344 + $0x6f] sm:$0xff]
      %v1465 = vld [vmem:[%s344 + $0x87] sm:$0xff]
      %v1466 = vld [vmem:[%s344 + $0x8f] sm:$0xff]
      %v1467 = vld [vmem:[%s344 + $0xa7] sm:$0xff]
      %v1468 = vld [vmem:[%s344 + $0xaf] sm:$0xff]
      %v1469 = vld [vmem:[%s344 + $0xc7] sm:$0xff]
      %v1470 = vld [vmem:[%s344 + $0xcf] sm:$0xff]
      %v1471 = vld [vmem:[%s344 + $0xe7] sm:$0xff]
      %v1472 = vld [vmem:[%s344 + $0xef] sm:$0xff]
      %v1473 = vld [vmem:[%s344 + $0x107] sm:$0xff]
      %v1474 = vld [vmem:[%s344 + $0x10f] sm:$0xff]
      %v1475 = vld [vmem:[%s344 + $0x127] sm:$0xff]
      %v1476 = vld [vmem:[%s344 + $0x12f] sm:$0xff]
      %v1477 = vld [vmem:[%s344 + $0x147] sm:$0xff]
      %v1478 = vld [vmem:[%s344 + $0x14f] sm:$0xff]
      %v1479 = vld [vmem:[%s344 + $0x167] sm:$0xff]
      %v1480 = vld [vmem:[%s344 + $0x16f] sm:$0xff]
      %v1481 = vld [vmem:[%s344 + $0x187] sm:$0xff]
      %v1482 = vld [vmem:[%s344 + $0x18f] sm:$0xff]
      %v1483 = vld [vmem:[%s344 + $0x1a7] sm:$0xff]
      %v1484 = vld [vmem:[%s344 + $0x1af] sm:$0xff]
      %v1485 = vld [vmem:[%s344 + $0x1c7] sm:$0xff]
      %v1486 = vld [vmem:[%s344 + $0x1cf] sm:$0xff]
      %v1487 = vld [vmem:[%s344 + $0x1e7] sm:$0xff]
      %v1488 = vld [vmem:[%s344 + $0x1ef] sm:$0xff]
      %v1489 = vpack.c.bf16 %v1458, %v1457
      %v1490 = vpack.c.bf16 %v1460, %v1459
      %v1491 = vpack.c.bf16 %v1462, %v1461
      %v1492 = vpack.c.bf16 %v1464, %v1463
      %v1493 = vpack.c.bf16 %v1466, %v1465
      %v1494 = vpack.c.bf16 %v1468, %v1467
      %v1495 = vpack.c.bf16 %v1470, %v1469
      %v1496 = vpack.c.bf16 %v1472, %v1471
      %v1497 = vpack.c.bf16 %v1474, %v1473
      %v1498 = vpack.c.bf16 %v1476, %v1475
      %v1499 = vpack.c.bf16 %v1478, %v1477
      %v1500 = vpack.c.bf16 %v1480, %v1479
      %v1501 = vpack.c.bf16 %v1482, %v1481
      %v1502 = vpack.c.bf16 %v1484, %v1483
      %v1503 = vpack.c.bf16 %v1486, %v1485
      %v1504 = vpack.c.bf16 %v1488, %v1487
      %s1505 = scalar_lea.vmem %s2, 192
      %v1506 = vld [vmem:[%s1505] sm:$0xf]
      %v1507 = vld [vmem:[%s1505 + $0x4] sm:$0xf]
      %v1508 = vld [vmem:[%s1505 + $0x8] sm:$0xf]
      %v1509 = vld [vmem:[%s1505 + $0xc] sm:$0xf]
      %v1510 = vld [vmem:[%s1505 + $0x10] sm:$0xf]
      %v1511 = vld [vmem:[%s1505 + $0x14] sm:$0xf]
      %v1512 = vld [vmem:[%s1505 + $0x18] sm:$0xf]
      %v1513 = vld [vmem:[%s1505 + $0x1c] sm:$0xf]
      %v1514 = vld [vmem:[%s1505 + $0x20] sm:$0xf]
      %v1515 = vld [vmem:[%s1505 + $0x24] sm:$0xf]
      %v1516 = vld [vmem:[%s1505 + $0x28] sm:$0xf]
      %v1517 = vld [vmem:[%s1505 + $0x2c] sm:$0xf]
      %v1518 = vld [vmem:[%s1505 + $0x30] sm:$0xf]
      %v1519 = vld [vmem:[%s1505 + $0x34] sm:$0xf]
      %v1520 = vld [vmem:[%s1505 + $0x38] sm:$0xf]
      %v1521 = vld [vmem:[%s1505 + $0x3c] sm:$0xf]
      %v1538 = vunpack.c.l.b16 %v1506
      %v1539 = vunpack.c.l.b16 %v1507
      %v1540 = vunpack.c.l.b16 %v1508
      %v1541 = vunpack.c.l.b16 %v1509
      %v1542 = vunpack.c.l.b16 %v1510
      %v1543 = vunpack.c.l.b16 %v1511
      %v1544 = vunpack.c.l.b16 %v1512
      %v1545 = vunpack.c.l.b16 %v1513
      %v1546 = vunpack.c.l.b16 %v1514
      %v1547 = vunpack.c.l.b16 %v1515
      %v1548 = vunpack.c.l.b16 %v1516
      %v1549 = vunpack.c.l.b16 %v1517
      %v1550 = vunpack.c.l.b16 %v1518
      %v1551 = vunpack.c.l.b16 %v1519
      %v1552 = vunpack.c.l.b16 %v1520
      %v1553 = vunpack.c.l.b16 %v1521
      %v1554 = vpack.c.b16 %v1539, %v1538
      %v1555 = vpack.c.b16 %v1541, %v1540
      %v1556 = vpack.c.b16 %v1543, %v1542
      %v1557 = vpack.c.b16 %v1545, %v1544
      %v1558 = vpack.c.b16 %v1547, %v1546
      %v1559 = vpack.c.b16 %v1549, %v1548
      %v1560 = vpack.c.b16 %v1551, %v1550
      %v1561 = vpack.c.b16 %v1553, %v1552
      %1570 = vmatprep.subr.bf16.mxu0 0
      %1571 = vmatpush1.bf16.msra.mxu0 %v1554
      %1572 = vmatprep.subr.bf16.mxu0 0
      %1573 = vmatpush1.bf16.msra.mxu0 %v1555
      %1574 = vmatprep.subr.bf16.mxu0 0
      %1575 = vmatpush1.bf16.msra.mxu0 %v1556
      %1576 = vmatprep.subr.bf16.mxu0 0
      %1577 = vmatpush1.bf16.msra.mxu0 %v1557
      %1578 = vmatprep.subr.bf16.mxu0 0
      %1579 = vmatpush1.bf16.msra.mxu0 %v1558
      %1580 = vmatprep.subr.bf16.mxu0 0
      %1581 = vmatpush1.bf16.msra.mxu0 %v1559
      %1582 = vmatprep.subr.bf16.mxu0 0
      %1583 = vmatpush1.bf16.msra.mxu0 %v1560
      %1584 = vmatprep.subr.bf16.mxu0 0
      %1585 = vmatpush1.bf16.msra.mxu0 %v1561
      %1586 = vmatprep.subr.bf16.mxu0 0
      %1587 = vmatpush1.bf16.msra.mxu0 0
      %1588 = vmatprep.subr.bf16.mxu0 0
      %1589 = vmatpush1.bf16.msra.mxu0 0
      %1590 = vmatprep.subr.bf16.mxu0 0
      %1591 = vmatpush1.bf16.msra.mxu0 0
      %1592 = vmatprep.subr.bf16.mxu0 0
      %1593 = vmatpush1.bf16.msra.mxu0 0
      %1594 = vmatprep.subr.bf16.mxu0 0
      %1595 = vmatpush1.bf16.msra.mxu0 0
      %1596 = vmatprep.subr.bf16.mxu0 0
      %1597 = vmatpush1.bf16.msra.mxu0 0
      %1598 = vmatprep.subr.bf16.mxu0 0
      %1599 = vmatpush1.bf16.msra.mxu0 0
      %1600 = vmatprep.subr.bf16.mxu0 0
      %1601 = vmatpush1.bf16.msra.mxu0 0
      %1602 = vmatprep.mubr.bf16.mxu0 0
      %1603 = vmatmul.mubr.bf16.gmra.mrb[0].mxu0 %v1489
      %v1604 = vpop.f32.mrb[0].mxu0
      %v1605 = vadd.f32 0.0, %v1604
      %v1606 = vpop.f32.mrb[0].mxu0
      %v1607 = vpop.f32.mrb[0].mxu0
      %v1608 = vadd.f32 0.0, %v1607
      %v1609 = vpop.f32.mrb[0].mxu0
      %1610 = vmatprep.mubr.bf16.mxu0 0
      %1611 = vmatmul.mubr.bf16.gmra.mrb[0].mxu0 %v1490
      %v1612 = vpop.f32.mrb[0].mxu0
      %v1613 = vadd.f32 0.0, %v1612
      %v1614 = vpop.f32.mrb[0].mxu0
      %v1615 = vpop.f32.mrb[0].mxu0
      %v1616 = vadd.f32 0.0, %v1615
      %v1617 = vpop.f32.mrb[0].mxu0
      %1618 = vmatprep.mubr.bf16.mxu0 0
      %1619 = vmatmul.mubr.bf16.gmra.mrb[0].mxu0 %v1491
      %v1620 = vpop.f32.mrb[0].mxu0
      %v1621 = vadd.f32 0.0, %v1620
      %v1622 = vpop.f32.mrb[0].mxu0
      %v1623 = vpop.f32.mrb[0].mxu0
      %v1624 = vadd.f32 0.0, %v1623
      %v1625 = vpop.f32.mrb[0].mxu0
      %1626 = vmatprep.mubr.bf16.mxu0 0
      %1627 = vmatmul.mubr.bf16.gmra.mrb[0].mxu0 %v1492
      %v1628 = vpop.f32.mrb[0].mxu0
      %v1629 = vadd.f32 0.0, %v1628
      %v1630 = vpop.f32.mrb[0].mxu0
      %v1631 = vpop.f32.mrb[0].mxu0
      %v1632 = vadd.f32 0.0, %v1631
      %v1633 = vpop.f32.mrb[0].mxu0
      %1634 = vmatprep.mubr.bf16.mxu0 0
      %1635 = vmatmul.mubr.bf16.gmra.mrb[0].mxu0 %v1493
      %v1636 = vpop.f32.mrb[0].mxu0
      %v1637 = vadd.f32 0.0, %v1636
      %v1638 = vpop.f32.mrb[0].mxu0
      %v1639 = vpop.f32.mrb[0].mxu0
      %v1640 = vadd.f32 0.0, %v1639
      %v1641 = vpop.f32.mrb[0].mxu0
      %1642 = vmatprep.mubr.bf16.mxu0 0
      %1643 = vmatmul.mubr.bf16.gmra.mrb[0].mxu0 %v1494
      %v1644 = vpop.f32.mrb[0].mxu0
      %v1645 = vadd.f32 0.0, %v1644
      %v1646 = vpop.f32.mrb[0].mxu0
      %v1647 = vpop.f32.mrb[0].mxu0
      %v1648 = vadd.f32 0.0, %v1647
      %v1649 = vpop.f32.mrb[0].mxu0
      %1650 = vmatprep.mubr.bf16.mxu0 0
      %1651 = vmatmul.mubr.bf16.gmra.mrb[0].mxu0 %v1495
      %v1652 = vpop.f32.mrb[0].mxu0
      %v1653 = vadd.f32 0.0, %v1652
      %v1654 = vpop.f32.mrb[0].mxu0
      %v1655 = vpop.f32.mrb[0].mxu0
      %v1656 = vadd.f32 0.0, %v1655
      %v1657 = vpop.f32.mrb[0].mxu0
      %1658 = vmatprep.mubr.bf16.mxu0 0
      %1659 = vmatmul.mubr.bf16.gmra.mrb[0].mxu0 %v1496
      %v1660 = vpop.f32.mrb[0].mxu0
      %v1661 = vadd.f32 0.0, %v1660
      %v1662 = vpop.f32.mrb[0].mxu0
      %v1663 = vpop.f32.mrb[0].mxu0
      %v1664 = vadd.f32 0.0, %v1663
      %v1665 = vpop.f32.mrb[0].mxu0
      %1666 = vmatprep.mubr.bf16.mxu0 0
      %1667 = vmatmul.mubr.bf16.gmra.mrb[0].mxu0 %v1497
      %v1668 = vpop.f32.mrb[0].mxu0
      %v1669 = vadd.f32 0.0, %v1668
      %v1670 = vpop.f32.mrb[0].mxu0
      %v1671 = vpop.f32.mrb[0].mxu0
      %v1672 = vadd.f32 0.0, %v1671
      %v1673 = vpop.f32.mrb[0].mxu0
      %1674 = vmatprep.mubr.bf16.mxu0 0
      %1675 = vmatmul.mubr.bf16.gmra.mrb[0].mxu0 %v1498
      %v1676 = vpop.f32.mrb[0].mxu0
      %v1677 = vadd.f32 0.0, %v1676
      %v1678 = vpop.f32.mrb[0].mxu0
      %v1679 = vpop.f32.mrb[0].mxu0
      %v1680 = vadd.f32 0.0, %v1679
      %v1681 = vpop.f32.mrb[0].mxu0
      %1682 = vmatprep.mubr.bf16.mxu0 0
      %1683 = vmatmul.mubr.bf16.gmra.mrb[0].mxu0 %v1499
      %v1684 = vpop.f32.mrb[0].mxu0
      %v1685 = vadd.f32 0.0, %v1684
      %v1686 = vpop.f32.mrb[0].mxu0
      %v1687 = vpop.f32.mrb[0].mxu0
      %v1688 = vadd.f32 0.0, %v1687
      %v1689 = vpop.f32.mrb[0].mxu0
      %1690 = vmatprep.mubr.bf16.mxu0 0
      %1691 = vmatmul.mubr.bf16.gmra.mrb[0].mxu0 %v1500
      %v1692 = vpop.f32.mrb[0].mxu0
      %v1693 = vadd.f32 0.0, %v1692
      %v1694 = vpop.f32.mrb[0].mxu0
      %v1695 = vpop.f32.mrb[0].mxu0
      %v1696 = vadd.f32 0.0, %v1695
      %v1697 = vpop.f32.mrb[0].mxu0
      %1698 = vmatprep.mubr.bf16.mxu0 0
      %1699 = vmatmul.mubr.bf16.gmra.mrb[0].mxu0 %v1501
      %v1700 = vpop.f32.mrb[0].mxu0
      %v1701 = vadd.f32 0.0, %v1700
      %v1702 = vpop.f32.mrb[0].mxu0
      %v1703 = vpop.f32.mrb[0].mxu0
      %v1704 = vadd.f32 0.0, %v1703
      %v1705 = vpop.f32.mrb[0].mxu0
      %1706 = vmatprep.mubr.bf16.mxu0 0
      %1707 = vmatmul.mubr.bf16.gmra.mrb[0].mxu0 %v1502
      %v1708 = vpop.f32.mrb[0].mxu0
      %v1709 = vadd.f32 0.0, %v1708
      %v1710 = vpop.f32.mrb[0].mxu0
      %v1711 = vpop.f32.mrb[0].mxu0
      %v1712 = vadd.f32 0.0, %v1711
      %v1713 = vpop.f32.mrb[0].mxu0
      %1714 = vmatprep.mubr.bf16.mxu0 0
      %1715 = vmatmul.mubr.bf16.gmra.mrb[0].mxu0 %v1503
      %v1716 = vpop.f32.mrb[0].mxu0
      %v1717 = vadd.f32 0.0, %v1716
      %v1718 = vpop.f32.mrb[0].mxu0
      %v1719 = vpop.f32.mrb[0].mxu0
      %v1720 = vadd.f32 0.0, %v1719
      %v1721 = vpop.f32.mrb[0].mxu0
      %1722 = vmatprep.mubr.bf16.mxu0 0
      %1723 = vmatmul.mubr.bf16.gmra.mrb[0].mxu0 %v1504
      %v1724 = vpop.f32.mrb[0].mxu0
      %v1725 = vadd.f32 0.0, %v1724
      %v1726 = vpop.f32.mrb[0].mxu0
      %v1727 = vpop.f32.mrb[0].mxu0
      %v1728 = vadd.f32 0.0, %v1727
      %v1729 = vpop.f32.mrb[0].mxu0
      %1730 = vdwg.mxu0
      %v1731 = vadd.f32 %v1425, %v1605
      %v1732 = vadd.f32 %v1426, %v1608
      %v1733 = vadd.f32 %v1427, %v1613
      %v1734 = vadd.f32 %v1428, %v1616
      %v1735 = vadd.f32 %v1429, %v1621
      %v1736 = vadd.f32 %v1430, %v1624
      %v1737 = vadd.f32 %v1431, %v1629
      %v1738 = vadd.f32 %v1432, %v1632
      %v1739 = vadd.f32 %v1433, %v1637
      %v1740 = vadd.f32 %v1434, %v1640
      %v1741 = vadd.f32 %v1435, %v1645
      %v1742 = vadd.f32 %v1436, %v1648
      %v1743 = vadd.f32 %v1437, %v1653
      %v1744 = vadd.f32 %v1438, %v1656
      %v1745 = vadd.f32 %v1439, %v1661
      %v1746 = vadd.f32 %v1440, %v1664
      %v1747 = vadd.f32 %v1441, %v1669
      %v1748 = vadd.f32 %v1442, %v1672
      %v1749 = vadd.f32 %v1443, %v1677
      %v1750 = vadd.f32 %v1444, %v1680
      %v1751 = vadd.f32 %v1445, %v1685
      %v1752 = vadd.f32 %v1446, %v1688
      %v1753 = vadd.f32 %v1447, %v1693
      %v1754 = vadd.f32 %v1448, %v1696
      %v1755 = vadd.f32 %v1449, %v1701
      %v1756 = vadd.f32 %v1450, %v1704
      %v1757 = vadd.f32 %v1451, %v1709
      %v1758 = vadd.f32 %v1452, %v1712
      %v1759 = vadd.f32 %v1453, %v1717
      %v1760 = vadd.f32 %v1454, %v1720
      %v1761 = vadd.f32 %v1455, %v1725
      %v1762 = vadd.f32 %v1456, %v1728
      %v1763 = vld [vmem:[%s344 + $0x8] sm:$0xff]
      %v1764 = vld [vmem:[%s344 + $0x10] sm:$0xff]
      %v1765 = vld [vmem:[%s344 + $0x28] sm:$0xff]
      %v1766 = vld [vmem:[%s344 + $0x30] sm:$0xff]
      %v1767 = vld [vmem:[%s344 + $0x48] sm:$0xff]
      %v1768 = vld [vmem:[%s344 + $0x50] sm:$0xff]
      %v1769 = vld [vmem:[%s344 + $0x68] sm:$0xff]
      %v1770 = vld [vmem:[%s344 + $0x70] sm:$0xff]
      %v1771 = vld [vmem:[%s344 + $0x88] sm:$0xff]
      %v1772 = vld [vmem:[%s344 + $0x90] sm:$0xff]
      %v1773 = vld [vmem:[%s344 + $0xa8] sm:$0xff]
      %v1774 = vld [vmem:[%s344 + $0xb0] sm:$0xff]
      %v1775 = vld [vmem:[%s344 + $0xc8] sm:$0xff]
      %v1776 = vld [vmem:[%s344 + $0xd0] sm:$0xff]
      %v1777 = vld [vmem:[%s344 + $0xe8] sm:$0xff]
      %v1778 = vld [vmem:[%s344 + $0xf0] sm:$0xff]
      %v1779 = vld [vmem:[%s344 + $0x108] sm:$0xff]
      %v1780 = vld [vmem:[%s344 + $0x110] sm:$0xff]
      %v1781 = vld [vmem:[%s344 + $0x128] sm:$0xff]
      %v1782 = vld [vmem:[%s344 + $0x130] sm:$0xff]
      %v1783 = vld [vmem:[%s344 + $0x148] sm:$0xff]
      %v1784 = vld [vmem:[%s344 + $0x150] sm:$0xff]
      %v1785 = vld [vmem:[%s344 + $0x168] sm:$0xff]
      %v1786 = vld [vmem:[%s344 + $0x170] sm:$0xff]
      %v1787 = vld [vmem:[%s344 + $0x188] sm:$0xff]
      %v1788 = vld [vmem:[%s344 + $0x190] sm:$0xff]
      %v1789 = vld [vmem:[%s344 + $0x1a8] sm:$0xff]
      %v1790 = vld [vmem:[%s344 + $0x1b0] sm:$0xff]
      %v1791 = vld [vmem:[%s344 + $0x1c8] sm:$0xff]
      %v1792 = vld [vmem:[%s344 + $0x1d0] sm:$0xff]
      %v1793 = vld [vmem:[%s344 + $0x1e8] sm:$0xff]
      %v1794 = vld [vmem:[%s344 + $0x1f0] sm:$0xff]
      %v1795 = vpack.c.bf16 %v1764, %v1763
      %v1796 = vpack.c.bf16 %v1766, %v1765
      %v1797 = vpack.c.bf16 %v1768, %v1767
      %v1798 = vpack.c.bf16 %v1770, %v1769
      %v1799 = vpack.c.bf16 %v1772, %v1771
      %v1800 = vpack.c.bf16 %v1774, %v1773
      %v1801 = vpack.c.bf16 %v1776, %v1775
      %v1802 = vpack.c.bf16 %v1778, %v1777
      %v1803 = vpack.c.bf16 %v1780, %v1779
      %v1804 = vpack.c.bf16 %v1782, %v1781
      %v1805 = vpack.c.bf16 %v1784, %v1783
      %v1806 = vpack.c.bf16 %v1786, %v1785
      %v1807 = vpack.c.bf16 %v1788, %v1787
      %v1808 = vpack.c.bf16 %v1790, %v1789
      %v1809 = vpack.c.bf16 %v1792, %v1791
      %v1810 = vpack.c.bf16 %v1794, %v1793
      %s1811 = scalar_lea.vmem %s2, 256
      %v1812 = vld [vmem:[%s1811] sm:$0xf]
      %v1813 = vld [vmem:[%s1811 + $0x4] sm:$0xf]
      %v1814 = vld [vmem:[%s1811 + $0x8] sm:$0xf]
      %v1815 = vld [vmem:[%s1811 + $0xc] sm:$0xf]
      %v1816 = vld [vmem:[%s1811 + $0x10] sm:$0xf]
      %v1817 = vld [vmem:[%s1811 + $0x14] sm:$0xf]
      %v1818 = vld [vmem:[%s1811 + $0x18] sm:$0xf]
      %v1819 = vld [vmem:[%s1811 + $0x1c] sm:$0xf]
      %v1820 = vld [vmem:[%s1811 + $0x20] sm:$0xf]
      %v1821 = vld [vmem:[%s1811 + $0x24] sm:$0xf]
      %v1822 = vld [vmem:[%s1811 + $0x28] sm:$0xf]
      %v1823 = vld [vmem:[%s1811 + $0x2c] sm:$0xf]
      %v1824 = vld [vmem:[%s1811 + $0x30] sm:$0xf]
      %v1825 = vld [vmem:[%s1811 + $0x34] sm:$0xf]
      %v1826 = vld [vmem:[%s1811 + $0x38] sm:$0xf]
      %v1827 = vld [vmem:[%s1811 + $0x3c] sm:$0xf]
      %v1844 = vunpack.c.l.b16 %v1812
      %v1845 = vunpack.c.l.b16 %v1813
      %v1846 = vunpack.c.l.b16 %v1814
      %v1847 = vunpack.c.l.b16 %v1815
      %v1848 = vunpack.c.l.b16 %v1816
      %v1849 = vunpack.c.l.b16 %v1817
      %v1850 = vunpack.c.l.b16 %v1818
      %v1851 = vunpack.c.l.b16 %v1819
      %v1852 = vunpack.c.l.b16 %v1820
      %v1853 = vunpack.c.l.b16 %v1821
      %v1854 = vunpack.c.l.b16 %v1822
      %v1855 = vunpack.c.l.b16 %v1823
      %v1856 = vunpack.c.l.b16 %v1824
      %v1857 = vunpack.c.l.b16 %v1825
      %v1858 = vunpack.c.l.b16 %v1826
      %v1859 = vunpack.c.l.b16 %v1827
      %v1860 = vpack.c.b16 %v1845, %v1844
      %v1861 = vpack.c.b16 %v1847, %v1846
      %v1862 = vpack.c.b16 %v1849, %v1848
      %v1863 = vpack.c.b16 %v1851, %v1850
      %v1864 = vpack.c.b16 %v1853, %v1852
      %v1865 = vpack.c.b16 %v1855, %v1854
      %v1866 = vpack.c.b16 %v1857, %v1856
      %v1867 = vpack.c.b16 %v1859, %v1858
      %1876 = vmatprep.subr.bf16.mxu0 0
      %1877 = vmatpush1.bf16.msra.mxu0 %v1860
      %1878 = vmatprep.subr.bf16.mxu0 0
      %1879 = vmatpush1.bf16.msra.mxu0 %v1861
      %1880 = vmatprep.subr.bf16.mxu0 0
      %1881 = vmatpush1.bf16.msra.mxu0 %v1862
      %1882 = vmatprep.subr.bf16.mxu0 0
      %1883 = vmatpush1.bf16.msra.mxu0 %v1863
      %1884 = vmatprep.subr.bf16.mxu0 0
      %1885 = vmatpush1.bf16.msra.mxu0 %v1864
      %1886 = vmatprep.subr.bf16.mxu0 0
      %1887 = vmatpush1.bf16.msra.mxu0 %v1865
      %1888 = vmatprep.subr.bf16.mxu0 0
      %1889 = vmatpush1.bf16.msra.mxu0 %v1866
      %1890 = vmatprep.subr.bf16.mxu0 0
      %1891 = vmatpush1.bf16.msra.mxu0 %v1867
      %1892 = vmatprep.subr.bf16.mxu0 0
      %1893 = vmatpush1.bf16.msra.mxu0 0
      %1894 = vmatprep.subr.bf16.mxu0 0
      %1895 = vmatpush1.bf16.msra.mxu0 0
      %1896 = vmatprep.subr.bf16.mxu0 0
      %1897 = vmatpush1.bf16.msra.mxu0 0
      %1898 = vmatprep.subr.bf16.mxu0 0
      %1899 = vmatpush1.bf16.msra.mxu0 0
      %1900 = vmatprep.subr.bf16.mxu0 0
      %1901 = vmatpush1.bf16.msra.mxu0 0
      %1902 = vmatprep.subr.bf16.mxu0 0
      %1903 = vmatpush1.bf16.msra.mxu0 0
      %1904 = vmatprep.subr.bf16.mxu0 0
      %1905 = vmatpush1.bf16.msra.mxu0 0
      %1906 = vmatprep.subr.bf16.mxu0 0
      %1907 = vmatpush1.bf16.msra.mxu0 0
      %1908 = vmatprep.mubr.bf16.mxu0 0
      %1909 = vmatmul.mubr.bf16.gmra.mrb[0].mxu0 %v1795
      %v1910 = vpop.f32.mrb[0].mxu0
      %v1911 = vadd.f32 0.0, %v1910
      %v1912 = vpop.f32.mrb[0].mxu0
      %v1913 = vpop.f32.mrb[0].mxu0
      %v1914 = vadd.f32 0.0, %v1913
      %v1915 = vpop.f32.mrb[0].mxu0
      %1916 = vmatprep.mubr.bf16.mxu0 0
      %1917 = vmatmul.mubr.bf16.gmra.mrb[0].mxu0 %v1796
      %v1918 = vpop.f32.mrb[0].mxu0
      %v1919 = vadd.f32 0.0, %v1918
      %v1920 = vpop.f32.mrb[0].mxu0
      %v1921 = vpop.f32.mrb[0].mxu0
      %v1922 = vadd.f32 0.0, %v1921
      %v1923 = vpop.f32.mrb[0].mxu0
      %1924 = vmatprep.mubr.bf16.mxu0 0
      %1925 = vmatmul.mubr.bf16.gmra.mrb[0].mxu0 %v1797
      %v1926 = vpop.f32.mrb[0].mxu0
      %v1927 = vadd.f32 0.0, %v1926
      %v1928 = vpop.f32.mrb[0].mxu0
      %v1929 = vpop.f32.mrb[0].mxu0
      %v1930 = vadd.f32 0.0, %v1929
      %v1931 = vpop.f32.mrb[0].mxu0
      %1932 = vmatprep.mubr.bf16.mxu0 0
      %1933 = vmatmul.mubr.bf16.gmra.mrb[0].mxu0 %v1798
      %v1934 = vpop.f32.mrb[0].mxu0
      %v1935 = vadd.f32 0.0, %v1934
      %v1936 = vpop.f32.mrb[0].mxu0
      %v1937 = vpop.f32.mrb[0].mxu0
      %v1938 = vadd.f32 0.0, %v1937
      %v1939 = vpop.f32.mrb[0].mxu0
      %1940 = vmatprep.mubr.bf16.mxu0 0
      %1941 = vmatmul.mubr.bf16.gmra.mrb[0].mxu0 %v1799
      %v1942 = vpop.f32.mrb[0].mxu0
      %v1943 = vadd.f32 0.0, %v1942
      %v1944 = vpop.f32.mrb[0].mxu0
      %v1945 = vpop.f32.mrb[0].mxu0
      %v1946 = vadd.f32 0.0, %v1945
      %v1947 = vpop.f32.mrb[0].mxu0
      %1948 = vmatprep.mubr.bf16.mxu0 0
      %1949 = vmatmul.mubr.bf16.gmra.mrb[0].mxu0 %v1800
      %v1950 = vpop.f32.mrb[0].mxu0
      %v1951 = vadd.f32 0.0, %v1950
      %v1952 = vpop.f32.mrb[0].mxu0
      %v1953 = vpop.f32.mrb[0].mxu0
      %v1954 = vadd.f32 0.0, %v1953
      %v1955 = vpop.f32.mrb[0].mxu0
      %1956 = vmatprep.mubr.bf16.mxu0 0
      %1957 = vmatmul.mubr.bf16.gmra.mrb[0].mxu0 %v1801
      %v1958 = vpop.f32.mrb[0].mxu0
      %v1959 = vadd.f32 0.0, %v1958
      %v1960 = vpop.f32.mrb[0].mxu0
      %v1961 = vpop.f32.mrb[0].mxu0
      %v1962 = vadd.f32 0.0, %v1961
      %v1963 = vpop.f32.mrb[0].mxu0
      %1964 = vmatprep.mubr.bf16.mxu0 0
      %1965 = vmatmul.mubr.bf16.gmra.mrb[0].mxu0 %v1802
      %v1966 = vpop.f32.mrb[0].mxu0
      %v1967 = vadd.f32 0.0, %v1966
      %v1968 = vpop.f32.mrb[0].mxu0
      %v1969 = vpop.f32.mrb[0].mxu0
      %v1970 = vadd.f32 0.0, %v1969
      %v1971 = vpop.f32.mrb[0].mxu0
      %1972 = vmatprep.mubr.bf16.mxu0 0
      %1973 = vmatmul.mubr.bf16.gmra.mrb[0].mxu0 %v1803
      %v1974 = vpop.f32.mrb[0].mxu0
      %v1975 = vadd.f32 0.0, %v1974
      %v1976 = vpop.f32.mrb[0].mxu0
      %v1977 = vpop.f32.mrb[0].mxu0
      %v1978 = vadd.f32 0.0, %v1977
      %v1979 = vpop.f32.mrb[0].mxu0
      %1980 = vmatprep.mubr.bf16.mxu0 0
      %1981 = vmatmul.mubr.bf16.gmra.mrb[0].mxu0 %v1804
      %v1982 = vpop.f32.mrb[0].mxu0
      %v1983 = vadd.f32 0.0, %v1982
      %v1984 = vpop.f32.mrb[0].mxu0
      %v1985 = vpop.f32.mrb[0].mxu0
      %v1986 = vadd.f32 0.0, %v1985
      %v1987 = vpop.f32.mrb[0].mxu0
      %1988 = vmatprep.mubr.bf16.mxu0 0
      %1989 = vmatmul.mubr.bf16.gmra.mrb[0].mxu0 %v1805
      %v1990 = vpop.f32.mrb[0].mxu0
      %v1991 = vadd.f32 0.0, %v1990
      %v1992 = vpop.f32.mrb[0].mxu0
      %v1993 = vpop.f32.mrb[0].mxu0
      %v1994 = vadd.f32 0.0, %v1993
      %v1995 = vpop.f32.mrb[0].mxu0
      %1996 = vmatprep.mubr.bf16.mxu0 0
      %1997 = vmatmul.mubr.bf16.gmra.mrb[0].mxu0 %v1806
      %v1998 = vpop.f32.mrb[0].mxu0
      %v1999 = vadd.f32 0.0, %v1998
      %v2000 = vpop.f32.mrb[0].mxu0
      %v2001 = vpop.f32.mrb[0].mxu0
      %v2002 = vadd.f32 0.0, %v2001
      %v2003 = vpop.f32.mrb[0].mxu0
      %2004 = vmatprep.mubr.bf16.mxu0 0
      %2005 = vmatmul.mubr.bf16.gmra.mrb[0].mxu0 %v1807
      %v2006 = vpop.f32.mrb[0].mxu0
      %v2007 = vadd.f32 0.0, %v2006
      %v2008 = vpop.f32.mrb[0].mxu0
      %v2009 = vpop.f32.mrb[0].mxu0
      %v2010 = vadd.f32 0.0, %v2009
      %v2011 = vpop.f32.mrb[0].mxu0
      %2012 = vmatprep.mubr.bf16.mxu0 0
      %2013 = vmatmul.mubr.bf16.gmra.mrb[0].mxu0 %v1808
      %v2014 = vpop.f32.mrb[0].mxu0
      %v2015 = vadd.f32 0.0, %v2014
      %v2016 = vpop.f32.mrb[0].mxu0
      %v2017 = vpop.f32.mrb[0].mxu0
      %v2018 = vadd.f32 0.0, %v2017
      %v2019 = vpop.f32.mrb[0].mxu0
      %2020 = vmatprep.mubr.bf16.mxu0 0
      %2021 = vmatmul.mubr.bf16.gmra.mrb[0].mxu0 %v1809
      %v2022 = vpop.f32.mrb[0].mxu0
      %v2023 = vadd.f32 0.0, %v2022
      %v2024 = vpop.f32.mrb[0].mxu0
      %v2025 = vpop.f32.mrb[0].mxu0
      %v2026 = vadd.f32 0.0, %v2025
      %v2027 = vpop.f32.mrb[0].mxu0
      %2028 = vmatprep.mubr.bf16.mxu0 0
      %2029 = vmatmul.mubr.bf16.gmra.mrb[0].mxu0 %v1810
      %v2030 = vpop.f32.mrb[0].mxu0
      %v2031 = vadd.f32 0.0, %v2030
      %v2032 = vpop.f32.mrb[0].mxu0
      %v2033 = vpop.f32.mrb[0].mxu0
      %v2034 = vadd.f32 0.0, %v2033
      %v2035 = vpop.f32.mrb[0].mxu0
      %2036 = vdwg.mxu0
      %v2037 = vadd.f32 %v1731, %v1911
      %v2038 = vadd.f32 %v1732, %v1914
      %v2039 = vadd.f32 %v1733, %v1919
      %v2040 = vadd.f32 %v1734, %v1922
      %v2041 = vadd.f32 %v1735, %v1927
      %v2042 = vadd.f32 %v1736, %v1930
      %v2043 = vadd.f32 %v1737, %v1935
      %v2044 = vadd.f32 %v1738, %v1938
      %v2045 = vadd.f32 %v1739, %v1943
      %v2046 = vadd.f32 %v1740, %v1946
      %v2047 = vadd.f32 %v1741, %v1951
      %v2048 = vadd.f32 %v1742, %v1954
      %v2049 = vadd.f32 %v1743, %v1959
      %v2050 = vadd.f32 %v1744, %v1962
      %v2051 = vadd.f32 %v1745, %v1967
      %v2052 = vadd.f32 %v1746, %v1970
      %v2053 = vadd.f32 %v1747, %v1975
      %v2054 = vadd.f32 %v1748, %v1978
      %v2055 = vadd.f32 %v1749, %v1983
      %v2056 = vadd.f32 %v1750, %v1986
      %v2057 = vadd.f32 %v1751, %v1991
      %v2058 = vadd.f32 %v1752, %v1994
      %v2059 = vadd.f32 %v1753, %v1999
      %v2060 = vadd.f32 %v1754, %v2002
      %v2061 = vadd.f32 %v1755, %v2007
      %v2062 = vadd.f32 %v1756, %v2010
      %v2063 = vadd.f32 %v1757, %v2015
      %v2064 = vadd.f32 %v1758, %v2018
      %v2065 = vadd.f32 %v1759, %v2023
      %v2066 = vadd.f32 %v1760, %v2026
      %v2067 = vadd.f32 %v1761, %v2031
      %v2068 = vadd.f32 %v1762, %v2034
      %v2069 = vld [vmem:[%s344 + $0x9] sm:$0xff]
      %v2070 = vld [vmem:[%s344 + $0x11] sm:$0xff]
      %v2071 = vld [vmem:[%s344 + $0x29] sm:$0xff]
      %v2072 = vld [vmem:[%s344 + $0x31] sm:$0xff]
      %v2073 = vld [vmem:[%s344 + $0x49] sm:$0xff]
      %v2074 = vld [vmem:[%s344 + $0x51] sm:$0xff]
      %v2075 = vld [vmem:[%s344 + $0x69] sm:$0xff]
      %v2076 = vld [vmem:[%s344 + $0x71] sm:$0xff]
      %v2077 = vld [vmem:[%s344 + $0x89] sm:$0xff]
      %v2078 = vld [vmem:[%s344 + $0x91] sm:$0xff]
      %v2079 = vld [vmem:[%s344 + $0xa9] sm:$0xff]
      %v2080 = vld [vmem:[%s344 + $0xb1] sm:$0xff]
      %v2081 = vld [vmem:[%s344 + $0xc9] sm:$0xff]
      %v2082 = vld [vmem:[%s344 + $0xd1] sm:$0xff]
      %v2083 = vld [vmem:[%s344 + $0xe9] sm:$0xff]
      %v2084 = vld [vmem:[%s344 + $0xf1] sm:$0xff]
      %v2085 = vld [vmem:[%s344 + $0x109] sm:$0xff]
      %v2086 = vld [vmem:[%s344 + $0x111] sm:$0xff]
      %v2087 = vld [vmem:[%s344 + $0x129] sm:$0xff]
      %v2088 = vld [vmem:[%s344 + $0x131] sm:$0xff]
      %v2089 = vld [vmem:[%s344 + $0x149] sm:$0xff]
      %v2090 = vld [vmem:[%s344 + $0x151] sm:$0xff]
      %v2091 = vld [vmem:[%s344 + $0x169] sm:$0xff]
      %v2092 = vld [vmem:[%s344 + $0x171] sm:$0xff]
      %v2093 = vld [vmem:[%s344 + $0x189] sm:$0xff]
      %v2094 = vld [vmem:[%s344 + $0x191] sm:$0xff]
      %v2095 = vld [vmem:[%s344 + $0x1a9] sm:$0xff]
      %v2096 = vld [vmem:[%s344 + $0x1b1] sm:$0xff]
      %v2097 = vld [vmem:[%s344 + $0x1c9] sm:$0xff]
      %v2098 = vld [vmem:[%s344 + $0x1d1] sm:$0xff]
      %v2099 = vld [vmem:[%s344 + $0x1e9] sm:$0xff]
      %v2100 = vld [vmem:[%s344 + $0x1f1] sm:$0xff]
      %v2101 = vpack.c.bf16 %v2070, %v2069
      %v2102 = vpack.c.bf16 %v2072, %v2071
      %v2103 = vpack.c.bf16 %v2074, %v2073
      %v2104 = vpack.c.bf16 %v2076, %v2075
      %v2105 = vpack.c.bf16 %v2078, %v2077
      %v2106 = vpack.c.bf16 %v2080, %v2079
      %v2107 = vpack.c.bf16 %v2082, %v2081
      %v2108 = vpack.c.bf16 %v2084, %v2083
      %v2109 = vpack.c.bf16 %v2086, %v2085
      %v2110 = vpack.c.bf16 %v2088, %v2087
      %v2111 = vpack.c.bf16 %v2090, %v2089
      %v2112 = vpack.c.bf16 %v2092, %v2091
      %v2113 = vpack.c.bf16 %v2094, %v2093
      %v2114 = vpack.c.bf16 %v2096, %v2095
      %v2115 = vpack.c.bf16 %v2098, %v2097
      %v2116 = vpack.c.bf16 %v2100, %v2099
      %s2117 = scalar_lea.vmem %s2, 320
      %v2118 = vld [vmem:[%s2117] sm:$0xf]
      %v2119 = vld [vmem:[%s2117 + $0x4] sm:$0xf]
      %v2120 = vld [vmem:[%s2117 + $0x8] sm:$0xf]
      %v2121 = vld [vmem:[%s2117 + $0xc] sm:$0xf]
      %v2122 = vld [vmem:[%s2117 + $0x10] sm:$0xf]
      %v2123 = vld [vmem:[%s2117 + $0x14] sm:$0xf]
      %v2124 = vld [vmem:[%s2117 + $0x18] sm:$0xf]
      %v2125 = vld [vmem:[%s2117 + $0x1c] sm:$0xf]
      %v2126 = vld [vmem:[%s2117 + $0x20] sm:$0xf]
      %v2127 = vld [vmem:[%s2117 + $0x24] sm:$0xf]
      %v2128 = vld [vmem:[%s2117 + $0x28] sm:$0xf]
      %v2129 = vld [vmem:[%s2117 + $0x2c] sm:$0xf]
      %v2130 = vld [vmem:[%s2117 + $0x30] sm:$0xf]
      %v2131 = vld [vmem:[%s2117 + $0x34] sm:$0xf]
      %v2132 = vld [vmem:[%s2117 + $0x38] sm:$0xf]
      %v2133 = vld [vmem:[%s2117 + $0x3c] sm:$0xf]
      %v2150 = vunpack.c.l.b16 %v2118
      %v2151 = vunpack.c.l.b16 %v2119
      %v2152 = vunpack.c.l.b16 %v2120
      %v2153 = vunpack.c.l.b16 %v2121
      %v2154 = vunpack.c.l.b16 %v2122
      %v2155 = vunpack.c.l.b16 %v2123
      %v2156 = vunpack.c.l.b16 %v2124
      %v2157 = vunpack.c.l.b16 %v2125
      %v2158 = vunpack.c.l.b16 %v2126
      %v2159 = vunpack.c.l.b16 %v2127
      %v2160 = vunpack.c.l.b16 %v2128
      %v2161 = vunpack.c.l.b16 %v2129
      %v2162 = vunpack.c.l.b16 %v2130
      %v2163 = vunpack.c.l.b16 %v2131
      %v2164 = vunpack.c.l.b16 %v2132
      %v2165 = vunpack.c.l.b16 %v2133
      %v2166 = vpack.c.b16 %v2151, %v2150
      %v2167 = vpack.c.b16 %v2153, %v2152
      %v2168 = vpack.c.b16 %v2155, %v2154
      %v2169 = vpack.c.b16 %v2157, %v2156
      %v2170 = vpack.c.b16 %v2159, %v2158
      %v2171 = vpack.c.b16 %v2161, %v2160
      %v2172 = vpack.c.b16 %v2163, %v2162
      %v2173 = vpack.c.b16 %v2165, %v2164
      %2182 = vmatprep.subr.bf16.mxu0 0
      %2183 = vmatpush1.bf16.msra.mxu0 %v2166
      %2184 = vmatprep.subr.bf16.mxu0 0
      %2185 = vmatpush1.bf16.msra.mxu0 %v2167
      %2186 = vmatprep.subr.bf16.mxu0 0
      %2187 = vmatpush1.bf16.msra.mxu0 %v2168
      %2188 = vmatprep.subr.bf16.mxu0 0
      %2189 = vmatpush1.bf16.msra.mxu0 %v2169
      %2190 = vmatprep.subr.bf16.mxu0 0
      %2191 = vmatpush1.bf16.msra.mxu0 %v2170
      %2192 = vmatprep.subr.bf16.mxu0 0
      %2193 = vmatpush1.bf16.msra.mxu0 %v2171
      %2194 = vmatprep.subr.bf16.mxu0 0
      %2195 = vmatpush1.bf16.msra.mxu0 %v2172
      %2196 = vmatprep.subr.bf16.mxu0 0
      %2197 = vmatpush1.bf16.msra.mxu0 %v2173
      %2198 = vmatprep.subr.bf16.mxu0 0
      %2199 = vmatpush1.bf16.msra.mxu0 0
      %2200 = vmatprep.subr.bf16.mxu0 0
      %2201 = vmatpush1.bf16.msra.mxu0 0
      %2202 = vmatprep.subr.bf16.mxu0 0
      %2203 = vmatpush1.bf16.msra.mxu0 0
      %2204 = vmatprep.subr.bf16.mxu0 0
      %2205 = vmatpush1.bf16.msra.mxu0 0
      %2206 = vmatprep.subr.bf16.mxu0 0
      %2207 = vmatpush1.bf16.msra.mxu0 0
      %2208 = vmatprep.subr.bf16.mxu0 0
      %2209 = vmatpush1.bf16.msra.mxu0 0
      %2210 = vmatprep.subr.bf16.mxu0 0
      %2211 = vmatpush1.bf16.msra.mxu0 0
      %2212 = vmatprep.subr.bf16.mxu0 0
      %2213 = vmatpush1.bf16.msra.mxu0 0
      %2214 = vmatprep.mubr.bf16.mxu0 0
      %2215 = vmatmul.mubr.bf16.gmra.mrb[0].mxu0 %v2101
      %v2216 = vpop.f32.mrb[0].mxu0
      %v2217 = vadd.f32 0.0, %v2216
      %v2218 = vpop.f32.mrb[0].mxu0
      %v2219 = vpop.f32.mrb[0].mxu0
      %v2220 = vadd.f32 0.0, %v2219
      %v2221 = vpop.f32.mrb[0].mxu0
      %2222 = vmatprep.mubr.bf16.mxu0 0
      %2223 = vmatmul.mubr.bf16.gmra.mrb[0].mxu0 %v2102
      %v2224 = vpop.f32.mrb[0].mxu0
      %v2225 = vadd.f32 0.0, %v2224
      %v2226 = vpop.f32.mrb[0].mxu0
      %v2227 = vpop.f32.mrb[0].mxu0
      %v2228 = vadd.f32 0.0, %v2227
      %v2229 = vpop.f32.mrb[0].mxu0
      %2230 = vmatprep.mubr.bf16.mxu0 0
      %2231 = vmatmul.mubr.bf16.gmra.mrb[0].mxu0 %v2103
      %v2232 = vpop.f32.mrb[0].mxu0
      %v2233 = vadd.f32 0.0, %v2232
      %v2234 = vpop.f32.mrb[0].mxu0
      %v2235 = vpop.f32.mrb[0].mxu0
      %v2236 = vadd.f32 0.0, %v2235
      %v2237 = vpop.f32.mrb[0].mxu0
      %2238 = vmatprep.mubr.bf16.mxu0 0
      %2239 = vmatmul.mubr.bf16.gmra.mrb[0].mxu0 %v2104
      %v2240 = vpop.f32.mrb[0].mxu0
      %v2241 = vadd.f32 0.0, %v2240
      %v2242 = vpop.f32.mrb[0].mxu0
      %v2243 = vpop.f32.mrb[0].mxu0
      %v2244 = vadd.f32 0.0, %v2243
      %v2245 = vpop.f32.mrb[0].mxu0
      %2246 = vmatprep.mubr.bf16.mxu0 0
      %2247 = vmatmul.mubr.bf16.gmra.mrb[0].mxu0 %v2105
      %v2248 = vpop.f32.mrb[0].mxu0
      %v2249 = vadd.f32 0.0, %v2248
      %v2250 = vpop.f32.mrb[0].mxu0
      %v2251 = vpop.f32.mrb[0].mxu0
      %v2252 = vadd.f32 0.0, %v2251
      %v2253 = vpop.f32.mrb[0].mxu0
      %2254 = vmatprep.mubr.bf16.mxu0 0
      %2255 = vmatmul.mubr.bf16.gmra.mrb[0].mxu0 %v2106
      %v2256 = vpop.f32.mrb[0].mxu0
      %v2257 = vadd.f32 0.0, %v2256
      %v2258 = vpop.f32.mrb[0].mxu0
      %v2259 = vpop.f32.mrb[0].mxu0
      %v2260 = vadd.f32 0.0, %v2259
      %v2261 = vpop.f32.mrb[0].mxu0
      %2262 = vmatprep.mubr.bf16.mxu0 0
      %2263 = vmatmul.mubr.bf16.gmra.mrb[0].mxu0 %v2107
      %v2264 = vpop.f32.mrb[0].mxu0
      %v2265 = vadd.f32 0.0, %v2264
      %v2266 = vpop.f32.mrb[0].mxu0
      %v2267 = vpop.f32.mrb[0].mxu0
      %v2268 = vadd.f32 0.0, %v2267
      %v2269 = vpop.f32.mrb[0].mxu0
      %2270 = vmatprep.mubr.bf16.mxu0 0
      %2271 = vmatmul.mubr.bf16.gmra.mrb[0].mxu0 %v2108
      %v2272 = vpop.f32.mrb[0].mxu0
      %v2273 = vadd.f32 0.0, %v2272
      %v2274 = vpop.f32.mrb[0].mxu0
      %v2275 = vpop.f32.mrb[0].mxu0
      %v2276 = vadd.f32 0.0, %v2275
      %v2277 = vpop.f32.mrb[0].mxu0
      %2278 = vmatprep.mubr.bf16.mxu0 0
      %2279 = vmatmul.mubr.bf16.gmra.mrb[0].mxu0 %v2109
      %v2280 = vpop.f32.mrb[0].mxu0
      %v2281 = vadd.f32 0.0, %v2280
      %v2282 = vpop.f32.mrb[0].mxu0
      %v2283 = vpop.f32.mrb[0].mxu0
      %v2284 = vadd.f32 0.0, %v2283
      %v2285 = vpop.f32.mrb[0].mxu0
      %2286 = vmatprep.mubr.bf16.mxu0 0
      %2287 = vmatmul.mubr.bf16.gmra.mrb[0].mxu0 %v2110
      %v2288 = vpop.f32.mrb[0].mxu0
      %v2289 = vadd.f32 0.0, %v2288
      %v2290 = vpop.f32.mrb[0].mxu0
      %v2291 = vpop.f32.mrb[0].mxu0
      %v2292 = vadd.f32 0.0, %v2291
      %v2293 = vpop.f32.mrb[0].mxu0
      %2294 = vmatprep.mubr.bf16.mxu0 0
      %2295 = vmatmul.mubr.bf16.gmra.mrb[0].mxu0 %v2111
      %v2296 = vpop.f32.mrb[0].mxu0
      %v2297 = vadd.f32 0.0, %v2296
      %v2298 = vpop.f32.mrb[0].mxu0
      %v2299 = vpop.f32.mrb[0].mxu0
      %v2300 = vadd.f32 0.0, %v2299
      %v2301 = vpop.f32.mrb[0].mxu0
      %2302 = vmatprep.mubr.bf16.mxu0 0
      %2303 = vmatmul.mubr.bf16.gmra.mrb[0].mxu0 %v2112
      %v2304 = vpop.f32.mrb[0].mxu0
      %v2305 = vadd.f32 0.0, %v2304
      %v2306 = vpop.f32.mrb[0].mxu0
      %v2307 = vpop.f32.mrb[0].mxu0
      %v2308 = vadd.f32 0.0, %v2307
      %v2309 = vpop.f32.mrb[0].mxu0
      %2310 = vmatprep.mubr.bf16.mxu0 0
      %2311 = vmatmul.mubr.bf16.gmra.mrb[0].mxu0 %v2113
      %v2312 = vpop.f32.mrb[0].mxu0
      %v2313 = vadd.f32 0.0, %v2312
      %v2314 = vpop.f32.mrb[0].mxu0
      %v2315 = vpop.f32.mrb[0].mxu0
      %v2316 = vadd.f32 0.0, %v2315
      %v2317 = vpop.f32.mrb[0].mxu0
      %2318 = vmatprep.mubr.bf16.mxu0 0
      %2319 = vmatmul.mubr.bf16.gmra.mrb[0].mxu0 %v2114
      %v2320 = vpop.f32.mrb[0].mxu0
      %v2321 = vadd.f32 0.0, %v2320
      %v2322 = vpop.f32.mrb[0].mxu0
      %v2323 = vpop.f32.mrb[0].mxu0
      %v2324 = vadd.f32 0.0, %v2323
      %v2325 = vpop.f32.mrb[0].mxu0
      %2326 = vmatprep.mubr.bf16.mxu0 0
      %2327 = vmatmul.mubr.bf16.gmra.mrb[0].mxu0 %v2115
      %v2328 = vpop.f32.mrb[0].mxu0
      %v2329 = vadd.f32 0.0, %v2328
      %v2330 = vpop.f32.mrb[0].mxu0
      %v2331 = vpop.f32.mrb[0].mxu0
      %v2332 = vadd.f32 0.0, %v2331
      %v2333 = vpop.f32.mrb[0].mxu0
      %2334 = vmatprep.mubr.bf16.mxu0 0
      %2335 = vmatmul.mubr.bf16.gmra.mrb[0].mxu0 %v2116
      %v2336 = vpop.f32.mrb[0].mxu0
      %v2337 = vadd.f32 0.0, %v2336
      %v2338 = vpop.f32.mrb[0].mxu0
      %v2339 = vpop.f32.mrb[0].mxu0
      %v2340 = vadd.f32 0.0, %v2339
      %v2341 = vpop.f32.mrb[0].mxu0
      %2342 = vdwg.mxu0
      %v2343 = vadd.f32 %v2037, %v2217
      %v2344 = vadd.f32 %v2038, %v2220
      %v2345 = vadd.f32 %v2039, %v2225
      %v2346 = vadd.f32 %v2040, %v2228
      %v2347 = vadd.f32 %v2041, %v2233
      %v2348 = vadd.f32 %v2042, %v2236
      %v2349 = vadd.f32 %v2043, %v2241
      %v2350 = vadd.f32 %v2044, %v2244
      %v2351 = vadd.f32 %v2045, %v2249
      %v2352 = vadd.f32 %v2046, %v2252
      %v2353 = vadd.f32 %v2047, %v2257
      %v2354 = vadd.f32 %v2048, %v2260
      %v2355 = vadd.f32 %v2049, %v2265
      %v2356 = vadd.f32 %v2050, %v2268
      %v2357 = vadd.f32 %v2051, %v2273
      %v2358 = vadd.f32 %v2052, %v2276
      %v2359 = vadd.f32 %v2053, %v2281
      %v2360 = vadd.f32 %v2054, %v2284
      %v2361 = vadd.f32 %v2055, %v2289
      %v2362 = vadd.f32 %v2056, %v2292
      %v2363 = vadd.f32 %v2057, %v2297
      %v2364 = vadd.f32 %v2058, %v2300
      %v2365 = vadd.f32 %v2059, %v2305
      %v2366 = vadd.f32 %v2060, %v2308
      %v2367 = vadd.f32 %v2061, %v2313
      %v2368 = vadd.f32 %v2062, %v2316
      %v2369 = vadd.f32 %v2063, %v2321
      %v2370 = vadd.f32 %v2064, %v2324
      %v2371 = vadd.f32 %v2065, %v2329
      %v2372 = vadd.f32 %v2066, %v2332
      %v2373 = vadd.f32 %v2067, %v2337
      %v2374 = vadd.f32 %v2068, %v2340
      %s2375 = scalar_lea.vmem [#allocation2], 64
      %v2376 = vld [vmem:[%s2375 + $0x7] sm:$0xff]
      %v2377 = vld [vmem:[%s2375 + $0xf] sm:$0xff]
      %v2378 = vld [vmem:[%s2375 + $0x27] sm:$0xff]
      %v2379 = vld [vmem:[%s2375 + $0x2f] sm:$0xff]
      %v2380 = vld [vmem:[%s2375 + $0x47] sm:$0xff]
      %v2381 = vld [vmem:[%s2375 + $0x4f] sm:$0xff]
      %v2382 = vld [vmem:[%s2375 + $0x67] sm:$0xff]
      %v2383 = vld [vmem:[%s2375 + $0x6f] sm:$0xff]
      %v2384 = vld [vmem:[%s2375 + $0x87] sm:$0xff]
      %v2385 = vld [vmem:[%s2375 + $0x8f] sm:$0xff]
      %v2386 = vld [vmem:[%s2375 + $0xa7] sm:$0xff]
      %v2387 = vld [vmem:[%s2375 + $0xaf] sm:$0xff]
      %v2388 = vld [vmem:[%s2375 + $0xc7] sm:$0xff]
      %v2389 = vld [vmem:[%s2375 + $0xcf] sm:$0xff]
      %v2390 = vld [vmem:[%s2375 + $0xe7] sm:$0xff]
      %v2391 = vld [vmem:[%s2375 + $0xef] sm:$0xff]
      %v2392 = vld [vmem:[%s2375 + $0x107] sm:$0xff]
      %v2393 = vld [vmem:[%s2375 + $0x10f] sm:$0xff]
      %v2394 = vld [vmem:[%s2375 + $0x127] sm:$0xff]
      %v2395 = vld [vmem:[%s2375 + $0x12f] sm:$0xff]
      %v2396 = vld [vmem:[%s2375 + $0x147] sm:$0xff]
      %v2397 = vld [vmem:[%s2375 + $0x14f] sm:$0xff]
      %v2398 = vld [vmem:[%s2375 + $0x167] sm:$0xff]
      %v2399 = vld [vmem:[%s2375 + $0x16f] sm:$0xff]
      %v2400 = vld [vmem:[%s2375 + $0x187] sm:$0xff]
      %v2401 = vld [vmem:[%s2375 + $0x18f] sm:$0xff]
      %v2402 = vld [vmem:[%s2375 + $0x1a7] sm:$0xff]
      %v2403 = vld [vmem:[%s2375 + $0x1af] sm:$0xff]
      %v2404 = vld [vmem:[%s2375 + $0x1c7] sm:$0xff]
      %v2405 = vld [vmem:[%s2375 + $0x1cf] sm:$0xff]
      %v2406 = vld [vmem:[%s2375 + $0x1e7] sm:$0xff]
      %v2407 = vld [vmem:[%s2375 + $0x1ef] sm:$0xff]
      %v2408 = vpack.c.bf16 %v2377, %v2376
      %v2409 = vpack.c.bf16 %v2379, %v2378
      %v2410 = vpack.c.bf16 %v2381, %v2380
      %v2411 = vpack.c.bf16 %v2383, %v2382
      %v2412 = vpack.c.bf16 %v2385, %v2384
      %v2413 = vpack.c.bf16 %v2387, %v2386
      %v2414 = vpack.c.bf16 %v2389, %v2388
      %v2415 = vpack.c.bf16 %v2391, %v2390
      %v2416 = vpack.c.bf16 %v2393, %v2392
      %v2417 = vpack.c.bf16 %v2395, %v2394
      %v2418 = vpack.c.bf16 %v2397, %v2396
      %v2419 = vpack.c.bf16 %v2399, %v2398
      %v2420 = vpack.c.bf16 %v2401, %v2400
      %v2421 = vpack.c.bf16 %v2403, %v2402
      %v2422 = vpack.c.bf16 %v2405, %v2404
      %v2423 = vpack.c.bf16 %v2407, %v2406
      %s2424 = scalar_lea.vmem %s2, 384
      %v2425 = vld [vmem:[%s2424] sm:$0xf]
      %v2426 = vld [vmem:[%s2424 + $0x4] sm:$0xf]
      %v2427 = vld [vmem:[%s2424 + $0x8] sm:$0xf]
      %v2428 = vld [vmem:[%s2424 + $0xc] sm:$0xf]
      %v2429 = vld [vmem:[%s2424 + $0x10] sm:$0xf]
      %v2430 = vld [vmem:[%s2424 + $0x14] sm:$0xf]
      %v2431 = vld [vmem:[%s2424 + $0x18] sm:$0xf]
      %v2432 = vld [vmem:[%s2424 + $0x1c] sm:$0xf]
      %v2433 = vld [vmem:[%s2424 + $0x20] sm:$0xf]
      %v2434 = vld [vmem:[%s2424 + $0x24] sm:$0xf]
      %v2435 = vld [vmem:[%s2424 + $0x28] sm:$0xf]
      %v2436 = vld [vmem:[%s2424 + $0x2c] sm:$0xf]
      %v2437 = vld [vmem:[%s2424 + $0x30] sm:$0xf]
      %v2438 = vld [vmem:[%s2424 + $0x34] sm:$0xf]
      %v2439 = vld [vmem:[%s2424 + $0x38] sm:$0xf]
      %v2440 = vld [vmem:[%s2424 + $0x3c] sm:$0xf]
      %v2457 = vunpack.c.l.b16 %v2425
      %v2458 = vunpack.c.l.b16 %v2426
      %v2459 = vunpack.c.l.b16 %v2427
      %v2460 = vunpack.c.l.b16 %v2428
      %v2461 = vunpack.c.l.b16 %v2429
      %v2462 = vunpack.c.l.b16 %v2430
      %v2463 = vunpack.c.l.b16 %v2431
      %v2464 = vunpack.c.l.b16 %v2432
      %v2465 = vunpack.c.l.b16 %v2433
      %v2466 = vunpack.c.l.b16 %v2434
      %v2467 = vunpack.c.l.b16 %v2435
      %v2468 = vunpack.c.l.b16 %v2436
      %v2469 = vunpack.c.l.b16 %v2437
      %v2470 = vunpack.c.l.b16 %v2438
      %v2471 = vunpack.c.l.b16 %v2439
      %v2472 = vunpack.c.l.b16 %v2440
      %v2473 = vpack.c.b16 %v2458, %v2457
      %v2474 = vpack.c.b16 %v2460, %v2459
      %v2475 = vpack.c.b16 %v2462, %v2461
      %v2476 = vpack.c.b16 %v2464, %v2463
      %v2477 = vpack.c.b16 %v2466, %v2465
      %v2478 = vpack.c.b16 %v2468, %v2467
      %v2479 = vpack.c.b16 %v2470, %v2469
      %v2480 = vpack.c.b16 %v2472, %v2471
      %2489 = vmatprep.subr.bf16.mxu0 0
      %2490 = vmatpush1.bf16.msra.mxu0 %v2473
      %2491 = vmatprep.subr.bf16.mxu0 0
      %2492 = vmatpush1.bf16.msra.mxu0 %v2474
      %2493 = vmatprep.subr.bf16.mxu0 0
      %2494 = vmatpush1.bf16.msra.mxu0 %v2475
      %2495 = vmatprep.subr.bf16.mxu0 0
      %2496 = vmatpush1.bf16.msra.mxu0 %v2476
      %2497 = vmatprep.subr.bf16.mxu0 0
      %2498 = vmatpush1.bf16.msra.mxu0 %v2477
      %2499 = vmatprep.subr.bf16.mxu0 0
      %2500 = vmatpush1.bf16.msra.mxu0 %v2478
      %2501 = vmatprep.subr.bf16.mxu0 0
      %2502 = vmatpush1.bf16.msra.mxu0 %v2479
      %2503 = vmatprep.subr.bf16.mxu0 0
      %2504 = vmatpush1.bf16.msra.mxu0 %v2480
      %2505 = vmatprep.subr.bf16.mxu0 0
      %2506 = vmatpush1.bf16.msra.mxu0 0
      %2507 = vmatprep.subr.bf16.mxu0 0
      %2508 = vmatpush1.bf16.msra.mxu0 0
      %2509 = vmatprep.subr.bf16.mxu0 0
      %2510 = vmatpush1.bf16.msra.mxu0 0
      %2511 = vmatprep.subr.bf16.mxu0 0
      %2512 = vmatpush1.bf16.msra.mxu0 0
      %2513 = vmatprep.subr.bf16.mxu0 0
      %2514 = vmatpush1.bf16.msra.mxu0 0
      %2515 = vmatprep.subr.bf16.mxu0 0
      %2516 = vmatpush1.bf16.msra.mxu0 0
      %2517 = vmatprep.subr.bf16.mxu0 0
      %2518 = vmatpush1.bf16.msra.mxu0 0
      %2519 = vmatprep.subr.bf16.mxu0 0
      %2520 = vmatpush1.bf16.msra.mxu0 0
      %2521 = vmatprep.mubr.bf16.mxu0 0
      %2522 = vmatmul.mubr.bf16.gmra.mrb[0].mxu0 %v2408
      %v2523 = vpop.f32.mrb[0].mxu0
      %v2524 = vadd.f32 0.0, %v2523
      %v2525 = vpop.f32.mrb[0].mxu0
      %v2526 = vpop.f32.mrb[0].mxu0
      %v2527 = vadd.f32 0.0, %v2526
      %v2528 = vpop.f32.mrb[0].mxu0
      %2529 = vmatprep.mubr.bf16.mxu0 0
      %2530 = vmatmul.mubr.bf16.gmra.mrb[0].mxu0 %v2409
      %v2531 = vpop.f32.mrb[0].mxu0
      %v2532 = vadd.f32 0.0, %v2531
      %v2533 = vpop.f32.mrb[0].mxu0
      %v2534 = vpop.f32.mrb[0].mxu0
      %v2535 = vadd.f32 0.0, %v2534
      %v2536 = vpop.f32.mrb[0].mxu0
      %2537 = vmatprep.mubr.bf16.mxu0 0
      %2538 = vmatmul.mubr.bf16.gmra.mrb[0].mxu0 %v2410
      %v2539 = vpop.f32.mrb[0].mxu0
      %v2540 = vadd.f32 0.0, %v2539
      %v2541 = vpop.f32.mrb[0].mxu0
      %v2542 = vpop.f32.mrb[0].mxu0
      %v2543 = vadd.f32 0.0, %v2542
      %v2544 = vpop.f32.mrb[0].mxu0
      %2545 = vmatprep.mubr.bf16.mxu0 0
      %2546 = vmatmul.mubr.bf16.gmra.mrb[0].mxu0 %v2411
      %v2547 = vpop.f32.mrb[0].mxu0
      %v2548 = vadd.f32 0.0, %v2547
      %v2549 = vpop.f32.mrb[0].mxu0
      %v2550 = vpop.f32.mrb[0].mxu0
      %v2551 = vadd.f32 0.0, %v2550
      %v2552 = vpop.f32.mrb[0].mxu0
      %2553 = vmatprep.mubr.bf16.mxu0 0
      %2554 = vmatmul.mubr.bf16.gmra.mrb[0].mxu0 %v2412
      %v2555 = vpop.f32.mrb[0].mxu0
      %v2556 = vadd.f32 0.0, %v2555
      %v2557 = vpop.f32.mrb[0].mxu0
      %v2558 = vpop.f32.mrb[0].mxu0
      %v2559 = vadd.f32 0.0, %v2558
      %v2560 = vpop.f32.mrb[0].mxu0
      %2561 = vmatprep.mubr.bf16.mxu0 0
      %2562 = vmatmul.mubr.bf16.gmra.mrb[0].mxu0 %v2413
      %v2563 = vpop.f32.mrb[0].mxu0
      %v2564 = vadd.f32 0.0, %v2563
      %v2565 = vpop.f32.mrb[0].mxu0
      %v2566 = vpop.f32.mrb[0].mxu0
      %v2567 = vadd.f32 0.0, %v2566
      %v2568 = vpop.f32.mrb[0].mxu0
      %2569 = vmatprep.mubr.bf16.mxu0 0
      %2570 = vmatmul.mubr.bf16.gmra.mrb[0].mxu0 %v2414
      %v2571 = vpop.f32.mrb[0].mxu0
      %v2572 = vadd.f32 0.0, %v2571
      %v2573 = vpop.f32.mrb[0].mxu0
      %v2574 = vpop.f32.mrb[0].mxu0
      %v2575 = vadd.f32 0.0, %v2574
      %v2576 = vpop.f32.mrb[0].mxu0
      %2577 = vmatprep.mubr.bf16.mxu0 0
      %2578 = vmatmul.mubr.bf16.gmra.mrb[0].mxu0 %v2415
      %v2579 = vpop.f32.mrb[0].mxu0
      %v2580 = vadd.f32 0.0, %v2579
      %v2581 = vpop.f32.mrb[0].mxu0
      %v2582 = vpop.f32.mrb[0].mxu0
      %v2583 = vadd.f32 0.0, %v2582
      %v2584 = vpop.f32.mrb[0].mxu0
      %2585 = vmatprep.mubr.bf16.mxu0 0
      %2586 = vmatmul.mubr.bf16.gmra.mrb[0].mxu0 %v2416
      %v2587 = vpop.f32.mrb[0].mxu0
      %v2588 = vadd.f32 0.0, %v2587
      %v2589 = vpop.f32.mrb[0].mxu0
      %v2590 = vpop.f32.mrb[0].mxu0
      %v2591 = vadd.f32 0.0, %v2590
      %v2592 = vpop.f32.mrb[0].mxu0
      %2593 = vmatprep.mubr.bf16.mxu0 0
      %2594 = vmatmul.mubr.bf16.gmra.mrb[0].mxu0 %v2417
      %v2595 = vpop.f32.mrb[0].mxu0
      %v2596 = vadd.f32 0.0, %v2595
      %v2597 = vpop.f32.mrb[0].mxu0
      %v2598 = vpop.f32.mrb[0].mxu0
      %v2599 = vadd.f32 0.0, %v2598
      %v2600 = vpop.f32.mrb[0].mxu0
      %2601 = vmatprep.mubr.bf16.mxu0 0
      %2602 = vmatmul.mubr.bf16.gmra.mrb[0].mxu0 %v2418
      %v2603 = vpop.f32.mrb[0].mxu0
      %v2604 = vadd.f32 0.0, %v2603
      %v2605 = vpop.f32.mrb[0].mxu0
      %v2606 = vpop.f32.mrb[0].mxu0
      %v2607 = vadd.f32 0.0, %v2606
      %v2608 = vpop.f32.mrb[0].mxu0
      %2609 = vmatprep.mubr.bf16.mxu0 0
      %2610 = vmatmul.mubr.bf16.gmra.mrb[0].mxu0 %v2419
      %v2611 = vpop.f32.mrb[0].mxu0
      %v2612 = vadd.f32 0.0, %v2611
      %v2613 = vpop.f32.mrb[0].mxu0
      %v2614 = vpop.f32.mrb[0].mxu0
      %v2615 = vadd.f32 0.0, %v2614
      %v2616 = vpop.f32.mrb[0].mxu0
      %2617 = vmatprep.mubr.bf16.mxu0 0
      %2618 = vmatmul.mubr.bf16.gmra.mrb[0].mxu0 %v2420
      %v2619 = vpop.f32.mrb[0].mxu0
      %v2620 = vadd.f32 0.0, %v2619
      %v2621 = vpop.f32.mrb[0].mxu0
      %v2622 = vpop.f32.mrb[0].mxu0
      %v2623 = vadd.f32 0.0, %v2622
      %v2624 = vpop.f32.mrb[0].mxu0
      %2625 = vmatprep.mubr.bf16.mxu0 0
      %2626 = vmatmul.mubr.bf16.gmra.mrb[0].mxu0 %v2421
      %v2627 = vpop.f32.mrb[0].mxu0
      %v2628 = vadd.f32 0.0, %v2627
      %v2629 = vpop.f32.mrb[0].mxu0
      %v2630 = vpop.f32.mrb[0].mxu0
      %v2631 = vadd.f32 0.0, %v2630
      %v2632 = vpop.f32.mrb[0].mxu0
      %2633 = vmatprep.mubr.bf16.mxu0 0
      %2634 = vmatmul.mubr.bf16.gmra.mrb[0].mxu0 %v2422
      %v2635 = vpop.f32.mrb[0].mxu0
      %v2636 = vadd.f32 0.0, %v2635
      %v2637 = vpop.f32.mrb[0].mxu0
      %v2638 = vpop.f32.mrb[0].mxu0
      %v2639 = vadd.f32 0.0, %v2638
      %v2640 = vpop.f32.mrb[0].mxu0
      %2641 = vmatprep.mubr.bf16.mxu0 0
      %2642 = vmatmul.mubr.bf16.gmra.mrb[0].mxu0 %v2423
      %v2643 = vpop.f32.mrb[0].mxu0
      %v2644 = vadd.f32 0.0, %v2643
      %v2645 = vpop.f32.mrb[0].mxu0
      %v2646 = vpop.f32.mrb[0].mxu0
      %v2647 = vadd.f32 0.0, %v2646
      %v2648 = vpop.f32.mrb[0].mxu0
      %2649 = vdwg.mxu0
      %v2650 = vadd.f32 %v2343, %v2524
      %v2651 = vadd.f32 %v2344, %v2527
      %v2652 = vadd.f32 %v2345, %v2532
      %v2653 = vadd.f32 %v2346, %v2535
      %v2654 = vadd.f32 %v2347, %v2540
      %v2655 = vadd.f32 %v2348, %v2543
      %v2656 = vadd.f32 %v2349, %v2548
      %v2657 = vadd.f32 %v2350, %v2551
      %v2658 = vadd.f32 %v2351, %v2556
      %v2659 = vadd.f32 %v2352, %v2559
      %v2660 = vadd.f32 %v2353, %v2564
      %v2661 = vadd.f32 %v2354, %v2567
      %v2662 = vadd.f32 %v2355, %v2572
      %v2663 = vadd.f32 %v2356, %v2575
      %v2664 = vadd.f32 %v2357, %v2580
      %v2665 = vadd.f32 %v2358, %v2583
      %v2666 = vadd.f32 %v2359, %v2588
      %v2667 = vadd.f32 %v2360, %v2591
      %v2668 = vadd.f32 %v2361, %v2596
      %v2669 = vadd.f32 %v2362, %v2599
      %v2670 = vadd.f32 %v2363, %v2604
      %v2671 = vadd.f32 %v2364, %v2607
      %v2672 = vadd.f32 %v2365, %v2612
      %v2673 = vadd.f32 %v2366, %v2615
      %v2674 = vadd.f32 %v2367, %v2620
      %v2675 = vadd.f32 %v2368, %v2623
      %v2676 = vadd.f32 %v2369, %v2628
      %v2677 = vadd.f32 %v2370, %v2631
      %v2678 = vadd.f32 %v2371, %v2636
      %v2679 = vadd.f32 %v2372, %v2639
      %v2680 = vadd.f32 %v2373, %v2644
      %v2681 = vadd.f32 %v2374, %v2647
      %v2682 = vld [vmem:[%s2375 + $0x8] sm:$0xff]
      %v2683 = vld [vmem:[%s2375 + $0x10] sm:$0xff]
      %v2684 = vld [vmem:[%s2375 + $0x28] sm:$0xff]
      %v2685 = vld [vmem:[%s2375 + $0x30] sm:$0xff]
      %v2686 = vld [vmem:[%s2375 + $0x48] sm:$0xff]
      %v2687 = vld [vmem:[%s2375 + $0x50] sm:$0xff]
      %v2688 = vld [vmem:[%s2375 + $0x68] sm:$0xff]
      %v2689 = vld [vmem:[%s2375 + $0x70] sm:$0xff]
      %v2690 = vld [vmem:[%s2375 + $0x88] sm:$0xff]
      %v2691 = vld [vmem:[%s2375 + $0x90] sm:$0xff]
      %v2692 = vld [vmem:[%s2375 + $0xa8] sm:$0xff]
      %v2693 = vld [vmem:[%s2375 + $0xb0] sm:$0xff]
      %v2694 = vld [vmem:[%s2375 + $0xc8] sm:$0xff]
      %v2695 = vld [vmem:[%s2375 + $0xd0] sm:$0xff]
      %v2696 = vld [vmem:[%s2375 + $0xe8] sm:$0xff]
      %v2697 = vld [vmem:[%s2375 + $0xf0] sm:$0xff]
      %v2698 = vld [vmem:[%s2375 + $0x108] sm:$0xff]
      %v2699 = vld [vmem:[%s2375 + $0x110] sm:$0xff]
      %v2700 = vld [vmem:[%s2375 + $0x128] sm:$0xff]
      %v2701 = vld [vmem:[%s2375 + $0x130] sm:$0xff]
      %v2702 = vld [vmem:[%s2375 + $0x148] sm:$0xff]
      %v2703 = vld [vmem:[%s2375 + $0x150] sm:$0xff]
      %v2704 = vld [vmem:[%s2375 + $0x168] sm:$0xff]
      %v2705 = vld [vmem:[%s2375 + $0x170] sm:$0xff]
      %v2706 = vld [vmem:[%s2375 + $0x188] sm:$0xff]
      %v2707 = vld [vmem:[%s2375 + $0x190] sm:$0xff]
      %v2708 = vld [vmem:[%s2375 + $0x1a8] sm:$0xff]
      %v2709 = vld [vmem:[%s2375 + $0x1b0] sm:$0xff]
      %v2710 = vld [vmem:[%s2375 + $0x1c8] sm:$0xff]
      %v2711 = vld [vmem:[%s2375 + $0x1d0] sm:$0xff]
      %v2712 = vld [vmem:[%s2375 + $0x1e8] sm:$0xff]
      %v2713 = vld [vmem:[%s2375 + $0x1f0] sm:$0xff]
      %v2714 = vpack.c.bf16 %v2683, %v2682
      %v2715 = vpack.c.bf16 %v2685, %v2684
      %v2716 = vpack.c.bf16 %v2687, %v2686
      %v2717 = vpack.c.bf16 %v2689, %v2688
      %v2718 = vpack.c.bf16 %v2691, %v2690
      %v2719 = vpack.c.bf16 %v2693, %v2692
      %v2720 = vpack.c.bf16 %v2695, %v2694
      %v2721 = vpack.c.bf16 %v2697, %v2696
      %v2722 = vpack.c.bf16 %v2699, %v2698
      %v2723 = vpack.c.bf16 %v2701, %v2700
      %v2724 = vpack.c.bf16 %v2703, %v2702
      %v2725 = vpack.c.bf16 %v2705, %v2704
      %v2726 = vpack.c.bf16 %v2707, %v2706
      %v2727 = vpack.c.bf16 %v2709, %v2708
      %v2728 = vpack.c.bf16 %v2711, %v2710
      %v2729 = vpack.c.bf16 %v2713, %v2712
      %s2730 = scalar_lea.vmem %s2, 448
      %v2731 = vld [vmem:[%s2730] sm:$0xf]
      %v2732 = vld [vmem:[%s2730 + $0x4] sm:$0xf]
      %v2733 = vld [vmem:[%s2730 + $0x8] sm:$0xf]
      %v2734 = vld [vmem:[%s2730 + $0xc] sm:$0xf]
      %v2735 = vld [vmem:[%s2730 + $0x10] sm:$0xf]
      %v2736 = vld [vmem:[%s2730 + $0x14] sm:$0xf]
      %v2737 = vld [vmem:[%s2730 + $0x18] sm:$0xf]
      %v2738 = vld [vmem:[%s2730 + $0x1c] sm:$0xf]
      %v2739 = vld [vmem:[%s2730 + $0x20] sm:$0xf]
      %v2740 = vld [vmem:[%s2730 + $0x24] sm:$0xf]
      %v2741 = vld [vmem:[%s2730 + $0x28] sm:$0xf]
      %v2742 = vld [vmem:[%s2730 + $0x2c] sm:$0xf]
      %v2743 = vld [vmem:[%s2730 + $0x30] sm:$0xf]
      %v2744 = vld [vmem:[%s2730 + $0x34] sm:$0xf]
      %v2745 = vld [vmem:[%s2730 + $0x38] sm:$0xf]
      %v2746 = vld [vmem:[%s2730 + $0x3c] sm:$0xf]
      %v2763 = vunpack.c.l.b16 %v2731
      %v2764 = vunpack.c.l.b16 %v2732
      %v2765 = vunpack.c.l.b16 %v2733
      %v2766 = vunpack.c.l.b16 %v2734
      %v2767 = vunpack.c.l.b16 %v2735
      %v2768 = vunpack.c.l.b16 %v2736
      %v2769 = vunpack.c.l.b16 %v2737
      %v2770 = vunpack.c.l.b16 %v2738
      %v2771 = vunpack.c.l.b16 %v2739
      %v2772 = vunpack.c.l.b16 %v2740
      %v2773 = vunpack.c.l.b16 %v2741
      %v2774 = vunpack.c.l.b16 %v2742
      %v2775 = vunpack.c.l.b16 %v2743
      %v2776 = vunpack.c.l.b16 %v2744
      %v2777 = vunpack.c.l.b16 %v2745
      %v2778 = vunpack.c.l.b16 %v2746
      %v2779 = vpack.c.b16 %v2764, %v2763
      %v2780 = vpack.c.b16 %v2766, %v2765
      %v2781 = vpack.c.b16 %v2768, %v2767
      %v2782 = vpack.c.b16 %v2770, %v2769
      %v2783 = vpack.c.b16 %v2772, %v2771
      %v2784 = vpack.c.b16 %v2774, %v2773
      %v2785 = vpack.c.b16 %v2776, %v2775
      %v2786 = vpack.c.b16 %v2778, %v2777
      %2795 = vmatprep.subr.bf16.mxu0 0
      %2796 = vmatpush1.bf16.msra.mxu0 %v2779
      %2797 = vmatprep.subr.bf16.mxu0 0
      %2798 = vmatpush1.bf16.msra.mxu0 %v2780
      %2799 = vmatprep.subr.bf16.mxu0 0
      %2800 = vmatpush1.bf16.msra.mxu0 %v2781
      %2801 = vmatprep.subr.bf16.mxu0 0
      %2802 = vmatpush1.bf16.msra.mxu0 %v2782
      %2803 = vmatprep.subr.bf16.mxu0 0
      %2804 = vmatpush1.bf16.msra.mxu0 %v2783
      %2805 = vmatprep.subr.bf16.mxu0 0
      %2806 = vmatpush1.bf16.msra.mxu0 %v2784
      %2807 = vmatprep.subr.bf16.mxu0 0
      %2808 = vmatpush1.bf16.msra.mxu0 %v2785
      %2809 = vmatprep.subr.bf16.mxu0 0
      %2810 = vmatpush1.bf16.msra.mxu0 %v2786
      %2811 = vmatprep.subr.bf16.mxu0 0
      %2812 = vmatpush1.bf16.msra.mxu0 0
      %2813 = vmatprep.subr.bf16.mxu0 0
      %2814 = vmatpush1.bf16.msra.mxu0 0
      %2815 = vmatprep.subr.bf16.mxu0 0
      %2816 = vmatpush1.bf16.msra.mxu0 0
      %2817 = vmatprep.subr.bf16.mxu0 0
      %2818 = vmatpush1.bf16.msra.mxu0 0
      %2819 = vmatprep.subr.bf16.mxu0 0
      %2820 = vmatpush1.bf16.msra.mxu0 0
      %2821 = vmatprep.subr.bf16.mxu0 0
      %2822 = vmatpush1.bf16.msra.mxu0 0
      %2823 = vmatprep.subr.bf16.mxu0 0
      %2824 = vmatpush1.bf16.msra.mxu0 0
      %2825 = vmatprep.subr.bf16.mxu0 0
      %2826 = vmatpush1.bf16.msra.mxu0 0
      %2827 = vmatprep.mubr.bf16.mxu0 0
      %2828 = vmatmul.mubr.bf16.gmra.mrb[0].mxu0 %v2714
      %v2829 = vpop.f32.mrb[0].mxu0
      %v2830 = vadd.f32 0.0, %v2829
      %v2831 = vpop.f32.mrb[0].mxu0
      %v2832 = vpop.f32.mrb[0].mxu0
      %v2833 = vadd.f32 0.0, %v2832
      %v2834 = vpop.f32.mrb[0].mxu0
      %2835 = vmatprep.mubr.bf16.mxu0 0
      %2836 = vmatmul.mubr.bf16.gmra.mrb[0].mxu0 %v2715
      %v2837 = vpop.f32.mrb[0].mxu0
      %v2838 = vadd.f32 0.0, %v2837
      %v2839 = vpop.f32.mrb[0].mxu0
      %v2840 = vpop.f32.mrb[0].mxu0
      %v2841 = vadd.f32 0.0, %v2840
      %v2842 = vpop.f32.mrb[0].mxu0
      %2843 = vmatprep.mubr.bf16.mxu0 0
      %2844 = vmatmul.mubr.bf16.gmra.mrb[0].mxu0 %v2716
      %v2845 = vpop.f32.mrb[0].mxu0
      %v2846 = vadd.f32 0.0, %v2845
      %v2847 = vpop.f32.mrb[0].mxu0
      %v2848 = vpop.f32.mrb[0].mxu0
      %v2849 = vadd.f32 0.0, %v2848
      %v2850 = vpop.f32.mrb[0].mxu0
      %2851 = vmatprep.mubr.bf16.mxu0 0
      %2852 = vmatmul.mubr.bf16.gmra.mrb[0].mxu0 %v2717
      %v2853 = vpop.f32.mrb[0].mxu0
      %v2854 = vadd.f32 0.0, %v2853
      %v2855 = vpop.f32.mrb[0].mxu0
      %v2856 = vpop.f32.mrb[0].mxu0
      %v2857 = vadd.f32 0.0, %v2856
      %v2858 = vpop.f32.mrb[0].mxu0
      %2859 = vmatprep.mubr.bf16.mxu0 0
      %2860 = vmatmul.mubr.bf16.gmra.mrb[0].mxu0 %v2718
      %v2861 = vpop.f32.mrb[0].mxu0
      %v2862 = vadd.f32 0.0, %v2861
      %v2863 = vpop.f32.mrb[0].mxu0
      %v2864 = vpop.f32.mrb[0].mxu0
      %v2865 = vadd.f32 0.0, %v2864
      %v2866 = vpop.f32.mrb[0].mxu0
      %2867 = vmatprep.mubr.bf16.mxu0 0
      %2868 = vmatmul.mubr.bf16.gmra.mrb[0].mxu0 %v2719
      %v2869 = vpop.f32.mrb[0].mxu0
      %v2870 = vadd.f32 0.0, %v2869
      %v2871 = vpop.f32.mrb[0].mxu0
      %v2872 = vpop.f32.mrb[0].mxu0
      %v2873 = vadd.f32 0.0, %v2872
      %v2874 = vpop.f32.mrb[0].mxu0
      %2875 = vmatprep.mubr.bf16.mxu0 0
      %2876 = vmatmul.mubr.bf16.gmra.mrb[0].mxu0 %v2720
      %v2877 = vpop.f32.mrb[0].mxu0
      %v2878 = vadd.f32 0.0, %v2877
      %v2879 = vpop.f32.mrb[0].mxu0
      %v2880 = vpop.f32.mrb[0].mxu0
      %v2881 = vadd.f32 0.0, %v2880
      %v2882 = vpop.f32.mrb[0].mxu0
      %2883 = vmatprep.mubr.bf16.mxu0 0
      %2884 = vmatmul.mubr.bf16.gmra.mrb[0].mxu0 %v2721
      %v2885 = vpop.f32.mrb[0].mxu0
      %v2886 = vadd.f32 0.0, %v2885
      %v2887 = vpop.f32.mrb[0].mxu0
      %v2888 = vpop.f32.mrb[0].mxu0
      %v2889 = vadd.f32 0.0, %v2888
      %v2890 = vpop.f32.mrb[0].mxu0
      %2891 = vmatprep.mubr.bf16.mxu0 0
      %2892 = vmatmul.mubr.bf16.gmra.mrb[0].mxu0 %v2722
      %v2893 = vpop.f32.mrb[0].mxu0
      %v2894 = vadd.f32 0.0, %v2893
      %v2895 = vpop.f32.mrb[0].mxu0
      %v2896 = vpop.f32.mrb[0].mxu0
      %v2897 = vadd.f32 0.0, %v2896
      %v2898 = vpop.f32.mrb[0].mxu0
      %2899 = vmatprep.mubr.bf16.mxu0 0
      %2900 = vmatmul.mubr.bf16.gmra.mrb[0].mxu0 %v2723
      %v2901 = vpop.f32.mrb[0].mxu0
      %v2902 = vadd.f32 0.0, %v2901
      %v2903 = vpop.f32.mrb[0].mxu0
      %v2904 = vpop.f32.mrb[0].mxu0
      %v2905 = vadd.f32 0.0, %v2904
      %v2906 = vpop.f32.mrb[0].mxu0
      %2907 = vmatprep.mubr.bf16.mxu0 0
      %2908 = vmatmul.mubr.bf16.gmra.mrb[0].mxu0 %v2724
      %v2909 = vpop.f32.mrb[0].mxu0
      %v2910 = vadd.f32 0.0, %v2909
      %v2911 = vpop.f32.mrb[0].mxu0
      %v2912 = vpop.f32.mrb[0].mxu0
      %v2913 = vadd.f32 0.0, %v2912
      %v2914 = vpop.f32.mrb[0].mxu0
      %2915 = vmatprep.mubr.bf16.mxu0 0
      %2916 = vmatmul.mubr.bf16.gmra.mrb[0].mxu0 %v2725
      %v2917 = vpop.f32.mrb[0].mxu0
      %v2918 = vadd.f32 0.0, %v2917
      %v2919 = vpop.f32.mrb[0].mxu0
      %v2920 = vpop.f32.mrb[0].mxu0
      %v2921 = vadd.f32 0.0, %v2920
      %v2922 = vpop.f32.mrb[0].mxu0
      %2923 = vmatprep.mubr.bf16.mxu0 0
      %2924 = vmatmul.mubr.bf16.gmra.mrb[0].mxu0 %v2726
      %v2925 = vpop.f32.mrb[0].mxu0
      %v2926 = vadd.f32 0.0, %v2925
      %v2927 = vpop.f32.mrb[0].mxu0
      %v2928 = vpop.f32.mrb[0].mxu0
      %v2929 = vadd.f32 0.0, %v2928
      %v2930 = vpop.f32.mrb[0].mxu0
      %2931 = vmatprep.mubr.bf16.mxu0 0
      %2932 = vmatmul.mubr.bf16.gmra.mrb[0].mxu0 %v2727
      %v2933 = vpop.f32.mrb[0].mxu0
      %v2934 = vadd.f32 0.0, %v2933
      %v2935 = vpop.f32.mrb[0].mxu0
      %v2936 = vpop.f32.mrb[0].mxu0
      %v2937 = vadd.f32 0.0, %v2936
      %v2938 = vpop.f32.mrb[0].mxu0
      %2939 = vmatprep.mubr.bf16.mxu0 0
      %2940 = vmatmul.mubr.bf16.gmra.mrb[0].mxu0 %v2728
      %v2941 = vpop.f32.mrb[0].mxu0
      %v2942 = vadd.f32 0.0, %v2941
      %v2943 = vpop.f32.mrb[0].mxu0
      %v2944 = vpop.f32.mrb[0].mxu0
      %v2945 = vadd.f32 0.0, %v2944
      %v2946 = vpop.f32.mrb[0].mxu0
      %2947 = vmatprep.mubr.bf16.mxu0 0
      %2948 = vmatmul.mubr.bf16.gmra.mrb[0].mxu0 %v2729
      %v2949 = vpop.f32.mrb[0].mxu0
      %v2950 = vadd.f32 0.0, %v2949
      %v2951 = vpop.f32.mrb[0].mxu0
      %v2952 = vpop.f32.mrb[0].mxu0
      %v2953 = vadd.f32 0.0, %v2952
      %v2954 = vpop.f32.mrb[0].mxu0
      %2955 = vdwg.mxu0
      %v2956 = vadd.f32 %v2650, %v2830
      %v2957 = vadd.f32 %v2651, %v2833
      %v2958 = vadd.f32 %v2652, %v2838
      %v2959 = vadd.f32 %v2653, %v2841
      %v2960 = vadd.f32 %v2654, %v2846
      %v2961 = vadd.f32 %v2655, %v2849
      %v2962 = vadd.f32 %v2656, %v2854
      %v2963 = vadd.f32 %v2657, %v2857
      %v2964 = vadd.f32 %v2658, %v2862
      %v2965 = vadd.f32 %v2659, %v2865
      %v2966 = vadd.f32 %v2660, %v2870
      %v2967 = vadd.f32 %v2661, %v2873
      %v2968 = vadd.f32 %v2662, %v2878
      %v2969 = vadd.f32 %v2663, %v2881
      %v2970 = vadd.f32 %v2664, %v2886
      %v2971 = vadd.f32 %v2665, %v2889
      %v2972 = vadd.f32 %v2666, %v2894
      %v2973 = vadd.f32 %v2667, %v2897
      %v2974 = vadd.f32 %v2668, %v2902
      %v2975 = vadd.f32 %v2669, %v2905
      %v2976 = vadd.f32 %v2670, %v2910
      %v2977 = vadd.f32 %v2671, %v2913
      %v2978 = vadd.f32 %v2672, %v2918
      %v2979 = vadd.f32 %v2673, %v2921
      %v2980 = vadd.f32 %v2674, %v2926
      %v2981 = vadd.f32 %v2675, %v2929
      %v2982 = vadd.f32 %v2676, %v2934
      %v2983 = vadd.f32 %v2677, %v2937
      %v2984 = vadd.f32 %v2678, %v2942
      %v2985 = vadd.f32 %v2679, %v2945
      %v2986 = vadd.f32 %v2680, %v2950
      %v2987 = vadd.f32 %v2681, %v2953
      %v2988 = vld [vmem:[%s2375 + $0x9] sm:$0xff]
      %v2989 = vld [vmem:[%s2375 + $0x11] sm:$0xff]
      %v2990 = vld [vmem:[%s2375 + $0x29] sm:$0xff]
      %v2991 = vld [vmem:[%s2375 + $0x31] sm:$0xff]
      %v2992 = vld [vmem:[%s2375 + $0x49] sm:$0xff]
      %v2993 = vld [vmem:[%s2375 + $0x51] sm:$0xff]
      %v2994 = vld [vmem:[%s2375 + $0x69] sm:$0xff]
      %v2995 = vld [vmem:[%s2375 + $0x71] sm:$0xff]
      %v2996 = vld [vmem:[%s2375 + $0x89] sm:$0xff]
      %v2997 = vld [vmem:[%s2375 + $0x91] sm:$0xff]
      %v2998 = vld [vmem:[%s2375 + $0xa9] sm:$0xff]
      %v2999 = vld [vmem:[%s2375 + $0xb1] sm:$0xff]
      %v3000 = vld [vmem:[%s2375 + $0xc9] sm:$0xff]
      %v3001 = vld [vmem:[%s2375 + $0xd1] sm:$0xff]
      %v3002 = vld [vmem:[%s2375 + $0xe9] sm:$0xff]
      %v3003 = vld [vmem:[%s2375 + $0xf1] sm:$0xff]
      %v3004 = vld [vmem:[%s2375 + $0x109] sm:$0xff]
      %v3005 = vld [vmem:[%s2375 + $0x111] sm:$0xff]
      %v3006 = vld [vmem:[%s2375 + $0x129] sm:$0xff]
      %v3007 = vld [vmem:[%s2375 + $0x131] sm:$0xff]
      %v3008 = vld [vmem:[%s2375 + $0x149] sm:$0xff]
      %v3009 = vld [vmem:[%s2375 + $0x151] sm:$0xff]
      %v3010 = vld [vmem:[%s2375 + $0x169] sm:$0xff]
      %v3011 = vld [vmem:[%s2375 + $0x171] sm:$0xff]
      %v3012 = vld [vmem:[%s2375 + $0x189] sm:$0xff]
      %v3013 = vld [vmem:[%s2375 + $0x191] sm:$0xff]
      %v3014 = vld [vmem:[%s2375 + $0x1a9] sm:$0xff]
      %v3015 = vld [vmem:[%s2375 + $0x1b1] sm:$0xff]
      %v3016 = vld [vmem:[%s2375 + $0x1c9] sm:$0xff]
      %v3017 = vld [vmem:[%s2375 + $0x1d1] sm:$0xff]
      %v3018 = vld [vmem:[%s2375 + $0x1e9] sm:$0xff]
      %v3019 = vld [vmem:[%s2375 + $0x1f1] sm:$0xff]
      %v3020 = vpack.c.bf16 %v2989, %v2988
      %v3021 = vpack.c.bf16 %v2991, %v2990
      %v3022 = vpack.c.bf16 %v2993, %v2992
      %v3023 = vpack.c.bf16 %v2995, %v2994
      %v3024 = vpack.c.bf16 %v2997, %v2996
      %v3025 = vpack.c.bf16 %v2999, %v2998
      %v3026 = vpack.c.bf16 %v3001, %v3000
      %v3027 = vpack.c.bf16 %v3003, %v3002
      %v3028 = vpack.c.bf16 %v3005, %v3004
      %v3029 = vpack.c.bf16 %v3007, %v3006
      %v3030 = vpack.c.bf16 %v3009, %v3008
      %v3031 = vpack.c.bf16 %v3011, %v3010
      %v3032 = vpack.c.bf16 %v3013, %v3012
      %v3033 = vpack.c.bf16 %v3015, %v3014
      %v3034 = vpack.c.bf16 %v3017, %v3016
      %v3035 = vpack.c.bf16 %v3019, %v3018
      %s3036 = scalar_lea.vmem %s2, 512
      %v3037 = vld [vmem:[%s3036] sm:$0xf]
      %v3038 = vld [vmem:[%s3036 + $0x4] sm:$0xf]
      %v3039 = vld [vmem:[%s3036 + $0x8] sm:$0xf]
      %v3040 = vld [vmem:[%s3036 + $0xc] sm:$0xf]
      %v3041 = vld [vmem:[%s3036 + $0x10] sm:$0xf]
      %v3042 = vld [vmem:[%s3036 + $0x14] sm:$0xf]
      %v3043 = vld [vmem:[%s3036 + $0x18] sm:$0xf]
      %v3044 = vld [vmem:[%s3036 + $0x1c] sm:$0xf]
      %v3045 = vld [vmem:[%s3036 + $0x20] sm:$0xf]
      %v3046 = vld [vmem:[%s3036 + $0x24] sm:$0xf]
      %v3047 = vld [vmem:[%s3036 + $0x28] sm:$0xf]
      %v3048 = vld [vmem:[%s3036 + $0x2c] sm:$0xf]
      %v3049 = vld [vmem:[%s3036 + $0x30] sm:$0xf]
      %v3050 = vld [vmem:[%s3036 + $0x34] sm:$0xf]
      %v3051 = vld [vmem:[%s3036 + $0x38] sm:$0xf]
      %v3052 = vld [vmem:[%s3036 + $0x3c] sm:$0xf]
      %v3069 = vunpack.c.l.b16 %v3037
      %v3070 = vunpack.c.l.b16 %v3038
      %v3071 = vunpack.c.l.b16 %v3039
      %v3072 = vunpack.c.l.b16 %v3040
      %v3073 = vunpack.c.l.b16 %v3041
      %v3074 = vunpack.c.l.b16 %v3042
      %v3075 = vunpack.c.l.b16 %v3043
      %v3076 = vunpack.c.l.b16 %v3044
      %v3077 = vunpack.c.l.b16 %v3045
      %v3078 = vunpack.c.l.b16 %v3046
      %v3079 = vunpack.c.l.b16 %v3047
      %v3080 = vunpack.c.l.b16 %v3048
      %v3081 = vunpack.c.l.b16 %v3049
      %v3082 = vunpack.c.l.b16 %v3050
      %v3083 = vunpack.c.l.b16 %v3051
      %v3084 = vunpack.c.l.b16 %v3052
      %v3085 = vpack.c.b16 %v3070, %v3069
      %v3086 = vpack.c.b16 %v3072, %v3071
      %v3087 = vpack.c.b16 %v3074, %v3073
      %v3088 = vpack.c.b16 %v3076, %v3075
      %v3089 = vpack.c.b16 %v3078, %v3077
      %v3090 = vpack.c.b16 %v3080, %v3079
      %v3091 = vpack.c.b16 %v3082, %v3081
      %v3092 = vpack.c.b16 %v3084, %v3083
      %3101 = vmatprep.subr.bf16.mxu0 0
      %3102 = vmatpush1.bf16.msra.mxu0 %v3085
      %3103 = vmatprep.subr.bf16.mxu0 0
      %3104 = vmatpush1.bf16.msra.mxu0 %v3086
      %3105 = vmatprep.subr.bf16.mxu0 0
      %3106 = vmatpush1.bf16.msra.mxu0 %v3087
      %3107 = vmatprep.subr.bf16.mxu0 0
      %3108 = vmatpush1.bf16.msra.mxu0 %v3088
      %3109 = vmatprep.subr.bf16.mxu0 0
      %3110 = vmatpush1.bf16.msra.mxu0 %v3089
      %3111 = vmatprep.subr.bf16.mxu0 0
      %3112 = vmatpush1.bf16.msra.mxu0 %v3090
      %3113 = vmatprep.subr.bf16.mxu0 0
      %3114 = vmatpush1.bf16.msra.mxu0 %v3091
      %3115 = vmatprep.subr.bf16.mxu0 0
      %3116 = vmatpush1.bf16.msra.mxu0 %v3092
      %3117 = vmatprep.subr.bf16.mxu0 0
      %3118 = vmatpush1.bf16.msra.mxu0 0
      %3119 = vmatprep.subr.bf16.mxu0 0
      %3120 = vmatpush1.bf16.msra.mxu0 0
      %3121 = vmatprep.subr.bf16.mxu0 0
      %3122 = vmatpush1.bf16.msra.mxu0 0
      %3123 = vmatprep.subr.bf16.mxu0 0
      %3124 = vmatpush1.bf16.msra.mxu0 0
      %3125 = vmatprep.subr.bf16.mxu0 0
      %3126 = vmatpush1.bf16.msra.mxu0 0
      %3127 = vmatprep.subr.bf16.mxu0 0
      %3128 = vmatpush1.bf16.msra.mxu0 0
      %3129 = vmatprep.subr.bf16.mxu0 0
      %3130 = vmatpush1.bf16.msra.mxu0 0
      %3131 = vmatprep.subr.bf16.mxu0 0
      %3132 = vmatpush1.bf16.msra.mxu0 0
      %3133 = vmatprep.mubr.bf16.mxu0 0
      %3134 = vmatmul.mubr.bf16.gmra.mrb[0].mxu0 %v3020
      %v3135 = vpop.f32.mrb[0].mxu0
      %v3136 = vadd.f32 0.0, %v3135
      %v3137 = vpop.f32.mrb[0].mxu0
      %v3138 = vpop.f32.mrb[0].mxu0
      %v3139 = vadd.f32 0.0, %v3138
      %v3140 = vpop.f32.mrb[0].mxu0
      %3141 = vmatprep.mubr.bf16.mxu0 0
      %3142 = vmatmul.mubr.bf16.gmra.mrb[0].mxu0 %v3021
      %v3143 = vpop.f32.mrb[0].mxu0
      %v3144 = vadd.f32 0.0, %v3143
      %v3145 = vpop.f32.mrb[0].mxu0
      %v3146 = vpop.f32.mrb[0].mxu0
      %v3147 = vadd.f32 0.0, %v3146
      %v3148 = vpop.f32.mrb[0].mxu0
      %3149 = vmatprep.mubr.bf16.mxu0 0
      %3150 = vmatmul.mubr.bf16.gmra.mrb[0].mxu0 %v3022
      %v3151 = vpop.f32.mrb[0].mxu0
      %v3152 = vadd.f32 0.0, %v3151
      %v3153 = vpop.f32.mrb[0].mxu0
      %v3154 = vpop.f32.mrb[0].mxu0
      %v3155 = vadd.f32 0.0, %v3154
      %v3156 = vpop.f32.mrb[0].mxu0
      %3157 = vmatprep.mubr.bf16.mxu0 0
      %3158 = vmatmul.mubr.bf16.gmra.mrb[0].mxu0 %v3023
      %v3159 = vpop.f32.mrb[0].mxu0
      %v3160 = vadd.f32 0.0, %v3159
      %v3161 = vpop.f32.mrb[0].mxu0
      %v3162 = vpop.f32.mrb[0].mxu0
      %v3163 = vadd.f32 0.0, %v3162
      %v3164 = vpop.f32.mrb[0].mxu0
      %3165 = vmatprep.mubr.bf16.mxu0 0
      %3166 = vmatmul.mubr.bf16.gmra.mrb[0].mxu0 %v3024
      %v3167 = vpop.f32.mrb[0].mxu0
      %v3168 = vadd.f32 0.0, %v3167
      %v3169 = vpop.f32.mrb[0].mxu0
      %v3170 = vpop.f32.mrb[0].mxu0
      %v3171 = vadd.f32 0.0, %v3170
      %v3172 = vpop.f32.mrb[0].mxu0
      %3173 = vmatprep.mubr.bf16.mxu0 0
      %3174 = vmatmul.mubr.bf16.gmra.mrb[0].mxu0 %v3025
      %v3175 = vpop.f32.mrb[0].mxu0
      %v3176 = vadd.f32 0.0, %v3175
      %v3177 = vpop.f32.mrb[0].mxu0
      %v3178 = vpop.f32.mrb[0].mxu0
      %v3179 = vadd.f32 0.0, %v3178
      %v3180 = vpop.f32.mrb[0].mxu0
      %3181 = vmatprep.mubr.bf16.mxu0 0
      %3182 = vmatmul.mubr.bf16.gmra.mrb[0].mxu0 %v3026
      %v3183 = vpop.f32.mrb[0].mxu0
      %v3184 = vadd.f32 0.0, %v3183
      %v3185 = vpop.f32.mrb[0].mxu0
      %v3186 = vpop.f32.mrb[0].mxu0
      %v3187 = vadd.f32 0.0, %v3186
      %v3188 = vpop.f32.mrb[0].mxu0
      %3189 = vmatprep.mubr.bf16.mxu0 0
      %3190 = vmatmul.mubr.bf16.gmra.mrb[0].mxu0 %v3027
      %v3191 = vpop.f32.mrb[0].mxu0
      %v3192 = vadd.f32 0.0, %v3191
      %v3193 = vpop.f32.mrb[0].mxu0
      %v3194 = vpop.f32.mrb[0].mxu0
      %v3195 = vadd.f32 0.0, %v3194
      %v3196 = vpop.f32.mrb[0].mxu0
      %3197 = vmatprep.mubr.bf16.mxu0 0
      %3198 = vmatmul.mubr.bf16.gmra.mrb[0].mxu0 %v3028
      %v3199 = vpop.f32.mrb[0].mxu0
      %v3200 = vadd.f32 0.0, %v3199
      %v3201 = vpop.f32.mrb[0].mxu0
      %v3202 = vpop.f32.mrb[0].mxu0
      %v3203 = vadd.f32 0.0, %v3202
      %v3204 = vpop.f32.mrb[0].mxu0
      %3205 = vmatprep.mubr.bf16.mxu0 0
      %3206 = vmatmul.mubr.bf16.gmra.mrb[0].mxu0 %v3029
      %v3207 = vpop.f32.mrb[0].mxu0
      %v3208 = vadd.f32 0.0, %v3207
      %v3209 = vpop.f32.mrb[0].mxu0
      %v3210 = vpop.f32.mrb[0].mxu0
      %v3211 = vadd.f32 0.0, %v3210
      %v3212 = vpop.f32.mrb[0].mxu0
      %3213 = vmatprep.mubr.bf16.mxu0 0
      %3214 = vmatmul.mubr.bf16.gmra.mrb[0].mxu0 %v3030
      %v3215 = vpop.f32.mrb[0].mxu0
      %v3216 = vadd.f32 0.0, %v3215
      %v3217 = vpop.f32.mrb[0].mxu0
      %v3218 = vpop.f32.mrb[0].mxu0
      %v3219 = vadd.f32 0.0, %v3218
      %v3220 = vpop.f32.mrb[0].mxu0
      %3221 = vmatprep.mubr.bf16.mxu0 0
      %3222 = vmatmul.mubr.bf16.gmra.mrb[0].mxu0 %v3031
      %v3223 = vpop.f32.mrb[0].mxu0
      %v3224 = vadd.f32 0.0, %v3223
      %v3225 = vpop.f32.mrb[0].mxu0
      %v3226 = vpop.f32.mrb[0].mxu0
      %v3227 = vadd.f32 0.0, %v3226
      %v3228 = vpop.f32.mrb[0].mxu0
      %3229 = vmatprep.mubr.bf16.mxu0 0
      %3230 = vmatmul.mubr.bf16.gmra.mrb[0].mxu0 %v3032
      %v3231 = vpop.f32.mrb[0].mxu0
      %v3232 = vadd.f32 0.0, %v3231
      %v3233 = vpop.f32.mrb[0].mxu0
      %v3234 = vpop.f32.mrb[0].mxu0
      %v3235 = vadd.f32 0.0, %v3234
      %v3236 = vpop.f32.mrb[0].mxu0
      %3237 = vmatprep.mubr.bf16.mxu0 0
      %3238 = vmatmul.mubr.bf16.gmra.mrb[0].mxu0 %v3033
      %v3239 = vpop.f32.mrb[0].mxu0
      %v3240 = vadd.f32 0.0, %v3239
      %v3241 = vpop.f32.mrb[0].mxu0
      %v3242 = vpop.f32.mrb[0].mxu0
      %v3243 = vadd.f32 0.0, %v3242
      %v3244 = vpop.f32.mrb[0].mxu0
      %3245 = vmatprep.mubr.bf16.mxu0 0
      %3246 = vmatmul.mubr.bf16.gmra.mrb[0].mxu0 %v3034
      %v3247 = vpop.f32.mrb[0].mxu0
      %v3248 = vadd.f32 0.0, %v3247
      %v3249 = vpop.f32.mrb[0].mxu0
      %v3250 = vpop.f32.mrb[0].mxu0
      %v3251 = vadd.f32 0.0, %v3250
      %v3252 = vpop.f32.mrb[0].mxu0
      %3253 = vmatprep.mubr.bf16.mxu0 0
      %3254 = vmatmul.mubr.bf16.gmra.mrb[0].mxu0 %v3035
      %v3255 = vpop.f32.mrb[0].mxu0
      %v3256 = vadd.f32 0.0, %v3255
      %v3257 = vpop.f32.mrb[0].mxu0
      %v3258 = vpop.f32.mrb[0].mxu0
      %v3259 = vadd.f32 0.0, %v3258
      %v3260 = vpop.f32.mrb[0].mxu0
      %3261 = vdwg.mxu0
      %v3262 = vadd.f32 %v2956, %v3136
      %v3263 = vadd.f32 %v2957, %v3139
      %v3264 = vadd.f32 %v2958, %v3144
      %v3265 = vadd.f32 %v2959, %v3147
      %v3266 = vadd.f32 %v2960, %v3152
      %v3267 = vadd.f32 %v2961, %v3155
      %v3268 = vadd.f32 %v2962, %v3160
      %v3269 = vadd.f32 %v2963, %v3163
      %v3270 = vadd.f32 %v2964, %v3168
      %v3271 = vadd.f32 %v2965, %v3171
      %v3272 = vadd.f32 %v2966, %v3176
      %v3273 = vadd.f32 %v2967, %v3179
      %v3274 = vadd.f32 %v2968, %v3184
      %v3275 = vadd.f32 %v2969, %v3187
      %v3276 = vadd.f32 %v2970, %v3192
      %v3277 = vadd.f32 %v2971, %v3195
      %v3278 = vadd.f32 %v2972, %v3200
      %v3279 = vadd.f32 %v2973, %v3203
      %v3280 = vadd.f32 %v2974, %v3208
      %v3281 = vadd.f32 %v2975, %v3211
      %v3282 = vadd.f32 %v2976, %v3216
      %v3283 = vadd.f32 %v2977, %v3219
      %v3284 = vadd.f32 %v2978, %v3224
      %v3285 = vadd.f32 %v2979, %v3227
      %v3286 = vadd.f32 %v2980, %v3232
      %v3287 = vadd.f32 %v2981, %v3235
      %v3288 = vadd.f32 %v2982, %v3240
      %v3289 = vadd.f32 %v2983, %v3243
      %v3290 = vadd.f32 %v2984, %v3248
      %v3291 = vadd.f32 %v2985, %v3251
      %v3292 = vadd.f32 %v2986, %v3256
      %v3293 = vadd.f32 %v2987, %v3259
      %v3294 = vpack.c.bf16 %v3263, %v3262
      %v3295 = vpack.c.bf16 %v3265, %v3264
      %v3296 = vpack.c.bf16 %v3267, %v3266
      %v3297 = vpack.c.bf16 %v3269, %v3268
      %v3298 = vpack.c.bf16 %v3271, %v3270
      %v3299 = vpack.c.bf16 %v3273, %v3272
      %v3300 = vpack.c.bf16 %v3275, %v3274
      %v3301 = vpack.c.bf16 %v3277, %v3276
      %v3302 = vpack.c.bf16 %v3279, %v3278
      %v3303 = vpack.c.bf16 %v3281, %v3280
      %v3304 = vpack.c.bf16 %v3283, %v3282
      %v3305 = vpack.c.bf16 %v3285, %v3284
      %v3306 = vpack.c.bf16 %v3287, %v3286
      %v3307 = vpack.c.bf16 %v3289, %v3288
      %v3308 = vpack.c.bf16 %v3291, %v3290
      %v3309 = vpack.c.bf16 %v3293, %v3292
      %v3326 = vunpack.c.l.b16 %v3294
      %v3327 = vunpack.c.h.b16 %v3294
      %v3328 = vunpack.c.l.b16 %v3295
      %v3329 = vunpack.c.h.b16 %v3295
      %v3330 = vunpack.c.l.b16 %v3296
      %v3331 = vunpack.c.h.b16 %v3296
      %v3332 = vunpack.c.l.b16 %v3297
      %v3333 = vunpack.c.h.b16 %v3297
      %v3334 = vunpack.c.l.b16 %v3298
      %v3335 = vunpack.c.h.b16 %v3298
      %v3336 = vunpack.c.l.b16 %v3299
      %v3337 = vunpack.c.h.b16 %v3299
      %v3338 = vunpack.c.l.b16 %v3300
      %v3339 = vunpack.c.h.b16 %v3300
      %v3340 = vunpack.c.l.b16 %v3301
      %v3341 = vunpack.c.h.b16 %v3301
      %v3342 = vunpack.c.l.b16 %v3302
      %v3343 = vunpack.c.h.b16 %v3302
      %v3344 = vunpack.c.l.b16 %v3303
      %v3345 = vunpack.c.h.b16 %v3303
      %v3346 = vunpack.c.l.b16 %v3304
      %v3347 = vunpack.c.h.b16 %v3304
      %v3348 = vunpack.c.l.b16 %v3305
      %v3349 = vunpack.c.h.b16 %v3305
      %v3350 = vunpack.c.l.b16 %v3306
      %v3351 = vunpack.c.h.b16 %v3306
      %v3352 = vunpack.c.l.b16 %v3307
      %v3353 = vunpack.c.h.b16 %v3307
      %v3354 = vunpack.c.l.b16 %v3308
      %v3355 = vunpack.c.h.b16 %v3308
      %v3356 = vunpack.c.l.b16 %v3309
      %v3357 = vunpack.c.h.b16 %v3309
      %v3358 = vpack.c.b16 %v3326, %v3326
      %v3359 = vpack.c.b16 %v3327, %v3327
      %v3360 = vpack.c.b16 %v3328, %v3328
      %v3361 = vpack.c.b16 %v3329, %v3329
      %v3362 = vpack.c.b16 %v3330, %v3330
      %v3363 = vpack.c.b16 %v3331, %v3331
      %v3364 = vpack.c.b16 %v3332, %v3332
      %v3365 = vpack.c.b16 %v3333, %v3333
      %v3366 = vpack.c.b16 %v3334, %v3334
      %v3367 = vpack.c.b16 %v3335, %v3335
      %v3368 = vpack.c.b16 %v3336, %v3336
      %v3369 = vpack.c.b16 %v3337, %v3337
      %v3370 = vpack.c.b16 %v3338, %v3338
      %v3371 = vpack.c.b16 %v3339, %v3339
      %v3372 = vpack.c.b16 %v3340, %v3340
      %v3373 = vpack.c.b16 %v3341, %v3341
      %v3374 = vpack.c.b16 %v3342, %v3342
      %v3375 = vpack.c.b16 %v3343, %v3343
      %v3376 = vpack.c.b16 %v3344, %v3344
      %v3377 = vpack.c.b16 %v3345, %v3345
      %v3378 = vpack.c.b16 %v3346, %v3346
      %v3379 = vpack.c.b16 %v3347, %v3347
      %v3380 = vpack.c.b16 %v3348, %v3348
      %v3381 = vpack.c.b16 %v3349, %v3349
      %v3382 = vpack.c.b16 %v3350, %v3350
      %v3383 = vpack.c.b16 %v3351, %v3351
      %v3384 = vpack.c.b16 %v3352, %v3352
      %v3385 = vpack.c.b16 %v3353, %v3353
      %v3386 = vpack.c.b16 %v3354, %v3354
      %v3387 = vpack.c.b16 %v3355, %v3355
      %v3388 = vpack.c.b16 %v3356, %v3356
      %v3389 = vpack.c.b16 %v3357, %v3357
      %3422 = vst [vmem:[%s257] sm:$0xf] %v3358
      %3423 = vst [vmem:[%s257 + $0x4] sm:$0xf] %v3359
      %3424 = vst [vmem:[%s257 + $0x8] sm:$0xf] %v3360
      %3425 = vst [vmem:[%s257 + $0xc] sm:$0xf] %v3361
      %3426 = vst [vmem:[%s257 + $0x10] sm:$0xf] %v3362
      %3427 = vst [vmem:[%s257 + $0x14] sm:$0xf] %v3363
      %3428 = vst [vmem:[%s257 + $0x18] sm:$0xf] %v3364
      %3429 = vst [vmem:[%s257 + $0x1c] sm:$0xf] %v3365
      %3430 = vst [vmem:[%s257 + $0x20] sm:$0xf] %v3366
      %3431 = vst [vmem:[%s257 + $0x24] sm:$0xf] %v3367
      %3432 = vst [vmem:[%s257 + $0x28] sm:$0xf] %v3368
      %3433 = vst [vmem:[%s257 + $0x2c] sm:$0xf] %v3369
      %3434 = vst [vmem:[%s257 + $0x30] sm:$0xf] %v3370
      %3435 = vst [vmem:[%s257 + $0x34] sm:$0xf] %v3371
      %3436 = vst [vmem:[%s257 + $0x38] sm:$0xf] %v3372
      %3437 = vst [vmem:[%s257 + $0x3c] sm:$0xf] %v3373
      %3438 = vst [vmem:[%s257 + $0x40] sm:$0xf] %v3374
      %3439 = vst [vmem:[%s257 + $0x44] sm:$0xf] %v3375
      %3440 = vst [vmem:[%s257 + $0x48] sm:$0xf] %v3376
      %3441 = vst [vmem:[%s257 + $0x4c] sm:$0xf] %v3377
      %3442 = vst [vmem:[%s257 + $0x50] sm:$0xf] %v3378
      %3443 = vst [vmem:[%s257 + $0x54] sm:$0xf] %v3379
      %3444 = vst [vmem:[%s257 + $0x58] sm:$0xf] %v3380
      %3445 = vst [vmem:[%s257 + $0x5c] sm:$0xf] %v3381
      %3446 = vst [vmem:[%s257 + $0x60] sm:$0xf] %v3382
      %3447 = vst [vmem:[%s257 + $0x64] sm:$0xf] %v3383
      %3448 = vst [vmem:[%s257 + $0x68] sm:$0xf] %v3384
      %3449 = vst [vmem:[%s257 + $0x6c] sm:$0xf] %v3385
      %3450 = vst [vmem:[%s257 + $0x70] sm:$0xf] %v3386
      %3451 = vst [vmem:[%s257 + $0x74] sm:$0xf] %v3387
      %3452 = vst [vmem:[%s257 + $0x78] sm:$0xf] %v3388
      %3453 = vst [vmem:[%s257 + $0x7c] sm:$0xf] %v3389
      %v3454 = vadd.f32 %v3262, %v3263
      %v3455 = vadd.f32 %v3454, %v3264
      %v3456 = vadd.f32 %v3455, %v3265
      %v3457 = vadd.f32 %v3456, %v3266
      %v3458 = vadd.f32 %v3457, %v3267
      %v3459 = vadd.f32 %v3458, %v3268
      %v3460 = vadd.f32 %v3459, %v3269
      %v3461 = vadd.f32 %v3460, %v3270
      %v3462 = vadd.f32 %v3461, %v3271
      %v3463 = vadd.f32 %v3462, %v3272
      %v3464 = vadd.f32 %v3463, %v3273
      %v3465 = vadd.f32 %v3464, %v3274
      %v3466 = vadd.f32 %v3465, %v3275
      %v3467 = vadd.f32 %v3466, %v3276
      %v3468 = vadd.f32 %v3467, %v3277
      %v3469 = vadd.f32 %v3468, %v3278
      %v3470 = vadd.f32 %v3469, %v3279
      %v3471 = vadd.f32 %v3470, %v3280
      %v3472 = vadd.f32 %v3471, %v3281
      %v3473 = vadd.f32 %v3472, %v3282
      %v3474 = vadd.f32 %v3473, %v3283
      %v3475 = vadd.f32 %v3474, %v3284
      %v3476 = vadd.f32 %v3475, %v3285
      %v3477 = vadd.f32 %v3476, %v3286
      %v3478 = vadd.f32 %v3477, %v3287
      %v3479 = vadd.f32 %v3478, %v3288
      %v3480 = vadd.f32 %v3479, %v3289
      %v3481 = vadd.f32 %v3480, %v3290
      %v3482 = vadd.f32 %v3481, %v3291
      %v3483 = vadd.f32 %v3482, %v3292
      %v3484 = vadd.f32 %v3483, %v3293
      %v3485 = vmul.f32 %v3262, %v3262
      %v3486 = vmul.f32 %v3263, %v3263
      %v3487 = vmul.f32 %v3264, %v3264
      %v3488 = vmul.f32 %v3265, %v3265
      %v3489 = vmul.f32 %v3266, %v3266
      %v3490 = vmul.f32 %v3267, %v3267
      %v3491 = vmul.f32 %v3268, %v3268
      %v3492 = vmul.f32 %v3269, %v3269
      %v3493 = vmul.f32 %v3270, %v3270
      %v3494 = vmul.f32 %v3271, %v3271
      %v3495 = vmul.f32 %v3272, %v3272
      %v3496 = vmul.f32 %v3273, %v3273
      %v3497 = vmul.f32 %v3274, %v3274
      %v3498 = vmul.f32 %v3275, %v3275
      %v3499 = vmul.f32 %v3276, %v3276
      %v3500 = vmul.f32 %v3277, %v3277
      %v3501 = vmul.f32 %v3278, %v3278
      %v3502 = vmul.f32 %v3279, %v3279
      %v3503 = vmul.f32 %v3280, %v3280
      %v3504 = vmul.f32 %v3281, %v3281
      %v3505 = vmul.f32 %v3282, %v3282
      %v3506 = vmul.f32 %v3283, %v3283
      %v3507 = vmul.f32 %v3284, %v3284
      %v3508 = vmul.f32 %v3285, %v3285
      %v3509 = vmul.f32 %v3286, %v3286
      %v3510 = vmul.f32 %v3287, %v3287
      %v3511 = vmul.f32 %v3288, %v3288
      %v3512 = vmul.f32 %v3289, %v3289
      %v3513 = vmul.f32 %v3290, %v3290
      %v3514 = vmul.f32 %v3291, %v3291
      %v3515 = vmul.f32 %v3292, %v3292
      %v3516 = vmul.f32 %v3293, %v3293
      %v3517 = vadd.f32 %v3485, %v3486
      %v3518 = vadd.f32 %v3517, %v3487
      %v3519 = vadd.f32 %v3518, %v3488
      %v3520 = vadd.f32 %v3519, %v3489
      %v3521 = vadd.f32 %v3520, %v3490
      %v3522 = vadd.f32 %v3521, %v3491
      %v3523 = vadd.f32 %v3522, %v3492
      %v3524 = vadd.f32 %v3523, %v3493
      %v3525 = vadd.f32 %v3524, %v3494
      %v3526 = vadd.f32 %v3525, %v3495
      %v3527 = vadd.f32 %v3526, %v3496
      %v3528 = vadd.f32 %v3527, %v3497
      %v3529 = vadd.f32 %v3528, %v3498
      %v3530 = vadd.f32 %v3529, %v3499
      %v3531 = vadd.f32 %v3530, %v3500
      %v3532 = vadd.f32 %v3531, %v3501
      %v3533 = vadd.f32 %v3532, %v3502
      %v3534 = vadd.f32 %v3533, %v3503
      %v3535 = vadd.f32 %v3534, %v3504
      %v3536 = vadd.f32 %v3535, %v3505
      %v3537 = vadd.f32 %v3536, %v3506
      %v3538 = vadd.f32 %v3537, %v3507
      %v3539 = vadd.f32 %v3538, %v3508
      %v3540 = vadd.f32 %v3539, %v3509
      %v3541 = vadd.f32 %v3540, %v3510
      %v3542 = vadd.f32 %v3541, %v3511
      %v3543 = vadd.f32 %v3542, %v3512
      %v3544 = vadd.f32 %v3543, %v3513
      %v3545 = vadd.f32 %v3544, %v3514
      %v3546 = vadd.f32 %v3545, %v3515
      %v3547 = vadd.f32 %v3546, %v3516
      %3548 = vst [vmem:[%s261] sm:$0xff] %v3484
      %3549 = vst [vmem:[%s265] sm:$0xff] %v3547
      %p3550 = scmp.lt.s32.totalorder %s17, 1
      %s3551 = scalar_select %p3550, %s17, 1
      %s3552 = smul.addr %s3551, 32
      %s3553 = smul.addr %s3552, 4
      %s3554 = scalar_lea.vmem %s3, %s3553
      %p3555 = scmp.lt.s32.totalorder %s17, 1
      %s3556 = scalar_select %p3555, %s17, 1
      %s3557 = smul.addr %s3556, 8
      %s3558 = scalar_lea.vmem %s4, %s3557
      %p3559 = scmp.lt.s32.totalorder %s17, 1
      %s3560 = scalar_select %p3559, %s17, 1
      %s3561 = smul.addr %s3560, 8
      %s3562 = scalar_lea.vmem %s5, %s3561
      // Predicated region
      $region33: #{unet_up_block_forward.3} parent=31 // pred_check
        %p3563 = pneg %p108
      $region34: #{unet_up_block_forward.3} parent=31 // pred_check_branch
        %3565 = sbr.rel (%p3563) target = $region36
      $region35: #{unet_up_block_forward.3} parent=31 // pred_region
        _
      $region36: #{unet_up_block_forward.3} parent=31 // pred_fallthru
        _
      // Predicated region
      $region37: #{unet_up_block_forward.3} parent=31 // pred_check
        %p3566 = pneg %p134
      $region38: #{unet_up_block_forward.3} parent=31 // pred_check_branch
        %3568 = sbr.rel (%p3566) target = $region40
      $region39: #{unet_up_block_forward.3} parent=31 // pred_region
        _
      $region40: #{unet_up_block_forward.3} parent=31 // pred_fallthru
        _
      // Predicated region
      $region41: #{unet_up_block_forward.3} parent=31 // pred_check
        %p3569 = pneg %p160
      $region42: #{unet_up_block_forward.3} parent=31 // pred_check_branch
        %3571 = sbr.rel (%p3569) target = $region44
      $region43: #{unet_up_block_forward.3} parent=31 // pred_region
        _
      $region44: #{unet_up_block_forward.3} parent=31 // pred_fallthru
        _
    $region32: #{unet_up_block_forward.3} parent=5 // pred_fallthru
      _
    %p3572 = scmp.le.s32.totalorder 2, %s12
    // Predicated region
    $region45: #{unet_up_block_forward.3} parent=5 // pred_check
      %p3573 = pneg %p3572
    $region46: #{unet_up_block_forward.3} parent=5 // pred_check_branch
      %3575 = sbr.rel (%p3573) target = $region48
    $region47: #{unet_up_block_forward.3} parent=5 // pred_region
      %s3576 = ssub.s32 %s12, 2
      // Predicated region
      $region49: #{unet_up_block_forward.3} parent=47 // pred_check
        %p3577 = pneg %p114
      $region50: #{unet_up_block_forward.3} parent=47 // pred_check_branch
        %3579 = sbr.rel (%p3577) target = $region52
      $region51: #{unet_up_block_forward.3} parent=47 // pred_region
        %p3580 = scmp.lt.s32.totalorder %s18, 1
        %s3581 = scalar_select %p3580, %s18, 1
        %s3582 = smul.addr %s3581, 32
        %s3583 = smul.addr %s3582, 4
        %s3584 = scalar_lea.vmem %s3, %s3583
      $region52: #{unet_up_block_forward.3} parent=47 // pred_fallthru
        _
      // Predicated region
      $region53: #{unet_up_block_forward.3} parent=47 // pred_check
        %p3585 = pneg %p140
      $region54: #{unet_up_block_forward.3} parent=47 // pred_check_branch
        %3587 = sbr.rel (%p3585) target = $region56
      $region55: #{unet_up_block_forward.3} parent=47 // pred_region
        %p3588 = scmp.lt.s32.totalorder %s18, 1
        %s3589 = scalar_select %p3588, %s18, 1
        %s3590 = smul.addr %s3589, 8
        %s3591 = scalar_lea.vmem %s4, %s3590
      $region56: #{unet_up_block_forward.3} parent=47 // pred_fallthru
        _
      // Predicated region
      $region57: #{unet_up_block_forward.3} parent=47 // pred_check
        %p3592 = pneg %p166
      $region58: #{unet_up_block_forward.3} parent=47 // pred_check_branch
        %3594 = sbr.rel (%p3592) target = $region60
      $region59: #{unet_up_block_forward.3} parent=47 // pred_region
        %p3595 = scmp.lt.s32.totalorder %s18, 1
        %s3596 = scalar_select %p3595, %s18, 1
        %s3597 = smul.addr %s3596, 8
        %s3598 = scalar_lea.vmem %s5, %s3597
      $region60: #{unet_up_block_forward.3} parent=47 // pred_fallthru
        _
    $region48: #{unet_up_block_forward.3} parent=5 // pred_fallthru
      _
  $region6: #{unet_up_block_forward.3} parent=0 // loop_footer
    %s16 = sadd.s32 1, %s12
  $region7: #{unet_up_block_forward.3} parent=0 // loop_footer_branch
    %11 = sbr.rel target = $region3
  $region8: #{unet_up_block_forward.3} parent=0 // loop_exit
    _

</llo_original>
